<compile_context>
chip_gen: v7x
topology: tpu7x:2x2x1
jax: 0.10.0
libtpu: 0.0.40
codegen_flags: <defaults>
</compile_context>

<pallas_src>
import functools

import jax
import jax.numpy as jnp
from jax.experimental import pallas as pl
from jax.experimental.pallas import tpu as pltpu


# --------------------------------------------------------------------------- #
# Kernel
# --------------------------------------------------------------------------- #
def _attention_block_kernel(
    x_ref,                     # [BB, T, C]  f32
    wqkv_ref,                  # [C, 3*C]    compute dtype (Q | K | V, heads concat)
    wp_ref, bp_ref,            # [C, C] cd, [1, C] f32
    ln1_g_ref, ln1_b_ref,      # [1, C] f32
    ln2_g_ref, ln2_b_ref,      # [1, C] f32
    w1_ref, b1_ref,            # [C, F] cd, [1, F] f32
    w2_ref, b2_ref,            # [F, C] cd, [1, C] f32
    out_ref,                   # [BB, T, C]
    attmap_ref,                # [BB, H, T]  (single lane-dense store per block)
    *, n_head, compute_dtype, approx_softmax,
):
    eps = 1e-5
    f32 = jnp.float32
    cd = compute_dtype

    BB, T, C = x_ref.shape
    hs = C // n_head
    rows = BB * T
    scale = hs ** (-0.5)

    # Batch folded into the matmul M dimension: all dense layers see [BB*T, ...].
    x = x_ref[...].astype(f32).reshape(rows, C)

    # ---- LayerNorm 1 (f32) ----
    mu = jnp.mean(x, axis=-1, keepdims=True)
    var = jnp.mean((x - mu) ** 2, axis=-1, keepdims=True)
    xn = (x - mu) * jax.lax.rsqrt(var + eps)
    xn = xn * ln1_g_ref[...].astype(f32) + ln1_b_ref[...].astype(f32)

    # ---- Fused QKV projection: one tall lane-dense matmul (weights pre-cast) ----
    qkv = jnp.dot(xn.astype(cd), wqkv_ref[...],
                  preferred_element_type=f32)                 # [rows, 3C] f32
    qkv_c = qkv.astype(cd)                                    # single cast

    # ---- Multi-head attention; per-head output-projection accumulation ----
    att_rows = []
    attn_acc = jnp.zeros((rows, C), f32)
    for h in range(n_head):
        lo = h * hs
        q = qkv_c[:, lo:lo + hs].reshape(BB, T, hs)
        k = qkv_c[:, C + lo:C + lo + hs].reshape(BB, T, hs)
        v = qkv_c[:, 2 * C + lo:2 * C + lo + hs].reshape(BB, T, hs)

        # q @ k^T batched over the BB sequences (transpose folded into contraction)
        aff = jnp.einsum("btd,bsd->bts", q, k,
                         preferred_element_type=f32) * scale  # [BB, T, T] f32
        att_rows.append(aff[:, 1:2, :])                       # pre-softmax row 1

        # softmax (f32 math)
        m = jnp.max(aff, axis=-1, keepdims=True)
        p = jnp.exp(aff - m)
        denom = jnp.sum(p, axis=-1, keepdims=True)
        if approx_softmax:
            p = p * pl.reciprocal(denom, approx=True)         # EUP slot, free-ish
        else:
            p = p / denom
        # dropout(p) is identity in eval mode

        out_h = jnp.einsum("bts,bsd->btd", p.astype(cd), v,
                           preferred_element_type=f32)        # [BB, T, hs]

        # accumulate this head's slice of the output projection (no concat)
        attn_acc = attn_acc + jnp.dot(
            out_h.reshape(rows, hs).astype(cd), wp_ref[lo:lo + hs, :],
            preferred_element_type=f32)                       # [rows, C]

    # one lane-dense store of all heads x all sequences in this block
    attmap_ref[...] = jnp.concatenate(att_rows, axis=1).astype(attmap_ref.dtype)

    # dropout(proj) is identity in eval mode
    x = x + attn_acc + bp_ref[...].astype(f32)                # residual 1

    # ---- LayerNorm 2 + FeedForward (f32 math, MXU in compute dtype) ----
    mu2 = jnp.mean(x, axis=-1, keepdims=True)
    var2 = jnp.mean((x - mu2) ** 2, axis=-1, keepdims=True)
    xn2 = (x - mu2) * jax.lax.rsqrt(var2 + eps)
    xn2 = xn2 * ln2_g_ref[...].astype(f32) + ln2_b_ref[...].astype(f32)

    h1 = jnp.dot(xn2.astype(cd), w1_ref[...],
                 preferred_element_type=f32) + b1_ref[...].astype(f32)
    h1 = jnp.maximum(h1, 0.0)                                 # ReLU
    ff = jnp.dot(h1.astype(cd), w2_ref[...],
                 preferred_element_type=f32) + b2_ref[...].astype(f32)
    # dropout(ff) is identity in eval mode

    out_ref[...] = (x + ff).reshape(BB, T, C).astype(out_ref.dtype)


# --------------------------------------------------------------------------- #
# Host-side packing, sizing and pallas_call wrapper
# --------------------------------------------------------------------------- #
def pack_params(params, n_head, compute_dtype=jnp.bfloat16):
    """Fuse per-head QKV weights into one [C, 3C] matrix and pre-cast the big
    matmul weights to compute_dtype.  Call ONCE at model init, not per step."""
    H = n_head
    C = params["wp"].shape[0]
    hs = C // H

    def heads_to_cols(w):  # [H, C, hs] -> [C, H*hs]
        return jnp.transpose(w, (1, 0, 2)).reshape(C, H * hs)

    wqkv = jnp.concatenate(
        [heads_to_cols(params["wq"]),
         heads_to_cols(params["wk"]),
         heads_to_cols(params["wv"])], axis=1)                # [C, 3C]

    f32 = jnp.float32
    return {
        "wqkv": wqkv.astype(compute_dtype),
        "wp": params["wp"].astype(compute_dtype),
        "bp": params["bp"].astype(f32),
        "ln1_g": params["ln1_g"].astype(f32),
        "ln1_b": params["ln1_b"].astype(f32),
        "ln2_g": params["ln2_g"].astype(f32),
        "ln2_b": params["ln2_b"].astype(f32),
        "w1": params["w1"].astype(compute_dtype),
        "b1": params["b1"].astype(f32),
        "w2": params["w2"].astype(compute_dtype),
        "b2": params["b2"].astype(f32),
    }


def _pick_block_batch(B, T, target_rows=256):
    """Fold enough sequences into one block that BB*T fills the MXU M dimension."""
    bb = max(1, min(B, -(-target_rows // T)))     # ceil(target_rows / T), capped at B
    while B % bb:
        bb -= 1
    # v7x megacore: prefer >=2 grid blocks when each block still has >=128 rows.
    if B // bb == 1 and B % 2 == 0 and (B // 2) * T >= 128:
        bb = B // 2
    return bb


def _vmem_limit_bytes(BB, T, C, F, H, w_bytes, weight_bufs):
    """Explicit, auditable VMEM budget: weights x buffer count + double-buffered
    activation blocks + in-kernel intermediates, with margin.  Capped at 64 MiB
    (v7x physical)."""
    f32 = 4
    rows = BB * T
    weights = (3 * C * C + C * C + C * F + F * C) * w_bytes * weight_bufs
    weights += (6 * C + F) * f32 * weight_bufs                 # biases + LN params
    acts = 2 * (2 * rows * C + BB * H * T) * f32               # in + out + maps, 2-buf
    inter = (2 * rows * 3 * C                                  # qkv f32 + cd copy
             + 3 * BB * T * T                                  # aff / exp / probs
             + 2 * rows * F                                    # FFN hidden + ReLU
             + 4 * rows * C) * f32                             # xn / acc / residuals
    est = weights + acts + inter
    return int(min(max(2 * est + (8 << 20), 32 << 20), 64 << 20))


@functools.partial(
    jax.jit,
    static_argnames=("n_head", "block_batch", "approx_softmax",
                     "single_buffer_weights"))
def _attention_block_call(x, packed, *, n_head, block_batch, approx_softmax,
                          single_buffer_weights):
    B, T, C = x.shape
    BB = block_batch
    H = n_head
    F = packed["w1"].shape[1]
    compute_dtype = packed["wqkv"].dtype

    kernel = functools.partial(
        _attention_block_kernel, n_head=n_head,
        compute_dtype=compute_dtype, approx_softmax=approx_softmax)

    bmap = lambda g: (g, 0, 0)       # per-block activations / outputs
    wmap = lambda g: (0, 0)          # weights resident across the whole grid

    wspec_kwargs = {}
    if single_buffer_weights:
        # Constant index_map -> one VMEM buffer suffices (halves weight VMEM).
        wspec_kwargs = dict(pipeline_mode=pl.Buffered(1))

    def wspec(shape):
        return pl.BlockSpec(shape, wmap, **wspec_kwargs)

    in_specs = [
        pl.BlockSpec((BB, T, C), bmap),          # x
        wspec((C, 3 * C)),                       # wqkv
        wspec((C, C)),                           # wp
        wspec((1, C)),                           # bp
        wspec((1, C)),                           # ln1_g
        wspec((1, C)),                           # ln1_b
        wspec((1, C)),                           # ln2_g
        wspec((1, C)),                           # ln2_b
        wspec((C, F)),                           # w1
        wspec((1, F)),                           # b1
        wspec((F, C)),                           # w2
        wspec((1, C)),                           # b2
    ]
    out_specs = (
        pl.BlockSpec((BB, T, C), bmap),          # x_out
        pl.BlockSpec((BB, H, T), bmap),          # attention maps
    )
    out_shapes = (
        jax.ShapeDtypeStruct((B, T, C), x.dtype),
        jax.ShapeDtypeStruct((B, H, T), jnp.float32),
    )

    w_bytes = jnp.dtype(compute_dtype).itemsize
    vmem_limit = _vmem_limit_bytes(
        BB, T, C, F, H, w_bytes, weight_bufs=1 if single_buffer_weights else 2)

    return pl.pallas_call(
        kernel,
        grid=(B // BB,),
        in_specs=in_specs,
        out_specs=out_specs,
        out_shape=out_shapes,
        compiler_params=pltpu.CompilerParams(
            dimension_semantics=("parallel",),
            vmem_limit_bytes=vmem_limit),
    )(
        x, packed["wqkv"], packed["wp"], packed["bp"],
        packed["ln1_g"], packed["ln1_b"], packed["ln2_g"], packed["ln2_b"],
        packed["w1"], packed["b1"], packed["w2"], packed["b2"],
    )


def attention_block_pallas(x, packed_params, n_head, *, approx_softmax=True,
                           block_batch=None):
    """x: [B, T, C] or [T, C] float32.  packed_params from pack_params().
    Returns (x_out, attention_maps[..., H, T])."""
    squeeze_batch = x.ndim == 2
    if squeeze_batch:
        x = x[None]
    B, T, C = x.shape
    if T < 2:
        raise ValueError("AttentionBlock requires T >= 2 (obj_affinities row 1).")
    if C % n_head:
        raise ValueError("n_embd must be divisible by n_head.")
    BB = block_batch if block_batch is not None else _pick_block_batch(B, T)
    if B % BB:
        raise ValueError("block_batch must divide the batch size.")

    kwargs = dict(n_head=n_head, block_batch=BB, approx_softmax=approx_softmax)
    try:
        out, attmaps = _attention_block_call(
            x, packed_params, single_buffer_weights=True, **kwargs)
    except Exception:
        # pl.Buffered(1) not supported by this JAX build: fall back to the
        # default double-buffered weight BlockSpecs (correctness identical).
        out, attmaps = _attention_block_call(
            x, packed_params, single_buffer_weights=False, **kwargs)

    if squeeze_batch:
        return out[0], attmaps[0]
    return out, attmaps


# --------------------------------------------------------------------------- #
# Pure-JAX reference (mirrors the PyTorch forward, eval mode) + param factory
# --------------------------------------------------------------------------- #
def attention_block_reference(x, params, n_head):
    eps = 1e-5
    T, C = x.shape
    hs = C // n_head

    def ln(v, g, b):
        mu = jnp.mean(v, -1, keepdims=True)
        var = jnp.mean((v - mu) ** 2, -1, keepdims=True)
        return (v - mu) / jnp.sqrt(var + eps) * g + b

    xn = ln(x, params["ln1_g"], params["ln1_b"])
    outs, maps = [], []
    for h in range(n_head):
        q = xn @ params["wq"][h]
        k = xn @ params["wk"][h]
        v = xn @ params["wv"][h]
        aff = (q @ k.T) * hs ** (-0.5)
        maps.append(aff[1:2, :])
        p = jax.nn.softmax(aff, axis=-1)
        outs.append(p @ v)
    attn = jnp.concatenate(outs, -1) @ params["wp"] + params["bp"]
    x = x + attn
    xn2 = ln(x, params["ln2_g"], params["ln2_b"])
    h1 = jnp.maximum(xn2 @ params["w1"] + params["b1"], 0.0)
    x = x + h1 @ params["w2"] + params["b2"]
    return x, jnp.stack(maps, 0)  # maps: [H, 1, T]


def make_params(key, n_embd, n_head, ff_hd):
    hs = n_embd // n_head
    ks = jax.random.split(key, 10)
    s = 0.05
    return {
        # per-head Q/K/V weights, stacked [H, C, hs] (already transposed for x @ W)
        "wq": jax.random.normal(ks[0], (n_head, n_embd, hs), jnp.float32) * s,
        "wk": jax.random.normal(ks[1], (n_head, n_embd, hs), jnp.float32) * s,
        "wv": jax.random.normal(ks[2], (n_head, n_embd, hs), jnp.float32) * s,
        # output projection [C, C] (transposed) + bias
        "wp": jax.random.normal(ks[3], (n_embd, n_embd), jnp.float32) * s,
        "bp": jax.random.normal(ks[4], (1, n_embd), jnp.float32) * s,
        # layer norms
        "ln1_g": jnp.ones((1, n_embd), jnp.float32),
        "ln1_b": jnp.zeros((1, n_embd), jnp.float32),
        "ln2_g": jnp.ones((1, n_embd), jnp.float32),
        "ln2_b": jnp.zeros((1, n_embd), jnp.float32),
        # feed-forward (transposed): [C, F], [1, F], [F, C], [1, C]
        "w1": jax.random.normal(ks[5], (n_embd, ff_hd), jnp.float32) * s,
        "b1": jax.random.normal(ks[6], (1, ff_hd), jnp.float32) * s,
        "w2": jax.random.normal(ks[7], (ff_hd, n_embd), jnp.float32) * s,
        "b2": jax.random.normal(ks[8], (1, n_embd), jnp.float32) * s,
    }


if __name__ == "__main__":
    # Several independent [T, C] sequences batched into one pallas_call; the batch
    # is folded into the matmul M dimension inside each grid block.
    B, T, n_embd, n_head, ff_hd = 4, 8, 32, 4, 64

    key = jax.random.PRNGKey(0)
    k_x, k_p = jax.random.split(key)
    x = jax.random.normal(k_x, (B, T, n_embd), jnp.float32)
    params = make_params(k_p, n_embd, n_head, ff_hd)

    # pure-JAX reference (per-sequence), batched with vmap
    x_ref, maps_ref = jax.vmap(
        lambda xb: attention_block_reference(xb, params, n_head))(x)
    maps_ref = maps_ref[:, :, 0, :]  # [B, H, T]

    # --- strict path: f32 MXU inputs, exact softmax denominator ---
    packed_f32 = pack_params(params, n_head, compute_dtype=jnp.float32)
    x_out, attmaps = attention_block_pallas(
        x, packed_f32, n_head, approx_softmax=False)
    jax.block_until_ready((x_out, attmaps))
    assert jnp.allclose(attmaps, maps_ref, atol=1e-4, rtol=1e-4)
    assert jnp.allclose(x_out, x_ref, atol=1e-3, rtol=1e-3)

    # --- perf path: bf16 MXU inputs (f32 accumulation), EUP reciprocal softmax ---
    # NOTE: attention maps on this path come from bf16 q/k (~1e-2 level deltas).
    packed_bf16 = pack_params(params, n_head, compute_dtype=jnp.bfloat16)
    x_bf, att_bf = attention_block_pallas(
        x, packed_bf16, n_head, approx_softmax=True)
    jax.block_until_ready((x_bf, att_bf))
    assert jnp.allclose(x_bf, x_ref, atol=3e-2, rtol=3e-2)
    assert jnp.allclose(att_bf, maps_ref, atol=3e-2, rtol=3e-2)

    # the PyTorch module returns attention_maps as a python list of [1, T] per head
    attention_maps = [attmaps[0, h][None, :] for h in range(n_head)]

    print("KERNEL_OK")
</pallas_src>

<mosaic_0001>
module attributes {stable_mosaic.version = 11 : i64} {
  func.func @_attention_block_kernel(%arg0: i32, %arg1: memref<4x8x32xf32, #tpu.memory_space<vmem>>, %arg2: memref<32x96xf32, #tpu.memory_space<vmem>>, %arg3: memref<32x32xf32, #tpu.memory_space<vmem>>, %arg4: memref<1x32xf32, #tpu.memory_space<vmem>>, %arg5: memref<1x32xf32, #tpu.memory_space<vmem>>, %arg6: memref<1x32xf32, #tpu.memory_space<vmem>>, %arg7: memref<1x32xf32, #tpu.memory_space<vmem>>, %arg8: memref<1x32xf32, #tpu.memory_space<vmem>>, %arg9: memref<32x64xf32, #tpu.memory_space<vmem>>, %arg10: memref<1x64xf32, #tpu.memory_space<vmem>>, %arg11: memref<64x32xf32, #tpu.memory_space<vmem>>, %arg12: memref<1x32xf32, #tpu.memory_space<vmem>>, %arg13: memref<4x8x32xf32, #tpu.memory_space<vmem>>, %arg14: memref<4x4x8xf32, #tpu.memory_space<vmem>>) attributes {dimension_semantics = [#tpu.dimension_semantics<parallel>], iteration_bounds = array<i64: 1>, scalar_prefetch = 0 : i64, scratch_operands = 0 : i64, tpu.core_type = #tpu.core_type<tc>, window_params = [{transform_indices = @transform_0, window_bounds = array<i64: 4, 8, 32>}, {pipeline_mode = #tpu.pipeline_mode<synchronous>, transform_indices = @transform_1, window_bounds = array<i64: 32, 96>}, {pipeline_mode = #tpu.pipeline_mode<synchronous>, transform_indices = @transform_2, window_bounds = array<i64: 32, 32>}, {pipeline_mode = #tpu.pipeline_mode<synchronous>, transform_indices = @transform_3, window_bounds = array<i64: 1, 32>}, {pipeline_mode = #tpu.pipeline_mode<synchronous>, transform_indices = @transform_4, window_bounds = array<i64: 1, 32>}, {pipeline_mode = #tpu.pipeline_mode<synchronous>, transform_indices = @transform_5, window_bounds = array<i64: 1, 32>}, {pipeline_mode = #tpu.pipeline_mode<synchronous>, transform_indices = @transform_6, window_bounds = array<i64: 1, 32>}, {pipeline_mode = #tpu.pipeline_mode<synchronous>, transform_indices = @transform_7, window_bounds = array<i64: 1, 32>}, {pipeline_mode = #tpu.pipeline_mode<synchronous>, transform_indices = @transform_8, window_bounds = array<i64: 32, 64>}, {pipeline_mode = #tpu.pipeline_mode<synchronous>, transform_indices = @transform_9, window_bounds = array<i64: 1, 64>}, {pipeline_mode = #tpu.pipeline_mode<synchronous>, transform_indices = @transform_10, window_bounds = array<i64: 64, 32>}, {pipeline_mode = #tpu.pipeline_mode<synchronous>, transform_indices = @transform_11, window_bounds = array<i64: 1, 32>}, {transform_indices = @transform_12, window_bounds = array<i64: 4, 8, 32>}, {transform_indices = @transform_13, window_bounds = array<i64: 4, 4, 8>}]} {
    %c0 = arith.constant 0 : index
    %c0_0 = arith.constant 0 : index
    %c0_1 = arith.constant 0 : index
    %0 = vector.load %arg1[%c0, %c0_0, %c0_1] : memref<4x8x32xf32, #tpu.memory_space<vmem>>, vector<4x8x32xf32>
    %1 = vector.shape_cast %0 : vector<4x8x32xf32> to vector<32x32xf32>
    %cst = arith.constant dense<0.000000e+00> : vector<32xf32>
    %2 = vector.multi_reduction <add>, %1, %cst [1] : vector<32x32xf32> to vector<32xf32>
    %3 = vector.shape_cast %2 : vector<32xf32> to vector<32x1xf32>
    %cst_2 = arith.constant 3.200000e+01 : f32
    %4 = vector.broadcast %cst_2 : f32 to vector<32x1xf32>
    %5 = arith.divf %3, %4 : vector<32x1xf32>
    %6 = vector.broadcast %5 : vector<32x1xf32> to vector<32x32xf32>
    %7 = arith.subf %1, %6 : vector<32x32xf32>
    %8 = arith.mulf %7, %7 : vector<32x32xf32>
    %cst_3 = arith.constant dense<0.000000e+00> : vector<32xf32>
    %9 = vector.multi_reduction <add>, %8, %cst_3 [1] : vector<32x32xf32> to vector<32xf32>
    %10 = vector.shape_cast %9 : vector<32xf32> to vector<32x1xf32>
    %cst_4 = arith.constant 3.200000e+01 : f32
    %11 = vector.broadcast %cst_4 : f32 to vector<32x1xf32>
    %12 = arith.divf %10, %11 : vector<32x1xf32>
    %13 = vector.broadcast %5 : vector<32x1xf32> to vector<32x32xf32>
    %14 = arith.subf %1, %13 : vector<32x32xf32>
    %cst_5 = arith.constant 9.99999974E-6 : f32
    %15 = vector.broadcast %cst_5 : f32 to vector<32x1xf32>
    %16 = arith.addf %12, %15 : vector<32x1xf32>
    %17 = math.rsqrt %16 : vector<32x1xf32>
    %18 = vector.broadcast %17 : vector<32x1xf32> to vector<32x32xf32>
    %19 = arith.mulf %14, %18 : vector<32x32xf32>
    %c0_6 = arith.constant 0 : index
    %c0_7 = arith.constant 0 : index
    %20 = vector.load %arg5[%c0_6, %c0_7] : memref<1x32xf32, #tpu.memory_space<vmem>>, vector<1x32xf32>
    %21 = vector.broadcast %20 : vector<1x32xf32> to vector<32x32xf32>
    %22 = arith.mulf %19, %21 : vector<32x32xf32>
    %c0_8 = arith.constant 0 : index
    %c0_9 = arith.constant 0 : index
    %23 = vector.load %arg6[%c0_8, %c0_9] : memref<1x32xf32, #tpu.memory_space<vmem>>, vector<1x32xf32>
    %24 = vector.broadcast %23 : vector<1x32xf32> to vector<32x32xf32>
    %25 = arith.addf %22, %24 : vector<32x32xf32>
    %c0_10 = arith.constant 0 : index
    %c0_11 = arith.constant 0 : index
    %26 = vector.load %arg2[%c0_10, %c0_11] : memref<32x96xf32, #tpu.memory_space<vmem>>, vector<32x96xf32>
    %cst_12 = arith.constant dense<0.000000e+00> : vector<32x96xf32>
    %27 = tpu.matmul %25, %26, %cst_12 {dimension_numbers = #tpu.dot_dimension_numbers<[1], [0], [0], [1], [0, 0, 1, 1], [], []>} : vector<32x32xf32>, vector<32x96xf32>, vector<32x96xf32> -> vector<32x96xf32>
    %cst_13 = arith.constant 0.000000e+00 : f32
    %28 = vector.broadcast %cst_13 : f32 to vector<32x32xf32>
    %29 = vector.extract_strided_slice %27 {offsets = [0, 0], sizes = [32, 8], strides = [1, 1]} : vector<32x96xf32> to vector<32x8xf32>
    %30 = vector.shape_cast %29 : vector<32x8xf32> to vector<4x8x8xf32>
    %31 = vector.extract_strided_slice %27 {offsets = [0, 32], sizes = [32, 8], strides = [1, 1]} : vector<32x96xf32> to vector<32x8xf32>
    %32 = vector.shape_cast %31 : vector<32x8xf32> to vector<4x8x8xf32>
    %33 = vector.extract_strided_slice %27 {offsets = [0, 64], sizes = [32, 8], strides = [1, 1]} : vector<32x96xf32> to vector<32x8xf32>
    %34 = vector.shape_cast %33 : vector<32x8xf32> to vector<4x8x8xf32>
    "tpu.trace_start"() <{level = 10 : i32, message = "btd,bsd->bts"}> : () -> ()
    %cst_14 = arith.constant dense<0.000000e+00> : vector<4x8x8xf32>
    %35 = tpu.matmul %30, %32, %cst_14 {dimension_numbers = #tpu.dot_dimension_numbers<[2], [2], [1], [1], [0, 0, 0, 1, 1, 1], [0], [0]>} : vector<4x8x8xf32>, vector<4x8x8xf32>, vector<4x8x8xf32> -> vector<4x8x8xf32>
    "tpu.trace_stop"() : () -> ()
    %cst_15 = arith.constant 0.353553385 : f32
    %36 = vector.broadcast %cst_15 : f32 to vector<4x8x8xf32>
    %37 = arith.mulf %35, %36 : vector<4x8x8xf32>
    %38 = vector.extract_strided_slice %37 {offsets = [0, 1, 0], sizes = [4, 1, 8], strides = [1, 1, 1]} : vector<4x8x8xf32> to vector<4x1x8xf32>
    %cst_16 = arith.constant dense<0xFF800000> : vector<4x8xf32>
    %39 = vector.multi_reduction <maximumf>, %37, %cst_16 [2] : vector<4x8x8xf32> to vector<4x8xf32>
    %40 = vector.shape_cast %39 : vector<4x8xf32> to vector<4x8x1xf32>
    %41 = vector.broadcast %40 : vector<4x8x1xf32> to vector<4x8x8xf32>
    %42 = arith.subf %37, %41 : vector<4x8x8xf32>
    %43 = math.exp %42 : vector<4x8x8xf32>
    %cst_17 = arith.constant dense<0.000000e+00> : vector<4x8xf32>
    %44 = vector.multi_reduction <add>, %43, %cst_17 [2] : vector<4x8x8xf32> to vector<4x8xf32>
    %45 = vector.shape_cast %44 : vector<4x8xf32> to vector<4x8x1xf32>
    %46 = vector.broadcast %45 : vector<4x8x1xf32> to vector<4x8x8xf32>
    %47 = arith.divf %43, %46 : vector<4x8x8xf32>
    "tpu.trace_start"() <{level = 10 : i32, message = "bts,bsd->btd"}> : () -> ()
    %cst_18 = arith.constant dense<0.000000e+00> : vector<4x8x8xf32>
    %48 = tpu.matmul %47, %34, %cst_18 {dimension_numbers = #tpu.dot_dimension_numbers<[2], [1], [1], [2], [0, 0, 0, 1, 1, 2], [0], [0]>} : vector<4x8x8xf32>, vector<4x8x8xf32>, vector<4x8x8xf32> -> vector<4x8x8xf32>
    "tpu.trace_stop"() : () -> ()
    %49 = vector.shape_cast %48 : vector<4x8x8xf32> to vector<32x8xf32>
    %c0_19 = arith.constant 0 : index
    %c0_20 = arith.constant 0 : index
    %50 = vector.load %arg3[%c0_19, %c0_20] : memref<32x32xf32, #tpu.memory_space<vmem>>, vector<8x32xf32>
    %cst_21 = arith.constant dense<0.000000e+00> : vector<32x32xf32>
    %51 = tpu.matmul %49, %50, %cst_21 {dimension_numbers = #tpu.dot_dimension_numbers<[1], [0], [0], [1], [0, 0, 1, 1], [], []>} : vector<32x8xf32>, vector<8x32xf32>, vector<32x32xf32> -> vector<32x32xf32>
    %52 = arith.addf %28, %51 : vector<32x32xf32>
    %53 = vector.extract_strided_slice %27 {offsets = [0, 8], sizes = [32, 8], strides = [1, 1]} : vector<32x96xf32> to vector<32x8xf32>
    %54 = vector.shape_cast %53 : vector<32x8xf32> to vector<4x8x8xf32>
    %55 = vector.extract_strided_slice %27 {offsets = [0, 40], sizes = [32, 8], strides = [1, 1]} : vector<32x96xf32> to vector<32x8xf32>
    %56 = vector.shape_cast %55 : vector<32x8xf32> to vector<4x8x8xf32>
    %57 = vector.extract_strided_slice %27 {offsets = [0, 72], sizes = [32, 8], strides = [1, 1]} : vector<32x96xf32> to vector<32x8xf32>
    %58 = vector.shape_cast %57 : vector<32x8xf32> to vector<4x8x8xf32>
    "tpu.trace_start"() <{level = 10 : i32, message = "btd,bsd->bts"}> : () -> ()
    %cst_22 = arith.constant dense<0.000000e+00> : vector<4x8x8xf32>
    %59 = tpu.matmul %54, %56, %cst_22 {dimension_numbers = #tpu.dot_dimension_numbers<[2], [2], [1], [1], [0, 0, 0, 1, 1, 1], [0], [0]>} : vector<4x8x8xf32>, vector<4x8x8xf32>, vector<4x8x8xf32> -> vector<4x8x8xf32>
    "tpu.trace_stop"() : () -> ()
    %cst_23 = arith.constant 0.353553385 : f32
    %60 = vector.broadcast %cst_23 : f32 to vector<4x8x8xf32>
    %61 = arith.mulf %59, %60 : vector<4x8x8xf32>
    %62 = vector.extract_strided_slice %61 {offsets = [0, 1, 0], sizes = [4, 1, 8], strides = [1, 1, 1]} : vector<4x8x8xf32> to vector<4x1x8xf32>
    %cst_24 = arith.constant dense<0xFF800000> : vector<4x8xf32>
    %63 = vector.multi_reduction <maximumf>, %61, %cst_24 [2] : vector<4x8x8xf32> to vector<4x8xf32>
    %64 = vector.shape_cast %63 : vector<4x8xf32> to vector<4x8x1xf32>
    %65 = vector.broadcast %64 : vector<4x8x1xf32> to vector<4x8x8xf32>
    %66 = arith.subf %61, %65 : vector<4x8x8xf32>
    %67 = math.exp %66 : vector<4x8x8xf32>
    %cst_25 = arith.constant dense<0.000000e+00> : vector<4x8xf32>
    %68 = vector.multi_reduction <add>, %67, %cst_25 [2] : vector<4x8x8xf32> to vector<4x8xf32>
    %69 = vector.shape_cast %68 : vector<4x8xf32> to vector<4x8x1xf32>
    %70 = vector.broadcast %69 : vector<4x8x1xf32> to vector<4x8x8xf32>
    %71 = arith.divf %67, %70 : vector<4x8x8xf32>
    "tpu.trace_start"() <{level = 10 : i32, message = "bts,bsd->btd"}> : () -> ()
    %cst_26 = arith.constant dense<0.000000e+00> : vector<4x8x8xf32>
    %72 = tpu.matmul %71, %58, %cst_26 {dimension_numbers = #tpu.dot_dimension_numbers<[2], [1], [1], [2], [0, 0, 0, 1, 1, 2], [0], [0]>} : vector<4x8x8xf32>, vector<4x8x8xf32>, vector<4x8x8xf32> -> vector<4x8x8xf32>
    "tpu.trace_stop"() : () -> ()
    %73 = vector.shape_cast %72 : vector<4x8x8xf32> to vector<32x8xf32>
    %c8 = arith.constant 8 : index
    %c0_27 = arith.constant 0 : index
    %74 = vector.load %arg3[%c8, %c0_27] : memref<32x32xf32, #tpu.memory_space<vmem>>, vector<8x32xf32>
    %cst_28 = arith.constant dense<0.000000e+00> : vector<32x32xf32>
    %75 = tpu.matmul %73, %74, %cst_28 {dimension_numbers = #tpu.dot_dimension_numbers<[1], [0], [0], [1], [0, 0, 1, 1], [], []>} : vector<32x8xf32>, vector<8x32xf32>, vector<32x32xf32> -> vector<32x32xf32>
    %76 = arith.addf %52, %75 : vector<32x32xf32>
    %77 = vector.extract_strided_slice %27 {offsets = [0, 16], sizes = [32, 8], strides = [1, 1]} : vector<32x96xf32> to vector<32x8xf32>
    %78 = vector.shape_cast %77 : vector<32x8xf32> to vector<4x8x8xf32>
    %79 = vector.extract_strided_slice %27 {offsets = [0, 48], sizes = [32, 8], strides = [1, 1]} : vector<32x96xf32> to vector<32x8xf32>
    %80 = vector.shape_cast %79 : vector<32x8xf32> to vector<4x8x8xf32>
    %81 = vector.extract_strided_slice %27 {offsets = [0, 80], sizes = [32, 8], strides = [1, 1]} : vector<32x96xf32> to vector<32x8xf32>
    %82 = vector.shape_cast %81 : vector<32x8xf32> to vector<4x8x8xf32>
    "tpu.trace_start"() <{level = 10 : i32, message = "btd,bsd->bts"}> : () -> ()
    %cst_29 = arith.constant dense<0.000000e+00> : vector<4x8x8xf32>
    %83 = tpu.matmul %78, %80, %cst_29 {dimension_numbers = #tpu.dot_dimension_numbers<[2], [2], [1], [1], [0, 0, 0, 1, 1, 1], [0], [0]>} : vector<4x8x8xf32>, vector<4x8x8xf32>, vector<4x8x8xf32> -> vector<4x8x8xf32>
    "tpu.trace_stop"() : () -> ()
    %cst_30 = arith.constant 0.353553385 : f32
    %84 = vector.broadcast %cst_30 : f32 to vector<4x8x8xf32>
    %85 = arith.mulf %83, %84 : vector<4x8x8xf32>
    %86 = vector.extract_strided_slice %85 {offsets = [0, 1, 0], sizes = [4, 1, 8], strides = [1, 1, 1]} : vector<4x8x8xf32> to vector<4x1x8xf32>
    %cst_31 = arith.constant dense<0xFF800000> : vector<4x8xf32>
    %87 = vector.multi_reduction <maximumf>, %85, %cst_31 [2] : vector<4x8x8xf32> to vector<4x8xf32>
    %88 = vector.shape_cast %87 : vector<4x8xf32> to vector<4x8x1xf32>
    %89 = vector.broadcast %88 : vector<4x8x1xf32> to vector<4x8x8xf32>
    %90 = arith.subf %85, %89 : vector<4x8x8xf32>
    %91 = math.exp %90 : vector<4x8x8xf32>
    %cst_32 = arith.constant dense<0.000000e+00> : vector<4x8xf32>
    %92 = vector.multi_reduction <add>, %91, %cst_32 [2] : vector<4x8x8xf32> to vector<4x8xf32>
    %93 = vector.shape_cast %92 : vector<4x8xf32> to vector<4x8x1xf32>
    %94 = vector.broadcast %93 : vector<4x8x1xf32> to vector<4x8x8xf32>
    %95 = arith.divf %91, %94 : vector<4x8x8xf32>
    "tpu.trace_start"() <{level = 10 : i32, message = "bts,bsd->btd"}> : () -> ()
    %cst_33 = arith.constant dense<0.000000e+00> : vector<4x8x8xf32>
    %96 = tpu.matmul %95, %82, %cst_33 {dimension_numbers = #tpu.dot_dimension_numbers<[2], [1], [1], [2], [0, 0, 0, 1, 1, 2], [0], [0]>} : vector<4x8x8xf32>, vector<4x8x8xf32>, vector<4x8x8xf32> -> vector<4x8x8xf32>
    "tpu.trace_stop"() : () -> ()
    %97 = vector.shape_cast %96 : vector<4x8x8xf32> to vector<32x8xf32>
    %c16 = arith.constant 16 : index
    %c0_34 = arith.constant 0 : index
    %98 = vector.load %arg3[%c16, %c0_34] : memref<32x32xf32, #tpu.memory_space<vmem>>, vector<8x32xf32>
    %cst_35 = arith.constant dense<0.000000e+00> : vector<32x32xf32>
    %99 = tpu.matmul %97, %98, %cst_35 {dimension_numbers = #tpu.dot_dimension_numbers<[1], [0], [0], [1], [0, 0, 1, 1], [], []>} : vector<32x8xf32>, vector<8x32xf32>, vector<32x32xf32> -> vector<32x32xf32>
    %100 = arith.addf %76, %99 : vector<32x32xf32>
    %101 = vector.extract_strided_slice %27 {offsets = [0, 24], sizes = [32, 8], strides = [1, 1]} : vector<32x96xf32> to vector<32x8xf32>
    %102 = vector.shape_cast %101 : vector<32x8xf32> to vector<4x8x8xf32>
    %103 = vector.extract_strided_slice %27 {offsets = [0, 56], sizes = [32, 8], strides = [1, 1]} : vector<32x96xf32> to vector<32x8xf32>
    %104 = vector.shape_cast %103 : vector<32x8xf32> to vector<4x8x8xf32>
    %105 = vector.extract_strided_slice %27 {offsets = [0, 88], sizes = [32, 8], strides = [1, 1]} : vector<32x96xf32> to vector<32x8xf32>
    %106 = vector.shape_cast %105 : vector<32x8xf32> to vector<4x8x8xf32>
    "tpu.trace_start"() <{level = 10 : i32, message = "btd,bsd->bts"}> : () -> ()
    %cst_36 = arith.constant dense<0.000000e+00> : vector<4x8x8xf32>
    %107 = tpu.matmul %102, %104, %cst_36 {dimension_numbers = #tpu.dot_dimension_numbers<[2], [2], [1], [1], [0, 0, 0, 1, 1, 1], [0], [0]>} : vector<4x8x8xf32>, vector<4x8x8xf32>, vector<4x8x8xf32> -> vector<4x8x8xf32>
    "tpu.trace_stop"() : () -> ()
    %cst_37 = arith.constant 0.353553385 : f32
    %108 = vector.broadcast %cst_37 : f32 to vector<4x8x8xf32>
    %109 = arith.mulf %107, %108 : vector<4x8x8xf32>
    %110 = vector.extract_strided_slice %109 {offsets = [0, 1, 0], sizes = [4, 1, 8], strides = [1, 1, 1]} : vector<4x8x8xf32> to vector<4x1x8xf32>
    %cst_38 = arith.constant dense<0xFF800000> : vector<4x8xf32>
    %111 = vector.multi_reduction <maximumf>, %109, %cst_38 [2] : vector<4x8x8xf32> to vector<4x8xf32>
    %112 = vector.shape_cast %111 : vector<4x8xf32> to vector<4x8x1xf32>
    %113 = vector.broadcast %112 : vector<4x8x1xf32> to vector<4x8x8xf32>
    %114 = arith.subf %109, %113 : vector<4x8x8xf32>
    %115 = math.exp %114 : vector<4x8x8xf32>
    %cst_39 = arith.constant dense<0.000000e+00> : vector<4x8xf32>
    %116 = vector.multi_reduction <add>, %115, %cst_39 [2] : vector<4x8x8xf32> to vector<4x8xf32>
    %117 = vector.shape_cast %116 : vector<4x8xf32> to vector<4x8x1xf32>
    %118 = vector.broadcast %117 : vector<4x8x1xf32> to vector<4x8x8xf32>
    %119 = arith.divf %115, %118 : vector<4x8x8xf32>
    "tpu.trace_start"() <{level = 10 : i32, message = "bts,bsd->btd"}> : () -> ()
    %cst_40 = arith.constant dense<0.000000e+00> : vector<4x8x8xf32>
    %120 = tpu.matmul %119, %106, %cst_40 {dimension_numbers = #tpu.dot_dimension_numbers<[2], [1], [1], [2], [0, 0, 0, 1, 1, 2], [0], [0]>} : vector<4x8x8xf32>, vector<4x8x8xf32>, vector<4x8x8xf32> -> vector<4x8x8xf32>
    "tpu.trace_stop"() : () -> ()
    %121 = vector.shape_cast %120 : vector<4x8x8xf32> to vector<32x8xf32>
    %c24 = arith.constant 24 : index
    %c0_41 = arith.constant 0 : index
    %122 = vector.load %arg3[%c24, %c0_41] : memref<32x32xf32, #tpu.memory_space<vmem>>, vector<8x32xf32>
    %cst_42 = arith.constant dense<0.000000e+00> : vector<32x32xf32>
    %123 = tpu.matmul %121, %122, %cst_42 {dimension_numbers = #tpu.dot_dimension_numbers<[1], [0], [0], [1], [0, 0, 1, 1], [], []>} : vector<32x8xf32>, vector<8x32xf32>, vector<32x32xf32> -> vector<32x32xf32>
    %124 = arith.addf %100, %123 : vector<32x32xf32>
    %125 = tpu.concatenate %38, %62, %86, %110 in 1 : vector<4x1x8xf32>, vector<4x1x8xf32>, vector<4x1x8xf32>, vector<4x1x8xf32> -> vector<4x4x8xf32>
    %c0_43 = arith.constant 0 : index
    %c0_44 = arith.constant 0 : index
    %c0_45 = arith.constant 0 : index
    %126 = vector.load %arg14[%c0_43, %c0_44, %c0_45] : memref<4x4x8xf32, #tpu.memory_space<vmem>>, vector<4x4x8xf32>
    tpu.vector_store %arg14[%c0_43, %c0_44, %c0_45], %125 {strides = array<i32>} : memref<4x4x8xf32, #tpu.memory_space<vmem>>, vector<4x4x8xf32>,
    %127 = arith.addf %1, %124 : vector<32x32xf32>
    %c0_46 = arith.constant 0 : index
    %c0_47 = arith.constant 0 : index
    %128 = vector.load %arg4[%c0_46, %c0_47] : memref<1x32xf32, #tpu.memory_space<vmem>>, vector<1x32xf32>
    %129 = vector.broadcast %128 : vector<1x32xf32> to vector<32x32xf32>
    %130 = arith.addf %127, %129 : vector<32x32xf32>
    %cst_48 = arith.constant dense<0.000000e+00> : vector<32xf32>
    %131 = vector.multi_reduction <add>, %130, %cst_48 [1] : vector<32x32xf32> to vector<32xf32>
    %132 = vector.shape_cast %131 : vector<32xf32> to vector<32x1xf32>
    %cst_49 = arith.constant 3.200000e+01 : f32
    %133 = vector.broadcast %cst_49 : f32 to vector<32x1xf32>
    %134 = arith.divf %132, %133 : vector<32x1xf32>
    %135 = vector.broadcast %134 : vector<32x1xf32> to vector<32x32xf32>
    %136 = arith.subf %130, %135 : vector<32x32xf32>
    %137 = arith.mulf %136, %136 : vector<32x32xf32>
    %cst_50 = arith.constant dense<0.000000e+00> : vector<32xf32>
    %138 = vector.multi_reduction <add>, %137, %cst_50 [1] : vector<32x32xf32> to vector<32xf32>
    %139 = vector.shape_cast %138 : vector<32xf32> to vector<32x1xf32>
    %cst_51 = arith.constant 3.200000e+01 : f32
    %140 = vector.broadcast %cst_51 : f32 to vector<32x1xf32>
    %141 = arith.divf %139, %140 : vector<32x1xf32>
    %142 = vector.broadcast %134 : vector<32x1xf32> to vector<32x32xf32>
    %143 = arith.subf %130, %142 : vector<32x32xf32>
    %cst_52 = arith.constant 9.99999974E-6 : f32
    %144 = vector.broadcast %cst_52 : f32 to vector<32x1xf32>
    %145 = arith.addf %141, %144 : vector<32x1xf32>
    %146 = math.rsqrt %145 : vector<32x1xf32>
    %147 = vector.broadcast %146 : vector<32x1xf32> to vector<32x32xf32>
    %148 = arith.mulf %143, %147 : vector<32x32xf32>
    %c0_53 = arith.constant 0 : index
    %c0_54 = arith.constant 0 : index
    %149 = vector.load %arg7[%c0_53, %c0_54] : memref<1x32xf32, #tpu.memory_space<vmem>>, vector<1x32xf32>
    %150 = vector.broadcast %149 : vector<1x32xf32> to vector<32x32xf32>
    %151 = arith.mulf %148, %150 : vector<32x32xf32>
    %c0_55 = arith.constant 0 : index
    %c0_56 = arith.constant 0 : index
    %152 = vector.load %arg8[%c0_55, %c0_56] : memref<1x32xf32, #tpu.memory_space<vmem>>, vector<1x32xf32>
    %153 = vector.broadcast %152 : vector<1x32xf32> to vector<32x32xf32>
    %154 = arith.addf %151, %153 : vector<32x32xf32>
    %c0_57 = arith.constant 0 : index
    %c0_58 = arith.constant 0 : index
    %155 = vector.load %arg9[%c0_57, %c0_58] : memref<32x64xf32, #tpu.memory_space<vmem>>, vector<32x64xf32>
    %cst_59 = arith.constant dense<0.000000e+00> : vector<32x64xf32>
    %156 = tpu.matmul %154, %155, %cst_59 {dimension_numbers = #tpu.dot_dimension_numbers<[1], [0], [0], [1], [0, 0, 1, 1], [], []>} : vector<32x32xf32>, vector<32x64xf32>, vector<32x64xf32> -> vector<32x64xf32>
    %c0_60 = arith.constant 0 : index
    %c0_61 = arith.constant 0 : index
    %157 = vector.load %arg10[%c0_60, %c0_61] : memref<1x64xf32, #tpu.memory_space<vmem>>, vector<1x64xf32>
    %158 = vector.broadcast %157 : vector<1x64xf32> to vector<32x64xf32>
    %159 = arith.addf %156, %158 : vector<32x64xf32>
    %cst_62 = arith.constant 0.000000e+00 : f32
    %160 = vector.broadcast %cst_62 : f32 to vector<32x64xf32>
    %161 = arith.maximumf %159, %160 : vector<32x64xf32>
    %c0_63 = arith.constant 0 : index
    %c0_64 = arith.constant 0 : index
    %162 = vector.load %arg11[%c0_63, %c0_64] : memref<64x32xf32, #tpu.memory_space<vmem>>, vector<64x32xf32>
    %cst_65 = arith.constant dense<0.000000e+00> : vector<32x32xf32>
    %163 = tpu.matmul %161, %162, %cst_65 {dimension_numbers = #tpu.dot_dimension_numbers<[1], [0], [0], [1], [0, 0, 1, 1], [], []>} : vector<32x64xf32>, vector<64x32xf32>, vector<32x32xf32> -> vector<32x32xf32>
    %c0_66 = arith.constant 0 : index
    %c0_67 = arith.constant 0 : index
    %164 = vector.load %arg12[%c0_66, %c0_67] : memref<1x32xf32, #tpu.memory_space<vmem>>, vector<1x32xf32>
    %165 = vector.broadcast %164 : vector<1x32xf32> to vector<32x32xf32>
    %166 = arith.addf %163, %165 : vector<32x32xf32>
    %167 = arith.addf %130, %166 : vector<32x32xf32>
    %168 = vector.shape_cast %167 : vector<32x32xf32> to vector<4x8x32xf32>
    %c0_68 = arith.constant 0 : index
    %c0_69 = arith.constant 0 : index
    %c0_70 = arith.constant 0 : index
    %169 = vector.load %arg13[%c0_68, %c0_69, %c0_70] : memref<4x8x32xf32, #tpu.memory_space<vmem>>, vector<4x8x32xf32>
    tpu.vector_store %arg13[%c0_68, %c0_69, %c0_70], %168 {strides = array<i32>} : memref<4x8x32xf32, #tpu.memory_space<vmem>>, vector<4x8x32xf32>,
    return
  }
  func.func @transform_0(%arg0: i32) -> (i32, i32, i32) {
    %c0_i32 = arith.constant 0 : i32
    %c0_i32_0 = arith.constant 0 : i32
    %c0_i32_1 = arith.constant 0 : i32
    return %arg0, %c0_i32, %c0_i32_0 : i32, i32, i32
  }
  func.func @transform_1(%arg0: i32) -> (i32, i32) {
    %c0_i32 = arith.constant 0 : i32
    %c0_i32_0 = arith.constant 0 : i32
    %c0_i32_1 = arith.constant 0 : i32
    return %c0_i32, %c0_i32_0 : i32, i32
  }
  func.func @transform_2(%arg0: i32) -> (i32, i32) {
    %c0_i32 = arith.constant 0 : i32
    %c0_i32_0 = arith.constant 0 : i32
    %c0_i32_1 = arith.constant 0 : i32
    return %c0_i32, %c0_i32_0 : i32, i32
  }
  func.func @transform_3(%arg0: i32) -> (i32, i32) {
    %c0_i32 = arith.constant 0 : i32
    %c0_i32_0 = arith.constant 0 : i32
    %c0_i32_1 = arith.constant 0 : i32
    return %c0_i32, %c0_i32_0 : i32, i32
  }
  func.func @transform_4(%arg0: i32) -> (i32, i32) {
    %c0_i32 = arith.constant 0 : i32
    %c0_i32_0 = arith.constant 0 : i32
    %c0_i32_1 = arith.constant 0 : i32
    return %c0_i32, %c0_i32_0 : i32, i32
  }
  func.func @transform_5(%arg0: i32) -> (i32, i32) {
    %c0_i32 = arith.constant 0 : i32
    %c0_i32_0 = arith.constant 0 : i32
    %c0_i32_1 = arith.constant 0 : i32
    return %c0_i32, %c0_i32_0 : i32, i32
  }
  func.func @transform_6(%arg0: i32) -> (i32, i32) {
    %c0_i32 = arith.constant 0 : i32
    %c0_i32_0 = arith.constant 0 : i32
    %c0_i32_1 = arith.constant 0 : i32
    return %c0_i32, %c0_i32_0 : i32, i32
  }
  func.func @transform_7(%arg0: i32) -> (i32, i32) {
    %c0_i32 = arith.constant 0 : i32
    %c0_i32_0 = arith.constant 0 : i32
    %c0_i32_1 = arith.constant 0 : i32
    return %c0_i32, %c0_i32_0 : i32, i32
  }
  func.func @transform_8(%arg0: i32) -> (i32, i32) {
    %c0_i32 = arith.constant 0 : i32
    %c0_i32_0 = arith.constant 0 : i32
    %c0_i32_1 = arith.constant 0 : i32
    return %c0_i32, %c0_i32_0 : i32, i32
  }
  func.func @transform_9(%arg0: i32) -> (i32, i32) {
    %c0_i32 = arith.constant 0 : i32
    %c0_i32_0 = arith.constant 0 : i32
    %c0_i32_1 = arith.constant 0 : i32
    return %c0_i32, %c0_i32_0 : i32, i32
  }
  func.func @transform_10(%arg0: i32) -> (i32, i32) {
    %c0_i32 = arith.constant 0 : i32
    %c0_i32_0 = arith.constant 0 : i32
    %c0_i32_1 = arith.constant 0 : i32
    return %c0_i32, %c0_i32_0 : i32, i32
  }
  func.func @transform_11(%arg0: i32) -> (i32, i32) {
    %c0_i32 = arith.constant 0 : i32
    %c0_i32_0 = arith.constant 0 : i32
    %c0_i32_1 = arith.constant 0 : i32
    return %c0_i32, %c0_i32_0 : i32, i32
  }
  func.func @transform_12(%arg0: i32) -> (i32, i32, i32) {
    %c0_i32 = arith.constant 0 : i32
    %c0_i32_0 = arith.constant 0 : i32
    %c0_i32_1 = arith.constant 0 : i32
    return %arg0, %c0_i32, %c0_i32_0 : i32, i32, i32
  }
  func.func @transform_13(%arg0: i32) -> (i32, i32, i32) {
    %c0_i32 = arith.constant 0 : i32
    %c0_i32_0 = arith.constant 0 : i32
    %c0_i32_1 = arith.constant 0 : i32
    return %arg0, %c0_i32, %c0_i32_0 : i32, i32, i32
  }
}

module attributes {stable_mosaic.version = 11 : i64} {
  func.func @_attention_block_kernel(%arg0: i32, %arg1: memref<4x8x32xf32, #tpu.memory_space<vmem>>, %arg2: memref<32x96xf32, #tpu.memory_space<vmem>>, %arg3: memref<32x32xf32, #tpu.memory_space<vmem>>, %arg4: memref<1x32xf32, #tpu.memory_space<vmem>>, %arg5: memref<1x32xf32, #tpu.memory_space<vmem>>, %arg6: memref<1x32xf32, #tpu.memory_space<vmem>>, %arg7: memref<1x32xf32, #tpu.memory_space<vmem>>, %arg8: memref<1x32xf32, #tpu.memory_space<vmem>>, %arg9: memref<32x64xf32, #tpu.memory_space<vmem>>, %arg10: memref<1x64xf32, #tpu.memory_space<vmem>>, %arg11: memref<64x32xf32, #tpu.memory_space<vmem>>, %arg12: memref<1x32xf32, #tpu.memory_space<vmem>>, %arg13: memref<4x8x32xf32, #tpu.memory_space<vmem>>, %arg14: memref<4x4x8xf32, #tpu.memory_space<vmem>>) attributes {dimension_semantics = [#tpu.dimension_semantics<parallel>], iteration_bounds = array<i64: 1>, scalar_prefetch = 0 : i64, scratch_operands = 0 : i64, tpu.core_type = #tpu.core_type<tc>, window_params = [{transform_indices = @transform_0, window_bounds = array<i64: 4, 8, 32>}, {pipeline_mode = #tpu.pipeline_mode<synchronous>, transform_indices = @transform_1, window_bounds = array<i64: 32, 96>}, {pipeline_mode = #tpu.pipeline_mode<synchronous>, transform_indices = @transform_2, window_bounds = array<i64: 32, 32>}, {pipeline_mode = #tpu.pipeline_mode<synchronous>, transform_indices = @transform_3, window_bounds = array<i64: 1, 32>}, {pipeline_mode = #tpu.pipeline_mode<synchronous>, transform_indices = @transform_4, window_bounds = array<i64: 1, 32>}, {pipeline_mode = #tpu.pipeline_mode<synchronous>, transform_indices = @transform_5, window_bounds = array<i64: 1, 32>}, {pipeline_mode = #tpu.pipeline_mode<synchronous>, transform_indices = @transform_6, window_bounds = array<i64: 1, 32>}, {pipeline_mode = #tpu.pipeline_mode<synchronous>, transform_indices = @transform_7, window_bounds = array<i64: 1, 32>}, {pipeline_mode = #tpu.pipeline_mode<synchronous>, transform_indices = @transform_8, window_bounds = array<i64: 32, 64>}, {pipeline_mode = #tpu.pipeline_mode<synchronous>, transform_indices = @transform_9, window_bounds = array<i64: 1, 64>}, {pipeline_mode = #tpu.pipeline_mode<synchronous>, transform_indices = @transform_10, window_bounds = array<i64: 64, 32>}, {pipeline_mode = #tpu.pipeline_mode<synchronous>, transform_indices = @transform_11, window_bounds = array<i64: 1, 32>}, {transform_indices = @transform_12, window_bounds = array<i64: 4, 8, 32>}, {transform_indices = @transform_13, window_bounds = array<i64: 4, 4, 8>}]} {
    %c0 = arith.constant 0 : index
    %c0_0 = arith.constant 0 : index
    %c0_1 = arith.constant 0 : index
    %0 = vector.load %arg1[%c0, %c0_0, %c0_1] : memref<4x8x32xf32, #tpu.memory_space<vmem>>, vector<4x8x32xf32>
    %1 = vector.shape_cast %0 : vector<4x8x32xf32> to vector<32x32xf32>
    %cst = arith.constant dense<0.000000e+00> : vector<32xf32>
    %2 = vector.multi_reduction <add>, %1, %cst [1] : vector<32x32xf32> to vector<32xf32>
    %3 = vector.shape_cast %2 : vector<32xf32> to vector<32x1xf32>
    %cst_2 = arith.constant 3.200000e+01 : f32
    %4 = vector.broadcast %cst_2 : f32 to vector<32x1xf32>
    %5 = arith.divf %3, %4 : vector<32x1xf32>
    %6 = vector.broadcast %5 : vector<32x1xf32> to vector<32x32xf32>
    %7 = arith.subf %1, %6 : vector<32x32xf32>
    %8 = arith.mulf %7, %7 : vector<32x32xf32>
    %cst_3 = arith.constant dense<0.000000e+00> : vector<32xf32>
    %9 = vector.multi_reduction <add>, %8, %cst_3 [1] : vector<32x32xf32> to vector<32xf32>
    %10 = vector.shape_cast %9 : vector<32xf32> to vector<32x1xf32>
    %cst_4 = arith.constant 3.200000e+01 : f32
    %11 = vector.broadcast %cst_4 : f32 to vector<32x1xf32>
    %12 = arith.divf %10, %11 : vector<32x1xf32>
    %13 = vector.broadcast %5 : vector<32x1xf32> to vector<32x32xf32>
    %14 = arith.subf %1, %13 : vector<32x32xf32>
    %cst_5 = arith.constant 9.99999974E-6 : f32
    %15 = vector.broadcast %cst_5 : f32 to vector<32x1xf32>
    %16 = arith.addf %12, %15 : vector<32x1xf32>
    %17 = math.rsqrt %16 : vector<32x1xf32>
    %18 = vector.broadcast %17 : vector<32x1xf32> to vector<32x32xf32>
    %19 = arith.mulf %14, %18 : vector<32x32xf32>
    %c0_6 = arith.constant 0 : index
    %c0_7 = arith.constant 0 : index
    %20 = vector.load %arg5[%c0_6, %c0_7] : memref<1x32xf32, #tpu.memory_space<vmem>>, vector<1x32xf32>
    %21 = vector.broadcast %20 : vector<1x32xf32> to vector<32x32xf32>
    %22 = arith.mulf %19, %21 : vector<32x32xf32>
    %c0_8 = arith.constant 0 : index
    %c0_9 = arith.constant 0 : index
    %23 = vector.load %arg6[%c0_8, %c0_9] : memref<1x32xf32, #tpu.memory_space<vmem>>, vector<1x32xf32>
    %24 = vector.broadcast %23 : vector<1x32xf32> to vector<32x32xf32>
    %25 = arith.addf %22, %24 : vector<32x32xf32>
    %c0_10 = arith.constant 0 : index
    %c0_11 = arith.constant 0 : index
    %26 = vector.load %arg2[%c0_10, %c0_11] : memref<32x96xf32, #tpu.memory_space<vmem>>, vector<32x96xf32>
    %cst_12 = arith.constant dense<0.000000e+00> : vector<32x96xf32>
    %27 = tpu.matmul %25, %26, %cst_12 {dimension_numbers = #tpu.dot_dimension_numbers<[1], [0], [0], [1], [0, 0, 1, 1], [], []>} : vector<32x32xf32>, vector<32x96xf32>, vector<32x96xf32> -> vector<32x96xf32>
    %cst_13 = arith.constant 0.000000e+00 : f32
    %28 = vector.broadcast %cst_13 : f32 to vector<32x32xf32>
    %29 = vector.extract_strided_slice %27 {offsets = [0, 0], sizes = [32, 8], strides = [1, 1]} : vector<32x96xf32> to vector<32x8xf32>
    %30 = vector.shape_cast %29 : vector<32x8xf32> to vector<4x8x8xf32>
    %31 = vector.extract_strided_slice %27 {offsets = [0, 32], sizes = [32, 8], strides = [1, 1]} : vector<32x96xf32> to vector<32x8xf32>
    %32 = vector.shape_cast %31 : vector<32x8xf32> to vector<4x8x8xf32>
    %33 = vector.extract_strided_slice %27 {offsets = [0, 64], sizes = [32, 8], strides = [1, 1]} : vector<32x96xf32> to vector<32x8xf32>
    %34 = vector.shape_cast %33 : vector<32x8xf32> to vector<4x8x8xf32>
    "tpu.trace_start"() <{level = 10 : i32, message = "btd,bsd->bts"}> : () -> ()
    %cst_14 = arith.constant dense<0.000000e+00> : vector<4x8x8xf32>
    %35 = tpu.matmul %30, %32, %cst_14 {dimension_numbers = #tpu.dot_dimension_numbers<[2], [2], [1], [1], [0, 0, 0, 1, 1, 1], [0], [0]>} : vector<4x8x8xf32>, vector<4x8x8xf32>, vector<4x8x8xf32> -> vector<4x8x8xf32>
    "tpu.trace_stop"() : () -> ()
    %cst_15 = arith.constant 0.353553385 : f32
    %36 = vector.broadcast %cst_15 : f32 to vector<4x8x8xf32>
    %37 = arith.mulf %35, %36 : vector<4x8x8xf32>
    %38 = vector.extract_strided_slice %37 {offsets = [0, 1, 0], sizes = [4, 1, 8], strides = [1, 1, 1]} : vector<4x8x8xf32> to vector<4x1x8xf32>
    %cst_16 = arith.constant dense<0xFF800000> : vector<4x8xf32>
    %39 = vector.multi_reduction <maximumf>, %37, %cst_16 [2] : vector<4x8x8xf32> to vector<4x8xf32>
    %40 = vector.shape_cast %39 : vector<4x8xf32> to vector<4x8x1xf32>
    %41 = vector.broadcast %40 : vector<4x8x1xf32> to vector<4x8x8xf32>
    %42 = arith.subf %37, %41 : vector<4x8x8xf32>
    %43 = math.exp %42 : vector<4x8x8xf32>
    %cst_17 = arith.constant dense<0.000000e+00> : vector<4x8xf32>
    %44 = vector.multi_reduction <add>, %43, %cst_17 [2] : vector<4x8x8xf32> to vector<4x8xf32>
    %45 = vector.shape_cast %44 : vector<4x8xf32> to vector<4x8x1xf32>
    %46 = vector.broadcast %45 : vector<4x8x1xf32> to vector<4x8x8xf32>
    %47 = arith.divf %43, %46 : vector<4x8x8xf32>
    "tpu.trace_start"() <{level = 10 : i32, message = "bts,bsd->btd"}> : () -> ()
    %cst_18 = arith.constant dense<0.000000e+00> : vector<4x8x8xf32>
    %48 = tpu.matmul %47, %34, %cst_18 {dimension_numbers = #tpu.dot_dimension_numbers<[2], [1], [1], [2], [0, 0, 0, 1, 1, 2], [0], [0]>} : vector<4x8x8xf32>, vector<4x8x8xf32>, vector<4x8x8xf32> -> vector<4x8x8xf32>
    "tpu.trace_stop"() : () -> ()
    %49 = vector.shape_cast %48 : vector<4x8x8xf32> to vector<32x8xf32>
    %c0_19 = arith.constant 0 : index
    %c0_20 = arith.constant 0 : index
    %50 = vector.load %arg3[%c0_19, %c0_20] : memref<32x32xf32, #tpu.memory_space<vmem>>, vector<8x32xf32>
    %cst_21 = arith.constant dense<0.000000e+00> : vector<32x32xf32>
    %51 = tpu.matmul %49, %50, %cst_21 {dimension_numbers = #tpu.dot_dimension_numbers<[1], [0], [0], [1], [0, 0, 1, 1], [], []>} : vector<32x8xf32>, vector<8x32xf32>, vector<32x32xf32> -> vector<32x32xf32>
    %52 = arith.addf %28, %51 : vector<32x32xf32>
    %53 = vector.extract_strided_slice %27 {offsets = [0, 8], sizes = [32, 8], strides = [1, 1]} : vector<32x96xf32> to vector<32x8xf32>
    %54 = vector.shape_cast %53 : vector<32x8xf32> to vector<4x8x8xf32>
    %55 = vector.extract_strided_slice %27 {offsets = [0, 40], sizes = [32, 8], strides = [1, 1]} : vector<32x96xf32> to vector<32x8xf32>
    %56 = vector.shape_cast %55 : vector<32x8xf32> to vector<4x8x8xf32>
    %57 = vector.extract_strided_slice %27 {offsets = [0, 72], sizes = [32, 8], strides = [1, 1]} : vector<32x96xf32> to vector<32x8xf32>
    %58 = vector.shape_cast %57 : vector<32x8xf32> to vector<4x8x8xf32>
    "tpu.trace_start"() <{level = 10 : i32, message = "btd,bsd->bts"}> : () -> ()
    %cst_22 = arith.constant dense<0.000000e+00> : vector<4x8x8xf32>
    %59 = tpu.matmul %54, %56, %cst_22 {dimension_numbers = #tpu.dot_dimension_numbers<[2], [2], [1], [1], [0, 0, 0, 1, 1, 1], [0], [0]>} : vector<4x8x8xf32>, vector<4x8x8xf32>, vector<4x8x8xf32> -> vector<4x8x8xf32>
    "tpu.trace_stop"() : () -> ()
    %cst_23 = arith.constant 0.353553385 : f32
    %60 = vector.broadcast %cst_23 : f32 to vector<4x8x8xf32>
    %61 = arith.mulf %59, %60 : vector<4x8x8xf32>
    %62 = vector.extract_strided_slice %61 {offsets = [0, 1, 0], sizes = [4, 1, 8], strides = [1, 1, 1]} : vector<4x8x8xf32> to vector<4x1x8xf32>
    %cst_24 = arith.constant dense<0xFF800000> : vector<4x8xf32>
    %63 = vector.multi_reduction <maximumf>, %61, %cst_24 [2] : vector<4x8x8xf32> to vector<4x8xf32>
    %64 = vector.shape_cast %63 : vector<4x8xf32> to vector<4x8x1xf32>
    %65 = vector.broadcast %64 : vector<4x8x1xf32> to vector<4x8x8xf32>
    %66 = arith.subf %61, %65 : vector<4x8x8xf32>
    %67 = math.exp %66 : vector<4x8x8xf32>
    %cst_25 = arith.constant dense<0.000000e+00> : vector<4x8xf32>
    %68 = vector.multi_reduction <add>, %67, %cst_25 [2] : vector<4x8x8xf32> to vector<4x8xf32>
    %69 = vector.shape_cast %68 : vector<4x8xf32> to vector<4x8x1xf32>
    %70 = vector.broadcast %69 : vector<4x8x1xf32> to vector<4x8x8xf32>
    %71 = arith.divf %67, %70 : vector<4x8x8xf32>
    "tpu.trace_start"() <{level = 10 : i32, message = "bts,bsd->btd"}> : () -> ()
    %cst_26 = arith.constant dense<0.000000e+00> : vector<4x8x8xf32>
    %72 = tpu.matmul %71, %58, %cst_26 {dimension_numbers = #tpu.dot_dimension_numbers<[2], [1], [1], [2], [0, 0, 0, 1, 1, 2], [0], [0]>} : vector<4x8x8xf32>, vector<4x8x8xf32>, vector<4x8x8xf32> -> vector<4x8x8xf32>
    "tpu.trace_stop"() : () -> ()
    %73 = vector.shape_cast %72 : vector<4x8x8xf32> to vector<32x8xf32>
    %c8 = arith.constant 8 : index
    %c0_27 = arith.constant 0 : index
    %74 = vector.load %arg3[%c8, %c0_27] : memref<32x32xf32, #tpu.memory_space<vmem>>, vector<8x32xf32>
    %cst_28 = arith.constant dense<0.000000e+00> : vector<32x32xf32>
    %75 = tpu.matmul %73, %74, %cst_28 {dimension_numbers = #tpu.dot_dimension_numbers<[1], [0], [0], [1], [0, 0, 1, 1], [], []>} : vector<32x8xf32>, vector<8x32xf32>, vector<32x32xf32> -> vector<32x32xf32>
    %76 = arith.addf %52, %75 : vector<32x32xf32>
    %77 = vector.extract_strided_slice %27 {offsets = [0, 16], sizes = [32, 8], strides = [1, 1]} : vector<32x96xf32> to vector<32x8xf32>
    %78 = vector.shape_cast %77 : vector<32x8xf32> to vector<4x8x8xf32>
    %79 = vector.extract_strided_slice %27 {offsets = [0, 48], sizes = [32, 8], strides = [1, 1]} : vector<32x96xf32> to vector<32x8xf32>
    %80 = vector.shape_cast %79 : vector<32x8xf32> to vector<4x8x8xf32>
    %81 = vector.extract_strided_slice %27 {offsets = [0, 80], sizes = [32, 8], strides = [1, 1]} : vector<32x96xf32> to vector<32x8xf32>
    %82 = vector.shape_cast %81 : vector<32x8xf32> to vector<4x8x8xf32>
    "tpu.trace_start"() <{level = 10 : i32, message = "btd,bsd->bts"}> : () -> ()
    %cst_29 = arith.constant dense<0.000000e+00> : vector<4x8x8xf32>
    %83 = tpu.matmul %78, %80, %cst_29 {dimension_numbers = #tpu.dot_dimension_numbers<[2], [2], [1], [1], [0, 0, 0, 1, 1, 1], [0], [0]>} : vector<4x8x8xf32>, vector<4x8x8xf32>, vector<4x8x8xf32> -> vector<4x8x8xf32>
    "tpu.trace_stop"() : () -> ()
    %cst_30 = arith.constant 0.353553385 : f32
    %84 = vector.broadcast %cst_30 : f32 to vector<4x8x8xf32>
    %85 = arith.mulf %83, %84 : vector<4x8x8xf32>
    %86 = vector.extract_strided_slice %85 {offsets = [0, 1, 0], sizes = [4, 1, 8], strides = [1, 1, 1]} : vector<4x8x8xf32> to vector<4x1x8xf32>
    %cst_31 = arith.constant dense<0xFF800000> : vector<4x8xf32>
    %87 = vector.multi_reduction <maximumf>, %85, %cst_31 [2] : vector<4x8x8xf32> to vector<4x8xf32>
    %88 = vector.shape_cast %87 : vector<4x8xf32> to vector<4x8x1xf32>
    %89 = vector.broadcast %88 : vector<4x8x1xf32> to vector<4x8x8xf32>
    %90 = arith.subf %85, %89 : vector<4x8x8xf32>
    %91 = math.exp %90 : vector<4x8x8xf32>
    %cst_32 = arith.constant dense<0.000000e+00> : vector<4x8xf32>
    %92 = vector.multi_reduction <add>, %91, %cst_32 [2] : vector<4x8x8xf32> to vector<4x8xf32>
    %93 = vector.shape_cast %92 : vector<4x8xf32> to vector<4x8x1xf32>
    %94 = vector.broadcast %93 : vector<4x8x1xf32> to vector<4x8x8xf32>
    %95 = arith.divf %91, %94 : vector<4x8x8xf32>
    "tpu.trace_start"() <{level = 10 : i32, message = "bts,bsd->btd"}> : () -> ()
    %cst_33 = arith.constant dense<0.000000e+00> : vector<4x8x8xf32>
    %96 = tpu.matmul %95, %82, %cst_33 {dimension_numbers = #tpu.dot_dimension_numbers<[2], [1], [1], [2], [0, 0, 0, 1, 1, 2], [0], [0]>} : vector<4x8x8xf32>, vector<4x8x8xf32>, vector<4x8x8xf32> -> vector<4x8x8xf32>
    "tpu.trace_stop"() : () -> ()
    %97 = vector.shape_cast %96 : vector<4x8x8xf32> to vector<32x8xf32>
    %c16 = arith.constant 16 : index
    %c0_34 = arith.constant 0 : index
    %98 = vector.load %arg3[%c16, %c0_34] : memref<32x32xf32, #tpu.memory_space<vmem>>, vector<8x32xf32>
    %cst_35 = arith.constant dense<0.000000e+00> : vector<32x32xf32>
    %99 = tpu.matmul %97, %98, %cst_35 {dimension_numbers = #tpu.dot_dimension_numbers<[1], [0], [0], [1], [0, 0, 1, 1], [], []>} : vector<32x8xf32>, vector<8x32xf32>, vector<32x32xf32> -> vector<32x32xf32>
    %100 = arith.addf %76, %99 : vector<32x32xf32>
    %101 = vector.extract_strided_slice %27 {offsets = [0, 24], sizes = [32, 8], strides = [1, 1]} : vector<32x96xf32> to vector<32x8xf32>
    %102 = vector.shape_cast %101 : vector<32x8xf32> to vector<4x8x8xf32>
    %103 = vector.extract_strided_slice %27 {offsets = [0, 56], sizes = [32, 8], strides = [1, 1]} : vector<32x96xf32> to vector<32x8xf32>
    %104 = vector.shape_cast %103 : vector<32x8xf32> to vector<4x8x8xf32>
    %105 = vector.extract_strided_slice %27 {offsets = [0, 88], sizes = [32, 8], strides = [1, 1]} : vector<32x96xf32> to vector<32x8xf32>
    %106 = vector.shape_cast %105 : vector<32x8xf32> to vector<4x8x8xf32>
    "tpu.trace_start"() <{level = 10 : i32, message = "btd,bsd->bts"}> : () -> ()
    %cst_36 = arith.constant dense<0.000000e+00> : vector<4x8x8xf32>
    %107 = tpu.matmul %102, %104, %cst_36 {dimension_numbers = #tpu.dot_dimension_numbers<[2], [2], [1], [1], [0, 0, 0, 1, 1, 1], [0], [0]>} : vector<4x8x8xf32>, vector<4x8x8xf32>, vector<4x8x8xf32> -> vector<4x8x8xf32>
    "tpu.trace_stop"() : () -> ()
    %cst_37 = arith.constant 0.353553385 : f32
    %108 = vector.broadcast %cst_37 : f32 to vector<4x8x8xf32>
    %109 = arith.mulf %107, %108 : vector<4x8x8xf32>
    %110 = vector.extract_strided_slice %109 {offsets = [0, 1, 0], sizes = [4, 1, 8], strides = [1, 1, 1]} : vector<4x8x8xf32> to vector<4x1x8xf32>
    %cst_38 = arith.constant dense<0xFF800000> : vector<4x8xf32>
    %111 = vector.multi_reduction <maximumf>, %109, %cst_38 [2] : vector<4x8x8xf32> to vector<4x8xf32>
    %112 = vector.shape_cast %111 : vector<4x8xf32> to vector<4x8x1xf32>
    %113 = vector.broadcast %112 : vector<4x8x1xf32> to vector<4x8x8xf32>
    %114 = arith.subf %109, %113 : vector<4x8x8xf32>
    %115 = math.exp %114 : vector<4x8x8xf32>
    %cst_39 = arith.constant dense<0.000000e+00> : vector<4x8xf32>
    %116 = vector.multi_reduction <add>, %115, %cst_39 [2] : vector<4x8x8xf32> to vector<4x8xf32>
    %117 = vector.shape_cast %116 : vector<4x8xf32> to vector<4x8x1xf32>
    %118 = vector.broadcast %117 : vector<4x8x1xf32> to vector<4x8x8xf32>
    %119 = arith.divf %115, %118 : vector<4x8x8xf32>
    "tpu.trace_start"() <{level = 10 : i32, message = "bts,bsd->btd"}> : () -> ()
    %cst_40 = arith.constant dense<0.000000e+00> : vector<4x8x8xf32>
    %120 = tpu.matmul %119, %106, %cst_40 {dimension_numbers = #tpu.dot_dimension_numbers<[2], [1], [1], [2], [0, 0, 0, 1, 1, 2], [0], [0]>} : vector<4x8x8xf32>, vector<4x8x8xf32>, vector<4x8x8xf32> -> vector<4x8x8xf32>
    "tpu.trace_stop"() : () -> ()
    %121 = vector.shape_cast %120 : vector<4x8x8xf32> to vector<32x8xf32>
    %c24 = arith.constant 24 : index
    %c0_41 = arith.constant 0 : index
    %122 = vector.load %arg3[%c24, %c0_41] : memref<32x32xf32, #tpu.memory_space<vmem>>, vector<8x32xf32>
    %cst_42 = arith.constant dense<0.000000e+00> : vector<32x32xf32>
    %123 = tpu.matmul %121, %122, %cst_42 {dimension_numbers = #tpu.dot_dimension_numbers<[1], [0], [0], [1], [0, 0, 1, 1], [], []>} : vector<32x8xf32>, vector<8x32xf32>, vector<32x32xf32> -> vector<32x32xf32>
    %124 = arith.addf %100, %123 : vector<32x32xf32>
    %125 = tpu.concatenate %38, %62, %86, %110 in 1 : vector<4x1x8xf32>, vector<4x1x8xf32>, vector<4x1x8xf32>, vector<4x1x8xf32> -> vector<4x4x8xf32>
    %c0_43 = arith.constant 0 : index
    %c0_44 = arith.constant 0 : index
    %c0_45 = arith.constant 0 : index
    %126 = vector.load %arg14[%c0_43, %c0_44, %c0_45] : memref<4x4x8xf32, #tpu.memory_space<vmem>>, vector<4x4x8xf32>
    tpu.vector_store %arg14[%c0_43, %c0_44, %c0_45], %125 {strides = array<i32>} : memref<4x4x8xf32, #tpu.memory_space<vmem>>, vector<4x4x8xf32>,
    %127 = arith.addf %1, %124 : vector<32x32xf32>
    %c0_46 = arith.constant 0 : index
    %c0_47 = arith.constant 0 : index
    %128 = vector.load %arg4[%c0_46, %c0_47] : memref<1x32xf32, #tpu.memory_space<vmem>>, vector<1x32xf32>
    %129 = vector.broadcast %128 : vector<1x32xf32> to vector<32x32xf32>
    %130 = arith.addf %127, %129 : vector<32x32xf32>
    %cst_48 = arith.constant dense<0.000000e+00> : vector<32xf32>
    %131 = vector.multi_reduction <add>, %130, %cst_48 [1] : vector<32x32xf32> to vector<32xf32>
    %132 = vector.shape_cast %131 : vector<32xf32> to vector<32x1xf32>
    %cst_49 = arith.constant 3.200000e+01 : f32
    %133 = vector.broadcast %cst_49 : f32 to vector<32x1xf32>
    %134 = arith.divf %132, %133 : vector<32x1xf32>
    %135 = vector.broadcast %134 : vector<32x1xf32> to vector<32x32xf32>
    %136 = arith.subf %130, %135 : vector<32x32xf32>
    %137 = arith.mulf %136, %136 : vector<32x32xf32>
    %cst_50 = arith.constant dense<0.000000e+00> : vector<32xf32>
    %138 = vector.multi_reduction <add>, %137, %cst_50 [1] : vector<32x32xf32> to vector<32xf32>
    %139 = vector.shape_cast %138 : vector<32xf32> to vector<32x1xf32>
    %cst_51 = arith.constant 3.200000e+01 : f32
    %140 = vector.broadcast %cst_51 : f32 to vector<32x1xf32>
    %141 = arith.divf %139, %140 : vector<32x1xf32>
    %142 = vector.broadcast %134 : vector<32x1xf32> to vector<32x32xf32>
    %143 = arith.subf %130, %142 : vector<32x32xf32>
    %cst_52 = arith.constant 9.99999974E-6 : f32
    %144 = vector.broadcast %cst_52 : f32 to vector<32x1xf32>
    %145 = arith.addf %141, %144 : vector<32x1xf32>
    %146 = math.rsqrt %145 : vector<32x1xf32>
    %147 = vector.broadcast %146 : vector<32x1xf32> to vector<32x32xf32>
    %148 = arith.mulf %143, %147 : vector<32x32xf32>
    %c0_53 = arith.constant 0 : index
    %c0_54 = arith.constant 0 : index
    %149 = vector.load %arg7[%c0_53, %c0_54] : memref<1x32xf32, #tpu.memory_space<vmem>>, vector<1x32xf32>
    %150 = vector.broadcast %149 : vector<1x32xf32> to vector<32x32xf32>
    %151 = arith.mulf %148, %150 : vector<32x32xf32>
    %c0_55 = arith.constant 0 : index
    %c0_56 = arith.constant 0 : index
    %152 = vector.load %arg8[%c0_55, %c0_56] : memref<1x32xf32, #tpu.memory_space<vmem>>, vector<1x32xf32>
    %153 = vector.broadcast %152 : vector<1x32xf32> to vector<32x32xf32>
    %154 = arith.addf %151, %153 : vector<32x32xf32>
    %c0_57 = arith.constant 0 : index
    %c0_58 = arith.constant 0 : index
    %155 = vector.load %arg9[%c0_57, %c0_58] : memref<32x64xf32, #tpu.memory_space<vmem>>, vector<32x64xf32>
    %cst_59 = arith.constant dense<0.000000e+00> : vector<32x64xf32>
    %156 = tpu.matmul %154, %155, %cst_59 {dimension_numbers = #tpu.dot_dimension_numbers<[1], [0], [0], [1], [0, 0, 1, 1], [], []>} : vector<32x32xf32>, vector<32x64xf32>, vector<32x64xf32> -> vector<32x64xf32>
    %c0_60 = arith.constant 0 : index
    %c0_61 = arith.constant 0 : index
    %157 = vector.load %arg10[%c0_60, %c0_61] : memref<1x64xf32, #tpu.memory_space<vmem>>, vector<1x64xf32>
    %158 = vector.broadcast %157 : vector<1x64xf32> to vector<32x64xf32>
    %159 = arith.addf %156, %158 : vector<32x64xf32>
    %cst_62 = arith.constant 0.000000e+00 : f32
    %160 = vector.broadcast %cst_62 : f32 to vector<32x64xf32>
    %161 = arith.maximumf %159, %160 : vector<32x64xf32>
    %c0_63 = arith.constant 0 : index
    %c0_64 = arith.constant 0 : index
    %162 = vector.load %arg11[%c0_63, %c0_64] : memref<64x32xf32, #tpu.memory_space<vmem>>, vector<64x32xf32>
    %cst_65 = arith.constant dense<0.000000e+00> : vector<32x32xf32>
    %163 = tpu.matmul %161, %162, %cst_65 {dimension_numbers = #tpu.dot_dimension_numbers<[1], [0], [0], [1], [0, 0, 1, 1], [], []>} : vector<32x64xf32>, vector<64x32xf32>, vector<32x32xf32> -> vector<32x32xf32>
    %c0_66 = arith.constant 0 : index
    %c0_67 = arith.constant 0 : index
    %164 = vector.load %arg12[%c0_66, %c0_67] : memref<1x32xf32, #tpu.memory_space<vmem>>, vector<1x32xf32>
    %165 = vector.broadcast %164 : vector<1x32xf32> to vector<32x32xf32>
    %166 = arith.addf %163, %165 : vector<32x32xf32>
    %167 = arith.addf %130, %166 : vector<32x32xf32>
    %168 = vector.shape_cast %167 : vector<32x32xf32> to vector<4x8x32xf32>
    %c0_68 = arith.constant 0 : index
    %c0_69 = arith.constant 0 : index
    %c0_70 = arith.constant 0 : index
    %169 = vector.load %arg13[%c0_68, %c0_69, %c0_70] : memref<4x8x32xf32, #tpu.memory_space<vmem>>, vector<4x8x32xf32>
    tpu.vector_store %arg13[%c0_68, %c0_69, %c0_70], %168 {strides = array<i32>} : memref<4x8x32xf32, #tpu.memory_space<vmem>>, vector<4x8x32xf32>,
    return
  }
  func.func @transform_0(%arg0: i32) -> (i32, i32, i32) {
    %c0_i32 = arith.constant 0 : i32
    %c0_i32_0 = arith.constant 0 : i32
    %c0_i32_1 = arith.constant 0 : i32
    return %arg0, %c0_i32, %c0_i32_0 : i32, i32, i32
  }
  func.func @transform_1(%arg0: i32) -> (i32, i32) {
    %c0_i32 = arith.constant 0 : i32
    %c0_i32_0 = arith.constant 0 : i32
    %c0_i32_1 = arith.constant 0 : i32
    return %c0_i32, %c0_i32_0 : i32, i32
  }
  func.func @transform_2(%arg0: i32) -> (i32, i32) {
    %c0_i32 = arith.constant 0 : i32
    %c0_i32_0 = arith.constant 0 : i32
    %c0_i32_1 = arith.constant 0 : i32
    return %c0_i32, %c0_i32_0 : i32, i32
  }
  func.func @transform_3(%arg0: i32) -> (i32, i32) {
    %c0_i32 = arith.constant 0 : i32
    %c0_i32_0 = arith.constant 0 : i32
    %c0_i32_1 = arith.constant 0 : i32
    return %c0_i32, %c0_i32_0 : i32, i32
  }
  func.func @transform_4(%arg0: i32) -> (i32, i32) {
    %c0_i32 = arith.constant 0 : i32
    %c0_i32_0 = arith.constant 0 : i32
    %c0_i32_1 = arith.constant 0 : i32
    return %c0_i32, %c0_i32_0 : i32, i32
  }
  func.func @transform_5(%arg0: i32) -> (i32, i32) {
    %c0_i32 = arith.constant 0 : i32
    %c0_i32_0 = arith.constant 0 : i32
    %c0_i32_1 = arith.constant 0 : i32
    return %c0_i32, %c0_i32_0 : i32, i32
  }
  func.func @transform_6(%arg0: i32) -> (i32, i32) {
    %c0_i32 = arith.constant 0 : i32
    %c0_i32_0 = arith.constant 0 : i32
    %c0_i32_1 = arith.constant 0 : i32
    return %c0_i32, %c0_i32_0 : i32, i32
  }
  func.func @transform_7(%arg0: i32) -> (i32, i32) {
    %c0_i32 = arith.constant 0 : i32
    %c0_i32_0 = arith.constant 0 : i32
    %c0_i32_1 = arith.constant 0 : i32
    return %c0_i32, %c0_i32_0 : i32, i32
  }
  func.func @transform_8(%arg0: i32) -> (i32, i32) {
    %c0_i32 = arith.constant 0 : i32
    %c0_i32_0 = arith.constant 0 : i32
    %c0_i32_1 = arith.constant 0 : i32
    return %c0_i32, %c0_i32_0 : i32, i32
  }
  func.func @transform_9(%arg0: i32) -> (i32, i32) {
    %c0_i32 = arith.constant 0 : i32
    %c0_i32_0 = arith.constant 0 : i32
    %c0_i32_1 = arith.constant 0 : i32
    return %c0_i32, %c0_i32_0 : i32, i32
  }
  func.func @transform_10(%arg0: i32) -> (i32, i32) {
    %c0_i32 = arith.constant 0 : i32
    %c0_i32_0 = arith.constant 0 : i32
    %c0_i32_1 = arith.constant 0 : i32
    return %c0_i32, %c0_i32_0 : i32, i32
  }
  func.func @transform_11(%arg0: i32) -> (i32, i32) {
    %c0_i32 = arith.constant 0 : i32
    %c0_i32_0 = arith.constant 0 : i32
    %c0_i32_1 = arith.constant 0 : i32
    return %c0_i32, %c0_i32_0 : i32, i32
  }
  func.func @transform_12(%arg0: i32) -> (i32, i32, i32) {
    %c0_i32 = arith.constant 0 : i32
    %c0_i32_0 = arith.constant 0 : i32
    %c0_i32_1 = arith.constant 0 : i32
    return %arg0, %c0_i32, %c0_i32_0 : i32, i32, i32
  }
  func.func @transform_13(%arg0: i32) -> (i32, i32, i32) {
    %c0_i32 = arith.constant 0 : i32
    %c0_i32_0 = arith.constant 0 : i32
    %c0_i32_1 = arith.constant 0 : i32
    return %arg0, %c0_i32, %c0_i32_0 : i32, i32, i32
  }
}

</mosaic_0001>

<llo_original>
// kernel: _attention_block_call.1
$region0: #{_attention_block_call.1}
  #allocation0 [shape = 'u32[]', space=smem, size = 0x4, offset = 0x4, fixed_abs, tag = 'smem constant byte address 0x4 - core index']
  #allocation1 [shape = 'u32[144,128]{1,0:T(1,128)}', space=vmem, size = 0x12000, scoped, tag = 'internal scratch']
  %s0 = inlined_call_operand.vmem [shape: f32[4,8,32], index: 0, kind: input, shape index: {}]
  %s1 = inlined_call_operand.vmem [shape: f32[32,96], index: 1, kind: input, shape index: {}]
  %s2 = inlined_call_operand.vmem [shape: f32[32,32], index: 2, kind: input, shape index: {}]
  %s3 = inlined_call_operand.vmem [shape: f32[1,32], index: 3, kind: input, shape index: {}]
  %s4 = inlined_call_operand.vmem [shape: f32[1,32], index: 4, kind: input, shape index: {}]
  %s5 = inlined_call_operand.hbm [shape: f32[1,32], index: 5, kind: input, shape index: {}]
  %s6 = inlined_call_operand.hbm [shape: f32[1,32], index: 6, kind: input, shape index: {}]
  %s7 = inlined_call_operand.hbm [shape: f32[1,32], index: 7, kind: input, shape index: {}]
  %s8 = inlined_call_operand.hbm [shape: f32[32,64], index: 8, kind: input, shape index: {}]
  %s9 = inlined_call_operand.hbm [shape: f32[1,64], index: 9, kind: input, shape index: {}]
  %s10 = inlined_call_operand.vmem [shape: f32[64,32], index: 10, kind: input, shape index: {}]
  %s11 = inlined_call_operand.hbm [shape: f32[1,32], index: 11, kind: input, shape index: {}]
  %s12 = inlined_call_operand.hbm [shape: f32[4,8,32], index: 12, kind: output, shape index: {0}]
  %s13 = inlined_call_operand.hbm [shape: f32[4,4,8], index: 13, kind: output, shape index: {1}]
  %14 = xla_tuple %s12, %s13
  %s15 = sld [smem:[#allocation0]]
  $region90: #{_attention_block_call.1} parent=0
    _
  %s17 = ssub.s32 1, %s15
  %s18 = scalar_select 0, %s17, %s15
  $region1: #{_attention_block_call.1} parent=0
    #allocation2 [shape = 'u8[512]{0}', space=vmem, size = 0x400, scoped, tag = 'input window, operand 5, single buffered']
    #allocation3 [shape = 's32[1]{0}', space=sflag, size = 0x4, scoped, tag = 'scoped memory for _attention_block_call.1']
    #allocation4 [shape = 's32[1]{0}', space=sflag, size = 0x4, scoped, tag = 'scoped memory for _attention_block_call.1']
    #allocation5 [shape = 'u8[512]{0}', space=vmem, size = 0x400, scoped, tag = 'input window, operand 6, single buffered']
    #allocation6 [shape = 's32[1]{0}', space=sflag, size = 0x4, scoped, tag = 'scoped memory for _attention_block_call.1']
    #allocation7 [shape = 'u8[512]{0}', space=vmem, size = 0x400, scoped, tag = 'input window, operand 7, single buffered']
    #allocation8 [shape = 'u8[16384]{0}', space=vmem, size = 0x4000, scoped, tag = 'input window, operand 8, single buffered']
    #allocation9 [shape = 's32[1]{0}', space=sflag, size = 0x4, scoped, tag = 'scoped memory for _attention_block_call.1']
    #allocation10 [shape = 'u8[512]{0}', space=vmem, size = 0x400, scoped, tag = 'input window, operand 9, single buffered']
    #allocation11 [shape = 'u8[512]{0}', space=vmem, size = 0x400, scoped, tag = 'input window, operand 11, single buffered']
    #allocation12 [shape = 's32[1]{0}', space=sflag, size = 0x4, scoped, tag = 'scoped memory for _attention_block_call.1']
    #allocation13 [shape = 'u8[16384]{0}', space=vmem, size = 0x4000, scoped, tag = 'output window, operand 0, single buffered']
    #allocation14 [shape = 'u8[8192]{0}', space=vmem, size = 0x2000, scoped, tag = 'output window, operand 1, single buffered']
    #allocation15 [shape = 's32[1]{0}', space=sflag, size = 0x4, scoped, tag = 'scoped memory for _attention_block_call.1']
    %19 = vsyncpa [#allocation3], 0
    %20 = vsyncpa [#allocation6], 0
    %21 = vsyncpa [#allocation9], 0
    %22 = vsyncpa [#allocation12], 0
    %23 = vsyncpa [#allocation4], 0
    %24 = vsyncpa [#allocation15], 0
    // Predicated region
    $region2: #{_attention_block_call.1} parent=1 // pred_check
      _
    $region3: #{_attention_block_call.1} parent=1 // pred_check_branch
      %26 = sbr.rel (0) target = $region5
    $region4: #{_attention_block_call.1} parent=1 // pred_region
      _
    $region5: #{_attention_block_call.1} parent=1 // pred_fallthru
      _
    // Predicated region
    $region6: #{_attention_block_call.1} parent=1 // pred_check
      _
    $region7: #{_attention_block_call.1} parent=1 // pred_check_branch
      %28 = sbr.rel (0) target = $region9
    $region8: #{_attention_block_call.1} parent=1 // pred_region
      _
    $region9: #{_attention_block_call.1} parent=1 // pred_fallthru
      _
    // Predicated region
    $region10: #{_attention_block_call.1} parent=1 // pred_check
      _
    $region11: #{_attention_block_call.1} parent=1 // pred_check_branch
      %30 = sbr.rel (0) target = $region13
    $region12: #{_attention_block_call.1} parent=1 // pred_region
      _
    $region13: #{_attention_block_call.1} parent=1 // pred_fallthru
      _
    // Predicated region
    $region14: #{_attention_block_call.1} parent=1 // pred_check
      _
    $region15: #{_attention_block_call.1} parent=1 // pred_check_branch
      %32 = sbr.rel (0) target = $region17
    $region16: #{_attention_block_call.1} parent=1 // pred_region
      _
    $region17: #{_attention_block_call.1} parent=1 // pred_fallthru
      _
    // Predicated region
    $region18: #{_attention_block_call.1} parent=1 // pred_check
      _
    $region19: #{_attention_block_call.1} parent=1 // pred_check_branch
      %34 = sbr.rel (0) target = $region21
    $region20: #{_attention_block_call.1} parent=1 // pred_region
      _
    $region21: #{_attention_block_call.1} parent=1 // pred_fallthru
      _
    // Predicated region
    $region22: #{_attention_block_call.1} parent=1 // pred_check
      _
    $region23: #{_attention_block_call.1} parent=1 // pred_check_branch
      %36 = sbr.rel (0) target = $region25
    $region24: #{_attention_block_call.1} parent=1 // pred_region
      %s38 = ssub.s32 16, 16
      %39 = vsyncadd [#allocation3], %s38
      %s41 = sshll.u32 [#allocation2], 4
      %s42 = int_to_ptr.vmem [resolvable:$true] %s41
      %44 = dma.hbm_to_vmem [thread:$0]  %s5, 16, %s42, [#allocation3]
    $region25: #{_attention_block_call.1} parent=1 // pred_fallthru
      _
    // Predicated region
    $region26: #{_attention_block_call.1} parent=1 // pred_check
      _
    $region27: #{_attention_block_call.1} parent=1 // pred_check_branch
      %46 = sbr.rel (0) target = $region29
    $region28: #{_attention_block_call.1} parent=1 // pred_region
      %s48 = ssub.s32 16, 16
      %49 = vsyncadd [#allocation6], %s48
      %s51 = sshll.u32 [#allocation5], 4
      %s52 = int_to_ptr.vmem [resolvable:$true] %s51
      %54 = dma.hbm_to_vmem [thread:$0]  %s6, 16, %s52, [#allocation6]
    $region29: #{_attention_block_call.1} parent=1 // pred_fallthru
      _
    // Predicated region
    $region30: #{_attention_block_call.1} parent=1 // pred_check
      _
    $region31: #{_attention_block_call.1} parent=1 // pred_check_branch
      %56 = sbr.rel (0) target = $region33
    $region32: #{_attention_block_call.1} parent=1 // pred_region
      %s58 = ssub.s32 16, 16
      %59 = vsyncadd [#allocation6], %s58
      %s61 = sshll.u32 [#allocation7], 4
      %s62 = int_to_ptr.vmem [resolvable:$true] %s61
      %64 = dma.hbm_to_vmem [thread:$0]  %s7, 16, %s62, [#allocation6]
    $region33: #{_attention_block_call.1} parent=1 // pred_fallthru
      _
    // Predicated region
    $region34: #{_attention_block_call.1} parent=1 // pred_check
      _
    $region35: #{_attention_block_call.1} parent=1 // pred_check_branch
      %66 = sbr.rel (0) target = $region37
    $region36: #{_attention_block_call.1} parent=1 // pred_region
      %s68 = ssub.s32 512, 512
      %69 = vsyncadd [#allocation9], %s68
      %s70 = sshll.u32 [#allocation8], 4
      %s71 = int_to_ptr.vmem [resolvable:$true] %s70
      %76 = dma.hbm_to_vmem [thread:$0]  %s8, 512, %s71, [#allocation9], 128, 128, 8
    $region37: #{_attention_block_call.1} parent=1 // pred_fallthru
      _
    // Predicated region
    $region38: #{_attention_block_call.1} parent=1 // pred_check
      _
    $region39: #{_attention_block_call.1} parent=1 // pred_check_branch
      %78 = sbr.rel (0) target = $region41
    $region40: #{_attention_block_call.1} parent=1 // pred_region
      %s80 = ssub.s32 16, 16
      %81 = vsyncadd [#allocation9], %s80
      %s83 = sshll.u32 [#allocation10], 4
      %s84 = int_to_ptr.vmem [resolvable:$true] %s83
      %86 = dma.hbm_to_vmem [thread:$0]  %s9, 16, %s84, [#allocation9]
    $region41: #{_attention_block_call.1} parent=1 // pred_fallthru
      _
    // Predicated region
    $region42: #{_attention_block_call.1} parent=1 // pred_check
      _
    $region43: #{_attention_block_call.1} parent=1 // pred_check_branch
      %88 = sbr.rel (0) target = $region45
    $region44: #{_attention_block_call.1} parent=1 // pred_region
      _
    $region45: #{_attention_block_call.1} parent=1 // pred_fallthru
      _
    // Predicated region
    $region46: #{_attention_block_call.1} parent=1 // pred_check
      _
    $region47: #{_attention_block_call.1} parent=1 // pred_check_branch
      %90 = sbr.rel (0) target = $region49
    $region48: #{_attention_block_call.1} parent=1 // pred_region
      %s92 = ssub.s32 16, 16
      %93 = vsyncadd [#allocation12], %s92
      %s95 = sshll.u32 [#allocation11], 4
      %s96 = int_to_ptr.vmem [resolvable:$true] %s95
      %98 = dma.hbm_to_vmem [thread:$0]  %s11, 16, %s96, [#allocation12]
    $region49: #{_attention_block_call.1} parent=1 // pred_fallthru
      _
    // Predicated region
    $region50: #{_attention_block_call.1} parent=1 // pred_check
      _
    $region51: #{_attention_block_call.1} parent=1 // pred_check_branch
      %100 = sbr.rel (0) target = $region53
    $region52: #{_attention_block_call.1} parent=1 // pred_region
      %101 = dma.done [#allocation3], 16
    $region53: #{_attention_block_call.1} parent=1 // pred_fallthru
      _
    // Predicated region
    $region54: #{_attention_block_call.1} parent=1 // pred_check
      _
    $region55: #{_attention_block_call.1} parent=1 // pred_check_branch
      %103 = sbr.rel (0) target = $region57
    $region56: #{_attention_block_call.1} parent=1 // pred_region
      %104 = dma.done [#allocation6], 16
    $region57: #{_attention_block_call.1} parent=1 // pred_fallthru
      _
    // Predicated region
    $region58: #{_attention_block_call.1} parent=1 // pred_check
      _
    $region59: #{_attention_block_call.1} parent=1 // pred_check_branch
      %106 = sbr.rel (0) target = $region61
    $region60: #{_attention_block_call.1} parent=1 // pred_region
      %107 = dma.done [#allocation6], 16
    $region61: #{_attention_block_call.1} parent=1 // pred_fallthru
      _
    // Predicated region
    $region62: #{_attention_block_call.1} parent=1 // pred_check
      _
    $region63: #{_attention_block_call.1} parent=1 // pred_check_branch
      %109 = sbr.rel (0) target = $region65
    $region64: #{_attention_block_call.1} parent=1 // pred_region
      %110 = dma.done [#allocation9], 512
    $region65: #{_attention_block_call.1} parent=1 // pred_fallthru
      _
    // Predicated region
    $region66: #{_attention_block_call.1} parent=1 // pred_check
      _
    $region67: #{_attention_block_call.1} parent=1 // pred_check_branch
      %112 = sbr.rel (0) target = $region69
    $region68: #{_attention_block_call.1} parent=1 // pred_region
      %113 = dma.done [#allocation9], 16
    $region69: #{_attention_block_call.1} parent=1 // pred_fallthru
      _
    // Predicated region
    $region70: #{_attention_block_call.1} parent=1 // pred_check
      _
    $region71: #{_attention_block_call.1} parent=1 // pred_check_branch
      %115 = sbr.rel (0) target = $region73
    $region72: #{_attention_block_call.1} parent=1 // pred_region
      %116 = dma.done [#allocation12], 16
    $region73: #{_attention_block_call.1} parent=1 // pred_fallthru
      _
    %v117 = vld [vmem:[%s0] sm:$0xff]
    %v118 = vld [vmem:[%s0 + $0x8] sm:$0xff]
    %v119 = vld [vmem:[%s0 + $0x10] sm:$0xff]
    %v120 = vld [vmem:[%s0 + $0x18] sm:$0xff]
    %vm121 = vcmask 261120
    %v122 = vsel %vm121, %v117, 0.0
    %123 = vadd.xlane.f32.xlu0 %v122
    %v124 = vpop.xlane.xlu0 %123
    %v125 = vsel %vm121, %v118, 0.0
    %126 = vadd.xlane.f32.xlu0 %v125
    %v127 = vpop.xlane.xlu0 %126
    %v128 = vsel %vm121, %v119, 0.0
    %129 = vadd.xlane.f32.xlu0 %v128
    %v130 = vpop.xlane.xlu0 %129
    %v131 = vsel %vm121, %v120, 0.0
    %132 = vadd.xlane.f32.xlu0 %v131
    %v133 = vpop.xlane.xlu0 %132
    %v134 = vrcp.pop 32.0
    %v135 = vmul.f32 %v124, %v134
    %v136 = vmul.f32 %v127, %v134
    %v137 = vmul.f32 %v130, %v134
    %v138 = vmul.f32 %v133, %v134
    %v139 = vsub.f32 %v117, %v135
    %v140 = vsub.f32 %v118, %v136
    %v141 = vsub.f32 %v119, %v137
    %v142 = vsub.f32 %v120, %v138
    %v143 = vmul.f32 %v139, %v139
    %v144 = vmul.f32 %v140, %v140
    %v145 = vmul.f32 %v141, %v141
    %v146 = vmul.f32 %v142, %v142
    %v147 = vsel %vm121, %v143, 0.0
    %148 = vadd.xlane.f32.xlu0 %v147
    %v149 = vpop.xlane.xlu0 %148
    %v150 = vsel %vm121, %v144, 0.0
    %151 = vadd.xlane.f32.xlu0 %v150
    %v152 = vpop.xlane.xlu0 %151
    %v153 = vsel %vm121, %v145, 0.0
    %154 = vadd.xlane.f32.xlu0 %v153
    %v155 = vpop.xlane.xlu0 %154
    %v156 = vsel %vm121, %v146, 0.0
    %157 = vadd.xlane.f32.xlu0 %v156
    %v158 = vpop.xlane.xlu0 %157
    %v159 = vmul.f32 %v149, %v134
    %v160 = vmul.f32 %v152, %v134
    %v161 = vmul.f32 %v155, %v134
    %v162 = vmul.f32 %v158, %v134
    %v163 = vadd.f32 %v159, 1e-05
    %v164 = vadd.f32 %v160, 1e-05
    %v165 = vadd.f32 %v161, 1e-05
    %v166 = vadd.f32 %v162, 1e-05
    %v167 = vrsqrt.pop %v163
    %v168 = vrsqrt.pop %v164
    %v169 = vrsqrt.pop %v165
    %v170 = vrsqrt.pop %v166
    %v171 = vmul.f32 %v139, %v167
    %v172 = vmul.f32 %v140, %v168
    %v173 = vmul.f32 %v141, %v169
    %v174 = vmul.f32 %v142, %v170
    %v175 = vld [vmem:[%s4] sm:$0x1]
    %v177 = vlaneseq
    %v178 = vshrl.u32 %v177, 7
    %v179 = vsub.s32 0, %v178
    %v180 = vrot.slane %v175, %v179
    %v182 = vmul.f32 %v171, %v180
    %v183 = vmul.f32 %v172, %v180
    %v184 = vmul.f32 %v173, %v180
    %v185 = vmul.f32 %v174, %v180
    %v186 = vld [vmem:[#allocation2] sm:$0x1]
    %v188 = vlaneseq
    %v189 = vshrl.u32 %v188, 7
    %v190 = vsub.s32 0, %v189
    %v191 = vrot.slane %v186, %v190
    %v193 = vadd.f32 %v182, %v191
    %v194 = vadd.f32 %v183, %v191
    %v195 = vadd.f32 %v184, %v191
    %v196 = vadd.f32 %v185, %v191
    %v197 = vld [vmem:[%s1] sm:$0xff]
    %v198 = vld [vmem:[%s1 + $0x8] sm:$0xff]
    %v199 = vld [vmem:[%s1 + $0x10] sm:$0xff]
    %v200 = vld [vmem:[%s1 + $0x18] sm:$0xff]
    %v202 = vsel %vm121, %v193, 0
    %v205 = vsel %vm121, %v194, 0
    %v208 = vsel %vm121, %v195, 0
    %v211 = vsel %vm121, %v196, 0
    %213 = vmatprep.subr.mxu0 0.0
    %214 = vmatpush1.msra.mxu0 %v197
    %215 = vmatprep.subr.mxu0 0.0
    %216 = vmatpush1.msra.mxu0 %v198
    %217 = vmatprep.subr.mxu0 0.0
    %218 = vmatpush1.msra.mxu0 %v199
    %219 = vmatprep.subr.mxu0 0.0
    %220 = vmatpush1.msra.mxu0 %v200
    %221 = vmatprep.subr.mxu0 0.0
    %222 = vmatpush1.msra.mxu0 0.0
    %223 = vmatprep.subr.mxu0 0.0
    %224 = vmatpush1.msra.mxu0 0.0
    %225 = vmatprep.subr.mxu0 0.0
    %226 = vmatpush1.msra.mxu0 0.0
    %227 = vmatprep.subr.mxu0 0.0
    %228 = vmatpush1.msra.mxu0 0.0
    %229 = vmatprep.subr.mxu0 0.0
    %230 = vmatpush1.msra.mxu0 0.0
    %231 = vmatprep.subr.mxu0 0.0
    %232 = vmatpush1.msra.mxu0 0.0
    %233 = vmatprep.subr.mxu0 0.0
    %234 = vmatpush1.msra.mxu0 0.0
    %235 = vmatprep.subr.mxu0 0.0
    %236 = vmatpush1.msra.mxu0 0.0
    %237 = vmatprep.subr.mxu0 0.0
    %238 = vmatpush1.msra.mxu0 0.0
    %239 = vmatprep.subr.mxu0 0.0
    %240 = vmatpush1.msra.mxu0 0.0
    %241 = vmatprep.subr.mxu0 0.0
    %242 = vmatpush1.msra.mxu0 0.0
    %243 = vmatprep.subr.mxu0 0.0
    %244 = vmatpush1.msra.mxu0 0.0
    %245 = vmatprep.subr.mxu0 0.0
    %246 = vmatpush1.msra.mxu0 0.0
    %247 = vmatprep.subr.mxu0 0.0
    %248 = vmatpush1.msra.mxu0 0.0
    %249 = vmatprep.subr.mxu0 0.0
    %250 = vmatpush1.msra.mxu0 0.0
    %251 = vmatprep.subr.mxu0 0.0
    %252 = vmatpush1.msra.mxu0 0.0
    %253 = vmatprep.subr.mxu0 0.0
    %254 = vmatpush1.msra.mxu0 0.0
    %255 = vmatprep.subr.mxu0 0.0
    %256 = vmatpush1.msra.mxu0 0.0
    %257 = vmatprep.subr.mxu0 0.0
    %258 = vmatpush1.msra.mxu0 0.0
    %259 = vmatprep.subr.mxu0 0.0
    %260 = vmatpush1.msra.mxu0 0.0
    %261 = vmatprep.subr.mxu0 0.0
    %262 = vmatpush1.msra.mxu0 0.0
    %263 = vmatprep.subr.mxu0 0.0
    %264 = vmatpush1.msra.mxu0 0.0
    %265 = vmatprep.subr.mxu0 0.0
    %266 = vmatpush1.msra.mxu0 0.0
    %267 = vmatprep.subr.mxu0 0.0
    %268 = vmatpush1.msra.mxu0 0.0
    %269 = vmatprep.subr.mxu0 0.0
    %270 = vmatpush1.msra.mxu0 0.0
    %271 = vmatprep.subr.mxu0 0.0
    %272 = vmatpush1.msra.mxu0 0.0
    %273 = vmatprep.subr.mxu0 0.0
    %274 = vmatpush1.msra.mxu0 0.0
    %275 = vmatprep.subr.mxu0 0.0
    %276 = vmatpush1.msra.mxu0 0.0
    %277 = vmatprep.mubr.f32.mxu0 0.0
    %278 = vmatmul.mubr.f32.gmra.mrb[0].mxu0 %v202
    %v279 = vpop.f32.mrb[0].mxu0
    %v280 = vadd.f32 0.0, %v279
    %v281 = vpop.f32.mrb[0].mxu0
    %282 = vmatprep.mubr.f32.mxu0 0.0
    %283 = vmatmul.mubr.f32.gmra.mrb[0].mxu0 %v205
    %v284 = vpop.f32.mrb[0].mxu0
    %v285 = vadd.f32 0.0, %v284
    %v286 = vpop.f32.mrb[0].mxu0
    %287 = vmatprep.mubr.f32.mxu0 0.0
    %288 = vmatmul.mubr.f32.gmra.mrb[0].mxu0 %v208
    %v289 = vpop.f32.mrb[0].mxu0
    %v290 = vadd.f32 0.0, %v289
    %v291 = vpop.f32.mrb[0].mxu0
    %292 = vmatprep.mubr.f32.mxu0 0.0
    %293 = vmatmul.mubr.f32.gmra.mrb[0].mxu0 %v211
    %v294 = vpop.f32.mrb[0].mxu0
    %v295 = vadd.f32 0.0, %v294
    %v296 = vpop.f32.mrb[0].mxu0
    %297 = vdwg.mxu0
    %299 = vrot.lane.b32.xlu0 %v280, 96
    %v300 = vpop.permute.xlu0 %299
    %vm301 = vcmask 64512
    %v302 = vsel %vm301, %v280, 0
    %v304 = vsel %vm301, %v300, 0
    %306 = vmatprep.subr.mxu0 0.0
    %307 = vmatpush1.xpose.msra.mxu0 %v304
    %308 = vmatprep.subr.mxu0 0.0
    %309 = vmatpush1.xpose.msra.mxu0 0.0
    %310 = vmatprep.subr.mxu0 0.0
    %311 = vmatpush1.xpose.msra.mxu0 0.0
    %312 = vmatprep.subr.mxu0 0.0
    %313 = vmatpush1.xpose.msra.mxu0 0.0
    %314 = vmatprep.subr.mxu0 0.0
    %315 = vmatpush1.xpose.msra.mxu0 0.0
    %316 = vmatprep.subr.mxu0 0.0
    %317 = vmatpush1.xpose.msra.mxu0 0.0
    %318 = vmatprep.subr.mxu0 0.0
    %319 = vmatpush1.xpose.msra.mxu0 0.0
    %320 = vmatprep.subr.mxu0 0.0
    %321 = vmatpush1.xpose.msra.mxu0 0.0
    %322 = vmatprep.subr.mxu0 0.0
    %323 = vmatpush1.xpose.msra.mxu0 0.0
    %324 = vmatprep.subr.mxu0 0.0
    %325 = vmatpush1.xpose.msra.mxu0 0.0
    %326 = vmatprep.subr.mxu0 0.0
    %327 = vmatpush1.xpose.msra.mxu0 0.0
    %328 = vmatprep.subr.mxu0 0.0
    %329 = vmatpush1.xpose.msra.mxu0 0.0
    %330 = vmatprep.subr.mxu0 0.0
    %331 = vmatpush1.xpose.msra.mxu0 0.0
    %332 = vmatprep.subr.mxu0 0.0
    %333 = vmatpush1.xpose.msra.mxu0 0.0
    %334 = vmatprep.subr.mxu0 0.0
    %335 = vmatpush1.xpose.msra.mxu0 0.0
    %336 = vmatprep.subr.mxu0 0.0
    %337 = vmatpush1.xpose.msra.mxu0 0.0
    %338 = vmatprep.subr.mxu0 0.0
    %339 = vmatpush1.xpose.msra.mxu0 0.0
    %340 = vmatprep.subr.mxu0 0.0
    %341 = vmatpush1.xpose.msra.mxu0 0.0
    %342 = vmatprep.subr.mxu0 0.0
    %343 = vmatpush1.xpose.msra.mxu0 0.0
    %344 = vmatprep.subr.mxu0 0.0
    %345 = vmatpush1.xpose.msra.mxu0 0.0
    %346 = vmatprep.subr.mxu0 0.0
    %347 = vmatpush1.xpose.msra.mxu0 0.0
    %348 = vmatprep.subr.mxu0 0.0
    %349 = vmatpush1.xpose.msra.mxu0 0.0
    %350 = vmatprep.subr.mxu0 0.0
    %351 = vmatpush1.xpose.msra.mxu0 0.0
    %352 = vmatprep.subr.mxu0 0.0
    %353 = vmatpush1.xpose.msra.mxu0 0.0
    %354 = vmatprep.subr.mxu0 0.0
    %355 = vmatpush1.xpose.msra.mxu0 0.0
    %356 = vmatprep.subr.mxu0 0.0
    %357 = vmatpush1.xpose.msra.mxu0 0.0
    %358 = vmatprep.subr.mxu0 0.0
    %359 = vmatpush1.xpose.msra.mxu0 0.0
    %360 = vmatprep.subr.mxu0 0.0
    %361 = vmatpush1.xpose.msra.mxu0 0.0
    %362 = vmatprep.subr.mxu0 0.0
    %363 = vmatpush1.xpose.msra.mxu0 0.0
    %364 = vmatprep.subr.mxu0 0.0
    %365 = vmatpush1.xpose.msra.mxu0 0.0
    %366 = vmatprep.subr.mxu0 0.0
    %367 = vmatpush1.xpose.msra.mxu0 0.0
    %368 = vmatprep.subr.mxu0 0.0
    %369 = vmatpush1.xpose.msra.mxu0 0.0
    %370 = vmatprep.mubr.f32.mxu0 0.0
    %371 = vmatmul.mubr.f32.gmra.mrb[0].mxu0 %v302
    %v372 = vpop.f32.mrb[0].mxu0
    %v373 = vadd.f32 0.0, %v372
    %v374 = vpop.f32.mrb[0].mxu0
    %375 = vdwg.mxu0
    %377 = vrot.lane.b32.xlu0 %v285, 96
    %v378 = vpop.permute.xlu0 %377
    %v379 = vsel %vm301, %v285, 0
    %v381 = vsel %vm301, %v378, 0
    %383 = vmatprep.subr.mxu0 0.0
    %384 = vmatpush1.xpose.msra.mxu0 %v381
    %385 = vmatprep.subr.mxu0 0.0
    %386 = vmatpush1.xpose.msra.mxu0 0.0
    %387 = vmatprep.subr.mxu0 0.0
    %388 = vmatpush1.xpose.msra.mxu0 0.0
    %389 = vmatprep.subr.mxu0 0.0
    %390 = vmatpush1.xpose.msra.mxu0 0.0
    %391 = vmatprep.subr.mxu0 0.0
    %392 = vmatpush1.xpose.msra.mxu0 0.0
    %393 = vmatprep.subr.mxu0 0.0
    %394 = vmatpush1.xpose.msra.mxu0 0.0
    %395 = vmatprep.subr.mxu0 0.0
    %396 = vmatpush1.xpose.msra.mxu0 0.0
    %397 = vmatprep.subr.mxu0 0.0
    %398 = vmatpush1.xpose.msra.mxu0 0.0
    %399 = vmatprep.subr.mxu0 0.0
    %400 = vmatpush1.xpose.msra.mxu0 0.0
    %401 = vmatprep.subr.mxu0 0.0
    %402 = vmatpush1.xpose.msra.mxu0 0.0
    %403 = vmatprep.subr.mxu0 0.0
    %404 = vmatpush1.xpose.msra.mxu0 0.0
    %405 = vmatprep.subr.mxu0 0.0
    %406 = vmatpush1.xpose.msra.mxu0 0.0
    %407 = vmatprep.subr.mxu0 0.0
    %408 = vmatpush1.xpose.msra.mxu0 0.0
    %409 = vmatprep.subr.mxu0 0.0
    %410 = vmatpush1.xpose.msra.mxu0 0.0
    %411 = vmatprep.subr.mxu0 0.0
    %412 = vmatpush1.xpose.msra.mxu0 0.0
    %413 = vmatprep.subr.mxu0 0.0
    %414 = vmatpush1.xpose.msra.mxu0 0.0
    %415 = vmatprep.subr.mxu0 0.0
    %416 = vmatpush1.xpose.msra.mxu0 0.0
    %417 = vmatprep.subr.mxu0 0.0
    %418 = vmatpush1.xpose.msra.mxu0 0.0
    %419 = vmatprep.subr.mxu0 0.0
    %420 = vmatpush1.xpose.msra.mxu0 0.0
    %421 = vmatprep.subr.mxu0 0.0
    %422 = vmatpush1.xpose.msra.mxu0 0.0
    %423 = vmatprep.subr.mxu0 0.0
    %424 = vmatpush1.xpose.msra.mxu0 0.0
    %425 = vmatprep.subr.mxu0 0.0
    %426 = vmatpush1.xpose.msra.mxu0 0.0
    %427 = vmatprep.subr.mxu0 0.0
    %428 = vmatpush1.xpose.msra.mxu0 0.0
    %429 = vmatprep.subr.mxu0 0.0
    %430 = vmatpush1.xpose.msra.mxu0 0.0
    %431 = vmatprep.subr.mxu0 0.0
    %432 = vmatpush1.xpose.msra.mxu0 0.0
    %433 = vmatprep.subr.mxu0 0.0
    %434 = vmatpush1.xpose.msra.mxu0 0.0
    %435 = vmatprep.subr.mxu0 0.0
    %436 = vmatpush1.xpose.msra.mxu0 0.0
    %437 = vmatprep.subr.mxu0 0.0
    %438 = vmatpush1.xpose.msra.mxu0 0.0
    %439 = vmatprep.subr.mxu0 0.0
    %440 = vmatpush1.xpose.msra.mxu0 0.0
    %441 = vmatprep.subr.mxu0 0.0
    %442 = vmatpush1.xpose.msra.mxu0 0.0
    %443 = vmatprep.subr.mxu0 0.0
    %444 = vmatpush1.xpose.msra.mxu0 0.0
    %445 = vmatprep.subr.mxu0 0.0
    %446 = vmatpush1.xpose.msra.mxu0 0.0
    %447 = vmatprep.mubr.f32.mxu0 0.0
    %448 = vmatmul.mubr.f32.gmra.mrb[0].mxu0 %v379
    %v449 = vpop.f32.mrb[0].mxu0
    %v450 = vadd.f32 0.0, %v449
    %v451 = vpop.f32.mrb[0].mxu0
    %452 = vdwg.mxu0
    %454 = vrot.lane.b32.xlu0 %v290, 96
    %v455 = vpop.permute.xlu0 %454
    %v456 = vsel %vm301, %v290, 0
    %v458 = vsel %vm301, %v455, 0
    %460 = vmatprep.subr.mxu0 0.0
    %461 = vmatpush1.xpose.msra.mxu0 %v458
    %462 = vmatprep.subr.mxu0 0.0
    %463 = vmatpush1.xpose.msra.mxu0 0.0
    %464 = vmatprep.subr.mxu0 0.0
    %465 = vmatpush1.xpose.msra.mxu0 0.0
    %466 = vmatprep.subr.mxu0 0.0
    %467 = vmatpush1.xpose.msra.mxu0 0.0
    %468 = vmatprep.subr.mxu0 0.0
    %469 = vmatpush1.xpose.msra.mxu0 0.0
    %470 = vmatprep.subr.mxu0 0.0
    %471 = vmatpush1.xpose.msra.mxu0 0.0
    %472 = vmatprep.subr.mxu0 0.0
    %473 = vmatpush1.xpose.msra.mxu0 0.0
    %474 = vmatprep.subr.mxu0 0.0
    %475 = vmatpush1.xpose.msra.mxu0 0.0
    %476 = vmatprep.subr.mxu0 0.0
    %477 = vmatpush1.xpose.msra.mxu0 0.0
    %478 = vmatprep.subr.mxu0 0.0
    %479 = vmatpush1.xpose.msra.mxu0 0.0
    %480 = vmatprep.subr.mxu0 0.0
    %481 = vmatpush1.xpose.msra.mxu0 0.0
    %482 = vmatprep.subr.mxu0 0.0
    %483 = vmatpush1.xpose.msra.mxu0 0.0
    %484 = vmatprep.subr.mxu0 0.0
    %485 = vmatpush1.xpose.msra.mxu0 0.0
    %486 = vmatprep.subr.mxu0 0.0
    %487 = vmatpush1.xpose.msra.mxu0 0.0
    %488 = vmatprep.subr.mxu0 0.0
    %489 = vmatpush1.xpose.msra.mxu0 0.0
    %490 = vmatprep.subr.mxu0 0.0
    %491 = vmatpush1.xpose.msra.mxu0 0.0
    %492 = vmatprep.subr.mxu0 0.0
    %493 = vmatpush1.xpose.msra.mxu0 0.0
    %494 = vmatprep.subr.mxu0 0.0
    %495 = vmatpush1.xpose.msra.mxu0 0.0
    %496 = vmatprep.subr.mxu0 0.0
    %497 = vmatpush1.xpose.msra.mxu0 0.0
    %498 = vmatprep.subr.mxu0 0.0
    %499 = vmatpush1.xpose.msra.mxu0 0.0
    %500 = vmatprep.subr.mxu0 0.0
    %501 = vmatpush1.xpose.msra.mxu0 0.0
    %502 = vmatprep.subr.mxu0 0.0
    %503 = vmatpush1.xpose.msra.mxu0 0.0
    %504 = vmatprep.subr.mxu0 0.0
    %505 = vmatpush1.xpose.msra.mxu0 0.0
    %506 = vmatprep.subr.mxu0 0.0
    %507 = vmatpush1.xpose.msra.mxu0 0.0
    %508 = vmatprep.subr.mxu0 0.0
    %509 = vmatpush1.xpose.msra.mxu0 0.0
    %510 = vmatprep.subr.mxu0 0.0
    %511 = vmatpush1.xpose.msra.mxu0 0.0
    %512 = vmatprep.subr.mxu0 0.0
    %513 = vmatpush1.xpose.msra.mxu0 0.0
    %514 = vmatprep.subr.mxu0 0.0
    %515 = vmatpush1.xpose.msra.mxu0 0.0
    %516 = vmatprep.subr.mxu0 0.0
    %517 = vmatpush1.xpose.msra.mxu0 0.0
    %518 = vmatprep.subr.mxu0 0.0
    %519 = vmatpush1.xpose.msra.mxu0 0.0
    %520 = vmatprep.subr.mxu0 0.0
    %521 = vmatpush1.xpose.msra.mxu0 0.0
    %522 = vmatprep.subr.mxu0 0.0
    %523 = vmatpush1.xpose.msra.mxu0 0.0
    %524 = vmatprep.mubr.f32.mxu0 0.0
    %525 = vmatmul.mubr.f32.gmra.mrb[0].mxu0 %v456
    %v526 = vpop.f32.mrb[0].mxu0
    %v527 = vadd.f32 0.0, %v526
    %v528 = vpop.f32.mrb[0].mxu0
    %529 = vdwg.mxu0
    %531 = vrot.lane.b32.xlu0 %v295, 96
    %v532 = vpop.permute.xlu0 %531
    %v533 = vsel %vm301, %v295, 0
    %v535 = vsel %vm301, %v532, 0
    %537 = vmatprep.subr.mxu0 0.0
    %538 = vmatpush1.xpose.msra.mxu0 %v535
    %539 = vmatprep.subr.mxu0 0.0
    %540 = vmatpush1.xpose.msra.mxu0 0.0
    %541 = vmatprep.subr.mxu0 0.0
    %542 = vmatpush1.xpose.msra.mxu0 0.0
    %543 = vmatprep.subr.mxu0 0.0
    %544 = vmatpush1.xpose.msra.mxu0 0.0
    %545 = vmatprep.subr.mxu0 0.0
    %546 = vmatpush1.xpose.msra.mxu0 0.0
    %547 = vmatprep.subr.mxu0 0.0
    %548 = vmatpush1.xpose.msra.mxu0 0.0
    %549 = vmatprep.subr.mxu0 0.0
    %550 = vmatpush1.xpose.msra.mxu0 0.0
    %551 = vmatprep.subr.mxu0 0.0
    %552 = vmatpush1.xpose.msra.mxu0 0.0
    %553 = vmatprep.subr.mxu0 0.0
    %554 = vmatpush1.xpose.msra.mxu0 0.0
    %555 = vmatprep.subr.mxu0 0.0
    %556 = vmatpush1.xpose.msra.mxu0 0.0
    %557 = vmatprep.subr.mxu0 0.0
    %558 = vmatpush1.xpose.msra.mxu0 0.0
    %559 = vmatprep.subr.mxu0 0.0
    %560 = vmatpush1.xpose.msra.mxu0 0.0
    %561 = vmatprep.subr.mxu0 0.0
    %562 = vmatpush1.xpose.msra.mxu0 0.0
    %563 = vmatprep.subr.mxu0 0.0
    %564 = vmatpush1.xpose.msra.mxu0 0.0
    %565 = vmatprep.subr.mxu0 0.0
    %566 = vmatpush1.xpose.msra.mxu0 0.0
    %567 = vmatprep.subr.mxu0 0.0
    %568 = vmatpush1.xpose.msra.mxu0 0.0
    %569 = vmatprep.subr.mxu0 0.0
    %570 = vmatpush1.xpose.msra.mxu0 0.0
    %571 = vmatprep.subr.mxu0 0.0
    %572 = vmatpush1.xpose.msra.mxu0 0.0
    %573 = vmatprep.subr.mxu0 0.0
    %574 = vmatpush1.xpose.msra.mxu0 0.0
    %575 = vmatprep.subr.mxu0 0.0
    %576 = vmatpush1.xpose.msra.mxu0 0.0
    %577 = vmatprep.subr.mxu0 0.0
    %578 = vmatpush1.xpose.msra.mxu0 0.0
    %579 = vmatprep.subr.mxu0 0.0
    %580 = vmatpush1.xpose.msra.mxu0 0.0
    %581 = vmatprep.subr.mxu0 0.0
    %582 = vmatpush1.xpose.msra.mxu0 0.0
    %583 = vmatprep.subr.mxu0 0.0
    %584 = vmatpush1.xpose.msra.mxu0 0.0
    %585 = vmatprep.subr.mxu0 0.0
    %586 = vmatpush1.xpose.msra.mxu0 0.0
    %587 = vmatprep.subr.mxu0 0.0
    %588 = vmatpush1.xpose.msra.mxu0 0.0
    %589 = vmatprep.subr.mxu0 0.0
    %590 = vmatpush1.xpose.msra.mxu0 0.0
    %591 = vmatprep.subr.mxu0 0.0
    %592 = vmatpush1.xpose.msra.mxu0 0.0
    %593 = vmatprep.subr.mxu0 0.0
    %594 = vmatpush1.xpose.msra.mxu0 0.0
    %595 = vmatprep.subr.mxu0 0.0
    %596 = vmatpush1.xpose.msra.mxu0 0.0
    %597 = vmatprep.subr.mxu0 0.0
    %598 = vmatpush1.xpose.msra.mxu0 0.0
    %599 = vmatprep.subr.mxu0 0.0
    %600 = vmatpush1.xpose.msra.mxu0 0.0
    %601 = vmatprep.mubr.f32.mxu0 0.0
    %602 = vmatmul.mubr.f32.gmra.mrb[0].mxu0 %v533
    %v603 = vpop.f32.mrb[0].mxu0
    %v604 = vadd.f32 0.0, %v603
    %v605 = vpop.f32.mrb[0].mxu0
    %606 = vdwg.mxu0
    %v607 = vmul.f32 %v373, 0.35355338
    %v608 = vmul.f32 %v450, 0.35355338
    %v609 = vmul.f32 %v527, 0.35355338
    %v610 = vmul.f32 %v604, 0.35355338
    %v611 = vsel %vm301, %v607, -inf
    %612 = vmax.xlane.f32.xlu0 %v611
    %v613 = vpop.xlane.xlu0 %612
    %v614 = vsel %vm301, %v608, -inf
    %615 = vmax.xlane.f32.xlu0 %v614
    %v616 = vpop.xlane.xlu0 %615
    %v617 = vsel %vm301, %v609, -inf
    %618 = vmax.xlane.f32.xlu0 %v617
    %v619 = vpop.xlane.xlu0 %618
    %v620 = vsel %vm301, %v610, -inf
    %621 = vmax.xlane.f32.xlu0 %v620
    %v622 = vpop.xlane.xlu0 %621
    %v623 = vsub.f32 %v607, %v613
    %v624 = vsub.f32 %v608, %v616
    %v625 = vsub.f32 %v609, %v619
    %v626 = vsub.f32 %v610, %v622
    %v627 = vmul.f32 %v623, 1.442695
    %v628 = vpow.pop %v627
    %v629 = vmul.f32 %v624, 1.442695
    %v630 = vpow.pop %v629
    %v631 = vmul.f32 %v625, 1.442695
    %v632 = vpow.pop %v631
    %v633 = vmul.f32 %v626, 1.442695
    %v634 = vpow.pop %v633
    %v635 = vsel %vm301, %v628, 0.0
    %636 = vadd.xlane.f32.xlu0 %v635
    %v637 = vpop.xlane.xlu0 %636
    %v638 = vsel %vm301, %v630, 0.0
    %639 = vadd.xlane.f32.xlu0 %v638
    %v640 = vpop.xlane.xlu0 %639
    %v641 = vsel %vm301, %v632, 0.0
    %642 = vadd.xlane.f32.xlu0 %v641
    %v643 = vpop.xlane.xlu0 %642
    %v644 = vsel %vm301, %v634, 0.0
    %645 = vadd.xlane.f32.xlu0 %v644
    %v646 = vpop.xlane.xlu0 %645
    %v647 = vrcp.pop %v637
    %v648 = vmul.f32 %v628, %v647
    %v649 = vrcp.pop %v640
    %v650 = vmul.f32 %v630, %v649
    %v651 = vrcp.pop %v643
    %v652 = vmul.f32 %v632, %v651
    %v653 = vrcp.pop %v646
    %v654 = vmul.f32 %v634, %v653
    %655 = vrot.lane.b32.xlu0 %v280, 64
    %v656 = vpop.permute.xlu0 %655
    %v659 = vsel %vm301, %v648, 0
    %661 = vmatprep.subr.mxu0 0.0
    %662 = vmatpush1.msra.mxu0 %v656
    %663 = vmatprep.subr.mxu0 0.0
    %664 = vmatpush1.msra.mxu0 0.0
    %665 = vmatprep.subr.mxu0 0.0
    %666 = vmatpush1.msra.mxu0 0.0
    %667 = vmatprep.subr.mxu0 0.0
    %668 = vmatpush1.msra.mxu0 0.0
    %669 = vmatprep.subr.mxu0 0.0
    %670 = vmatpush1.msra.mxu0 0.0
    %671 = vmatprep.subr.mxu0 0.0
    %672 = vmatpush1.msra.mxu0 0.0
    %673 = vmatprep.subr.mxu0 0.0
    %674 = vmatpush1.msra.mxu0 0.0
    %675 = vmatprep.subr.mxu0 0.0
    %676 = vmatpush1.msra.mxu0 0.0
    %677 = vmatprep.subr.mxu0 0.0
    %678 = vmatpush1.msra.mxu0 0.0
    %679 = vmatprep.subr.mxu0 0.0
    %680 = vmatpush1.msra.mxu0 0.0
    %681 = vmatprep.subr.mxu0 0.0
    %682 = vmatpush1.msra.mxu0 0.0
    %683 = vmatprep.subr.mxu0 0.0
    %684 = vmatpush1.msra.mxu0 0.0
    %685 = vmatprep.subr.mxu0 0.0
    %686 = vmatpush1.msra.mxu0 0.0
    %687 = vmatprep.subr.mxu0 0.0
    %688 = vmatpush1.msra.mxu0 0.0
    %689 = vmatprep.subr.mxu0 0.0
    %690 = vmatpush1.msra.mxu0 0.0
    %691 = vmatprep.subr.mxu0 0.0
    %692 = vmatpush1.msra.mxu0 0.0
    %693 = vmatprep.subr.mxu0 0.0
    %694 = vmatpush1.msra.mxu0 0.0
    %695 = vmatprep.subr.mxu0 0.0
    %696 = vmatpush1.msra.mxu0 0.0
    %697 = vmatprep.subr.mxu0 0.0
    %698 = vmatpush1.msra.mxu0 0.0
    %699 = vmatprep.subr.mxu0 0.0
    %700 = vmatpush1.msra.mxu0 0.0
    %701 = vmatprep.subr.mxu0 0.0
    %702 = vmatpush1.msra.mxu0 0.0
    %703 = vmatprep.subr.mxu0 0.0
    %704 = vmatpush1.msra.mxu0 0.0
    %705 = vmatprep.subr.mxu0 0.0
    %706 = vmatpush1.msra.mxu0 0.0
    %707 = vmatprep.subr.mxu0 0.0
    %708 = vmatpush1.msra.mxu0 0.0
    %709 = vmatprep.subr.mxu0 0.0
    %710 = vmatpush1.msra.mxu0 0.0
    %711 = vmatprep.subr.mxu0 0.0
    %712 = vmatpush1.msra.mxu0 0.0
    %713 = vmatprep.subr.mxu0 0.0
    %714 = vmatpush1.msra.mxu0 0.0
    %715 = vmatprep.subr.mxu0 0.0
    %716 = vmatpush1.msra.mxu0 0.0
    %717 = vmatprep.subr.mxu0 0.0
    %718 = vmatpush1.msra.mxu0 0.0
    %719 = vmatprep.subr.mxu0 0.0
    %720 = vmatpush1.msra.mxu0 0.0
    %721 = vmatprep.subr.mxu0 0.0
    %722 = vmatpush1.msra.mxu0 0.0
    %723 = vmatprep.subr.mxu0 0.0
    %724 = vmatpush1.msra.mxu0 0.0
    %725 = vmatprep.mubr.f32.mxu0 0.0
    %726 = vmatmul.mubr.f32.gmra.mrb[0].mxu0 %v659
    %v727 = vpop.f32.mrb[0].mxu0
    %v728 = vadd.f32 0.0, %v727
    %v729 = vpop.f32.mrb[0].mxu0
    %730 = vdwg.mxu0
    %731 = vrot.lane.b32.xlu0 %v285, 64
    %v732 = vpop.permute.xlu0 %731
    %v735 = vsel %vm301, %v650, 0
    %737 = vmatprep.subr.mxu0 0.0
    %738 = vmatpush1.msra.mxu0 %v732
    %739 = vmatprep.subr.mxu0 0.0
    %740 = vmatpush1.msra.mxu0 0.0
    %741 = vmatprep.subr.mxu0 0.0
    %742 = vmatpush1.msra.mxu0 0.0
    %743 = vmatprep.subr.mxu0 0.0
    %744 = vmatpush1.msra.mxu0 0.0
    %745 = vmatprep.subr.mxu0 0.0
    %746 = vmatpush1.msra.mxu0 0.0
    %747 = vmatprep.subr.mxu0 0.0
    %748 = vmatpush1.msra.mxu0 0.0
    %749 = vmatprep.subr.mxu0 0.0
    %750 = vmatpush1.msra.mxu0 0.0
    %751 = vmatprep.subr.mxu0 0.0
    %752 = vmatpush1.msra.mxu0 0.0
    %753 = vmatprep.subr.mxu0 0.0
    %754 = vmatpush1.msra.mxu0 0.0
    %755 = vmatprep.subr.mxu0 0.0
    %756 = vmatpush1.msra.mxu0 0.0
    %757 = vmatprep.subr.mxu0 0.0
    %758 = vmatpush1.msra.mxu0 0.0
    %759 = vmatprep.subr.mxu0 0.0
    %760 = vmatpush1.msra.mxu0 0.0
    %761 = vmatprep.subr.mxu0 0.0
    %762 = vmatpush1.msra.mxu0 0.0
    %763 = vmatprep.subr.mxu0 0.0
    %764 = vmatpush1.msra.mxu0 0.0
    %765 = vmatprep.subr.mxu0 0.0
    %766 = vmatpush1.msra.mxu0 0.0
    %767 = vmatprep.subr.mxu0 0.0
    %768 = vmatpush1.msra.mxu0 0.0
    %769 = vmatprep.subr.mxu0 0.0
    %770 = vmatpush1.msra.mxu0 0.0
    %771 = vmatprep.subr.mxu0 0.0
    %772 = vmatpush1.msra.mxu0 0.0
    %773 = vmatprep.subr.mxu0 0.0
    %774 = vmatpush1.msra.mxu0 0.0
    %775 = vmatprep.subr.mxu0 0.0
    %776 = vmatpush1.msra.mxu0 0.0
    %777 = vmatprep.subr.mxu0 0.0
    %778 = vmatpush1.msra.mxu0 0.0
    %779 = vmatprep.subr.mxu0 0.0
    %780 = vmatpush1.msra.mxu0 0.0
    %781 = vmatprep.subr.mxu0 0.0
    %782 = vmatpush1.msra.mxu0 0.0
    %783 = vmatprep.subr.mxu0 0.0
    %784 = vmatpush1.msra.mxu0 0.0
    %785 = vmatprep.subr.mxu0 0.0
    %786 = vmatpush1.msra.mxu0 0.0
    %787 = vmatprep.subr.mxu0 0.0
    %788 = vmatpush1.msra.mxu0 0.0
    %789 = vmatprep.subr.mxu0 0.0
    %790 = vmatpush1.msra.mxu0 0.0
    %791 = vmatprep.subr.mxu0 0.0
    %792 = vmatpush1.msra.mxu0 0.0
    %793 = vmatprep.subr.mxu0 0.0
    %794 = vmatpush1.msra.mxu0 0.0
    %795 = vmatprep.subr.mxu0 0.0
    %796 = vmatpush1.msra.mxu0 0.0
    %797 = vmatprep.subr.mxu0 0.0
    %798 = vmatpush1.msra.mxu0 0.0
    %799 = vmatprep.subr.mxu0 0.0
    %800 = vmatpush1.msra.mxu0 0.0
    %801 = vmatprep.mubr.f32.mxu0 0.0
    %802 = vmatmul.mubr.f32.gmra.mrb[0].mxu0 %v735
    %v803 = vpop.f32.mrb[0].mxu0
    %v804 = vadd.f32 0.0, %v803
    %v805 = vpop.f32.mrb[0].mxu0
    %806 = vdwg.mxu0
    %807 = vrot.lane.b32.xlu0 %v290, 64
    %v808 = vpop.permute.xlu0 %807
    %v811 = vsel %vm301, %v652, 0
    %813 = vmatprep.subr.mxu0 0.0
    %814 = vmatpush1.msra.mxu0 %v808
    %815 = vmatprep.subr.mxu0 0.0
    %816 = vmatpush1.msra.mxu0 0.0
    %817 = vmatprep.subr.mxu0 0.0
    %818 = vmatpush1.msra.mxu0 0.0
    %819 = vmatprep.subr.mxu0 0.0
    %820 = vmatpush1.msra.mxu0 0.0
    %821 = vmatprep.subr.mxu0 0.0
    %822 = vmatpush1.msra.mxu0 0.0
    %823 = vmatprep.subr.mxu0 0.0
    %824 = vmatpush1.msra.mxu0 0.0
    %825 = vmatprep.subr.mxu0 0.0
    %826 = vmatpush1.msra.mxu0 0.0
    %827 = vmatprep.subr.mxu0 0.0
    %828 = vmatpush1.msra.mxu0 0.0
    %829 = vmatprep.subr.mxu0 0.0
    %830 = vmatpush1.msra.mxu0 0.0
    %831 = vmatprep.subr.mxu0 0.0
    %832 = vmatpush1.msra.mxu0 0.0
    %833 = vmatprep.subr.mxu0 0.0
    %834 = vmatpush1.msra.mxu0 0.0
    %835 = vmatprep.subr.mxu0 0.0
    %836 = vmatpush1.msra.mxu0 0.0
    %837 = vmatprep.subr.mxu0 0.0
    %838 = vmatpush1.msra.mxu0 0.0
    %839 = vmatprep.subr.mxu0 0.0
    %840 = vmatpush1.msra.mxu0 0.0
    %841 = vmatprep.subr.mxu0 0.0
    %842 = vmatpush1.msra.mxu0 0.0
    %843 = vmatprep.subr.mxu0 0.0
    %844 = vmatpush1.msra.mxu0 0.0
    %845 = vmatprep.subr.mxu0 0.0
    %846 = vmatpush1.msra.mxu0 0.0
    %847 = vmatprep.subr.mxu0 0.0
    %848 = vmatpush1.msra.mxu0 0.0
    %849 = vmatprep.subr.mxu0 0.0
    %850 = vmatpush1.msra.mxu0 0.0
    %851 = vmatprep.subr.mxu0 0.0
    %852 = vmatpush1.msra.mxu0 0.0
    %853 = vmatprep.subr.mxu0 0.0
    %854 = vmatpush1.msra.mxu0 0.0
    %855 = vmatprep.subr.mxu0 0.0
    %856 = vmatpush1.msra.mxu0 0.0
    %857 = vmatprep.subr.mxu0 0.0
    %858 = vmatpush1.msra.mxu0 0.0
    %859 = vmatprep.subr.mxu0 0.0
    %860 = vmatpush1.msra.mxu0 0.0
    %861 = vmatprep.subr.mxu0 0.0
    %862 = vmatpush1.msra.mxu0 0.0
    %863 = vmatprep.subr.mxu0 0.0
    %864 = vmatpush1.msra.mxu0 0.0
    %865 = vmatprep.subr.mxu0 0.0
    %866 = vmatpush1.msra.mxu0 0.0
    %867 = vmatprep.subr.mxu0 0.0
    %868 = vmatpush1.msra.mxu0 0.0
    %869 = vmatprep.subr.mxu0 0.0
    %870 = vmatpush1.msra.mxu0 0.0
    %871 = vmatprep.subr.mxu0 0.0
    %872 = vmatpush1.msra.mxu0 0.0
    %873 = vmatprep.subr.mxu0 0.0
    %874 = vmatpush1.msra.mxu0 0.0
    %875 = vmatprep.subr.mxu0 0.0
    %876 = vmatpush1.msra.mxu0 0.0
    %877 = vmatprep.mubr.f32.mxu0 0.0
    %878 = vmatmul.mubr.f32.gmra.mrb[0].mxu0 %v811
    %v879 = vpop.f32.mrb[0].mxu0
    %v880 = vadd.f32 0.0, %v879
    %v881 = vpop.f32.mrb[0].mxu0
    %882 = vdwg.mxu0
    %883 = vrot.lane.b32.xlu0 %v295, 64
    %v884 = vpop.permute.xlu0 %883
    %v887 = vsel %vm301, %v654, 0
    %889 = vmatprep.subr.mxu0 0.0
    %890 = vmatpush1.msra.mxu0 %v884
    %891 = vmatprep.subr.mxu0 0.0
    %892 = vmatpush1.msra.mxu0 0.0
    %893 = vmatprep.subr.mxu0 0.0
    %894 = vmatpush1.msra.mxu0 0.0
    %895 = vmatprep.subr.mxu0 0.0
    %896 = vmatpush1.msra.mxu0 0.0
    %897 = vmatprep.subr.mxu0 0.0
    %898 = vmatpush1.msra.mxu0 0.0
    %899 = vmatprep.subr.mxu0 0.0
    %900 = vmatpush1.msra.mxu0 0.0
    %901 = vmatprep.subr.mxu0 0.0
    %902 = vmatpush1.msra.mxu0 0.0
    %903 = vmatprep.subr.mxu0 0.0
    %904 = vmatpush1.msra.mxu0 0.0
    %905 = vmatprep.subr.mxu0 0.0
    %906 = vmatpush1.msra.mxu0 0.0
    %907 = vmatprep.subr.mxu0 0.0
    %908 = vmatpush1.msra.mxu0 0.0
    %909 = vmatprep.subr.mxu0 0.0
    %910 = vmatpush1.msra.mxu0 0.0
    %911 = vmatprep.subr.mxu0 0.0
    %912 = vmatpush1.msra.mxu0 0.0
    %913 = vmatprep.subr.mxu0 0.0
    %914 = vmatpush1.msra.mxu0 0.0
    %915 = vmatprep.subr.mxu0 0.0
    %916 = vmatpush1.msra.mxu0 0.0
    %917 = vmatprep.subr.mxu0 0.0
    %918 = vmatpush1.msra.mxu0 0.0
    %919 = vmatprep.subr.mxu0 0.0
    %920 = vmatpush1.msra.mxu0 0.0
    %921 = vmatprep.subr.mxu0 0.0
    %922 = vmatpush1.msra.mxu0 0.0
    %923 = vmatprep.subr.mxu0 0.0
    %924 = vmatpush1.msra.mxu0 0.0
    %925 = vmatprep.subr.mxu0 0.0
    %926 = vmatpush1.msra.mxu0 0.0
    %927 = vmatprep.subr.mxu0 0.0
    %928 = vmatpush1.msra.mxu0 0.0
    %929 = vmatprep.subr.mxu0 0.0
    %930 = vmatpush1.msra.mxu0 0.0
    %931 = vmatprep.subr.mxu0 0.0
    %932 = vmatpush1.msra.mxu0 0.0
    %933 = vmatprep.subr.mxu0 0.0
    %934 = vmatpush1.msra.mxu0 0.0
    %935 = vmatprep.subr.mxu0 0.0
    %936 = vmatpush1.msra.mxu0 0.0
    %937 = vmatprep.subr.mxu0 0.0
    %938 = vmatpush1.msra.mxu0 0.0
    %939 = vmatprep.subr.mxu0 0.0
    %940 = vmatpush1.msra.mxu0 0.0
    %941 = vmatprep.subr.mxu0 0.0
    %942 = vmatpush1.msra.mxu0 0.0
    %943 = vmatprep.subr.mxu0 0.0
    %944 = vmatpush1.msra.mxu0 0.0
    %945 = vmatprep.subr.mxu0 0.0
    %946 = vmatpush1.msra.mxu0 0.0
    %947 = vmatprep.subr.mxu0 0.0
    %948 = vmatpush1.msra.mxu0 0.0
    %949 = vmatprep.subr.mxu0 0.0
    %950 = vmatpush1.msra.mxu0 0.0
    %951 = vmatprep.subr.mxu0 0.0
    %952 = vmatpush1.msra.mxu0 0.0
    %953 = vmatprep.mubr.f32.mxu0 0.0
    %954 = vmatmul.mubr.f32.gmra.mrb[0].mxu0 %v887
    %v955 = vpop.f32.mrb[0].mxu0
    %v956 = vadd.f32 0.0, %v955
    %v957 = vpop.f32.mrb[0].mxu0
    %958 = vdwg.mxu0
    %v959 = vld [vmem:[%s2] sm:$0xff]
    %960 = vrot.lane.b32.xlu0 %v280, 120
    %v961 = vpop.permute.xlu0 %960
    %962 = vrot.lane.b32.xlu0 %v280, 88
    %v963 = vpop.permute.xlu0 %962
    %v964 = vsel %vm301, %v961, 0
    %v966 = vsel %vm301, %v963, 0
    %968 = vmatprep.subr.mxu0 0.0
    %969 = vmatpush1.xpose.msra.mxu0 %v966
    %970 = vmatprep.subr.mxu0 0.0
    %971 = vmatpush1.xpose.msra.mxu0 0.0
    %972 = vmatprep.subr.mxu0 0.0
    %973 = vmatpush1.xpose.msra.mxu0 0.0
    %974 = vmatprep.subr.mxu0 0.0
    %975 = vmatpush1.xpose.msra.mxu0 0.0
    %976 = vmatprep.subr.mxu0 0.0
    %977 = vmatpush1.xpose.msra.mxu0 0.0
    %978 = vmatprep.subr.mxu0 0.0
    %979 = vmatpush1.xpose.msra.mxu0 0.0
    %980 = vmatprep.subr.mxu0 0.0
    %981 = vmatpush1.xpose.msra.mxu0 0.0
    %982 = vmatprep.subr.mxu0 0.0
    %983 = vmatpush1.xpose.msra.mxu0 0.0
    %984 = vmatprep.subr.mxu0 0.0
    %985 = vmatpush1.xpose.msra.mxu0 0.0
    %986 = vmatprep.subr.mxu0 0.0
    %987 = vmatpush1.xpose.msra.mxu0 0.0
    %988 = vmatprep.subr.mxu0 0.0
    %989 = vmatpush1.xpose.msra.mxu0 0.0
    %990 = vmatprep.subr.mxu0 0.0
    %991 = vmatpush1.xpose.msra.mxu0 0.0
    %992 = vmatprep.subr.mxu0 0.0
    %993 = vmatpush1.xpose.msra.mxu0 0.0
    %994 = vmatprep.subr.mxu0 0.0
    %995 = vmatpush1.xpose.msra.mxu0 0.0
    %996 = vmatprep.subr.mxu0 0.0
    %997 = vmatpush1.xpose.msra.mxu0 0.0
    %998 = vmatprep.subr.mxu0 0.0
    %999 = vmatpush1.xpose.msra.mxu0 0.0
    %1000 = vmatprep.subr.mxu0 0.0
    %1001 = vmatpush1.xpose.msra.mxu0 0.0
    %1002 = vmatprep.subr.mxu0 0.0
    %1003 = vmatpush1.xpose.msra.mxu0 0.0
    %1004 = vmatprep.subr.mxu0 0.0
    %1005 = vmatpush1.xpose.msra.mxu0 0.0
    %1006 = vmatprep.subr.mxu0 0.0
    %1007 = vmatpush1.xpose.msra.mxu0 0.0
    %1008 = vmatprep.subr.mxu0 0.0
    %1009 = vmatpush1.xpose.msra.mxu0 0.0
    %1010 = vmatprep.subr.mxu0 0.0
    %1011 = vmatpush1.xpose.msra.mxu0 0.0
    %1012 = vmatprep.subr.mxu0 0.0
    %1013 = vmatpush1.xpose.msra.mxu0 0.0
    %1014 = vmatprep.subr.mxu0 0.0
    %1015 = vmatpush1.xpose.msra.mxu0 0.0
    %1016 = vmatprep.subr.mxu0 0.0
    %1017 = vmatpush1.xpose.msra.mxu0 0.0
    %1018 = vmatprep.subr.mxu0 0.0
    %1019 = vmatpush1.xpose.msra.mxu0 0.0
    %1020 = vmatprep.subr.mxu0 0.0
    %1021 = vmatpush1.xpose.msra.mxu0 0.0
    %1022 = vmatprep.subr.mxu0 0.0
    %1023 = vmatpush1.xpose.msra.mxu0 0.0
    %1024 = vmatprep.subr.mxu0 0.0
    %1025 = vmatpush1.xpose.msra.mxu0 0.0
    %1026 = vmatprep.subr.mxu0 0.0
    %1027 = vmatpush1.xpose.msra.mxu0 0.0
    %1028 = vmatprep.subr.mxu0 0.0
    %1029 = vmatpush1.xpose.msra.mxu0 0.0
    %1030 = vmatprep.subr.mxu0 0.0
    %1031 = vmatpush1.xpose.msra.mxu0 0.0
    %1032 = vmatprep.mubr.f32.mxu0 0.0
    %1033 = vmatmul.mubr.f32.gmra.mrb[0].mxu0 %v964
    %v1034 = vpop.f32.mrb[0].mxu0
    %v1035 = vadd.f32 0.0, %v1034
    %v1036 = vpop.f32.mrb[0].mxu0
    %1037 = vdwg.mxu0
    %1038 = vrot.lane.b32.xlu0 %v285, 120
    %v1039 = vpop.permute.xlu0 %1038
    %1040 = vrot.lane.b32.xlu0 %v285, 88
    %v1041 = vpop.permute.xlu0 %1040
    %v1042 = vsel %vm301, %v1039, 0
    %v1044 = vsel %vm301, %v1041, 0
    %1046 = vmatprep.subr.mxu0 0.0
    %1047 = vmatpush1.xpose.msra.mxu0 %v1044
    %1048 = vmatprep.subr.mxu0 0.0
    %1049 = vmatpush1.xpose.msra.mxu0 0.0
    %1050 = vmatprep.subr.mxu0 0.0
    %1051 = vmatpush1.xpose.msra.mxu0 0.0
    %1052 = vmatprep.subr.mxu0 0.0
    %1053 = vmatpush1.xpose.msra.mxu0 0.0
    %1054 = vmatprep.subr.mxu0 0.0
    %1055 = vmatpush1.xpose.msra.mxu0 0.0
    %1056 = vmatprep.subr.mxu0 0.0
    %1057 = vmatpush1.xpose.msra.mxu0 0.0
    %1058 = vmatprep.subr.mxu0 0.0
    %1059 = vmatpush1.xpose.msra.mxu0 0.0
    %1060 = vmatprep.subr.mxu0 0.0
    %1061 = vmatpush1.xpose.msra.mxu0 0.0
    %1062 = vmatprep.subr.mxu0 0.0
    %1063 = vmatpush1.xpose.msra.mxu0 0.0
    %1064 = vmatprep.subr.mxu0 0.0
    %1065 = vmatpush1.xpose.msra.mxu0 0.0
    %1066 = vmatprep.subr.mxu0 0.0
    %1067 = vmatpush1.xpose.msra.mxu0 0.0
    %1068 = vmatprep.subr.mxu0 0.0
    %1069 = vmatpush1.xpose.msra.mxu0 0.0
    %1070 = vmatprep.subr.mxu0 0.0
    %1071 = vmatpush1.xpose.msra.mxu0 0.0
    %1072 = vmatprep.subr.mxu0 0.0
    %1073 = vmatpush1.xpose.msra.mxu0 0.0
    %1074 = vmatprep.subr.mxu0 0.0
    %1075 = vmatpush1.xpose.msra.mxu0 0.0
    %1076 = vmatprep.subr.mxu0 0.0
    %1077 = vmatpush1.xpose.msra.mxu0 0.0
    %1078 = vmatprep.subr.mxu0 0.0
    %1079 = vmatpush1.xpose.msra.mxu0 0.0
    %1080 = vmatprep.subr.mxu0 0.0
    %1081 = vmatpush1.xpose.msra.mxu0 0.0
    %1082 = vmatprep.subr.mxu0 0.0
    %1083 = vmatpush1.xpose.msra.mxu0 0.0
    %1084 = vmatprep.subr.mxu0 0.0
    %1085 = vmatpush1.xpose.msra.mxu0 0.0
    %1086 = vmatprep.subr.mxu0 0.0
    %1087 = vmatpush1.xpose.msra.mxu0 0.0
    %1088 = vmatprep.subr.mxu0 0.0
    %1089 = vmatpush1.xpose.msra.mxu0 0.0
    %1090 = vmatprep.subr.mxu0 0.0
    %1091 = vmatpush1.xpose.msra.mxu0 0.0
    %1092 = vmatprep.subr.mxu0 0.0
    %1093 = vmatpush1.xpose.msra.mxu0 0.0
    %1094 = vmatprep.subr.mxu0 0.0
    %1095 = vmatpush1.xpose.msra.mxu0 0.0
    %1096 = vmatprep.subr.mxu0 0.0
    %1097 = vmatpush1.xpose.msra.mxu0 0.0
    %1098 = vmatprep.subr.mxu0 0.0
    %1099 = vmatpush1.xpose.msra.mxu0 0.0
    %1100 = vmatprep.subr.mxu0 0.0
    %1101 = vmatpush1.xpose.msra.mxu0 0.0
    %1102 = vmatprep.subr.mxu0 0.0
    %1103 = vmatpush1.xpose.msra.mxu0 0.0
    %1104 = vmatprep.subr.mxu0 0.0
    %1105 = vmatpush1.xpose.msra.mxu0 0.0
    %1106 = vmatprep.subr.mxu0 0.0
    %1107 = vmatpush1.xpose.msra.mxu0 0.0
    %1108 = vmatprep.subr.mxu0 0.0
    %1109 = vmatpush1.xpose.msra.mxu0 0.0
    %1110 = vmatprep.mubr.f32.mxu0 0.0
    %1111 = vmatmul.mubr.f32.gmra.mrb[0].mxu0 %v1042
    %v1112 = vpop.f32.mrb[0].mxu0
    %v1113 = vadd.f32 0.0, %v1112
    %v1114 = vpop.f32.mrb[0].mxu0
    %1115 = vdwg.mxu0
    %1116 = vrot.lane.b32.xlu0 %v290, 120
    %v1117 = vpop.permute.xlu0 %1116
    %1118 = vrot.lane.b32.xlu0 %v290, 88
    %v1119 = vpop.permute.xlu0 %1118
    %v1120 = vsel %vm301, %v1117, 0
    %v1122 = vsel %vm301, %v1119, 0
    %1124 = vmatprep.subr.mxu0 0.0
    %1125 = vmatpush1.xpose.msra.mxu0 %v1122
    %1126 = vmatprep.subr.mxu0 0.0
    %1127 = vmatpush1.xpose.msra.mxu0 0.0
    %1128 = vmatprep.subr.mxu0 0.0
    %1129 = vmatpush1.xpose.msra.mxu0 0.0
    %1130 = vmatprep.subr.mxu0 0.0
    %1131 = vmatpush1.xpose.msra.mxu0 0.0
    %1132 = vmatprep.subr.mxu0 0.0
    %1133 = vmatpush1.xpose.msra.mxu0 0.0
    %1134 = vmatprep.subr.mxu0 0.0
    %1135 = vmatpush1.xpose.msra.mxu0 0.0
    %1136 = vmatprep.subr.mxu0 0.0
    %1137 = vmatpush1.xpose.msra.mxu0 0.0
    %1138 = vmatprep.subr.mxu0 0.0
    %1139 = vmatpush1.xpose.msra.mxu0 0.0
    %1140 = vmatprep.subr.mxu0 0.0
    %1141 = vmatpush1.xpose.msra.mxu0 0.0
    %1142 = vmatprep.subr.mxu0 0.0
    %1143 = vmatpush1.xpose.msra.mxu0 0.0
    %1144 = vmatprep.subr.mxu0 0.0
    %1145 = vmatpush1.xpose.msra.mxu0 0.0
    %1146 = vmatprep.subr.mxu0 0.0
    %1147 = vmatpush1.xpose.msra.mxu0 0.0
    %1148 = vmatprep.subr.mxu0 0.0
    %1149 = vmatpush1.xpose.msra.mxu0 0.0
    %1150 = vmatprep.subr.mxu0 0.0
    %1151 = vmatpush1.xpose.msra.mxu0 0.0
    %1152 = vmatprep.subr.mxu0 0.0
    %1153 = vmatpush1.xpose.msra.mxu0 0.0
    %1154 = vmatprep.subr.mxu0 0.0
    %1155 = vmatpush1.xpose.msra.mxu0 0.0
    %1156 = vmatprep.subr.mxu0 0.0
    %1157 = vmatpush1.xpose.msra.mxu0 0.0
    %1158 = vmatprep.subr.mxu0 0.0
    %1159 = vmatpush1.xpose.msra.mxu0 0.0
    %1160 = vmatprep.subr.mxu0 0.0
    %1161 = vmatpush1.xpose.msra.mxu0 0.0
    %1162 = vmatprep.subr.mxu0 0.0
    %1163 = vmatpush1.xpose.msra.mxu0 0.0
    %1164 = vmatprep.subr.mxu0 0.0
    %1165 = vmatpush1.xpose.msra.mxu0 0.0
    %1166 = vmatprep.subr.mxu0 0.0
    %1167 = vmatpush1.xpose.msra.mxu0 0.0
    %1168 = vmatprep.subr.mxu0 0.0
    %1169 = vmatpush1.xpose.msra.mxu0 0.0
    %1170 = vmatprep.subr.mxu0 0.0
    %1171 = vmatpush1.xpose.msra.mxu0 0.0
    %1172 = vmatprep.subr.mxu0 0.0
    %1173 = vmatpush1.xpose.msra.mxu0 0.0
    %1174 = vmatprep.subr.mxu0 0.0
    %1175 = vmatpush1.xpose.msra.mxu0 0.0
    %1176 = vmatprep.subr.mxu0 0.0
    %1177 = vmatpush1.xpose.msra.mxu0 0.0
    %1178 = vmatprep.subr.mxu0 0.0
    %1179 = vmatpush1.xpose.msra.mxu0 0.0
    %1180 = vmatprep.subr.mxu0 0.0
    %1181 = vmatpush1.xpose.msra.mxu0 0.0
    %1182 = vmatprep.subr.mxu0 0.0
    %1183 = vmatpush1.xpose.msra.mxu0 0.0
    %1184 = vmatprep.subr.mxu0 0.0
    %1185 = vmatpush1.xpose.msra.mxu0 0.0
    %1186 = vmatprep.subr.mxu0 0.0
    %1187 = vmatpush1.xpose.msra.mxu0 0.0
    %1188 = vmatprep.mubr.f32.mxu0 0.0
    %1189 = vmatmul.mubr.f32.gmra.mrb[0].mxu0 %v1120
    %v1190 = vpop.f32.mrb[0].mxu0
    %v1191 = vadd.f32 0.0, %v1190
    %v1192 = vpop.f32.mrb[0].mxu0
    %1193 = vdwg.mxu0
    %1194 = vrot.lane.b32.xlu0 %v295, 120
    %v1195 = vpop.permute.xlu0 %1194
    %1196 = vrot.lane.b32.xlu0 %v295, 88
    %v1197 = vpop.permute.xlu0 %1196
    %v1198 = vsel %vm301, %v1195, 0
    %v1200 = vsel %vm301, %v1197, 0
    %1202 = vmatprep.subr.mxu0 0.0
    %1203 = vmatpush1.xpose.msra.mxu0 %v1200
    %1204 = vmatprep.subr.mxu0 0.0
    %1205 = vmatpush1.xpose.msra.mxu0 0.0
    %1206 = vmatprep.subr.mxu0 0.0
    %1207 = vmatpush1.xpose.msra.mxu0 0.0
    %1208 = vmatprep.subr.mxu0 0.0
    %1209 = vmatpush1.xpose.msra.mxu0 0.0
    %1210 = vmatprep.subr.mxu0 0.0
    %1211 = vmatpush1.xpose.msra.mxu0 0.0
    %1212 = vmatprep.subr.mxu0 0.0
    %1213 = vmatpush1.xpose.msra.mxu0 0.0
    %1214 = vmatprep.subr.mxu0 0.0
    %1215 = vmatpush1.xpose.msra.mxu0 0.0
    %1216 = vmatprep.subr.mxu0 0.0
    %1217 = vmatpush1.xpose.msra.mxu0 0.0
    %1218 = vmatprep.subr.mxu0 0.0
    %1219 = vmatpush1.xpose.msra.mxu0 0.0
    %1220 = vmatprep.subr.mxu0 0.0
    %1221 = vmatpush1.xpose.msra.mxu0 0.0
    %1222 = vmatprep.subr.mxu0 0.0
    %1223 = vmatpush1.xpose.msra.mxu0 0.0
    %1224 = vmatprep.subr.mxu0 0.0
    %1225 = vmatpush1.xpose.msra.mxu0 0.0
    %1226 = vmatprep.subr.mxu0 0.0
    %1227 = vmatpush1.xpose.msra.mxu0 0.0
    %1228 = vmatprep.subr.mxu0 0.0
    %1229 = vmatpush1.xpose.msra.mxu0 0.0
    %1230 = vmatprep.subr.mxu0 0.0
    %1231 = vmatpush1.xpose.msra.mxu0 0.0
    %1232 = vmatprep.subr.mxu0 0.0
    %1233 = vmatpush1.xpose.msra.mxu0 0.0
    %1234 = vmatprep.subr.mxu0 0.0
    %1235 = vmatpush1.xpose.msra.mxu0 0.0
    %1236 = vmatprep.subr.mxu0 0.0
    %1237 = vmatpush1.xpose.msra.mxu0 0.0
    %1238 = vmatprep.subr.mxu0 0.0
    %1239 = vmatpush1.xpose.msra.mxu0 0.0
    %1240 = vmatprep.subr.mxu0 0.0
    %1241 = vmatpush1.xpose.msra.mxu0 0.0
    %1242 = vmatprep.subr.mxu0 0.0
    %1243 = vmatpush1.xpose.msra.mxu0 0.0
    %1244 = vmatprep.subr.mxu0 0.0
    %1245 = vmatpush1.xpose.msra.mxu0 0.0
    %1246 = vmatprep.subr.mxu0 0.0
    %1247 = vmatpush1.xpose.msra.mxu0 0.0
    %1248 = vmatprep.subr.mxu0 0.0
    %1249 = vmatpush1.xpose.msra.mxu0 0.0
    %1250 = vmatprep.subr.mxu0 0.0
    %1251 = vmatpush1.xpose.msra.mxu0 0.0
    %1252 = vmatprep.subr.mxu0 0.0
    %1253 = vmatpush1.xpose.msra.mxu0 0.0
    %1254 = vmatprep.subr.mxu0 0.0
    %1255 = vmatpush1.xpose.msra.mxu0 0.0
    %1256 = vmatprep.subr.mxu0 0.0
    %1257 = vmatpush1.xpose.msra.mxu0 0.0
    %1258 = vmatprep.subr.mxu0 0.0
    %1259 = vmatpush1.xpose.msra.mxu0 0.0
    %1260 = vmatprep.subr.mxu0 0.0
    %1261 = vmatpush1.xpose.msra.mxu0 0.0
    %1262 = vmatprep.subr.mxu0 0.0
    %1263 = vmatpush1.xpose.msra.mxu0 0.0
    %1264 = vmatprep.subr.mxu0 0.0
    %1265 = vmatpush1.xpose.msra.mxu0 0.0
    %1266 = vmatprep.mubr.f32.mxu0 0.0
    %1267 = vmatmul.mubr.f32.gmra.mrb[0].mxu0 %v1198
    %v1268 = vpop.f32.mrb[0].mxu0
    %v1269 = vadd.f32 0.0, %v1268
    %v1270 = vpop.f32.mrb[0].mxu0
    %1271 = vdwg.mxu0
    %v1272 = vmul.f32 %v1035, 0.35355338
    %v1273 = vmul.f32 %v1113, 0.35355338
    %v1274 = vmul.f32 %v1191, 0.35355338
    %v1275 = vmul.f32 %v1269, 0.35355338
    %v1276 = vsel %vm301, %v1272, -inf
    %1277 = vmax.xlane.f32.xlu0 %v1276
    %v1278 = vpop.xlane.xlu0 %1277
    %v1279 = vsel %vm301, %v1273, -inf
    %1280 = vmax.xlane.f32.xlu0 %v1279
    %v1281 = vpop.xlane.xlu0 %1280
    %v1282 = vsel %vm301, %v1274, -inf
    %1283 = vmax.xlane.f32.xlu0 %v1282
    %v1284 = vpop.xlane.xlu0 %1283
    %v1285 = vsel %vm301, %v1275, -inf
    %1286 = vmax.xlane.f32.xlu0 %v1285
    %v1287 = vpop.xlane.xlu0 %1286
    %v1288 = vsub.f32 %v1272, %v1278
    %v1289 = vsub.f32 %v1273, %v1281
    %v1290 = vsub.f32 %v1274, %v1284
    %v1291 = vsub.f32 %v1275, %v1287
    %v1292 = vmul.f32 %v1288, 1.442695
    %v1293 = vpow.pop %v1292
    %v1294 = vmul.f32 %v1289, 1.442695
    %v1295 = vpow.pop %v1294
    %v1296 = vmul.f32 %v1290, 1.442695
    %v1297 = vpow.pop %v1296
    %v1298 = vmul.f32 %v1291, 1.442695
    %v1299 = vpow.pop %v1298
    %v1300 = vsel %vm301, %v1293, 0.0
    %1301 = vadd.xlane.f32.xlu0 %v1300
    %v1302 = vpop.xlane.xlu0 %1301
    %v1303 = vsel %vm301, %v1295, 0.0
    %1304 = vadd.xlane.f32.xlu0 %v1303
    %v1305 = vpop.xlane.xlu0 %1304
    %v1306 = vsel %vm301, %v1297, 0.0
    %1307 = vadd.xlane.f32.xlu0 %v1306
    %v1308 = vpop.xlane.xlu0 %1307
    %v1309 = vsel %vm301, %v1299, 0.0
    %1310 = vadd.xlane.f32.xlu0 %v1309
    %v1311 = vpop.xlane.xlu0 %1310
    %v1312 = vrcp.pop %v1302
    %v1313 = vmul.f32 %v1293, %v1312
    %v1314 = vrcp.pop %v1305
    %v1315 = vmul.f32 %v1295, %v1314
    %v1316 = vrcp.pop %v1308
    %v1317 = vmul.f32 %v1297, %v1316
    %v1318 = vrcp.pop %v1311
    %v1319 = vmul.f32 %v1299, %v1318
    %1320 = vrot.lane.b32.xlu0 %v280, 56
    %v1321 = vpop.permute.xlu0 %1320
    %v1324 = vsel %vm301, %v1313, 0
    %1326 = vmatprep.subr.mxu0 0.0
    %1327 = vmatpush1.msra.mxu0 %v1321
    %1328 = vmatprep.subr.mxu0 0.0
    %1329 = vmatpush1.msra.mxu0 0.0
    %1330 = vmatprep.subr.mxu0 0.0
    %1331 = vmatpush1.msra.mxu0 0.0
    %1332 = vmatprep.subr.mxu0 0.0
    %1333 = vmatpush1.msra.mxu0 0.0
    %1334 = vmatprep.subr.mxu0 0.0
    %1335 = vmatpush1.msra.mxu0 0.0
    %1336 = vmatprep.subr.mxu0 0.0
    %1337 = vmatpush1.msra.mxu0 0.0
    %1338 = vmatprep.subr.mxu0 0.0
    %1339 = vmatpush1.msra.mxu0 0.0
    %1340 = vmatprep.subr.mxu0 0.0
    %1341 = vmatpush1.msra.mxu0 0.0
    %1342 = vmatprep.subr.mxu0 0.0
    %1343 = vmatpush1.msra.mxu0 0.0
    %1344 = vmatprep.subr.mxu0 0.0
    %1345 = vmatpush1.msra.mxu0 0.0
    %1346 = vmatprep.subr.mxu0 0.0
    %1347 = vmatpush1.msra.mxu0 0.0
    %1348 = vmatprep.subr.mxu0 0.0
    %1349 = vmatpush1.msra.mxu0 0.0
    %1350 = vmatprep.subr.mxu0 0.0
    %1351 = vmatpush1.msra.mxu0 0.0
    %1352 = vmatprep.subr.mxu0 0.0
    %1353 = vmatpush1.msra.mxu0 0.0
    %1354 = vmatprep.subr.mxu0 0.0
    %1355 = vmatpush1.msra.mxu0 0.0
    %1356 = vmatprep.subr.mxu0 0.0
    %1357 = vmatpush1.msra.mxu0 0.0
    %1358 = vmatprep.subr.mxu0 0.0
    %1359 = vmatpush1.msra.mxu0 0.0
    %1360 = vmatprep.subr.mxu0 0.0
    %1361 = vmatpush1.msra.mxu0 0.0
    %1362 = vmatprep.subr.mxu0 0.0
    %1363 = vmatpush1.msra.mxu0 0.0
    %1364 = vmatprep.subr.mxu0 0.0
    %1365 = vmatpush1.msra.mxu0 0.0
    %1366 = vmatprep.subr.mxu0 0.0
    %1367 = vmatpush1.msra.mxu0 0.0
    %1368 = vmatprep.subr.mxu0 0.0
    %1369 = vmatpush1.msra.mxu0 0.0
    %1370 = vmatprep.subr.mxu0 0.0
    %1371 = vmatpush1.msra.mxu0 0.0
    %1372 = vmatprep.subr.mxu0 0.0
    %1373 = vmatpush1.msra.mxu0 0.0
    %1374 = vmatprep.subr.mxu0 0.0
    %1375 = vmatpush1.msra.mxu0 0.0
    %1376 = vmatprep.subr.mxu0 0.0
    %1377 = vmatpush1.msra.mxu0 0.0
    %1378 = vmatprep.subr.mxu0 0.0
    %1379 = vmatpush1.msra.mxu0 0.0
    %1380 = vmatprep.subr.mxu0 0.0
    %1381 = vmatpush1.msra.mxu0 0.0
    %1382 = vmatprep.subr.mxu0 0.0
    %1383 = vmatpush1.msra.mxu0 0.0
    %1384 = vmatprep.subr.mxu0 0.0
    %1385 = vmatpush1.msra.mxu0 0.0
    %1386 = vmatprep.subr.mxu0 0.0
    %1387 = vmatpush1.msra.mxu0 0.0
    %1388 = vmatprep.subr.mxu0 0.0
    %1389 = vmatpush1.msra.mxu0 0.0
    %1390 = vmatprep.mubr.f32.mxu0 0.0
    %1391 = vmatmul.mubr.f32.gmra.mrb[0].mxu0 %v1324
    %v1392 = vpop.f32.mrb[0].mxu0
    %v1393 = vadd.f32 0.0, %v1392
    %v1394 = vpop.f32.mrb[0].mxu0
    %1395 = vdwg.mxu0
    %1396 = vrot.lane.b32.xlu0 %v285, 56
    %v1397 = vpop.permute.xlu0 %1396
    %v1400 = vsel %vm301, %v1315, 0
    %1402 = vmatprep.subr.mxu0 0.0
    %1403 = vmatpush1.msra.mxu0 %v1397
    %1404 = vmatprep.subr.mxu0 0.0
    %1405 = vmatpush1.msra.mxu0 0.0
    %1406 = vmatprep.subr.mxu0 0.0
    %1407 = vmatpush1.msra.mxu0 0.0
    %1408 = vmatprep.subr.mxu0 0.0
    %1409 = vmatpush1.msra.mxu0 0.0
    %1410 = vmatprep.subr.mxu0 0.0
    %1411 = vmatpush1.msra.mxu0 0.0
    %1412 = vmatprep.subr.mxu0 0.0
    %1413 = vmatpush1.msra.mxu0 0.0
    %1414 = vmatprep.subr.mxu0 0.0
    %1415 = vmatpush1.msra.mxu0 0.0
    %1416 = vmatprep.subr.mxu0 0.0
    %1417 = vmatpush1.msra.mxu0 0.0
    %1418 = vmatprep.subr.mxu0 0.0
    %1419 = vmatpush1.msra.mxu0 0.0
    %1420 = vmatprep.subr.mxu0 0.0
    %1421 = vmatpush1.msra.mxu0 0.0
    %1422 = vmatprep.subr.mxu0 0.0
    %1423 = vmatpush1.msra.mxu0 0.0
    %1424 = vmatprep.subr.mxu0 0.0
    %1425 = vmatpush1.msra.mxu0 0.0
    %1426 = vmatprep.subr.mxu0 0.0
    %1427 = vmatpush1.msra.mxu0 0.0
    %1428 = vmatprep.subr.mxu0 0.0
    %1429 = vmatpush1.msra.mxu0 0.0
    %1430 = vmatprep.subr.mxu0 0.0
    %1431 = vmatpush1.msra.mxu0 0.0
    %1432 = vmatprep.subr.mxu0 0.0
    %1433 = vmatpush1.msra.mxu0 0.0
    %1434 = vmatprep.subr.mxu0 0.0
    %1435 = vmatpush1.msra.mxu0 0.0
    %1436 = vmatprep.subr.mxu0 0.0
    %1437 = vmatpush1.msra.mxu0 0.0
    %1438 = vmatprep.subr.mxu0 0.0
    %1439 = vmatpush1.msra.mxu0 0.0
    %1440 = vmatprep.subr.mxu0 0.0
    %1441 = vmatpush1.msra.mxu0 0.0
    %1442 = vmatprep.subr.mxu0 0.0
    %1443 = vmatpush1.msra.mxu0 0.0
    %1444 = vmatprep.subr.mxu0 0.0
    %1445 = vmatpush1.msra.mxu0 0.0
    %1446 = vmatprep.subr.mxu0 0.0
    %1447 = vmatpush1.msra.mxu0 0.0
    %1448 = vmatprep.subr.mxu0 0.0
    %1449 = vmatpush1.msra.mxu0 0.0
    %1450 = vmatprep.subr.mxu0 0.0
    %1451 = vmatpush1.msra.mxu0 0.0
    %1452 = vmatprep.subr.mxu0 0.0
    %1453 = vmatpush1.msra.mxu0 0.0
    %1454 = vmatprep.subr.mxu0 0.0
    %1455 = vmatpush1.msra.mxu0 0.0
    %1456 = vmatprep.subr.mxu0 0.0
    %1457 = vmatpush1.msra.mxu0 0.0
    %1458 = vmatprep.subr.mxu0 0.0
    %1459 = vmatpush1.msra.mxu0 0.0
    %1460 = vmatprep.subr.mxu0 0.0
    %1461 = vmatpush1.msra.mxu0 0.0
    %1462 = vmatprep.subr.mxu0 0.0
    %1463 = vmatpush1.msra.mxu0 0.0
    %1464 = vmatprep.subr.mxu0 0.0
    %1465 = vmatpush1.msra.mxu0 0.0
    %1466 = vmatprep.mubr.f32.mxu0 0.0
    %1467 = vmatmul.mubr.f32.gmra.mrb[0].mxu0 %v1400
    %v1468 = vpop.f32.mrb[0].mxu0
    %v1469 = vadd.f32 0.0, %v1468
    %v1470 = vpop.f32.mrb[0].mxu0
    %1471 = vdwg.mxu0
    %1472 = vrot.lane.b32.xlu0 %v290, 56
    %v1473 = vpop.permute.xlu0 %1472
    %v1476 = vsel %vm301, %v1317, 0
    %1478 = vmatprep.subr.mxu0 0.0
    %1479 = vmatpush1.msra.mxu0 %v1473
    %1480 = vmatprep.subr.mxu0 0.0
    %1481 = vmatpush1.msra.mxu0 0.0
    %1482 = vmatprep.subr.mxu0 0.0
    %1483 = vmatpush1.msra.mxu0 0.0
    %1484 = vmatprep.subr.mxu0 0.0
    %1485 = vmatpush1.msra.mxu0 0.0
    %1486 = vmatprep.subr.mxu0 0.0
    %1487 = vmatpush1.msra.mxu0 0.0
    %1488 = vmatprep.subr.mxu0 0.0
    %1489 = vmatpush1.msra.mxu0 0.0
    %1490 = vmatprep.subr.mxu0 0.0
    %1491 = vmatpush1.msra.mxu0 0.0
    %1492 = vmatprep.subr.mxu0 0.0
    %1493 = vmatpush1.msra.mxu0 0.0
    %1494 = vmatprep.subr.mxu0 0.0
    %1495 = vmatpush1.msra.mxu0 0.0
    %1496 = vmatprep.subr.mxu0 0.0
    %1497 = vmatpush1.msra.mxu0 0.0
    %1498 = vmatprep.subr.mxu0 0.0
    %1499 = vmatpush1.msra.mxu0 0.0
    %1500 = vmatprep.subr.mxu0 0.0
    %1501 = vmatpush1.msra.mxu0 0.0
    %1502 = vmatprep.subr.mxu0 0.0
    %1503 = vmatpush1.msra.mxu0 0.0
    %1504 = vmatprep.subr.mxu0 0.0
    %1505 = vmatpush1.msra.mxu0 0.0
    %1506 = vmatprep.subr.mxu0 0.0
    %1507 = vmatpush1.msra.mxu0 0.0
    %1508 = vmatprep.subr.mxu0 0.0
    %1509 = vmatpush1.msra.mxu0 0.0
    %1510 = vmatprep.subr.mxu0 0.0
    %1511 = vmatpush1.msra.mxu0 0.0
    %1512 = vmatprep.subr.mxu0 0.0
    %1513 = vmatpush1.msra.mxu0 0.0
    %1514 = vmatprep.subr.mxu0 0.0
    %1515 = vmatpush1.msra.mxu0 0.0
    %1516 = vmatprep.subr.mxu0 0.0
    %1517 = vmatpush1.msra.mxu0 0.0
    %1518 = vmatprep.subr.mxu0 0.0
    %1519 = vmatpush1.msra.mxu0 0.0
    %1520 = vmatprep.subr.mxu0 0.0
    %1521 = vmatpush1.msra.mxu0 0.0
    %1522 = vmatprep.subr.mxu0 0.0
    %1523 = vmatpush1.msra.mxu0 0.0
    %1524 = vmatprep.subr.mxu0 0.0
    %1525 = vmatpush1.msra.mxu0 0.0
    %1526 = vmatprep.subr.mxu0 0.0
    %1527 = vmatpush1.msra.mxu0 0.0
    %1528 = vmatprep.subr.mxu0 0.0
    %1529 = vmatpush1.msra.mxu0 0.0
    %1530 = vmatprep.subr.mxu0 0.0
    %1531 = vmatpush1.msra.mxu0 0.0
    %1532 = vmatprep.subr.mxu0 0.0
    %1533 = vmatpush1.msra.mxu0 0.0
    %1534 = vmatprep.subr.mxu0 0.0
    %1535 = vmatpush1.msra.mxu0 0.0
    %1536 = vmatprep.subr.mxu0 0.0
    %1537 = vmatpush1.msra.mxu0 0.0
    %1538 = vmatprep.subr.mxu0 0.0
    %1539 = vmatpush1.msra.mxu0 0.0
    %1540 = vmatprep.subr.mxu0 0.0
    %1541 = vmatpush1.msra.mxu0 0.0
    %1542 = vmatprep.mubr.f32.mxu0 0.0
    %1543 = vmatmul.mubr.f32.gmra.mrb[0].mxu0 %v1476
    %v1544 = vpop.f32.mrb[0].mxu0
    %v1545 = vadd.f32 0.0, %v1544
    %v1546 = vpop.f32.mrb[0].mxu0
    %1547 = vdwg.mxu0
    %1548 = vrot.lane.b32.xlu0 %v295, 56
    %v1549 = vpop.permute.xlu0 %1548
    %v1552 = vsel %vm301, %v1319, 0
    %1554 = vmatprep.subr.mxu0 0.0
    %1555 = vmatpush1.msra.mxu0 %v1549
    %1556 = vmatprep.subr.mxu0 0.0
    %1557 = vmatpush1.msra.mxu0 0.0
    %1558 = vmatprep.subr.mxu0 0.0
    %1559 = vmatpush1.msra.mxu0 0.0
    %1560 = vmatprep.subr.mxu0 0.0
    %1561 = vmatpush1.msra.mxu0 0.0
    %1562 = vmatprep.subr.mxu0 0.0
    %1563 = vmatpush1.msra.mxu0 0.0
    %1564 = vmatprep.subr.mxu0 0.0
    %1565 = vmatpush1.msra.mxu0 0.0
    %1566 = vmatprep.subr.mxu0 0.0
    %1567 = vmatpush1.msra.mxu0 0.0
    %1568 = vmatprep.subr.mxu0 0.0
    %1569 = vmatpush1.msra.mxu0 0.0
    %1570 = vmatprep.subr.mxu0 0.0
    %1571 = vmatpush1.msra.mxu0 0.0
    %1572 = vmatprep.subr.mxu0 0.0
    %1573 = vmatpush1.msra.mxu0 0.0
    %1574 = vmatprep.subr.mxu0 0.0
    %1575 = vmatpush1.msra.mxu0 0.0
    %1576 = vmatprep.subr.mxu0 0.0
    %1577 = vmatpush1.msra.mxu0 0.0
    %1578 = vmatprep.subr.mxu0 0.0
    %1579 = vmatpush1.msra.mxu0 0.0
    %1580 = vmatprep.subr.mxu0 0.0
    %1581 = vmatpush1.msra.mxu0 0.0
    %1582 = vmatprep.subr.mxu0 0.0
    %1583 = vmatpush1.msra.mxu0 0.0
    %1584 = vmatprep.subr.mxu0 0.0
    %1585 = vmatpush1.msra.mxu0 0.0
    %1586 = vmatprep.subr.mxu0 0.0
    %1587 = vmatpush1.msra.mxu0 0.0
    %1588 = vmatprep.subr.mxu0 0.0
    %1589 = vmatpush1.msra.mxu0 0.0
    %1590 = vmatprep.subr.mxu0 0.0
    %1591 = vmatpush1.msra.mxu0 0.0
    %1592 = vmatprep.subr.mxu0 0.0
    %1593 = vmatpush1.msra.mxu0 0.0
    %1594 = vmatprep.subr.mxu0 0.0
    %1595 = vmatpush1.msra.mxu0 0.0
    %1596 = vmatprep.subr.mxu0 0.0
    %1597 = vmatpush1.msra.mxu0 0.0
    %1598 = vmatprep.subr.mxu0 0.0
    %1599 = vmatpush1.msra.mxu0 0.0
    %1600 = vmatprep.subr.mxu0 0.0
    %1601 = vmatpush1.msra.mxu0 0.0
    %1602 = vmatprep.subr.mxu0 0.0
    %1603 = vmatpush1.msra.mxu0 0.0
    %1604 = vmatprep.subr.mxu0 0.0
    %1605 = vmatpush1.msra.mxu0 0.0
    %1606 = vmatprep.subr.mxu0 0.0
    %1607 = vmatpush1.msra.mxu0 0.0
    %1608 = vmatprep.subr.mxu0 0.0
    %1609 = vmatpush1.msra.mxu0 0.0
    %1610 = vmatprep.subr.mxu0 0.0
    %1611 = vmatpush1.msra.mxu0 0.0
    %1612 = vmatprep.subr.mxu0 0.0
    %1613 = vmatpush1.msra.mxu0 0.0
    %1614 = vmatprep.subr.mxu0 0.0
    %1615 = vmatpush1.msra.mxu0 0.0
    %1616 = vmatprep.subr.mxu0 0.0
    %1617 = vmatpush1.msra.mxu0 0.0
    %1618 = vmatprep.mubr.f32.mxu0 0.0
    %1619 = vmatmul.mubr.f32.gmra.mrb[0].mxu0 %v1552
    %v1620 = vpop.f32.mrb[0].mxu0
    %v1621 = vadd.f32 0.0, %v1620
    %v1622 = vpop.f32.mrb[0].mxu0
    %1623 = vdwg.mxu0
    %v1624 = vld [vmem:[%s2 + $0x8] sm:$0xff]
    %v1626 = vsel %vm301, %v1393, 0
    %v1629 = vsel %vm301, %v1469, 0
    %v1632 = vsel %vm301, %v1545, 0
    %v1635 = vsel %vm301, %v1621, 0
    %1637 = vmatprep.subr.mxu0 0.0
    %1638 = vmatpush1.msra.mxu0 %v1624
    %1639 = vmatprep.subr.mxu0 0.0
    %1640 = vmatpush1.msra.mxu0 0.0
    %1641 = vmatprep.subr.mxu0 0.0
    %1642 = vmatpush1.msra.mxu0 0.0
    %1643 = vmatprep.subr.mxu0 0.0
    %1644 = vmatpush1.msra.mxu0 0.0
    %1645 = vmatprep.subr.mxu0 0.0
    %1646 = vmatpush1.msra.mxu0 0.0
    %1647 = vmatprep.subr.mxu0 0.0
    %1648 = vmatpush1.msra.mxu0 0.0
    %1649 = vmatprep.subr.mxu0 0.0
    %1650 = vmatpush1.msra.mxu0 0.0
    %1651 = vmatprep.subr.mxu0 0.0
    %1652 = vmatpush1.msra.mxu0 0.0
    %1653 = vmatprep.subr.mxu0 0.0
    %1654 = vmatpush1.msra.mxu0 0.0
    %1655 = vmatprep.subr.mxu0 0.0
    %1656 = vmatpush1.msra.mxu0 0.0
    %1657 = vmatprep.subr.mxu0 0.0
    %1658 = vmatpush1.msra.mxu0 0.0
    %1659 = vmatprep.subr.mxu0 0.0
    %1660 = vmatpush1.msra.mxu0 0.0
    %1661 = vmatprep.subr.mxu0 0.0
    %1662 = vmatpush1.msra.mxu0 0.0
    %1663 = vmatprep.subr.mxu0 0.0
    %1664 = vmatpush1.msra.mxu0 0.0
    %1665 = vmatprep.subr.mxu0 0.0
    %1666 = vmatpush1.msra.mxu0 0.0
    %1667 = vmatprep.subr.mxu0 0.0
    %1668 = vmatpush1.msra.mxu0 0.0
    %1669 = vmatprep.subr.mxu0 0.0
    %1670 = vmatpush1.msra.mxu0 0.0
    %1671 = vmatprep.subr.mxu0 0.0
    %1672 = vmatpush1.msra.mxu0 0.0
    %1673 = vmatprep.subr.mxu0 0.0
    %1674 = vmatpush1.msra.mxu0 0.0
    %1675 = vmatprep.subr.mxu0 0.0
    %1676 = vmatpush1.msra.mxu0 0.0
    %1677 = vmatprep.subr.mxu0 0.0
    %1678 = vmatpush1.msra.mxu0 0.0
    %1679 = vmatprep.subr.mxu0 0.0
    %1680 = vmatpush1.msra.mxu0 0.0
    %1681 = vmatprep.subr.mxu0 0.0
    %1682 = vmatpush1.msra.mxu0 0.0
    %1683 = vmatprep.subr.mxu0 0.0
    %1684 = vmatpush1.msra.mxu0 0.0
    %1685 = vmatprep.subr.mxu0 0.0
    %1686 = vmatpush1.msra.mxu0 0.0
    %1687 = vmatprep.subr.mxu0 0.0
    %1688 = vmatpush1.msra.mxu0 0.0
    %1689 = vmatprep.subr.mxu0 0.0
    %1690 = vmatpush1.msra.mxu0 0.0
    %1691 = vmatprep.subr.mxu0 0.0
    %1692 = vmatpush1.msra.mxu0 0.0
    %1693 = vmatprep.subr.mxu0 0.0
    %1694 = vmatpush1.msra.mxu0 0.0
    %1695 = vmatprep.subr.mxu0 0.0
    %1696 = vmatpush1.msra.mxu0 0.0
    %1697 = vmatprep.subr.mxu0 0.0
    %1698 = vmatpush1.msra.mxu0 0.0
    %1699 = vmatprep.subr.mxu0 0.0
    %1700 = vmatpush1.msra.mxu0 0.0
    %1701 = vmatprep.mubr.f32.mxu0 0.0
    %1702 = vmatmul.mubr.f32.gmra.mrb[0].mxu0 %v1626
    %v1703 = vpop.f32.mrb[0].mxu0
    %v1704 = vadd.f32 0.0, %v1703
    %v1705 = vpop.f32.mrb[0].mxu0
    %1706 = vmatprep.mubr.f32.mxu0 0.0
    %1707 = vmatmul.mubr.f32.gmra.mrb[0].mxu0 %v1629
    %v1708 = vpop.f32.mrb[0].mxu0
    %v1709 = vadd.f32 0.0, %v1708
    %v1710 = vpop.f32.mrb[0].mxu0
    %1711 = vmatprep.mubr.f32.mxu0 0.0
    %1712 = vmatmul.mubr.f32.gmra.mrb[0].mxu0 %v1632
    %v1713 = vpop.f32.mrb[0].mxu0
    %v1714 = vadd.f32 0.0, %v1713
    %v1715 = vpop.f32.mrb[0].mxu0
    %1716 = vmatprep.mubr.f32.mxu0 0.0
    %1717 = vmatmul.mubr.f32.gmra.mrb[0].mxu0 %v1635
    %v1718 = vpop.f32.mrb[0].mxu0
    %v1719 = vadd.f32 0.0, %v1718
    %v1720 = vpop.f32.mrb[0].mxu0
    %1721 = vdwg.mxu0
    %v1723 = vsel %vm301, %v728, 0
    %v1726 = vsel %vm301, %v804, 0
    %v1729 = vsel %vm301, %v880, 0
    %v1732 = vsel %vm301, %v956, 0
    %1734 = vmatprep.subr.mxu0 0.0
    %1735 = vmatpush1.msra.mxu0 %v959
    %1736 = vmatprep.subr.mxu0 0.0
    %1737 = vmatpush1.msra.mxu0 0.0
    %1738 = vmatprep.subr.mxu0 0.0
    %1739 = vmatpush1.msra.mxu0 0.0
    %1740 = vmatprep.subr.mxu0 0.0
    %1741 = vmatpush1.msra.mxu0 0.0
    %1742 = vmatprep.subr.mxu0 0.0
    %1743 = vmatpush1.msra.mxu0 0.0
    %1744 = vmatprep.subr.mxu0 0.0
    %1745 = vmatpush1.msra.mxu0 0.0
    %1746 = vmatprep.subr.mxu0 0.0
    %1747 = vmatpush1.msra.mxu0 0.0
    %1748 = vmatprep.subr.mxu0 0.0
    %1749 = vmatpush1.msra.mxu0 0.0
    %1750 = vmatprep.subr.mxu0 0.0
    %1751 = vmatpush1.msra.mxu0 0.0
    %1752 = vmatprep.subr.mxu0 0.0
    %1753 = vmatpush1.msra.mxu0 0.0
    %1754 = vmatprep.subr.mxu0 0.0
    %1755 = vmatpush1.msra.mxu0 0.0
    %1756 = vmatprep.subr.mxu0 0.0
    %1757 = vmatpush1.msra.mxu0 0.0
    %1758 = vmatprep.subr.mxu0 0.0
    %1759 = vmatpush1.msra.mxu0 0.0
    %1760 = vmatprep.subr.mxu0 0.0
    %1761 = vmatpush1.msra.mxu0 0.0
    %1762 = vmatprep.subr.mxu0 0.0
    %1763 = vmatpush1.msra.mxu0 0.0
    %1764 = vmatprep.subr.mxu0 0.0
    %1765 = vmatpush1.msra.mxu0 0.0
    %1766 = vmatprep.subr.mxu0 0.0
    %1767 = vmatpush1.msra.mxu0 0.0
    %1768 = vmatprep.subr.mxu0 0.0
    %1769 = vmatpush1.msra.mxu0 0.0
    %1770 = vmatprep.subr.mxu0 0.0
    %1771 = vmatpush1.msra.mxu0 0.0
    %1772 = vmatprep.subr.mxu0 0.0
    %1773 = vmatpush1.msra.mxu0 0.0
    %1774 = vmatprep.subr.mxu0 0.0
    %1775 = vmatpush1.msra.mxu0 0.0
    %1776 = vmatprep.subr.mxu0 0.0
    %1777 = vmatpush1.msra.mxu0 0.0
    %1778 = vmatprep.subr.mxu0 0.0
    %1779 = vmatpush1.msra.mxu0 0.0
    %1780 = vmatprep.subr.mxu0 0.0
    %1781 = vmatpush1.msra.mxu0 0.0
    %1782 = vmatprep.subr.mxu0 0.0
    %1783 = vmatpush1.msra.mxu0 0.0
    %1784 = vmatprep.subr.mxu0 0.0
    %1785 = vmatpush1.msra.mxu0 0.0
    %1786 = vmatprep.subr.mxu0 0.0
    %1787 = vmatpush1.msra.mxu0 0.0
    %1788 = vmatprep.subr.mxu0 0.0
    %1789 = vmatpush1.msra.mxu0 0.0
    %1790 = vmatprep.subr.mxu0 0.0
    %1791 = vmatpush1.msra.mxu0 0.0
    %1792 = vmatprep.subr.mxu0 0.0
    %1793 = vmatpush1.msra.mxu0 0.0
    %1794 = vmatprep.subr.mxu0 0.0
    %1795 = vmatpush1.msra.mxu0 0.0
    %1796 = vmatprep.subr.mxu0 0.0
    %1797 = vmatpush1.msra.mxu0 0.0
    %1798 = vmatprep.mubr.f32.mxu0 0.0
    %1799 = vmatmul.mubr.f32.gmra.mrb[0].mxu0 %v1723
    %v1800 = vpop.f32.mrb[0].mxu0
    %v1801 = vadd.f32 %v1704, %v1800
    %v1802 = vpop.f32.mrb[0].mxu0
    %1803 = vmatprep.mubr.f32.mxu0 0.0
    %1804 = vmatmul.mubr.f32.gmra.mrb[0].mxu0 %v1726
    %v1805 = vpop.f32.mrb[0].mxu0
    %v1806 = vadd.f32 %v1709, %v1805
    %v1807 = vpop.f32.mrb[0].mxu0
    %1808 = vmatprep.mubr.f32.mxu0 0.0
    %1809 = vmatmul.mubr.f32.gmra.mrb[0].mxu0 %v1729
    %v1810 = vpop.f32.mrb[0].mxu0
    %v1811 = vadd.f32 %v1714, %v1810
    %v1812 = vpop.f32.mrb[0].mxu0
    %1813 = vmatprep.mubr.f32.mxu0 0.0
    %1814 = vmatmul.mubr.f32.gmra.mrb[0].mxu0 %v1732
    %v1815 = vpop.f32.mrb[0].mxu0
    %v1816 = vadd.f32 %v1719, %v1815
    %v1817 = vpop.f32.mrb[0].mxu0
    %1818 = vdwg.mxu0
    %1819 = vrot.lane.b32.xlu0 %v280, 112
    %v1820 = vpop.permute.xlu0 %1819
    %1821 = vrot.lane.b32.xlu0 %v280, 80
    %v1822 = vpop.permute.xlu0 %1821
    %v1823 = vsel %vm301, %v1820, 0
    %v1825 = vsel %vm301, %v1822, 0
    %1827 = vmatprep.subr.mxu0 0.0
    %1828 = vmatpush1.xpose.msra.mxu0 %v1825
    %1829 = vmatprep.subr.mxu0 0.0
    %1830 = vmatpush1.xpose.msra.mxu0 0.0
    %1831 = vmatprep.subr.mxu0 0.0
    %1832 = vmatpush1.xpose.msra.mxu0 0.0
    %1833 = vmatprep.subr.mxu0 0.0
    %1834 = vmatpush1.xpose.msra.mxu0 0.0
    %1835 = vmatprep.subr.mxu0 0.0
    %1836 = vmatpush1.xpose.msra.mxu0 0.0
    %1837 = vmatprep.subr.mxu0 0.0
    %1838 = vmatpush1.xpose.msra.mxu0 0.0
    %1839 = vmatprep.subr.mxu0 0.0
    %1840 = vmatpush1.xpose.msra.mxu0 0.0
    %1841 = vmatprep.subr.mxu0 0.0
    %1842 = vmatpush1.xpose.msra.mxu0 0.0
    %1843 = vmatprep.subr.mxu0 0.0
    %1844 = vmatpush1.xpose.msra.mxu0 0.0
    %1845 = vmatprep.subr.mxu0 0.0
    %1846 = vmatpush1.xpose.msra.mxu0 0.0
    %1847 = vmatprep.subr.mxu0 0.0
    %1848 = vmatpush1.xpose.msra.mxu0 0.0
    %1849 = vmatprep.subr.mxu0 0.0
    %1850 = vmatpush1.xpose.msra.mxu0 0.0
    %1851 = vmatprep.subr.mxu0 0.0
    %1852 = vmatpush1.xpose.msra.mxu0 0.0
    %1853 = vmatprep.subr.mxu0 0.0
    %1854 = vmatpush1.xpose.msra.mxu0 0.0
    %1855 = vmatprep.subr.mxu0 0.0
    %1856 = vmatpush1.xpose.msra.mxu0 0.0
    %1857 = vmatprep.subr.mxu0 0.0
    %1858 = vmatpush1.xpose.msra.mxu0 0.0
    %1859 = vmatprep.subr.mxu0 0.0
    %1860 = vmatpush1.xpose.msra.mxu0 0.0
    %1861 = vmatprep.subr.mxu0 0.0
    %1862 = vmatpush1.xpose.msra.mxu0 0.0
    %1863 = vmatprep.subr.mxu0 0.0
    %1864 = vmatpush1.xpose.msra.mxu0 0.0
    %1865 = vmatprep.subr.mxu0 0.0
    %1866 = vmatpush1.xpose.msra.mxu0 0.0
    %1867 = vmatprep.subr.mxu0 0.0
    %1868 = vmatpush1.xpose.msra.mxu0 0.0
    %1869 = vmatprep.subr.mxu0 0.0
    %1870 = vmatpush1.xpose.msra.mxu0 0.0
    %1871 = vmatprep.subr.mxu0 0.0
    %1872 = vmatpush1.xpose.msra.mxu0 0.0
    %1873 = vmatprep.subr.mxu0 0.0
    %1874 = vmatpush1.xpose.msra.mxu0 0.0
    %1875 = vmatprep.subr.mxu0 0.0
    %1876 = vmatpush1.xpose.msra.mxu0 0.0
    %1877 = vmatprep.subr.mxu0 0.0
    %1878 = vmatpush1.xpose.msra.mxu0 0.0
    %1879 = vmatprep.subr.mxu0 0.0
    %1880 = vmatpush1.xpose.msra.mxu0 0.0
    %1881 = vmatprep.subr.mxu0 0.0
    %1882 = vmatpush1.xpose.msra.mxu0 0.0
    %1883 = vmatprep.subr.mxu0 0.0
    %1884 = vmatpush1.xpose.msra.mxu0 0.0
    %1885 = vmatprep.subr.mxu0 0.0
    %1886 = vmatpush1.xpose.msra.mxu0 0.0
    %1887 = vmatprep.subr.mxu0 0.0
    %1888 = vmatpush1.xpose.msra.mxu0 0.0
    %1889 = vmatprep.subr.mxu0 0.0
    %1890 = vmatpush1.xpose.msra.mxu0 0.0
    %1891 = vmatprep.mubr.f32.mxu0 0.0
    %1892 = vmatmul.mubr.f32.gmra.mrb[0].mxu0 %v1823
    %v1893 = vpop.f32.mrb[0].mxu0
    %v1894 = vadd.f32 0.0, %v1893
    %v1895 = vpop.f32.mrb[0].mxu0
    %1896 = vdwg.mxu0
    %1897 = vrot.lane.b32.xlu0 %v285, 112
    %v1898 = vpop.permute.xlu0 %1897
    %1899 = vrot.lane.b32.xlu0 %v285, 80
    %v1900 = vpop.permute.xlu0 %1899
    %v1901 = vsel %vm301, %v1898, 0
    %v1903 = vsel %vm301, %v1900, 0
    %1905 = vmatprep.subr.mxu0 0.0
    %1906 = vmatpush1.xpose.msra.mxu0 %v1903
    %1907 = vmatprep.subr.mxu0 0.0
    %1908 = vmatpush1.xpose.msra.mxu0 0.0
    %1909 = vmatprep.subr.mxu0 0.0
    %1910 = vmatpush1.xpose.msra.mxu0 0.0
    %1911 = vmatprep.subr.mxu0 0.0
    %1912 = vmatpush1.xpose.msra.mxu0 0.0
    %1913 = vmatprep.subr.mxu0 0.0
    %1914 = vmatpush1.xpose.msra.mxu0 0.0
    %1915 = vmatprep.subr.mxu0 0.0
    %1916 = vmatpush1.xpose.msra.mxu0 0.0
    %1917 = vmatprep.subr.mxu0 0.0
    %1918 = vmatpush1.xpose.msra.mxu0 0.0
    %1919 = vmatprep.subr.mxu0 0.0
    %1920 = vmatpush1.xpose.msra.mxu0 0.0
    %1921 = vmatprep.subr.mxu0 0.0
    %1922 = vmatpush1.xpose.msra.mxu0 0.0
    %1923 = vmatprep.subr.mxu0 0.0
    %1924 = vmatpush1.xpose.msra.mxu0 0.0
    %1925 = vmatprep.subr.mxu0 0.0
    %1926 = vmatpush1.xpose.msra.mxu0 0.0
    %1927 = vmatprep.subr.mxu0 0.0
    %1928 = vmatpush1.xpose.msra.mxu0 0.0
    %1929 = vmatprep.subr.mxu0 0.0
    %1930 = vmatpush1.xpose.msra.mxu0 0.0
    %1931 = vmatprep.subr.mxu0 0.0
    %1932 = vmatpush1.xpose.msra.mxu0 0.0
    %1933 = vmatprep.subr.mxu0 0.0
    %1934 = vmatpush1.xpose.msra.mxu0 0.0
    %1935 = vmatprep.subr.mxu0 0.0
    %1936 = vmatpush1.xpose.msra.mxu0 0.0
    %1937 = vmatprep.subr.mxu0 0.0
    %1938 = vmatpush1.xpose.msra.mxu0 0.0
    %1939 = vmatprep.subr.mxu0 0.0
    %1940 = vmatpush1.xpose.msra.mxu0 0.0
    %1941 = vmatprep.subr.mxu0 0.0
    %1942 = vmatpush1.xpose.msra.mxu0 0.0
    %1943 = vmatprep.subr.mxu0 0.0
    %1944 = vmatpush1.xpose.msra.mxu0 0.0
    %1945 = vmatprep.subr.mxu0 0.0
    %1946 = vmatpush1.xpose.msra.mxu0 0.0
    %1947 = vmatprep.subr.mxu0 0.0
    %1948 = vmatpush1.xpose.msra.mxu0 0.0
    %1949 = vmatprep.subr.mxu0 0.0
    %1950 = vmatpush1.xpose.msra.mxu0 0.0
    %1951 = vmatprep.subr.mxu0 0.0
    %1952 = vmatpush1.xpose.msra.mxu0 0.0
    %1953 = vmatprep.subr.mxu0 0.0
    %1954 = vmatpush1.xpose.msra.mxu0 0.0
    %1955 = vmatprep.subr.mxu0 0.0
    %1956 = vmatpush1.xpose.msra.mxu0 0.0
    %1957 = vmatprep.subr.mxu0 0.0
    %1958 = vmatpush1.xpose.msra.mxu0 0.0
    %1959 = vmatprep.subr.mxu0 0.0
    %1960 = vmatpush1.xpose.msra.mxu0 0.0
    %1961 = vmatprep.subr.mxu0 0.0
    %1962 = vmatpush1.xpose.msra.mxu0 0.0
    %1963 = vmatprep.subr.mxu0 0.0
    %1964 = vmatpush1.xpose.msra.mxu0 0.0
    %1965 = vmatprep.subr.mxu0 0.0
    %1966 = vmatpush1.xpose.msra.mxu0 0.0
    %1967 = vmatprep.subr.mxu0 0.0
    %1968 = vmatpush1.xpose.msra.mxu0 0.0
    %1969 = vmatprep.mubr.f32.mxu0 0.0
    %1970 = vmatmul.mubr.f32.gmra.mrb[0].mxu0 %v1901
    %v1971 = vpop.f32.mrb[0].mxu0
    %v1972 = vadd.f32 0.0, %v1971
    %v1973 = vpop.f32.mrb[0].mxu0
    %1974 = vdwg.mxu0
    %1975 = vrot.lane.b32.xlu0 %v290, 112
    %v1976 = vpop.permute.xlu0 %1975
    %1977 = vrot.lane.b32.xlu0 %v290, 80
    %v1978 = vpop.permute.xlu0 %1977
    %v1979 = vsel %vm301, %v1976, 0
    %v1981 = vsel %vm301, %v1978, 0
    %1983 = vmatprep.subr.mxu0 0.0
    %1984 = vmatpush1.xpose.msra.mxu0 %v1981
    %1985 = vmatprep.subr.mxu0 0.0
    %1986 = vmatpush1.xpose.msra.mxu0 0.0
    %1987 = vmatprep.subr.mxu0 0.0
    %1988 = vmatpush1.xpose.msra.mxu0 0.0
    %1989 = vmatprep.subr.mxu0 0.0
    %1990 = vmatpush1.xpose.msra.mxu0 0.0
    %1991 = vmatprep.subr.mxu0 0.0
    %1992 = vmatpush1.xpose.msra.mxu0 0.0
    %1993 = vmatprep.subr.mxu0 0.0
    %1994 = vmatpush1.xpose.msra.mxu0 0.0
    %1995 = vmatprep.subr.mxu0 0.0
    %1996 = vmatpush1.xpose.msra.mxu0 0.0
    %1997 = vmatprep.subr.mxu0 0.0
    %1998 = vmatpush1.xpose.msra.mxu0 0.0
    %1999 = vmatprep.subr.mxu0 0.0
    %2000 = vmatpush1.xpose.msra.mxu0 0.0
    %2001 = vmatprep.subr.mxu0 0.0
    %2002 = vmatpush1.xpose.msra.mxu0 0.0
    %2003 = vmatprep.subr.mxu0 0.0
    %2004 = vmatpush1.xpose.msra.mxu0 0.0
    %2005 = vmatprep.subr.mxu0 0.0
    %2006 = vmatpush1.xpose.msra.mxu0 0.0
    %2007 = vmatprep.subr.mxu0 0.0
    %2008 = vmatpush1.xpose.msra.mxu0 0.0
    %2009 = vmatprep.subr.mxu0 0.0
    %2010 = vmatpush1.xpose.msra.mxu0 0.0
    %2011 = vmatprep.subr.mxu0 0.0
    %2012 = vmatpush1.xpose.msra.mxu0 0.0
    %2013 = vmatprep.subr.mxu0 0.0
    %2014 = vmatpush1.xpose.msra.mxu0 0.0
    %2015 = vmatprep.subr.mxu0 0.0
    %2016 = vmatpush1.xpose.msra.mxu0 0.0
    %2017 = vmatprep.subr.mxu0 0.0
    %2018 = vmatpush1.xpose.msra.mxu0 0.0
    %2019 = vmatprep.subr.mxu0 0.0
    %2020 = vmatpush1.xpose.msra.mxu0 0.0
    %2021 = vmatprep.subr.mxu0 0.0
    %2022 = vmatpush1.xpose.msra.mxu0 0.0
    %2023 = vmatprep.subr.mxu0 0.0
    %2024 = vmatpush1.xpose.msra.mxu0 0.0
    %2025 = vmatprep.subr.mxu0 0.0
    %2026 = vmatpush1.xpose.msra.mxu0 0.0
    %2027 = vmatprep.subr.mxu0 0.0
    %2028 = vmatpush1.xpose.msra.mxu0 0.0
    %2029 = vmatprep.subr.mxu0 0.0
    %2030 = vmatpush1.xpose.msra.mxu0 0.0
    %2031 = vmatprep.subr.mxu0 0.0
    %2032 = vmatpush1.xpose.msra.mxu0 0.0
    %2033 = vmatprep.subr.mxu0 0.0
    %2034 = vmatpush1.xpose.msra.mxu0 0.0
    %2035 = vmatprep.subr.mxu0 0.0
    %2036 = vmatpush1.xpose.msra.mxu0 0.0
    %2037 = vmatprep.subr.mxu0 0.0
    %2038 = vmatpush1.xpose.msra.mxu0 0.0
    %2039 = vmatprep.subr.mxu0 0.0
    %2040 = vmatpush1.xpose.msra.mxu0 0.0
    %2041 = vmatprep.subr.mxu0 0.0
    %2042 = vmatpush1.xpose.msra.mxu0 0.0
    %2043 = vmatprep.subr.mxu0 0.0
    %2044 = vmatpush1.xpose.msra.mxu0 0.0
    %2045 = vmatprep.subr.mxu0 0.0
    %2046 = vmatpush1.xpose.msra.mxu0 0.0
    %2047 = vmatprep.mubr.f32.mxu0 0.0
    %2048 = vmatmul.mubr.f32.gmra.mrb[0].mxu0 %v1979
    %v2049 = vpop.f32.mrb[0].mxu0
    %v2050 = vadd.f32 0.0, %v2049
    %v2051 = vpop.f32.mrb[0].mxu0
    %2052 = vdwg.mxu0
    %2053 = vrot.lane.b32.xlu0 %v295, 112
    %v2054 = vpop.permute.xlu0 %2053
    %2055 = vrot.lane.b32.xlu0 %v295, 80
    %v2056 = vpop.permute.xlu0 %2055
    %v2057 = vsel %vm301, %v2054, 0
    %v2059 = vsel %vm301, %v2056, 0
    %2061 = vmatprep.subr.mxu0 0.0
    %2062 = vmatpush1.xpose.msra.mxu0 %v2059
    %2063 = vmatprep.subr.mxu0 0.0
    %2064 = vmatpush1.xpose.msra.mxu0 0.0
    %2065 = vmatprep.subr.mxu0 0.0
    %2066 = vmatpush1.xpose.msra.mxu0 0.0
    %2067 = vmatprep.subr.mxu0 0.0
    %2068 = vmatpush1.xpose.msra.mxu0 0.0
    %2069 = vmatprep.subr.mxu0 0.0
    %2070 = vmatpush1.xpose.msra.mxu0 0.0
    %2071 = vmatprep.subr.mxu0 0.0
    %2072 = vmatpush1.xpose.msra.mxu0 0.0
    %2073 = vmatprep.subr.mxu0 0.0
    %2074 = vmatpush1.xpose.msra.mxu0 0.0
    %2075 = vmatprep.subr.mxu0 0.0
    %2076 = vmatpush1.xpose.msra.mxu0 0.0
    %2077 = vmatprep.subr.mxu0 0.0
    %2078 = vmatpush1.xpose.msra.mxu0 0.0
    %2079 = vmatprep.subr.mxu0 0.0
    %2080 = vmatpush1.xpose.msra.mxu0 0.0
    %2081 = vmatprep.subr.mxu0 0.0
    %2082 = vmatpush1.xpose.msra.mxu0 0.0
    %2083 = vmatprep.subr.mxu0 0.0
    %2084 = vmatpush1.xpose.msra.mxu0 0.0
    %2085 = vmatprep.subr.mxu0 0.0
    %2086 = vmatpush1.xpose.msra.mxu0 0.0
    %2087 = vmatprep.subr.mxu0 0.0
    %2088 = vmatpush1.xpose.msra.mxu0 0.0
    %2089 = vmatprep.subr.mxu0 0.0
    %2090 = vmatpush1.xpose.msra.mxu0 0.0
    %2091 = vmatprep.subr.mxu0 0.0
    %2092 = vmatpush1.xpose.msra.mxu0 0.0
    %2093 = vmatprep.subr.mxu0 0.0
    %2094 = vmatpush1.xpose.msra.mxu0 0.0
    %2095 = vmatprep.subr.mxu0 0.0
    %2096 = vmatpush1.xpose.msra.mxu0 0.0
    %2097 = vmatprep.subr.mxu0 0.0
    %2098 = vmatpush1.xpose.msra.mxu0 0.0
    %2099 = vmatprep.subr.mxu0 0.0
    %2100 = vmatpush1.xpose.msra.mxu0 0.0
    %2101 = vmatprep.subr.mxu0 0.0
    %2102 = vmatpush1.xpose.msra.mxu0 0.0
    %2103 = vmatprep.subr.mxu0 0.0
    %2104 = vmatpush1.xpose.msra.mxu0 0.0
    %2105 = vmatprep.subr.mxu0 0.0
    %2106 = vmatpush1.xpose.msra.mxu0 0.0
    %2107 = vmatprep.subr.mxu0 0.0
    %2108 = vmatpush1.xpose.msra.mxu0 0.0
    %2109 = vmatprep.subr.mxu0 0.0
    %2110 = vmatpush1.xpose.msra.mxu0 0.0
    %2111 = vmatprep.subr.mxu0 0.0
    %2112 = vmatpush1.xpose.msra.mxu0 0.0
    %2113 = vmatprep.subr.mxu0 0.0
    %2114 = vmatpush1.xpose.msra.mxu0 0.0
    %2115 = vmatprep.subr.mxu0 0.0
    %2116 = vmatpush1.xpose.msra.mxu0 0.0
    %2117 = vmatprep.subr.mxu0 0.0
    %2118 = vmatpush1.xpose.msra.mxu0 0.0
    %2119 = vmatprep.subr.mxu0 0.0
    %2120 = vmatpush1.xpose.msra.mxu0 0.0
    %2121 = vmatprep.subr.mxu0 0.0
    %2122 = vmatpush1.xpose.msra.mxu0 0.0
    %2123 = vmatprep.subr.mxu0 0.0
    %2124 = vmatpush1.xpose.msra.mxu0 0.0
    %2125 = vmatprep.mubr.f32.mxu0 0.0
    %2126 = vmatmul.mubr.f32.gmra.mrb[0].mxu0 %v2057
    %v2127 = vpop.f32.mrb[0].mxu0
    %v2128 = vadd.f32 0.0, %v2127
    %v2129 = vpop.f32.mrb[0].mxu0
    %2130 = vdwg.mxu0
    %v2131 = vmul.f32 %v1894, 0.35355338
    %v2132 = vmul.f32 %v1972, 0.35355338
    %v2133 = vmul.f32 %v2050, 0.35355338
    %v2134 = vmul.f32 %v2128, 0.35355338
    %v2135 = vsel %vm301, %v2131, -inf
    %2136 = vmax.xlane.f32.xlu0 %v2135
    %v2137 = vpop.xlane.xlu0 %2136
    %v2138 = vsel %vm301, %v2132, -inf
    %2139 = vmax.xlane.f32.xlu0 %v2138
    %v2140 = vpop.xlane.xlu0 %2139
    %v2141 = vsel %vm301, %v2133, -inf
    %2142 = vmax.xlane.f32.xlu0 %v2141
    %v2143 = vpop.xlane.xlu0 %2142
    %v2144 = vsel %vm301, %v2134, -inf
    %2145 = vmax.xlane.f32.xlu0 %v2144
    %v2146 = vpop.xlane.xlu0 %2145
    %v2147 = vsub.f32 %v2131, %v2137
    %v2148 = vsub.f32 %v2132, %v2140
    %v2149 = vsub.f32 %v2133, %v2143
    %v2150 = vsub.f32 %v2134, %v2146
    %v2151 = vmul.f32 %v2147, 1.442695
    %v2152 = vpow.pop %v2151
    %v2153 = vmul.f32 %v2148, 1.442695
    %v2154 = vpow.pop %v2153
    %v2155 = vmul.f32 %v2149, 1.442695
    %v2156 = vpow.pop %v2155
    %v2157 = vmul.f32 %v2150, 1.442695
    %v2158 = vpow.pop %v2157
    %v2159 = vsel %vm301, %v2152, 0.0
    %2160 = vadd.xlane.f32.xlu0 %v2159
    %v2161 = vpop.xlane.xlu0 %2160
    %v2162 = vsel %vm301, %v2154, 0.0
    %2163 = vadd.xlane.f32.xlu0 %v2162
    %v2164 = vpop.xlane.xlu0 %2163
    %v2165 = vsel %vm301, %v2156, 0.0
    %2166 = vadd.xlane.f32.xlu0 %v2165
    %v2167 = vpop.xlane.xlu0 %2166
    %v2168 = vsel %vm301, %v2158, 0.0
    %2169 = vadd.xlane.f32.xlu0 %v2168
    %v2170 = vpop.xlane.xlu0 %2169
    %v2171 = vrcp.pop %v2161
    %v2172 = vmul.f32 %v2152, %v2171
    %v2173 = vrcp.pop %v2164
    %v2174 = vmul.f32 %v2154, %v2173
    %v2175 = vrcp.pop %v2167
    %v2176 = vmul.f32 %v2156, %v2175
    %v2177 = vrcp.pop %v2170
    %v2178 = vmul.f32 %v2158, %v2177
    %2179 = vrot.lane.b32.xlu0 %v280, 48
    %v2180 = vpop.permute.xlu0 %2179
    %v2183 = vsel %vm301, %v2172, 0
    %2185 = vmatprep.subr.mxu0 0.0
    %2186 = vmatpush1.msra.mxu0 %v2180
    %2187 = vmatprep.subr.mxu0 0.0
    %2188 = vmatpush1.msra.mxu0 0.0
    %2189 = vmatprep.subr.mxu0 0.0
    %2190 = vmatpush1.msra.mxu0 0.0
    %2191 = vmatprep.subr.mxu0 0.0
    %2192 = vmatpush1.msra.mxu0 0.0
    %2193 = vmatprep.subr.mxu0 0.0
    %2194 = vmatpush1.msra.mxu0 0.0
    %2195 = vmatprep.subr.mxu0 0.0
    %2196 = vmatpush1.msra.mxu0 0.0
    %2197 = vmatprep.subr.mxu0 0.0
    %2198 = vmatpush1.msra.mxu0 0.0
    %2199 = vmatprep.subr.mxu0 0.0
    %2200 = vmatpush1.msra.mxu0 0.0
    %2201 = vmatprep.subr.mxu0 0.0
    %2202 = vmatpush1.msra.mxu0 0.0
    %2203 = vmatprep.subr.mxu0 0.0
    %2204 = vmatpush1.msra.mxu0 0.0
    %2205 = vmatprep.subr.mxu0 0.0
    %2206 = vmatpush1.msra.mxu0 0.0
    %2207 = vmatprep.subr.mxu0 0.0
    %2208 = vmatpush1.msra.mxu0 0.0
    %2209 = vmatprep.subr.mxu0 0.0
    %2210 = vmatpush1.msra.mxu0 0.0
    %2211 = vmatprep.subr.mxu0 0.0
    %2212 = vmatpush1.msra.mxu0 0.0
    %2213 = vmatprep.subr.mxu0 0.0
    %2214 = vmatpush1.msra.mxu0 0.0
    %2215 = vmatprep.subr.mxu0 0.0
    %2216 = vmatpush1.msra.mxu0 0.0
    %2217 = vmatprep.subr.mxu0 0.0
    %2218 = vmatpush1.msra.mxu0 0.0
    %2219 = vmatprep.subr.mxu0 0.0
    %2220 = vmatpush1.msra.mxu0 0.0
    %2221 = vmatprep.subr.mxu0 0.0
    %2222 = vmatpush1.msra.mxu0 0.0
    %2223 = vmatprep.subr.mxu0 0.0
    %2224 = vmatpush1.msra.mxu0 0.0
    %2225 = vmatprep.subr.mxu0 0.0
    %2226 = vmatpush1.msra.mxu0 0.0
    %2227 = vmatprep.subr.mxu0 0.0
    %2228 = vmatpush1.msra.mxu0 0.0
    %2229 = vmatprep.subr.mxu0 0.0
    %2230 = vmatpush1.msra.mxu0 0.0
    %2231 = vmatprep.subr.mxu0 0.0
    %2232 = vmatpush1.msra.mxu0 0.0
    %2233 = vmatprep.subr.mxu0 0.0
    %2234 = vmatpush1.msra.mxu0 0.0
    %2235 = vmatprep.subr.mxu0 0.0
    %2236 = vmatpush1.msra.mxu0 0.0
    %2237 = vmatprep.subr.mxu0 0.0
    %2238 = vmatpush1.msra.mxu0 0.0
    %2239 = vmatprep.subr.mxu0 0.0
    %2240 = vmatpush1.msra.mxu0 0.0
    %2241 = vmatprep.subr.mxu0 0.0
    %2242 = vmatpush1.msra.mxu0 0.0
    %2243 = vmatprep.subr.mxu0 0.0
    %2244 = vmatpush1.msra.mxu0 0.0
    %2245 = vmatprep.subr.mxu0 0.0
    %2246 = vmatpush1.msra.mxu0 0.0
    %2247 = vmatprep.subr.mxu0 0.0
    %2248 = vmatpush1.msra.mxu0 0.0
    %2249 = vmatprep.mubr.f32.mxu0 0.0
    %2250 = vmatmul.mubr.f32.gmra.mrb[0].mxu0 %v2183
    %v2251 = vpop.f32.mrb[0].mxu0
    %v2252 = vadd.f32 0.0, %v2251
    %v2253 = vpop.f32.mrb[0].mxu0
    %2254 = vdwg.mxu0
    %2255 = vrot.lane.b32.xlu0 %v285, 48
    %v2256 = vpop.permute.xlu0 %2255
    %v2259 = vsel %vm301, %v2174, 0
    %2261 = vmatprep.subr.mxu0 0.0
    %2262 = vmatpush1.msra.mxu0 %v2256
    %2263 = vmatprep.subr.mxu0 0.0
    %2264 = vmatpush1.msra.mxu0 0.0
    %2265 = vmatprep.subr.mxu0 0.0
    %2266 = vmatpush1.msra.mxu0 0.0
    %2267 = vmatprep.subr.mxu0 0.0
    %2268 = vmatpush1.msra.mxu0 0.0
    %2269 = vmatprep.subr.mxu0 0.0
    %2270 = vmatpush1.msra.mxu0 0.0
    %2271 = vmatprep.subr.mxu0 0.0
    %2272 = vmatpush1.msra.mxu0 0.0
    %2273 = vmatprep.subr.mxu0 0.0
    %2274 = vmatpush1.msra.mxu0 0.0
    %2275 = vmatprep.subr.mxu0 0.0
    %2276 = vmatpush1.msra.mxu0 0.0
    %2277 = vmatprep.subr.mxu0 0.0
    %2278 = vmatpush1.msra.mxu0 0.0
    %2279 = vmatprep.subr.mxu0 0.0
    %2280 = vmatpush1.msra.mxu0 0.0
    %2281 = vmatprep.subr.mxu0 0.0
    %2282 = vmatpush1.msra.mxu0 0.0
    %2283 = vmatprep.subr.mxu0 0.0
    %2284 = vmatpush1.msra.mxu0 0.0
    %2285 = vmatprep.subr.mxu0 0.0
    %2286 = vmatpush1.msra.mxu0 0.0
    %2287 = vmatprep.subr.mxu0 0.0
    %2288 = vmatpush1.msra.mxu0 0.0
    %2289 = vmatprep.subr.mxu0 0.0
    %2290 = vmatpush1.msra.mxu0 0.0
    %2291 = vmatprep.subr.mxu0 0.0
    %2292 = vmatpush1.msra.mxu0 0.0
    %2293 = vmatprep.subr.mxu0 0.0
    %2294 = vmatpush1.msra.mxu0 0.0
    %2295 = vmatprep.subr.mxu0 0.0
    %2296 = vmatpush1.msra.mxu0 0.0
    %2297 = vmatprep.subr.mxu0 0.0
    %2298 = vmatpush1.msra.mxu0 0.0
    %2299 = vmatprep.subr.mxu0 0.0
    %2300 = vmatpush1.msra.mxu0 0.0
    %2301 = vmatprep.subr.mxu0 0.0
    %2302 = vmatpush1.msra.mxu0 0.0
    %2303 = vmatprep.subr.mxu0 0.0
    %2304 = vmatpush1.msra.mxu0 0.0
    %2305 = vmatprep.subr.mxu0 0.0
    %2306 = vmatpush1.msra.mxu0 0.0
    %2307 = vmatprep.subr.mxu0 0.0
    %2308 = vmatpush1.msra.mxu0 0.0
    %2309 = vmatprep.subr.mxu0 0.0
    %2310 = vmatpush1.msra.mxu0 0.0
    %2311 = vmatprep.subr.mxu0 0.0
    %2312 = vmatpush1.msra.mxu0 0.0
    %2313 = vmatprep.subr.mxu0 0.0
    %2314 = vmatpush1.msra.mxu0 0.0
    %2315 = vmatprep.subr.mxu0 0.0
    %2316 = vmatpush1.msra.mxu0 0.0
    %2317 = vmatprep.subr.mxu0 0.0
    %2318 = vmatpush1.msra.mxu0 0.0
    %2319 = vmatprep.subr.mxu0 0.0
    %2320 = vmatpush1.msra.mxu0 0.0
    %2321 = vmatprep.subr.mxu0 0.0
    %2322 = vmatpush1.msra.mxu0 0.0
    %2323 = vmatprep.subr.mxu0 0.0
    %2324 = vmatpush1.msra.mxu0 0.0
    %2325 = vmatprep.mubr.f32.mxu0 0.0
    %2326 = vmatmul.mubr.f32.gmra.mrb[0].mxu0 %v2259
    %v2327 = vpop.f32.mrb[0].mxu0
    %v2328 = vadd.f32 0.0, %v2327
    %v2329 = vpop.f32.mrb[0].mxu0
    %2330 = vdwg.mxu0
    %2331 = vrot.lane.b32.xlu0 %v290, 48
    %v2332 = vpop.permute.xlu0 %2331
    %v2335 = vsel %vm301, %v2176, 0
    %2337 = vmatprep.subr.mxu0 0.0
    %2338 = vmatpush1.msra.mxu0 %v2332
    %2339 = vmatprep.subr.mxu0 0.0
    %2340 = vmatpush1.msra.mxu0 0.0
    %2341 = vmatprep.subr.mxu0 0.0
    %2342 = vmatpush1.msra.mxu0 0.0
    %2343 = vmatprep.subr.mxu0 0.0
    %2344 = vmatpush1.msra.mxu0 0.0
    %2345 = vmatprep.subr.mxu0 0.0
    %2346 = vmatpush1.msra.mxu0 0.0
    %2347 = vmatprep.subr.mxu0 0.0
    %2348 = vmatpush1.msra.mxu0 0.0
    %2349 = vmatprep.subr.mxu0 0.0
    %2350 = vmatpush1.msra.mxu0 0.0
    %2351 = vmatprep.subr.mxu0 0.0
    %2352 = vmatpush1.msra.mxu0 0.0
    %2353 = vmatprep.subr.mxu0 0.0
    %2354 = vmatpush1.msra.mxu0 0.0
    %2355 = vmatprep.subr.mxu0 0.0
    %2356 = vmatpush1.msra.mxu0 0.0
    %2357 = vmatprep.subr.mxu0 0.0
    %2358 = vmatpush1.msra.mxu0 0.0
    %2359 = vmatprep.subr.mxu0 0.0
    %2360 = vmatpush1.msra.mxu0 0.0
    %2361 = vmatprep.subr.mxu0 0.0
    %2362 = vmatpush1.msra.mxu0 0.0
    %2363 = vmatprep.subr.mxu0 0.0
    %2364 = vmatpush1.msra.mxu0 0.0
    %2365 = vmatprep.subr.mxu0 0.0
    %2366 = vmatpush1.msra.mxu0 0.0
    %2367 = vmatprep.subr.mxu0 0.0
    %2368 = vmatpush1.msra.mxu0 0.0
    %2369 = vmatprep.subr.mxu0 0.0
    %2370 = vmatpush1.msra.mxu0 0.0
    %2371 = vmatprep.subr.mxu0 0.0
    %2372 = vmatpush1.msra.mxu0 0.0
    %2373 = vmatprep.subr.mxu0 0.0
    %2374 = vmatpush1.msra.mxu0 0.0
    %2375 = vmatprep.subr.mxu0 0.0
    %2376 = vmatpush1.msra.mxu0 0.0
    %2377 = vmatprep.subr.mxu0 0.0
    %2378 = vmatpush1.msra.mxu0 0.0
    %2379 = vmatprep.subr.mxu0 0.0
    %2380 = vmatpush1.msra.mxu0 0.0
    %2381 = vmatprep.subr.mxu0 0.0
    %2382 = vmatpush1.msra.mxu0 0.0
    %2383 = vmatprep.subr.mxu0 0.0
    %2384 = vmatpush1.msra.mxu0 0.0
    %2385 = vmatprep.subr.mxu0 0.0
    %2386 = vmatpush1.msra.mxu0 0.0
    %2387 = vmatprep.subr.mxu0 0.0
    %2388 = vmatpush1.msra.mxu0 0.0
    %2389 = vmatprep.subr.mxu0 0.0
    %2390 = vmatpush1.msra.mxu0 0.0
    %2391 = vmatprep.subr.mxu0 0.0
    %2392 = vmatpush1.msra.mxu0 0.0
    %2393 = vmatprep.subr.mxu0 0.0
    %2394 = vmatpush1.msra.mxu0 0.0
    %2395 = vmatprep.subr.mxu0 0.0
    %2396 = vmatpush1.msra.mxu0 0.0
    %2397 = vmatprep.subr.mxu0 0.0
    %2398 = vmatpush1.msra.mxu0 0.0
    %2399 = vmatprep.subr.mxu0 0.0
    %2400 = vmatpush1.msra.mxu0 0.0
    %2401 = vmatprep.mubr.f32.mxu0 0.0
    %2402 = vmatmul.mubr.f32.gmra.mrb[0].mxu0 %v2335
    %v2403 = vpop.f32.mrb[0].mxu0
    %v2404 = vadd.f32 0.0, %v2403
    %v2405 = vpop.f32.mrb[0].mxu0
    %2406 = vdwg.mxu0
    %2407 = vrot.lane.b32.xlu0 %v295, 48
    %v2408 = vpop.permute.xlu0 %2407
    %v2411 = vsel %vm301, %v2178, 0
    %2413 = vmatprep.subr.mxu0 0.0
    %2414 = vmatpush1.msra.mxu0 %v2408
    %2415 = vmatprep.subr.mxu0 0.0
    %2416 = vmatpush1.msra.mxu0 0.0
    %2417 = vmatprep.subr.mxu0 0.0
    %2418 = vmatpush1.msra.mxu0 0.0
    %2419 = vmatprep.subr.mxu0 0.0
    %2420 = vmatpush1.msra.mxu0 0.0
    %2421 = vmatprep.subr.mxu0 0.0
    %2422 = vmatpush1.msra.mxu0 0.0
    %2423 = vmatprep.subr.mxu0 0.0
    %2424 = vmatpush1.msra.mxu0 0.0
    %2425 = vmatprep.subr.mxu0 0.0
    %2426 = vmatpush1.msra.mxu0 0.0
    %2427 = vmatprep.subr.mxu0 0.0
    %2428 = vmatpush1.msra.mxu0 0.0
    %2429 = vmatprep.subr.mxu0 0.0
    %2430 = vmatpush1.msra.mxu0 0.0
    %2431 = vmatprep.subr.mxu0 0.0
    %2432 = vmatpush1.msra.mxu0 0.0
    %2433 = vmatprep.subr.mxu0 0.0
    %2434 = vmatpush1.msra.mxu0 0.0
    %2435 = vmatprep.subr.mxu0 0.0
    %2436 = vmatpush1.msra.mxu0 0.0
    %2437 = vmatprep.subr.mxu0 0.0
    %2438 = vmatpush1.msra.mxu0 0.0
    %2439 = vmatprep.subr.mxu0 0.0
    %2440 = vmatpush1.msra.mxu0 0.0
    %2441 = vmatprep.subr.mxu0 0.0
    %2442 = vmatpush1.msra.mxu0 0.0
    %2443 = vmatprep.subr.mxu0 0.0
    %2444 = vmatpush1.msra.mxu0 0.0
    %2445 = vmatprep.subr.mxu0 0.0
    %2446 = vmatpush1.msra.mxu0 0.0
    %2447 = vmatprep.subr.mxu0 0.0
    %2448 = vmatpush1.msra.mxu0 0.0
    %2449 = vmatprep.subr.mxu0 0.0
    %2450 = vmatpush1.msra.mxu0 0.0
    %2451 = vmatprep.subr.mxu0 0.0
    %2452 = vmatpush1.msra.mxu0 0.0
    %2453 = vmatprep.subr.mxu0 0.0
    %2454 = vmatpush1.msra.mxu0 0.0
    %2455 = vmatprep.subr.mxu0 0.0
    %2456 = vmatpush1.msra.mxu0 0.0
    %2457 = vmatprep.subr.mxu0 0.0
    %2458 = vmatpush1.msra.mxu0 0.0
    %2459 = vmatprep.subr.mxu0 0.0
    %2460 = vmatpush1.msra.mxu0 0.0
    %2461 = vmatprep.subr.mxu0 0.0
    %2462 = vmatpush1.msra.mxu0 0.0
    %2463 = vmatprep.subr.mxu0 0.0
    %2464 = vmatpush1.msra.mxu0 0.0
    %2465 = vmatprep.subr.mxu0 0.0
    %2466 = vmatpush1.msra.mxu0 0.0
    %2467 = vmatprep.subr.mxu0 0.0
    %2468 = vmatpush1.msra.mxu0 0.0
    %2469 = vmatprep.subr.mxu0 0.0
    %2470 = vmatpush1.msra.mxu0 0.0
    %2471 = vmatprep.subr.mxu0 0.0
    %2472 = vmatpush1.msra.mxu0 0.0
    %2473 = vmatprep.subr.mxu0 0.0
    %2474 = vmatpush1.msra.mxu0 0.0
    %2475 = vmatprep.subr.mxu0 0.0
    %2476 = vmatpush1.msra.mxu0 0.0
    %2477 = vmatprep.mubr.f32.mxu0 0.0
    %2478 = vmatmul.mubr.f32.gmra.mrb[0].mxu0 %v2411
    %v2479 = vpop.f32.mrb[0].mxu0
    %v2480 = vadd.f32 0.0, %v2479
    %v2481 = vpop.f32.mrb[0].mxu0
    %2482 = vdwg.mxu0
    %v2483 = vld [vmem:[%s2 + $0x10] sm:$0xff]
    %v2485 = vsel %vm301, %v2252, 0
    %v2488 = vsel %vm301, %v2328, 0
    %v2491 = vsel %vm301, %v2404, 0
    %v2494 = vsel %vm301, %v2480, 0
    %2496 = vmatprep.subr.mxu0 0.0
    %2497 = vmatpush1.msra.mxu0 %v2483
    %2498 = vmatprep.subr.mxu0 0.0
    %2499 = vmatpush1.msra.mxu0 0.0
    %2500 = vmatprep.subr.mxu0 0.0
    %2501 = vmatpush1.msra.mxu0 0.0
    %2502 = vmatprep.subr.mxu0 0.0
    %2503 = vmatpush1.msra.mxu0 0.0
    %2504 = vmatprep.subr.mxu0 0.0
    %2505 = vmatpush1.msra.mxu0 0.0
    %2506 = vmatprep.subr.mxu0 0.0
    %2507 = vmatpush1.msra.mxu0 0.0
    %2508 = vmatprep.subr.mxu0 0.0
    %2509 = vmatpush1.msra.mxu0 0.0
    %2510 = vmatprep.subr.mxu0 0.0
    %2511 = vmatpush1.msra.mxu0 0.0
    %2512 = vmatprep.subr.mxu0 0.0
    %2513 = vmatpush1.msra.mxu0 0.0
    %2514 = vmatprep.subr.mxu0 0.0
    %2515 = vmatpush1.msra.mxu0 0.0
    %2516 = vmatprep.subr.mxu0 0.0
    %2517 = vmatpush1.msra.mxu0 0.0
    %2518 = vmatprep.subr.mxu0 0.0
    %2519 = vmatpush1.msra.mxu0 0.0
    %2520 = vmatprep.subr.mxu0 0.0
    %2521 = vmatpush1.msra.mxu0 0.0
    %2522 = vmatprep.subr.mxu0 0.0
    %2523 = vmatpush1.msra.mxu0 0.0
    %2524 = vmatprep.subr.mxu0 0.0
    %2525 = vmatpush1.msra.mxu0 0.0
    %2526 = vmatprep.subr.mxu0 0.0
    %2527 = vmatpush1.msra.mxu0 0.0
    %2528 = vmatprep.subr.mxu0 0.0
    %2529 = vmatpush1.msra.mxu0 0.0
    %2530 = vmatprep.subr.mxu0 0.0
    %2531 = vmatpush1.msra.mxu0 0.0
    %2532 = vmatprep.subr.mxu0 0.0
    %2533 = vmatpush1.msra.mxu0 0.0
    %2534 = vmatprep.subr.mxu0 0.0
    %2535 = vmatpush1.msra.mxu0 0.0
    %2536 = vmatprep.subr.mxu0 0.0
    %2537 = vmatpush1.msra.mxu0 0.0
    %2538 = vmatprep.subr.mxu0 0.0
    %2539 = vmatpush1.msra.mxu0 0.0
    %2540 = vmatprep.subr.mxu0 0.0
    %2541 = vmatpush1.msra.mxu0 0.0
    %2542 = vmatprep.subr.mxu0 0.0
    %2543 = vmatpush1.msra.mxu0 0.0
    %2544 = vmatprep.subr.mxu0 0.0
    %2545 = vmatpush1.msra.mxu0 0.0
    %2546 = vmatprep.subr.mxu0 0.0
    %2547 = vmatpush1.msra.mxu0 0.0
    %2548 = vmatprep.subr.mxu0 0.0
    %2549 = vmatpush1.msra.mxu0 0.0
    %2550 = vmatprep.subr.mxu0 0.0
    %2551 = vmatpush1.msra.mxu0 0.0
    %2552 = vmatprep.subr.mxu0 0.0
    %2553 = vmatpush1.msra.mxu0 0.0
    %2554 = vmatprep.subr.mxu0 0.0
    %2555 = vmatpush1.msra.mxu0 0.0
    %2556 = vmatprep.subr.mxu0 0.0
    %2557 = vmatpush1.msra.mxu0 0.0
    %2558 = vmatprep.subr.mxu0 0.0
    %2559 = vmatpush1.msra.mxu0 0.0
    %2560 = vmatprep.mubr.f32.mxu0 0.0
    %2561 = vmatmul.mubr.f32.gmra.mrb[0].mxu0 %v2485
    %v2562 = vpop.f32.mrb[0].mxu0
    %v2563 = vadd.f32 0.0, %v2562
    %v2564 = vpop.f32.mrb[0].mxu0
    %2565 = vmatprep.mubr.f32.mxu0 0.0
    %2566 = vmatmul.mubr.f32.gmra.mrb[0].mxu0 %v2488
    %v2567 = vpop.f32.mrb[0].mxu0
    %v2568 = vadd.f32 0.0, %v2567
    %v2569 = vpop.f32.mrb[0].mxu0
    %2570 = vmatprep.mubr.f32.mxu0 0.0
    %2571 = vmatmul.mubr.f32.gmra.mrb[0].mxu0 %v2491
    %v2572 = vpop.f32.mrb[0].mxu0
    %v2573 = vadd.f32 0.0, %v2572
    %v2574 = vpop.f32.mrb[0].mxu0
    %2575 = vmatprep.mubr.f32.mxu0 0.0
    %2576 = vmatmul.mubr.f32.gmra.mrb[0].mxu0 %v2494
    %v2577 = vpop.f32.mrb[0].mxu0
    %v2578 = vadd.f32 0.0, %v2577
    %v2579 = vpop.f32.mrb[0].mxu0
    %2580 = vdwg.mxu0
    %v2581 = vadd.f32 %v1801, %v2563
    %v2582 = vadd.f32 %v1806, %v2568
    %v2583 = vadd.f32 %v1811, %v2573
    %v2584 = vadd.f32 %v1816, %v2578
    %2585 = vrot.lane.b32.xlu0 %v280, 104
    %v2586 = vpop.permute.xlu0 %2585
    %2587 = vrot.lane.b32.xlu0 %v280, 72
    %v2588 = vpop.permute.xlu0 %2587
    %v2589 = vsel %vm301, %v2586, 0
    %v2591 = vsel %vm301, %v2588, 0
    %2593 = vmatprep.subr.mxu0 0.0
    %2594 = vmatpush1.xpose.msra.mxu0 %v2591
    %2595 = vmatprep.subr.mxu0 0.0
    %2596 = vmatpush1.xpose.msra.mxu0 0.0
    %2597 = vmatprep.subr.mxu0 0.0
    %2598 = vmatpush1.xpose.msra.mxu0 0.0
    %2599 = vmatprep.subr.mxu0 0.0
    %2600 = vmatpush1.xpose.msra.mxu0 0.0
    %2601 = vmatprep.subr.mxu0 0.0
    %2602 = vmatpush1.xpose.msra.mxu0 0.0
    %2603 = vmatprep.subr.mxu0 0.0
    %2604 = vmatpush1.xpose.msra.mxu0 0.0
    %2605 = vmatprep.subr.mxu0 0.0
    %2606 = vmatpush1.xpose.msra.mxu0 0.0
    %2607 = vmatprep.subr.mxu0 0.0
    %2608 = vmatpush1.xpose.msra.mxu0 0.0
    %2609 = vmatprep.subr.mxu0 0.0
    %2610 = vmatpush1.xpose.msra.mxu0 0.0
    %2611 = vmatprep.subr.mxu0 0.0
    %2612 = vmatpush1.xpose.msra.mxu0 0.0
    %2613 = vmatprep.subr.mxu0 0.0
    %2614 = vmatpush1.xpose.msra.mxu0 0.0
    %2615 = vmatprep.subr.mxu0 0.0
    %2616 = vmatpush1.xpose.msra.mxu0 0.0
    %2617 = vmatprep.subr.mxu0 0.0
    %2618 = vmatpush1.xpose.msra.mxu0 0.0
    %2619 = vmatprep.subr.mxu0 0.0
    %2620 = vmatpush1.xpose.msra.mxu0 0.0
    %2621 = vmatprep.subr.mxu0 0.0
    %2622 = vmatpush1.xpose.msra.mxu0 0.0
    %2623 = vmatprep.subr.mxu0 0.0
    %2624 = vmatpush1.xpose.msra.mxu0 0.0
    %2625 = vmatprep.subr.mxu0 0.0
    %2626 = vmatpush1.xpose.msra.mxu0 0.0
    %2627 = vmatprep.subr.mxu0 0.0
    %2628 = vmatpush1.xpose.msra.mxu0 0.0
    %2629 = vmatprep.subr.mxu0 0.0
    %2630 = vmatpush1.xpose.msra.mxu0 0.0
    %2631 = vmatprep.subr.mxu0 0.0
    %2632 = vmatpush1.xpose.msra.mxu0 0.0
    %2633 = vmatprep.subr.mxu0 0.0
    %2634 = vmatpush1.xpose.msra.mxu0 0.0
    %2635 = vmatprep.subr.mxu0 0.0
    %2636 = vmatpush1.xpose.msra.mxu0 0.0
    %2637 = vmatprep.subr.mxu0 0.0
    %2638 = vmatpush1.xpose.msra.mxu0 0.0
    %2639 = vmatprep.subr.mxu0 0.0
    %2640 = vmatpush1.xpose.msra.mxu0 0.0
    %2641 = vmatprep.subr.mxu0 0.0
    %2642 = vmatpush1.xpose.msra.mxu0 0.0
    %2643 = vmatprep.subr.mxu0 0.0
    %2644 = vmatpush1.xpose.msra.mxu0 0.0
    %2645 = vmatprep.subr.mxu0 0.0
    %2646 = vmatpush1.xpose.msra.mxu0 0.0
    %2647 = vmatprep.subr.mxu0 0.0
    %2648 = vmatpush1.xpose.msra.mxu0 0.0
    %2649 = vmatprep.subr.mxu0 0.0
    %2650 = vmatpush1.xpose.msra.mxu0 0.0
    %2651 = vmatprep.subr.mxu0 0.0
    %2652 = vmatpush1.xpose.msra.mxu0 0.0
    %2653 = vmatprep.subr.mxu0 0.0
    %2654 = vmatpush1.xpose.msra.mxu0 0.0
    %2655 = vmatprep.subr.mxu0 0.0
    %2656 = vmatpush1.xpose.msra.mxu0 0.0
    %2657 = vmatprep.mubr.f32.mxu0 0.0
    %2658 = vmatmul.mubr.f32.gmra.mrb[0].mxu0 %v2589
    %v2659 = vpop.f32.mrb[0].mxu0
    %v2660 = vadd.f32 0.0, %v2659
    %v2661 = vpop.f32.mrb[0].mxu0
    %2662 = vdwg.mxu0
    %2663 = vrot.lane.b32.xlu0 %v285, 104
    %v2664 = vpop.permute.xlu0 %2663
    %2665 = vrot.lane.b32.xlu0 %v285, 72
    %v2666 = vpop.permute.xlu0 %2665
    %v2667 = vsel %vm301, %v2664, 0
    %v2669 = vsel %vm301, %v2666, 0
    %2671 = vmatprep.subr.mxu0 0.0
    %2672 = vmatpush1.xpose.msra.mxu0 %v2669
    %2673 = vmatprep.subr.mxu0 0.0
    %2674 = vmatpush1.xpose.msra.mxu0 0.0
    %2675 = vmatprep.subr.mxu0 0.0
    %2676 = vmatpush1.xpose.msra.mxu0 0.0
    %2677 = vmatprep.subr.mxu0 0.0
    %2678 = vmatpush1.xpose.msra.mxu0 0.0
    %2679 = vmatprep.subr.mxu0 0.0
    %2680 = vmatpush1.xpose.msra.mxu0 0.0
    %2681 = vmatprep.subr.mxu0 0.0
    %2682 = vmatpush1.xpose.msra.mxu0 0.0
    %2683 = vmatprep.subr.mxu0 0.0
    %2684 = vmatpush1.xpose.msra.mxu0 0.0
    %2685 = vmatprep.subr.mxu0 0.0
    %2686 = vmatpush1.xpose.msra.mxu0 0.0
    %2687 = vmatprep.subr.mxu0 0.0
    %2688 = vmatpush1.xpose.msra.mxu0 0.0
    %2689 = vmatprep.subr.mxu0 0.0
    %2690 = vmatpush1.xpose.msra.mxu0 0.0
    %2691 = vmatprep.subr.mxu0 0.0
    %2692 = vmatpush1.xpose.msra.mxu0 0.0
    %2693 = vmatprep.subr.mxu0 0.0
    %2694 = vmatpush1.xpose.msra.mxu0 0.0
    %2695 = vmatprep.subr.mxu0 0.0
    %2696 = vmatpush1.xpose.msra.mxu0 0.0
    %2697 = vmatprep.subr.mxu0 0.0
    %2698 = vmatpush1.xpose.msra.mxu0 0.0
    %2699 = vmatprep.subr.mxu0 0.0
    %2700 = vmatpush1.xpose.msra.mxu0 0.0
    %2701 = vmatprep.subr.mxu0 0.0
    %2702 = vmatpush1.xpose.msra.mxu0 0.0
    %2703 = vmatprep.subr.mxu0 0.0
    %2704 = vmatpush1.xpose.msra.mxu0 0.0
    %2705 = vmatprep.subr.mxu0 0.0
    %2706 = vmatpush1.xpose.msra.mxu0 0.0
    %2707 = vmatprep.subr.mxu0 0.0
    %2708 = vmatpush1.xpose.msra.mxu0 0.0
    %2709 = vmatprep.subr.mxu0 0.0
    %2710 = vmatpush1.xpose.msra.mxu0 0.0
    %2711 = vmatprep.subr.mxu0 0.0
    %2712 = vmatpush1.xpose.msra.mxu0 0.0
    %2713 = vmatprep.subr.mxu0 0.0
    %2714 = vmatpush1.xpose.msra.mxu0 0.0
    %2715 = vmatprep.subr.mxu0 0.0
    %2716 = vmatpush1.xpose.msra.mxu0 0.0
    %2717 = vmatprep.subr.mxu0 0.0
    %2718 = vmatpush1.xpose.msra.mxu0 0.0
    %2719 = vmatprep.subr.mxu0 0.0
    %2720 = vmatpush1.xpose.msra.mxu0 0.0
    %2721 = vmatprep.subr.mxu0 0.0
    %2722 = vmatpush1.xpose.msra.mxu0 0.0
    %2723 = vmatprep.subr.mxu0 0.0
    %2724 = vmatpush1.xpose.msra.mxu0 0.0
    %2725 = vmatprep.subr.mxu0 0.0
    %2726 = vmatpush1.xpose.msra.mxu0 0.0
    %2727 = vmatprep.subr.mxu0 0.0
    %2728 = vmatpush1.xpose.msra.mxu0 0.0
    %2729 = vmatprep.subr.mxu0 0.0
    %2730 = vmatpush1.xpose.msra.mxu0 0.0
    %2731 = vmatprep.subr.mxu0 0.0
    %2732 = vmatpush1.xpose.msra.mxu0 0.0
    %2733 = vmatprep.subr.mxu0 0.0
    %2734 = vmatpush1.xpose.msra.mxu0 0.0
    %2735 = vmatprep.mubr.f32.mxu0 0.0
    %2736 = vmatmul.mubr.f32.gmra.mrb[0].mxu0 %v2667
    %v2737 = vpop.f32.mrb[0].mxu0
    %v2738 = vadd.f32 0.0, %v2737
    %v2739 = vpop.f32.mrb[0].mxu0
    %2740 = vdwg.mxu0
    %2741 = vrot.lane.b32.xlu0 %v290, 104
    %v2742 = vpop.permute.xlu0 %2741
    %2743 = vrot.lane.b32.xlu0 %v290, 72
    %v2744 = vpop.permute.xlu0 %2743
    %v2745 = vsel %vm301, %v2742, 0
    %v2747 = vsel %vm301, %v2744, 0
    %2749 = vmatprep.subr.mxu0 0.0
    %2750 = vmatpush1.xpose.msra.mxu0 %v2747
    %2751 = vmatprep.subr.mxu0 0.0
    %2752 = vmatpush1.xpose.msra.mxu0 0.0
    %2753 = vmatprep.subr.mxu0 0.0
    %2754 = vmatpush1.xpose.msra.mxu0 0.0
    %2755 = vmatprep.subr.mxu0 0.0
    %2756 = vmatpush1.xpose.msra.mxu0 0.0
    %2757 = vmatprep.subr.mxu0 0.0
    %2758 = vmatpush1.xpose.msra.mxu0 0.0
    %2759 = vmatprep.subr.mxu0 0.0
    %2760 = vmatpush1.xpose.msra.mxu0 0.0
    %2761 = vmatprep.subr.mxu0 0.0
    %2762 = vmatpush1.xpose.msra.mxu0 0.0
    %2763 = vmatprep.subr.mxu0 0.0
    %2764 = vmatpush1.xpose.msra.mxu0 0.0
    %2765 = vmatprep.subr.mxu0 0.0
    %2766 = vmatpush1.xpose.msra.mxu0 0.0
    %2767 = vmatprep.subr.mxu0 0.0
    %2768 = vmatpush1.xpose.msra.mxu0 0.0
    %2769 = vmatprep.subr.mxu0 0.0
    %2770 = vmatpush1.xpose.msra.mxu0 0.0
    %2771 = vmatprep.subr.mxu0 0.0
    %2772 = vmatpush1.xpose.msra.mxu0 0.0
    %2773 = vmatprep.subr.mxu0 0.0
    %2774 = vmatpush1.xpose.msra.mxu0 0.0
    %2775 = vmatprep.subr.mxu0 0.0
    %2776 = vmatpush1.xpose.msra.mxu0 0.0
    %2777 = vmatprep.subr.mxu0 0.0
    %2778 = vmatpush1.xpose.msra.mxu0 0.0
    %2779 = vmatprep.subr.mxu0 0.0
    %2780 = vmatpush1.xpose.msra.mxu0 0.0
    %2781 = vmatprep.subr.mxu0 0.0
    %2782 = vmatpush1.xpose.msra.mxu0 0.0
    %2783 = vmatprep.subr.mxu0 0.0
    %2784 = vmatpush1.xpose.msra.mxu0 0.0
    %2785 = vmatprep.subr.mxu0 0.0
    %2786 = vmatpush1.xpose.msra.mxu0 0.0
    %2787 = vmatprep.subr.mxu0 0.0
    %2788 = vmatpush1.xpose.msra.mxu0 0.0
    %2789 = vmatprep.subr.mxu0 0.0
    %2790 = vmatpush1.xpose.msra.mxu0 0.0
    %2791 = vmatprep.subr.mxu0 0.0
    %2792 = vmatpush1.xpose.msra.mxu0 0.0
    %2793 = vmatprep.subr.mxu0 0.0
    %2794 = vmatpush1.xpose.msra.mxu0 0.0
    %2795 = vmatprep.subr.mxu0 0.0
    %2796 = vmatpush1.xpose.msra.mxu0 0.0
    %2797 = vmatprep.subr.mxu0 0.0
    %2798 = vmatpush1.xpose.msra.mxu0 0.0
    %2799 = vmatprep.subr.mxu0 0.0
    %2800 = vmatpush1.xpose.msra.mxu0 0.0
    %2801 = vmatprep.subr.mxu0 0.0
    %2802 = vmatpush1.xpose.msra.mxu0 0.0
    %2803 = vmatprep.subr.mxu0 0.0
    %2804 = vmatpush1.xpose.msra.mxu0 0.0
    %2805 = vmatprep.subr.mxu0 0.0
    %2806 = vmatpush1.xpose.msra.mxu0 0.0
    %2807 = vmatprep.subr.mxu0 0.0
    %2808 = vmatpush1.xpose.msra.mxu0 0.0
    %2809 = vmatprep.subr.mxu0 0.0
    %2810 = vmatpush1.xpose.msra.mxu0 0.0
    %2811 = vmatprep.subr.mxu0 0.0
    %2812 = vmatpush1.xpose.msra.mxu0 0.0
    %2813 = vmatprep.mubr.f32.mxu0 0.0
    %2814 = vmatmul.mubr.f32.gmra.mrb[0].mxu0 %v2745
    %v2815 = vpop.f32.mrb[0].mxu0
    %v2816 = vadd.f32 0.0, %v2815
    %v2817 = vpop.f32.mrb[0].mxu0
    %2818 = vdwg.mxu0
    %2819 = vrot.lane.b32.xlu0 %v295, 104
    %v2820 = vpop.permute.xlu0 %2819
    %2821 = vrot.lane.b32.xlu0 %v295, 72
    %v2822 = vpop.permute.xlu0 %2821
    %v2823 = vsel %vm301, %v2820, 0
    %v2825 = vsel %vm301, %v2822, 0
    %2827 = vmatprep.subr.mxu0 0.0
    %2828 = vmatpush1.xpose.msra.mxu0 %v2825
    %2829 = vmatprep.subr.mxu0 0.0
    %2830 = vmatpush1.xpose.msra.mxu0 0.0
    %2831 = vmatprep.subr.mxu0 0.0
    %2832 = vmatpush1.xpose.msra.mxu0 0.0
    %2833 = vmatprep.subr.mxu0 0.0
    %2834 = vmatpush1.xpose.msra.mxu0 0.0
    %2835 = vmatprep.subr.mxu0 0.0
    %2836 = vmatpush1.xpose.msra.mxu0 0.0
    %2837 = vmatprep.subr.mxu0 0.0
    %2838 = vmatpush1.xpose.msra.mxu0 0.0
    %2839 = vmatprep.subr.mxu0 0.0
    %2840 = vmatpush1.xpose.msra.mxu0 0.0
    %2841 = vmatprep.subr.mxu0 0.0
    %2842 = vmatpush1.xpose.msra.mxu0 0.0
    %2843 = vmatprep.subr.mxu0 0.0
    %2844 = vmatpush1.xpose.msra.mxu0 0.0
    %2845 = vmatprep.subr.mxu0 0.0
    %2846 = vmatpush1.xpose.msra.mxu0 0.0
    %2847 = vmatprep.subr.mxu0 0.0
    %2848 = vmatpush1.xpose.msra.mxu0 0.0
    %2849 = vmatprep.subr.mxu0 0.0
    %2850 = vmatpush1.xpose.msra.mxu0 0.0
    %2851 = vmatprep.subr.mxu0 0.0
    %2852 = vmatpush1.xpose.msra.mxu0 0.0
    %2853 = vmatprep.subr.mxu0 0.0
    %2854 = vmatpush1.xpose.msra.mxu0 0.0
    %2855 = vmatprep.subr.mxu0 0.0
    %2856 = vmatpush1.xpose.msra.mxu0 0.0
    %2857 = vmatprep.subr.mxu0 0.0
    %2858 = vmatpush1.xpose.msra.mxu0 0.0
    %2859 = vmatprep.subr.mxu0 0.0
    %2860 = vmatpush1.xpose.msra.mxu0 0.0
    %2861 = vmatprep.subr.mxu0 0.0
    %2862 = vmatpush1.xpose.msra.mxu0 0.0
    %2863 = vmatprep.subr.mxu0 0.0
    %2864 = vmatpush1.xpose.msra.mxu0 0.0
    %2865 = vmatprep.subr.mxu0 0.0
    %2866 = vmatpush1.xpose.msra.mxu0 0.0
    %2867 = vmatprep.subr.mxu0 0.0
    %2868 = vmatpush1.xpose.msra.mxu0 0.0
    %2869 = vmatprep.subr.mxu0 0.0
    %2870 = vmatpush1.xpose.msra.mxu0 0.0
    %2871 = vmatprep.subr.mxu0 0.0
    %2872 = vmatpush1.xpose.msra.mxu0 0.0
    %2873 = vmatprep.subr.mxu0 0.0
    %2874 = vmatpush1.xpose.msra.mxu0 0.0
    %2875 = vmatprep.subr.mxu0 0.0
    %2876 = vmatpush1.xpose.msra.mxu0 0.0
    %2877 = vmatprep.subr.mxu0 0.0
    %2878 = vmatpush1.xpose.msra.mxu0 0.0
    %2879 = vmatprep.subr.mxu0 0.0
    %2880 = vmatpush1.xpose.msra.mxu0 0.0
    %2881 = vmatprep.subr.mxu0 0.0
    %2882 = vmatpush1.xpose.msra.mxu0 0.0
    %2883 = vmatprep.subr.mxu0 0.0
    %2884 = vmatpush1.xpose.msra.mxu0 0.0
    %2885 = vmatprep.subr.mxu0 0.0
    %2886 = vmatpush1.xpose.msra.mxu0 0.0
    %2887 = vmatprep.subr.mxu0 0.0
    %2888 = vmatpush1.xpose.msra.mxu0 0.0
    %2889 = vmatprep.subr.mxu0 0.0
    %2890 = vmatpush1.xpose.msra.mxu0 0.0
    %2891 = vmatprep.mubr.f32.mxu0 0.0
    %2892 = vmatmul.mubr.f32.gmra.mrb[0].mxu0 %v2823
    %v2893 = vpop.f32.mrb[0].mxu0
    %v2894 = vadd.f32 0.0, %v2893
    %v2895 = vpop.f32.mrb[0].mxu0
    %2896 = vdwg.mxu0
    %v2897 = vmul.f32 %v2660, 0.35355338
    %v2898 = vmul.f32 %v2738, 0.35355338
    %v2899 = vmul.f32 %v2816, 0.35355338
    %v2900 = vmul.f32 %v2894, 0.35355338
    %v2901 = vsel %vm301, %v2897, -inf
    %2902 = vmax.xlane.f32.xlu0 %v2901
    %v2903 = vpop.xlane.xlu0 %2902
    %v2904 = vsel %vm301, %v2898, -inf
    %2905 = vmax.xlane.f32.xlu0 %v2904
    %v2906 = vpop.xlane.xlu0 %2905
    %v2907 = vsel %vm301, %v2899, -inf
    %2908 = vmax.xlane.f32.xlu0 %v2907
    %v2909 = vpop.xlane.xlu0 %2908
    %v2910 = vsel %vm301, %v2900, -inf
    %2911 = vmax.xlane.f32.xlu0 %v2910
    %v2912 = vpop.xlane.xlu0 %2911
    %v2913 = vsub.f32 %v2897, %v2903
    %v2914 = vsub.f32 %v2898, %v2906
    %v2915 = vsub.f32 %v2899, %v2909
    %v2916 = vsub.f32 %v2900, %v2912
    %v2917 = vmul.f32 %v2913, 1.442695
    %v2918 = vpow.pop %v2917
    %v2919 = vmul.f32 %v2914, 1.442695
    %v2920 = vpow.pop %v2919
    %v2921 = vmul.f32 %v2915, 1.442695
    %v2922 = vpow.pop %v2921
    %v2923 = vmul.f32 %v2916, 1.442695
    %v2924 = vpow.pop %v2923
    %v2925 = vsel %vm301, %v2918, 0.0
    %2926 = vadd.xlane.f32.xlu0 %v2925
    %v2927 = vpop.xlane.xlu0 %2926
    %v2928 = vsel %vm301, %v2920, 0.0
    %2929 = vadd.xlane.f32.xlu0 %v2928
    %v2930 = vpop.xlane.xlu0 %2929
    %v2931 = vsel %vm301, %v2922, 0.0
    %2932 = vadd.xlane.f32.xlu0 %v2931
    %v2933 = vpop.xlane.xlu0 %2932
    %v2934 = vsel %vm301, %v2924, 0.0
    %2935 = vadd.xlane.f32.xlu0 %v2934
    %v2936 = vpop.xlane.xlu0 %2935
    %v2937 = vrcp.pop %v2927
    %v2938 = vmul.f32 %v2918, %v2937
    %v2939 = vrcp.pop %v2930
    %v2940 = vmul.f32 %v2920, %v2939
    %v2941 = vrcp.pop %v2933
    %v2942 = vmul.f32 %v2922, %v2941
    %v2943 = vrcp.pop %v2936
    %v2944 = vmul.f32 %v2924, %v2943
    %2945 = vrot.lane.b32.xlu0 %v280, 40
    %v2946 = vpop.permute.xlu0 %2945
    %v2949 = vsel %vm301, %v2938, 0
    %2951 = vmatprep.subr.mxu0 0.0
    %2952 = vmatpush1.msra.mxu0 %v2946
    %2953 = vmatprep.subr.mxu0 0.0
    %2954 = vmatpush1.msra.mxu0 0.0
    %2955 = vmatprep.subr.mxu0 0.0
    %2956 = vmatpush1.msra.mxu0 0.0
    %2957 = vmatprep.subr.mxu0 0.0
    %2958 = vmatpush1.msra.mxu0 0.0
    %2959 = vmatprep.subr.mxu0 0.0
    %2960 = vmatpush1.msra.mxu0 0.0
    %2961 = vmatprep.subr.mxu0 0.0
    %2962 = vmatpush1.msra.mxu0 0.0
    %2963 = vmatprep.subr.mxu0 0.0
    %2964 = vmatpush1.msra.mxu0 0.0
    %2965 = vmatprep.subr.mxu0 0.0
    %2966 = vmatpush1.msra.mxu0 0.0
    %2967 = vmatprep.subr.mxu0 0.0
    %2968 = vmatpush1.msra.mxu0 0.0
    %2969 = vmatprep.subr.mxu0 0.0
    %2970 = vmatpush1.msra.mxu0 0.0
    %2971 = vmatprep.subr.mxu0 0.0
    %2972 = vmatpush1.msra.mxu0 0.0
    %2973 = vmatprep.subr.mxu0 0.0
    %2974 = vmatpush1.msra.mxu0 0.0
    %2975 = vmatprep.subr.mxu0 0.0
    %2976 = vmatpush1.msra.mxu0 0.0
    %2977 = vmatprep.subr.mxu0 0.0
    %2978 = vmatpush1.msra.mxu0 0.0
    %2979 = vmatprep.subr.mxu0 0.0
    %2980 = vmatpush1.msra.mxu0 0.0
    %2981 = vmatprep.subr.mxu0 0.0
    %2982 = vmatpush1.msra.mxu0 0.0
    %2983 = vmatprep.subr.mxu0 0.0
    %2984 = vmatpush1.msra.mxu0 0.0
    %2985 = vmatprep.subr.mxu0 0.0
    %2986 = vmatpush1.msra.mxu0 0.0
    %2987 = vmatprep.subr.mxu0 0.0
    %2988 = vmatpush1.msra.mxu0 0.0
    %2989 = vmatprep.subr.mxu0 0.0
    %2990 = vmatpush1.msra.mxu0 0.0
    %2991 = vmatprep.subr.mxu0 0.0
    %2992 = vmatpush1.msra.mxu0 0.0
    %2993 = vmatprep.subr.mxu0 0.0
    %2994 = vmatpush1.msra.mxu0 0.0
    %2995 = vmatprep.subr.mxu0 0.0
    %2996 = vmatpush1.msra.mxu0 0.0
    %2997 = vmatprep.subr.mxu0 0.0
    %2998 = vmatpush1.msra.mxu0 0.0
    %2999 = vmatprep.subr.mxu0 0.0
    %3000 = vmatpush1.msra.mxu0 0.0
    %3001 = vmatprep.subr.mxu0 0.0
    %3002 = vmatpush1.msra.mxu0 0.0
    %3003 = vmatprep.subr.mxu0 0.0
    %3004 = vmatpush1.msra.mxu0 0.0
    %3005 = vmatprep.subr.mxu0 0.0
    %3006 = vmatpush1.msra.mxu0 0.0
    %3007 = vmatprep.subr.mxu0 0.0
    %3008 = vmatpush1.msra.mxu0 0.0
    %3009 = vmatprep.subr.mxu0 0.0
    %3010 = vmatpush1.msra.mxu0 0.0
    %3011 = vmatprep.subr.mxu0 0.0
    %3012 = vmatpush1.msra.mxu0 0.0
    %3013 = vmatprep.subr.mxu0 0.0
    %3014 = vmatpush1.msra.mxu0 0.0
    %3015 = vmatprep.mubr.f32.mxu0 0.0
    %3016 = vmatmul.mubr.f32.gmra.mrb[0].mxu0 %v2949
    %v3017 = vpop.f32.mrb[0].mxu0
    %v3018 = vadd.f32 0.0, %v3017
    %v3019 = vpop.f32.mrb[0].mxu0
    %3020 = vdwg.mxu0
    %3021 = vrot.lane.b32.xlu0 %v285, 40
    %v3022 = vpop.permute.xlu0 %3021
    %v3025 = vsel %vm301, %v2940, 0
    %3027 = vmatprep.subr.mxu0 0.0
    %3028 = vmatpush1.msra.mxu0 %v3022
    %3029 = vmatprep.subr.mxu0 0.0
    %3030 = vmatpush1.msra.mxu0 0.0
    %3031 = vmatprep.subr.mxu0 0.0
    %3032 = vmatpush1.msra.mxu0 0.0
    %3033 = vmatprep.subr.mxu0 0.0
    %3034 = vmatpush1.msra.mxu0 0.0
    %3035 = vmatprep.subr.mxu0 0.0
    %3036 = vmatpush1.msra.mxu0 0.0
    %3037 = vmatprep.subr.mxu0 0.0
    %3038 = vmatpush1.msra.mxu0 0.0
    %3039 = vmatprep.subr.mxu0 0.0
    %3040 = vmatpush1.msra.mxu0 0.0
    %3041 = vmatprep.subr.mxu0 0.0
    %3042 = vmatpush1.msra.mxu0 0.0
    %3043 = vmatprep.subr.mxu0 0.0
    %3044 = vmatpush1.msra.mxu0 0.0
    %3045 = vmatprep.subr.mxu0 0.0
    %3046 = vmatpush1.msra.mxu0 0.0
    %3047 = vmatprep.subr.mxu0 0.0
    %3048 = vmatpush1.msra.mxu0 0.0
    %3049 = vmatprep.subr.mxu0 0.0
    %3050 = vmatpush1.msra.mxu0 0.0
    %3051 = vmatprep.subr.mxu0 0.0
    %3052 = vmatpush1.msra.mxu0 0.0
    %3053 = vmatprep.subr.mxu0 0.0
    %3054 = vmatpush1.msra.mxu0 0.0
    %3055 = vmatprep.subr.mxu0 0.0
    %3056 = vmatpush1.msra.mxu0 0.0
    %3057 = vmatprep.subr.mxu0 0.0
    %3058 = vmatpush1.msra.mxu0 0.0
    %3059 = vmatprep.subr.mxu0 0.0
    %3060 = vmatpush1.msra.mxu0 0.0
    %3061 = vmatprep.subr.mxu0 0.0
    %3062 = vmatpush1.msra.mxu0 0.0
    %3063 = vmatprep.subr.mxu0 0.0
    %3064 = vmatpush1.msra.mxu0 0.0
    %3065 = vmatprep.subr.mxu0 0.0
    %3066 = vmatpush1.msra.mxu0 0.0
    %3067 = vmatprep.subr.mxu0 0.0
    %3068 = vmatpush1.msra.mxu0 0.0
    %3069 = vmatprep.subr.mxu0 0.0
    %3070 = vmatpush1.msra.mxu0 0.0
    %3071 = vmatprep.subr.mxu0 0.0
    %3072 = vmatpush1.msra.mxu0 0.0
    %3073 = vmatprep.subr.mxu0 0.0
    %3074 = vmatpush1.msra.mxu0 0.0
    %3075 = vmatprep.subr.mxu0 0.0
    %3076 = vmatpush1.msra.mxu0 0.0
    %3077 = vmatprep.subr.mxu0 0.0
    %3078 = vmatpush1.msra.mxu0 0.0
    %3079 = vmatprep.subr.mxu0 0.0
    %3080 = vmatpush1.msra.mxu0 0.0
    %3081 = vmatprep.subr.mxu0 0.0
    %3082 = vmatpush1.msra.mxu0 0.0
    %3083 = vmatprep.subr.mxu0 0.0
    %3084 = vmatpush1.msra.mxu0 0.0
    %3085 = vmatprep.subr.mxu0 0.0
    %3086 = vmatpush1.msra.mxu0 0.0
    %3087 = vmatprep.subr.mxu0 0.0
    %3088 = vmatpush1.msra.mxu0 0.0
    %3089 = vmatprep.subr.mxu0 0.0
    %3090 = vmatpush1.msra.mxu0 0.0
    %3091 = vmatprep.mubr.f32.mxu0 0.0
    %3092 = vmatmul.mubr.f32.gmra.mrb[0].mxu0 %v3025
    %v3093 = vpop.f32.mrb[0].mxu0
    %v3094 = vadd.f32 0.0, %v3093
    %v3095 = vpop.f32.mrb[0].mxu0
    %3096 = vdwg.mxu0
    %3097 = vrot.lane.b32.xlu0 %v290, 40
    %v3098 = vpop.permute.xlu0 %3097
    %v3101 = vsel %vm301, %v2942, 0
    %3103 = vmatprep.subr.mxu0 0.0
    %3104 = vmatpush1.msra.mxu0 %v3098
    %3105 = vmatprep.subr.mxu0 0.0
    %3106 = vmatpush1.msra.mxu0 0.0
    %3107 = vmatprep.subr.mxu0 0.0
    %3108 = vmatpush1.msra.mxu0 0.0
    %3109 = vmatprep.subr.mxu0 0.0
    %3110 = vmatpush1.msra.mxu0 0.0
    %3111 = vmatprep.subr.mxu0 0.0
    %3112 = vmatpush1.msra.mxu0 0.0
    %3113 = vmatprep.subr.mxu0 0.0
    %3114 = vmatpush1.msra.mxu0 0.0
    %3115 = vmatprep.subr.mxu0 0.0
    %3116 = vmatpush1.msra.mxu0 0.0
    %3117 = vmatprep.subr.mxu0 0.0
    %3118 = vmatpush1.msra.mxu0 0.0
    %3119 = vmatprep.subr.mxu0 0.0
    %3120 = vmatpush1.msra.mxu0 0.0
    %3121 = vmatprep.subr.mxu0 0.0
    %3122 = vmatpush1.msra.mxu0 0.0
    %3123 = vmatprep.subr.mxu0 0.0
    %3124 = vmatpush1.msra.mxu0 0.0
    %3125 = vmatprep.subr.mxu0 0.0
    %3126 = vmatpush1.msra.mxu0 0.0
    %3127 = vmatprep.subr.mxu0 0.0
    %3128 = vmatpush1.msra.mxu0 0.0
    %3129 = vmatprep.subr.mxu0 0.0
    %3130 = vmatpush1.msra.mxu0 0.0
    %3131 = vmatprep.subr.mxu0 0.0
    %3132 = vmatpush1.msra.mxu0 0.0
    %3133 = vmatprep.subr.mxu0 0.0
    %3134 = vmatpush1.msra.mxu0 0.0
    %3135 = vmatprep.subr.mxu0 0.0
    %3136 = vmatpush1.msra.mxu0 0.0
    %3137 = vmatprep.subr.mxu0 0.0
    %3138 = vmatpush1.msra.mxu0 0.0
    %3139 = vmatprep.subr.mxu0 0.0
    %3140 = vmatpush1.msra.mxu0 0.0
    %3141 = vmatprep.subr.mxu0 0.0
    %3142 = vmatpush1.msra.mxu0 0.0
    %3143 = vmatprep.subr.mxu0 0.0
    %3144 = vmatpush1.msra.mxu0 0.0
    %3145 = vmatprep.subr.mxu0 0.0
    %3146 = vmatpush1.msra.mxu0 0.0
    %3147 = vmatprep.subr.mxu0 0.0
    %3148 = vmatpush1.msra.mxu0 0.0
    %3149 = vmatprep.subr.mxu0 0.0
    %3150 = vmatpush1.msra.mxu0 0.0
    %3151 = vmatprep.subr.mxu0 0.0
    %3152 = vmatpush1.msra.mxu0 0.0
    %3153 = vmatprep.subr.mxu0 0.0
    %3154 = vmatpush1.msra.mxu0 0.0
    %3155 = vmatprep.subr.mxu0 0.0
    %3156 = vmatpush1.msra.mxu0 0.0
    %3157 = vmatprep.subr.mxu0 0.0
    %3158 = vmatpush1.msra.mxu0 0.0
    %3159 = vmatprep.subr.mxu0 0.0
    %3160 = vmatpush1.msra.mxu0 0.0
    %3161 = vmatprep.subr.mxu0 0.0
    %3162 = vmatpush1.msra.mxu0 0.0
    %3163 = vmatprep.subr.mxu0 0.0
    %3164 = vmatpush1.msra.mxu0 0.0
    %3165 = vmatprep.subr.mxu0 0.0
    %3166 = vmatpush1.msra.mxu0 0.0
    %3167 = vmatprep.mubr.f32.mxu0 0.0
    %3168 = vmatmul.mubr.f32.gmra.mrb[0].mxu0 %v3101
    %v3169 = vpop.f32.mrb[0].mxu0
    %v3170 = vadd.f32 0.0, %v3169
    %v3171 = vpop.f32.mrb[0].mxu0
    %3172 = vdwg.mxu0
    %3173 = vrot.lane.b32.xlu0 %v295, 40
    %v3174 = vpop.permute.xlu0 %3173
    %v3177 = vsel %vm301, %v2944, 0
    %3179 = vmatprep.subr.mxu0 0.0
    %3180 = vmatpush1.msra.mxu0 %v3174
    %3181 = vmatprep.subr.mxu0 0.0
    %3182 = vmatpush1.msra.mxu0 0.0
    %3183 = vmatprep.subr.mxu0 0.0
    %3184 = vmatpush1.msra.mxu0 0.0
    %3185 = vmatprep.subr.mxu0 0.0
    %3186 = vmatpush1.msra.mxu0 0.0
    %3187 = vmatprep.subr.mxu0 0.0
    %3188 = vmatpush1.msra.mxu0 0.0
    %3189 = vmatprep.subr.mxu0 0.0
    %3190 = vmatpush1.msra.mxu0 0.0
    %3191 = vmatprep.subr.mxu0 0.0
    %3192 = vmatpush1.msra.mxu0 0.0
    %3193 = vmatprep.subr.mxu0 0.0
    %3194 = vmatpush1.msra.mxu0 0.0
    %3195 = vmatprep.subr.mxu0 0.0
    %3196 = vmatpush1.msra.mxu0 0.0
    %3197 = vmatprep.subr.mxu0 0.0
    %3198 = vmatpush1.msra.mxu0 0.0
    %3199 = vmatprep.subr.mxu0 0.0
    %3200 = vmatpush1.msra.mxu0 0.0
    %3201 = vmatprep.subr.mxu0 0.0
    %3202 = vmatpush1.msra.mxu0 0.0
    %3203 = vmatprep.subr.mxu0 0.0
    %3204 = vmatpush1.msra.mxu0 0.0
    %3205 = vmatprep.subr.mxu0 0.0
    %3206 = vmatpush1.msra.mxu0 0.0
    %3207 = vmatprep.subr.mxu0 0.0
    %3208 = vmatpush1.msra.mxu0 0.0
    %3209 = vmatprep.subr.mxu0 0.0
    %3210 = vmatpush1.msra.mxu0 0.0
    %3211 = vmatprep.subr.mxu0 0.0
    %3212 = vmatpush1.msra.mxu0 0.0
    %3213 = vmatprep.subr.mxu0 0.0
    %3214 = vmatpush1.msra.mxu0 0.0
    %3215 = vmatprep.subr.mxu0 0.0
    %3216 = vmatpush1.msra.mxu0 0.0
    %3217 = vmatprep.subr.mxu0 0.0
    %3218 = vmatpush1.msra.mxu0 0.0
    %3219 = vmatprep.subr.mxu0 0.0
    %3220 = vmatpush1.msra.mxu0 0.0
    %3221 = vmatprep.subr.mxu0 0.0
    %3222 = vmatpush1.msra.mxu0 0.0
    %3223 = vmatprep.subr.mxu0 0.0
    %3224 = vmatpush1.msra.mxu0 0.0
    %3225 = vmatprep.subr.mxu0 0.0
    %3226 = vmatpush1.msra.mxu0 0.0
    %3227 = vmatprep.subr.mxu0 0.0
    %3228 = vmatpush1.msra.mxu0 0.0
    %3229 = vmatprep.subr.mxu0 0.0
    %3230 = vmatpush1.msra.mxu0 0.0
    %3231 = vmatprep.subr.mxu0 0.0
    %3232 = vmatpush1.msra.mxu0 0.0
    %3233 = vmatprep.subr.mxu0 0.0
    %3234 = vmatpush1.msra.mxu0 0.0
    %3235 = vmatprep.subr.mxu0 0.0
    %3236 = vmatpush1.msra.mxu0 0.0
    %3237 = vmatprep.subr.mxu0 0.0
    %3238 = vmatpush1.msra.mxu0 0.0
    %3239 = vmatprep.subr.mxu0 0.0
    %3240 = vmatpush1.msra.mxu0 0.0
    %3241 = vmatprep.subr.mxu0 0.0
    %3242 = vmatpush1.msra.mxu0 0.0
    %3243 = vmatprep.mubr.f32.mxu0 0.0
    %3244 = vmatmul.mubr.f32.gmra.mrb[0].mxu0 %v3177
    %v3245 = vpop.f32.mrb[0].mxu0
    %v3246 = vadd.f32 0.0, %v3245
    %v3247 = vpop.f32.mrb[0].mxu0
    %3248 = vdwg.mxu0
    %v3249 = vld [vmem:[%s2 + $0x18] sm:$0xff]
    %v3251 = vsel %vm301, %v3018, 0
    %v3254 = vsel %vm301, %v3094, 0
    %v3257 = vsel %vm301, %v3170, 0
    %v3260 = vsel %vm301, %v3246, 0
    %3262 = vmatprep.subr.mxu0 0.0
    %3263 = vmatpush1.msra.mxu0 %v3249
    %3264 = vmatprep.subr.mxu0 0.0
    %3265 = vmatpush1.msra.mxu0 0.0
    %3266 = vmatprep.subr.mxu0 0.0
    %3267 = vmatpush1.msra.mxu0 0.0
    %3268 = vmatprep.subr.mxu0 0.0
    %3269 = vmatpush1.msra.mxu0 0.0
    %3270 = vmatprep.subr.mxu0 0.0
    %3271 = vmatpush1.msra.mxu0 0.0
    %3272 = vmatprep.subr.mxu0 0.0
    %3273 = vmatpush1.msra.mxu0 0.0
    %3274 = vmatprep.subr.mxu0 0.0
    %3275 = vmatpush1.msra.mxu0 0.0
    %3276 = vmatprep.subr.mxu0 0.0
    %3277 = vmatpush1.msra.mxu0 0.0
    %3278 = vmatprep.subr.mxu0 0.0
    %3279 = vmatpush1.msra.mxu0 0.0
    %3280 = vmatprep.subr.mxu0 0.0
    %3281 = vmatpush1.msra.mxu0 0.0
    %3282 = vmatprep.subr.mxu0 0.0
    %3283 = vmatpush1.msra.mxu0 0.0
    %3284 = vmatprep.subr.mxu0 0.0
    %3285 = vmatpush1.msra.mxu0 0.0
    %3286 = vmatprep.subr.mxu0 0.0
    %3287 = vmatpush1.msra.mxu0 0.0
    %3288 = vmatprep.subr.mxu0 0.0
    %3289 = vmatpush1.msra.mxu0 0.0
    %3290 = vmatprep.subr.mxu0 0.0
    %3291 = vmatpush1.msra.mxu0 0.0
    %3292 = vmatprep.subr.mxu0 0.0
    %3293 = vmatpush1.msra.mxu0 0.0
    %3294 = vmatprep.subr.mxu0 0.0
    %3295 = vmatpush1.msra.mxu0 0.0
    %3296 = vmatprep.subr.mxu0 0.0
    %3297 = vmatpush1.msra.mxu0 0.0
    %3298 = vmatprep.subr.mxu0 0.0
    %3299 = vmatpush1.msra.mxu0 0.0
    %3300 = vmatprep.subr.mxu0 0.0
    %3301 = vmatpush1.msra.mxu0 0.0
    %3302 = vmatprep.subr.mxu0 0.0
    %3303 = vmatpush1.msra.mxu0 0.0
    %3304 = vmatprep.subr.mxu0 0.0
    %3305 = vmatpush1.msra.mxu0 0.0
    %3306 = vmatprep.subr.mxu0 0.0
    %3307 = vmatpush1.msra.mxu0 0.0
    %3308 = vmatprep.subr.mxu0 0.0
    %3309 = vmatpush1.msra.mxu0 0.0
    %3310 = vmatprep.subr.mxu0 0.0
    %3311 = vmatpush1.msra.mxu0 0.0
    %3312 = vmatprep.subr.mxu0 0.0
    %3313 = vmatpush1.msra.mxu0 0.0
    %3314 = vmatprep.subr.mxu0 0.0
    %3315 = vmatpush1.msra.mxu0 0.0
    %3316 = vmatprep.subr.mxu0 0.0
    %3317 = vmatpush1.msra.mxu0 0.0
    %3318 = vmatprep.subr.mxu0 0.0
    %3319 = vmatpush1.msra.mxu0 0.0
    %3320 = vmatprep.subr.mxu0 0.0
    %3321 = vmatpush1.msra.mxu0 0.0
    %3322 = vmatprep.subr.mxu0 0.0
    %3323 = vmatpush1.msra.mxu0 0.0
    %3324 = vmatprep.subr.mxu0 0.0
    %3325 = vmatpush1.msra.mxu0 0.0
    %3326 = vmatprep.mubr.f32.mxu0 0.0
    %3327 = vmatmul.mubr.f32.gmra.mrb[0].mxu0 %v3251
    %v3328 = vpop.f32.mrb[0].mxu0
    %v3329 = vadd.f32 0.0, %v3328
    %v3330 = vpop.f32.mrb[0].mxu0
    %3331 = vmatprep.mubr.f32.mxu0 0.0
    %3332 = vmatmul.mubr.f32.gmra.mrb[0].mxu0 %v3254
    %v3333 = vpop.f32.mrb[0].mxu0
    %v3334 = vadd.f32 0.0, %v3333
    %v3335 = vpop.f32.mrb[0].mxu0
    %3336 = vmatprep.mubr.f32.mxu0 0.0
    %3337 = vmatmul.mubr.f32.gmra.mrb[0].mxu0 %v3257
    %v3338 = vpop.f32.mrb[0].mxu0
    %v3339 = vadd.f32 0.0, %v3338
    %v3340 = vpop.f32.mrb[0].mxu0
    %3341 = vmatprep.mubr.f32.mxu0 0.0
    %3342 = vmatmul.mubr.f32.gmra.mrb[0].mxu0 %v3260
    %v3343 = vpop.f32.mrb[0].mxu0
    %v3344 = vadd.f32 0.0, %v3343
    %v3345 = vpop.f32.mrb[0].mxu0
    %3346 = vdwg.mxu0
    %v3347 = vadd.f32 %v2581, %v3329
    %v3348 = vadd.f32 %v2582, %v3334
    %v3349 = vadd.f32 %v2583, %v3339
    %v3350 = vadd.f32 %v2584, %v3344
    %v3355 = vrot.slane %v607, 1
    %v3356 = vrot.slane %v608, 1
    %v3357 = vrot.slane %v609, 1
    %v3358 = vrot.slane %v610, 1
    %v3367 = vrot.slane %v2131, 7
    %v3368 = vrot.slane %v2132, 7
    %v3369 = vrot.slane %v2133, 7
    %v3370 = vrot.slane %v2134, 7
    %v3379 = vrot.slane %v2897, 6
    %v3380 = vrot.slane %v2898, 6
    %v3381 = vrot.slane %v2899, 6
    %v3382 = vrot.slane %v2900, 6
    %vm3387 = vcmask 1040384
    %v3388 = vsel %vm3387, %v3355, %v1272
    %v3389 = vsel %vm3387, %v3356, %v1273
    %v3390 = vsel %vm3387, %v3357, %v1274
    %v3391 = vsel %vm3387, %v3358, %v1275
    %vm3392 = vcmask 1041408
    %v3393 = vsel %vm3392, %v3388, %v3367
    %v3394 = vsel %vm3392, %v3389, %v3368
    %v3395 = vsel %vm3392, %v3390, %v3369
    %v3396 = vsel %vm3392, %v3391, %v3370
    %vm3397 = vcmask 1042432
    %v3398 = vsel %vm3397, %v3393, %v3379
    %v3399 = vsel %vm3397, %v3394, %v3380
    %v3400 = vsel %vm3397, %v3395, %v3381
    %v3401 = vsel %vm3397, %v3396, %v3382
    %vm3402 = vcmask 60416
    %3403 = vst.msk [vmem:[#allocation14] sm:$0xf] %vm3402, %v3398
    %3404 = vst.msk [vmem:[#allocation14 + $0x4] sm:$0xf] %vm3402, %v3399
    %3405 = vst.msk [vmem:[#allocation14 + $0x8] sm:$0xf] %vm3402, %v3400
    %3406 = vst.msk [vmem:[#allocation14 + $0xc] sm:$0xf] %vm3402, %v3401
    %v3407 = vadd.f32 %v117, %v3347
    %v3408 = vadd.f32 %v118, %v3348
    %v3409 = vadd.f32 %v119, %v3349
    %v3410 = vadd.f32 %v120, %v3350
    %v3411 = vld [vmem:[%s3] sm:$0x1]
    %v3413 = vlaneseq
    %v3414 = vshrl.u32 %v3413, 7
    %v3415 = vsub.s32 0, %v3414
    %v3416 = vrot.slane %v3411, %v3415
    %v3418 = vadd.f32 %v3407, %v3416
    %v3419 = vadd.f32 %v3408, %v3416
    %v3420 = vadd.f32 %v3409, %v3416
    %v3421 = vadd.f32 %v3410, %v3416
    %v3422 = vsel %vm121, %v3418, 0.0
    %3423 = vadd.xlane.f32.xlu0 %v3422
    %v3424 = vpop.xlane.xlu0 %3423
    %v3425 = vsel %vm121, %v3419, 0.0
    %3426 = vadd.xlane.f32.xlu0 %v3425
    %v3427 = vpop.xlane.xlu0 %3426
    %v3428 = vsel %vm121, %v3420, 0.0
    %3429 = vadd.xlane.f32.xlu0 %v3428
    %v3430 = vpop.xlane.xlu0 %3429
    %v3431 = vsel %vm121, %v3421, 0.0
    %3432 = vadd.xlane.f32.xlu0 %v3431
    %v3433 = vpop.xlane.xlu0 %3432
    %v3434 = vmul.f32 %v3424, %v134
    %v3435 = vmul.f32 %v3427, %v134
    %v3436 = vmul.f32 %v3430, %v134
    %v3437 = vmul.f32 %v3433, %v134
    %v3438 = vsub.f32 %v3418, %v3434
    %v3439 = vsub.f32 %v3419, %v3435
    %v3440 = vsub.f32 %v3420, %v3436
    %v3441 = vsub.f32 %v3421, %v3437
    %v3442 = vmul.f32 %v3438, %v3438
    %v3443 = vmul.f32 %v3439, %v3439
    %v3444 = vmul.f32 %v3440, %v3440
    %v3445 = vmul.f32 %v3441, %v3441
    %v3446 = vsel %vm121, %v3442, 0.0
    %3447 = vadd.xlane.f32.xlu0 %v3446
    %v3448 = vpop.xlane.xlu0 %3447
    %v3449 = vsel %vm121, %v3443, 0.0
    %3450 = vadd.xlane.f32.xlu0 %v3449
    %v3451 = vpop.xlane.xlu0 %3450
    %v3452 = vsel %vm121, %v3444, 0.0
    %3453 = vadd.xlane.f32.xlu0 %v3452
    %v3454 = vpop.xlane.xlu0 %3453
    %v3455 = vsel %vm121, %v3445, 0.0
    %3456 = vadd.xlane.f32.xlu0 %v3455
    %v3457 = vpop.xlane.xlu0 %3456
    %v3458 = vmul.f32 %v3448, %v134
    %v3459 = vmul.f32 %v3451, %v134
    %v3460 = vmul.f32 %v3454, %v134
    %v3461 = vmul.f32 %v3457, %v134
    %v3462 = vadd.f32 %v3458, 1e-05
    %v3463 = vadd.f32 %v3459, 1e-05
    %v3464 = vadd.f32 %v3460, 1e-05
    %v3465 = vadd.f32 %v3461, 1e-05
    %v3466 = vrsqrt.pop %v3462
    %v3467 = vrsqrt.pop %v3463
    %v3468 = vrsqrt.pop %v3464
    %v3469 = vrsqrt.pop %v3465
    %v3470 = vmul.f32 %v3438, %v3466
    %v3471 = vmul.f32 %v3439, %v3467
    %v3472 = vmul.f32 %v3440, %v3468
    %v3473 = vmul.f32 %v3441, %v3469
    %v3474 = vld [vmem:[#allocation5] sm:$0x1]
    %v3476 = vlaneseq
    %v3477 = vshrl.u32 %v3476, 7
    %v3478 = vsub.s32 0, %v3477
    %v3479 = vrot.slane %v3474, %v3478
    %v3481 = vmul.f32 %v3470, %v3479
    %v3482 = vmul.f32 %v3471, %v3479
    %v3483 = vmul.f32 %v3472, %v3479
    %v3484 = vmul.f32 %v3473, %v3479
    %v3485 = vld [vmem:[#allocation7] sm:$0x1]
    %v3487 = vlaneseq
    %v3488 = vshrl.u32 %v3487, 7
    %v3489 = vsub.s32 0, %v3488
    %v3490 = vrot.slane %v3485, %v3489
    %v3492 = vadd.f32 %v3481, %v3490
    %v3493 = vadd.f32 %v3482, %v3490
    %v3494 = vadd.f32 %v3483, %v3490
    %v3495 = vadd.f32 %v3484, %v3490
    %v3496 = vld [vmem:[#allocation8] sm:$0xff]
    %v3497 = vld [vmem:[#allocation8 + $0x8] sm:$0xff]
    %v3498 = vld [vmem:[#allocation8 + $0x10] sm:$0xff]
    %v3499 = vld [vmem:[#allocation8 + $0x18] sm:$0xff]
    %v3500 = vld [vmem:[#allocation10] sm:$0x1]
    %v3502 = vlaneseq
    %v3503 = vshrl.u32 %v3502, 7
    %v3504 = vsub.s32 0, %v3503
    %v3505 = vrot.slane %v3500, %v3504
    %v3508 = vsel %vm121, %v3492, 0
    %v3511 = vsel %vm121, %v3493, 0
    %v3514 = vsel %vm121, %v3494, 0
    %v3517 = vsel %vm121, %v3495, 0
    %3519 = vmatprep.subr.mxu0 0.0
    %3520 = vmatpush1.msra.mxu0 %v3496
    %3521 = vmatprep.subr.mxu0 0.0
    %3522 = vmatpush1.msra.mxu0 %v3497
    %3523 = vmatprep.subr.mxu0 0.0
    %3524 = vmatpush1.msra.mxu0 %v3498
    %3525 = vmatprep.subr.mxu0 0.0
    %3526 = vmatpush1.msra.mxu0 %v3499
    %3527 = vmatprep.subr.mxu0 0.0
    %3528 = vmatpush1.msra.mxu0 0.0
    %3529 = vmatprep.subr.mxu0 0.0
    %3530 = vmatpush1.msra.mxu0 0.0
    %3531 = vmatprep.subr.mxu0 0.0
    %3532 = vmatpush1.msra.mxu0 0.0
    %3533 = vmatprep.subr.mxu0 0.0
    %3534 = vmatpush1.msra.mxu0 0.0
    %3535 = vmatprep.subr.mxu0 0.0
    %3536 = vmatpush1.msra.mxu0 0.0
    %3537 = vmatprep.subr.mxu0 0.0
    %3538 = vmatpush1.msra.mxu0 0.0
    %3539 = vmatprep.subr.mxu0 0.0
    %3540 = vmatpush1.msra.mxu0 0.0
    %3541 = vmatprep.subr.mxu0 0.0
    %3542 = vmatpush1.msra.mxu0 0.0
    %3543 = vmatprep.subr.mxu0 0.0
    %3544 = vmatpush1.msra.mxu0 0.0
    %3545 = vmatprep.subr.mxu0 0.0
    %3546 = vmatpush1.msra.mxu0 0.0
    %3547 = vmatprep.subr.mxu0 0.0
    %3548 = vmatpush1.msra.mxu0 0.0
    %3549 = vmatprep.subr.mxu0 0.0
    %3550 = vmatpush1.msra.mxu0 0.0
    %3551 = vmatprep.subr.mxu0 0.0
    %3552 = vmatpush1.msra.mxu0 0.0
    %3553 = vmatprep.subr.mxu0 0.0
    %3554 = vmatpush1.msra.mxu0 0.0
    %3555 = vmatprep.subr.mxu0 0.0
    %3556 = vmatpush1.msra.mxu0 0.0
    %3557 = vmatprep.subr.mxu0 0.0
    %3558 = vmatpush1.msra.mxu0 0.0
    %3559 = vmatprep.subr.mxu0 0.0
    %3560 = vmatpush1.msra.mxu0 0.0
    %3561 = vmatprep.subr.mxu0 0.0
    %3562 = vmatpush1.msra.mxu0 0.0
    %3563 = vmatprep.subr.mxu0 0.0
    %3564 = vmatpush1.msra.mxu0 0.0
    %3565 = vmatprep.subr.mxu0 0.0
    %3566 = vmatpush1.msra.mxu0 0.0
    %3567 = vmatprep.subr.mxu0 0.0
    %3568 = vmatpush1.msra.mxu0 0.0
    %3569 = vmatprep.subr.mxu0 0.0
    %3570 = vmatpush1.msra.mxu0 0.0
    %3571 = vmatprep.subr.mxu0 0.0
    %3572 = vmatpush1.msra.mxu0 0.0
    %3573 = vmatprep.subr.mxu0 0.0
    %3574 = vmatpush1.msra.mxu0 0.0
    %3575 = vmatprep.subr.mxu0 0.0
    %3576 = vmatpush1.msra.mxu0 0.0
    %3577 = vmatprep.subr.mxu0 0.0
    %3578 = vmatpush1.msra.mxu0 0.0
    %3579 = vmatprep.subr.mxu0 0.0
    %3580 = vmatpush1.msra.mxu0 0.0
    %3581 = vmatprep.subr.mxu0 0.0
    %3582 = vmatpush1.msra.mxu0 0.0
    %3583 = vmatprep.mubr.f32.mxu0 0.0
    %3584 = vmatmul.mubr.f32.gmra.mrb[0].mxu0 %v3508
    %v3585 = vpop.f32.mrb[0].mxu0
    %v3586 = vadd.f32 %v3505, %v3585
    %v3587 = vpop.f32.mrb[0].mxu0
    %3588 = vmatprep.mubr.f32.mxu0 0.0
    %3589 = vmatmul.mubr.f32.gmra.mrb[0].mxu0 %v3511
    %v3590 = vpop.f32.mrb[0].mxu0
    %v3591 = vadd.f32 %v3505, %v3590
    %v3592 = vpop.f32.mrb[0].mxu0
    %3593 = vmatprep.mubr.f32.mxu0 0.0
    %3594 = vmatmul.mubr.f32.gmra.mrb[0].mxu0 %v3514
    %v3595 = vpop.f32.mrb[0].mxu0
    %v3596 = vadd.f32 %v3505, %v3595
    %v3597 = vpop.f32.mrb[0].mxu0
    %3598 = vmatprep.mubr.f32.mxu0 0.0
    %3599 = vmatmul.mubr.f32.gmra.mrb[0].mxu0 %v3517
    %v3600 = vpop.f32.mrb[0].mxu0
    %v3601 = vadd.f32 %v3505, %v3600
    %v3602 = vpop.f32.mrb[0].mxu0
    %3603 = vdwg.mxu0
    %v3604 = vmax.f32 %v3586, 0.0
    %v3605 = vmax.f32 %v3591, 0.0
    %v3606 = vmax.f32 %v3596, 0.0
    %v3607 = vmax.f32 %v3601, 0.0
    %v3608 = vld [vmem:[%s10] sm:$0xff]
    %v3609 = vld [vmem:[%s10 + $0x8] sm:$0xff]
    %v3610 = vld [vmem:[%s10 + $0x10] sm:$0xff]
    %v3611 = vld [vmem:[%s10 + $0x18] sm:$0xff]
    %v3612 = vld [vmem:[%s10 + $0x20] sm:$0xff]
    %v3613 = vld [vmem:[%s10 + $0x28] sm:$0xff]
    %v3614 = vld [vmem:[%s10 + $0x30] sm:$0xff]
    %v3615 = vld [vmem:[%s10 + $0x38] sm:$0xff]
    %v3616 = vld [vmem:[#allocation11] sm:$0x1]
    %v3618 = vlaneseq
    %v3619 = vshrl.u32 %v3618, 7
    %v3620 = vsub.s32 0, %v3619
    %v3621 = vrot.slane %v3616, %v3620
    %vm3623 = vcmask 523264
    %v3625 = vsel %vm3623, %v3604, 0
    %v3628 = vsel %vm3623, %v3605, 0
    %v3631 = vsel %vm3623, %v3606, 0
    %v3634 = vsel %vm3623, %v3607, 0
    %3636 = vmatprep.subr.mxu0 0.0
    %3637 = vmatpush1.msra.mxu0 %v3608
    %3638 = vmatprep.subr.mxu0 0.0
    %3639 = vmatpush1.msra.mxu0 %v3609
    %3640 = vmatprep.subr.mxu0 0.0
    %3641 = vmatpush1.msra.mxu0 %v3610
    %3642 = vmatprep.subr.mxu0 0.0
    %3643 = vmatpush1.msra.mxu0 %v3611
    %3644 = vmatprep.subr.mxu0 0.0
    %3645 = vmatpush1.msra.mxu0 %v3612
    %3646 = vmatprep.subr.mxu0 0.0
    %3647 = vmatpush1.msra.mxu0 %v3613
    %3648 = vmatprep.subr.mxu0 0.0
    %3649 = vmatpush1.msra.mxu0 %v3614
    %3650 = vmatprep.subr.mxu0 0.0
    %3651 = vmatpush1.msra.mxu0 %v3615
    %3652 = vmatprep.subr.mxu0 0.0
    %3653 = vmatpush1.msra.mxu0 0.0
    %3654 = vmatprep.subr.mxu0 0.0
    %3655 = vmatpush1.msra.mxu0 0.0
    %3656 = vmatprep.subr.mxu0 0.0
    %3657 = vmatpush1.msra.mxu0 0.0
    %3658 = vmatprep.subr.mxu0 0.0
    %3659 = vmatpush1.msra.mxu0 0.0
    %3660 = vmatprep.subr.mxu0 0.0
    %3661 = vmatpush1.msra.mxu0 0.0
    %3662 = vmatprep.subr.mxu0 0.0
    %3663 = vmatpush1.msra.mxu0 0.0
    %3664 = vmatprep.subr.mxu0 0.0
    %3665 = vmatpush1.msra.mxu0 0.0
    %3666 = vmatprep.subr.mxu0 0.0
    %3667 = vmatpush1.msra.mxu0 0.0
    %3668 = vmatprep.subr.mxu0 0.0
    %3669 = vmatpush1.msra.mxu0 0.0
    %3670 = vmatprep.subr.mxu0 0.0
    %3671 = vmatpush1.msra.mxu0 0.0
    %3672 = vmatprep.subr.mxu0 0.0
    %3673 = vmatpush1.msra.mxu0 0.0
    %3674 = vmatprep.subr.mxu0 0.0
    %3675 = vmatpush1.msra.mxu0 0.0
    %3676 = vmatprep.subr.mxu0 0.0
    %3677 = vmatpush1.msra.mxu0 0.0
    %3678 = vmatprep.subr.mxu0 0.0
    %3679 = vmatpush1.msra.mxu0 0.0
    %3680 = vmatprep.subr.mxu0 0.0
    %3681 = vmatpush1.msra.mxu0 0.0
    %3682 = vmatprep.subr.mxu0 0.0
    %3683 = vmatpush1.msra.mxu0 0.0
    %3684 = vmatprep.subr.mxu0 0.0
    %3685 = vmatpush1.msra.mxu0 0.0
    %3686 = vmatprep.subr.mxu0 0.0
    %3687 = vmatpush1.msra.mxu0 0.0
    %3688 = vmatprep.subr.mxu0 0.0
    %3689 = vmatpush1.msra.mxu0 0.0
    %3690 = vmatprep.subr.mxu0 0.0
    %3691 = vmatpush1.msra.mxu0 0.0
    %3692 = vmatprep.subr.mxu0 0.0
    %3693 = vmatpush1.msra.mxu0 0.0
    %3694 = vmatprep.subr.mxu0 0.0
    %3695 = vmatpush1.msra.mxu0 0.0
    %3696 = vmatprep.subr.mxu0 0.0
    %3697 = vmatpush1.msra.mxu0 0.0
    %3698 = vmatprep.subr.mxu0 0.0
    %3699 = vmatpush1.msra.mxu0 0.0
    %3700 = vmatprep.mubr.f32.mxu0 0.0
    %3701 = vmatmul.mubr.f32.gmra.mrb[0].mxu0 %v3625
    %v3702 = vpop.f32.mrb[0].mxu0
    %v3703 = vadd.f32 %v3621, %v3702
    %v3704 = vpop.f32.mrb[0].mxu0
    %3705 = vmatprep.mubr.f32.mxu0 0.0
    %3706 = vmatmul.mubr.f32.gmra.mrb[0].mxu0 %v3628
    %v3707 = vpop.f32.mrb[0].mxu0
    %v3708 = vadd.f32 %v3621, %v3707
    %v3709 = vpop.f32.mrb[0].mxu0
    %3710 = vmatprep.mubr.f32.mxu0 0.0
    %3711 = vmatmul.mubr.f32.gmra.mrb[0].mxu0 %v3631
    %v3712 = vpop.f32.mrb[0].mxu0
    %v3713 = vadd.f32 %v3621, %v3712
    %v3714 = vpop.f32.mrb[0].mxu0
    %3715 = vmatprep.mubr.f32.mxu0 0.0
    %3716 = vmatmul.mubr.f32.gmra.mrb[0].mxu0 %v3634
    %v3717 = vpop.f32.mrb[0].mxu0
    %v3718 = vadd.f32 %v3621, %v3717
    %v3719 = vpop.f32.mrb[0].mxu0
    %3720 = vdwg.mxu0
    %v3721 = vadd.f32 %v3418, %v3703
    %v3722 = vadd.f32 %v3419, %v3708
    %v3723 = vadd.f32 %v3420, %v3713
    %v3724 = vadd.f32 %v3421, %v3718
    %3725 = vst.msk [vmem:[#allocation13] sm:$0xff] %vm121, %v3721
    %3726 = vst.msk [vmem:[#allocation13 + $0x8] sm:$0xff] %vm121, %v3722
    %3727 = vst.msk [vmem:[#allocation13 + $0x10] sm:$0xff] %vm121, %v3723
    %3728 = vst.msk [vmem:[#allocation13 + $0x18] sm:$0xff] %vm121, %v3724
    // Predicated region
    $region74: #{_attention_block_call.1} parent=1 // pred_check
      _
    $region75: #{_attention_block_call.1} parent=1 // pred_check_branch
      %3730 = sbr.rel (0) target = $region77
    $region76: #{_attention_block_call.1} parent=1 // pred_region
      %s3732 = ssub.s32 512, 512
      %3733 = vsyncadd [#allocation4], %s3732
      %s3734 = sshll.u32 [#allocation13], 4
      %s3735 = int_to_ptr.vmem [resolvable:$true] %s3734
      %3740 = dma.vmem_to_hbm [thread:$0]  %s3735, 512, %s12, [#allocation4], 128, 128, 8
    $region77: #{_attention_block_call.1} parent=1 // pred_fallthru
      _
    // Predicated region
    $region78: #{_attention_block_call.1} parent=1 // pred_check
      _
    $region79: #{_attention_block_call.1} parent=1 // pred_check_branch
      %3742 = sbr.rel (0) target = $region81
    $region80: #{_attention_block_call.1} parent=1 // pred_region
      %s3744 = ssub.s32 256, 256
      %3745 = vsyncadd [#allocation15], %s3744
      %s3746 = sshll.u32 [#allocation14], 4
      %s3747 = int_to_ptr.vmem [resolvable:$true] %s3746
      %3752 = dma.vmem_to_hbm [thread:$0]  %s3747, 256, %s13, [#allocation15], 64, 64, 4
    $region81: #{_attention_block_call.1} parent=1 // pred_fallthru
      _
    // Predicated region
    $region82: #{_attention_block_call.1} parent=1 // pred_check
      _
    $region83: #{_attention_block_call.1} parent=1 // pred_check_branch
      %3754 = sbr.rel (0) target = $region85
    $region84: #{_attention_block_call.1} parent=1 // pred_region
      %3755 = dma.done [#allocation4], 512
    $region85: #{_attention_block_call.1} parent=1 // pred_fallthru
      _
    // Predicated region
    $region86: #{_attention_block_call.1} parent=1 // pred_check
      _
    $region87: #{_attention_block_call.1} parent=1 // pred_check_branch
      %3757 = sbr.rel (0) target = $region89
    $region88: #{_attention_block_call.1} parent=1 // pred_region
      %3758 = dma.done [#allocation15], 256
    $region89: #{_attention_block_call.1} parent=1 // pred_fallthru
      _
    %3759 = vsyncpa [#allocation3], 1
    %3760 = vsyncpa [#allocation6], 1
    %3761 = vsyncpa [#allocation9], 1
    %3762 = vsyncpa [#allocation12], 1
    %3763 = vsyncpa [#allocation4], 1
    %3764 = vsyncpa [#allocation15], 1

// kernel: _attention_block_call.1
$region0: #{_attention_block_call.1}
  #allocation0 [shape = 'u32[]', space=smem, size = 0x4, offset = 0x4, fixed_abs, tag = 'smem constant byte address 0x4 - core index']
  #allocation1 [shape = 'u32[144,128]{1,0:T(1,128)}', space=vmem, size = 0x12000, scoped, tag = 'internal scratch']
  %s0 = inlined_call_operand.vmem [shape: f32[4,8,32], index: 0, kind: input, shape index: {}]
  %s1 = inlined_call_operand.vmem [shape: f32[32,96], index: 1, kind: input, shape index: {}]
  %s2 = inlined_call_operand.vmem [shape: f32[32,32], index: 2, kind: input, shape index: {}]
  %s3 = inlined_call_operand.vmem [shape: f32[1,32], index: 3, kind: input, shape index: {}]
  %s4 = inlined_call_operand.vmem [shape: f32[1,32], index: 4, kind: input, shape index: {}]
  %s5 = inlined_call_operand.hbm [shape: f32[1,32], index: 5, kind: input, shape index: {}]
  %s6 = inlined_call_operand.hbm [shape: f32[1,32], index: 6, kind: input, shape index: {}]
  %s7 = inlined_call_operand.hbm [shape: f32[1,32], index: 7, kind: input, shape index: {}]
  %s8 = inlined_call_operand.hbm [shape: f32[32,64], index: 8, kind: input, shape index: {}]
  %s9 = inlined_call_operand.hbm [shape: f32[1,64], index: 9, kind: input, shape index: {}]
  %s10 = inlined_call_operand.vmem [shape: f32[64,32], index: 10, kind: input, shape index: {}]
  %s11 = inlined_call_operand.hbm [shape: f32[1,32], index: 11, kind: input, shape index: {}]
  %s12 = inlined_call_operand.hbm [shape: f32[4,8,32], index: 12, kind: output, shape index: {0}]
  %s13 = inlined_call_operand.hbm [shape: f32[4,4,8], index: 13, kind: output, shape index: {1}]
  %14 = xla_tuple %s12, %s13
  %s15 = sld [smem:[#allocation0]]
  $region90: #{_attention_block_call.1} parent=0
    _
  %s17 = ssub.s32 1, %s15
  %s18 = scalar_select 0, %s17, %s15
  $region1: #{_attention_block_call.1} parent=0
    #allocation2 [shape = 'u8[512]{0}', space=vmem, size = 0x400, scoped, tag = 'input window, operand 5, single buffered']
    #allocation3 [shape = 's32[1]{0}', space=sflag, size = 0x4, scoped, tag = 'scoped memory for _attention_block_call.1']
    #allocation4 [shape = 's32[1]{0}', space=sflag, size = 0x4, scoped, tag = 'scoped memory for _attention_block_call.1']
    #allocation5 [shape = 'u8[512]{0}', space=vmem, size = 0x400, scoped, tag = 'input window, operand 6, single buffered']
    #allocation6 [shape = 's32[1]{0}', space=sflag, size = 0x4, scoped, tag = 'scoped memory for _attention_block_call.1']
    #allocation7 [shape = 'u8[512]{0}', space=vmem, size = 0x400, scoped, tag = 'input window, operand 7, single buffered']
    #allocation8 [shape = 'u8[16384]{0}', space=vmem, size = 0x4000, scoped, tag = 'input window, operand 8, single buffered']
    #allocation9 [shape = 's32[1]{0}', space=sflag, size = 0x4, scoped, tag = 'scoped memory for _attention_block_call.1']
    #allocation10 [shape = 'u8[512]{0}', space=vmem, size = 0x400, scoped, tag = 'input window, operand 9, single buffered']
    #allocation11 [shape = 'u8[512]{0}', space=vmem, size = 0x400, scoped, tag = 'input window, operand 11, single buffered']
    #allocation12 [shape = 's32[1]{0}', space=sflag, size = 0x4, scoped, tag = 'scoped memory for _attention_block_call.1']
    #allocation13 [shape = 'u8[16384]{0}', space=vmem, size = 0x4000, scoped, tag = 'output window, operand 0, single buffered']
    #allocation14 [shape = 'u8[8192]{0}', space=vmem, size = 0x2000, scoped, tag = 'output window, operand 1, single buffered']
    #allocation15 [shape = 's32[1]{0}', space=sflag, size = 0x4, scoped, tag = 'scoped memory for _attention_block_call.1']
    %19 = vsyncpa [#allocation3], 0
    %20 = vsyncpa [#allocation6], 0
    %21 = vsyncpa [#allocation9], 0
    %22 = vsyncpa [#allocation12], 0
    %23 = vsyncpa [#allocation4], 0
    %24 = vsyncpa [#allocation15], 0
    // Predicated region
    $region2: #{_attention_block_call.1} parent=1 // pred_check
      _
    $region3: #{_attention_block_call.1} parent=1 // pred_check_branch
      %26 = sbr.rel (0) target = $region5
    $region4: #{_attention_block_call.1} parent=1 // pred_region
      _
    $region5: #{_attention_block_call.1} parent=1 // pred_fallthru
      _
    // Predicated region
    $region6: #{_attention_block_call.1} parent=1 // pred_check
      _
    $region7: #{_attention_block_call.1} parent=1 // pred_check_branch
      %28 = sbr.rel (0) target = $region9
    $region8: #{_attention_block_call.1} parent=1 // pred_region
      _
    $region9: #{_attention_block_call.1} parent=1 // pred_fallthru
      _
    // Predicated region
    $region10: #{_attention_block_call.1} parent=1 // pred_check
      _
    $region11: #{_attention_block_call.1} parent=1 // pred_check_branch
      %30 = sbr.rel (0) target = $region13
    $region12: #{_attention_block_call.1} parent=1 // pred_region
      _
    $region13: #{_attention_block_call.1} parent=1 // pred_fallthru
      _
    // Predicated region
    $region14: #{_attention_block_call.1} parent=1 // pred_check
      _
    $region15: #{_attention_block_call.1} parent=1 // pred_check_branch
      %32 = sbr.rel (0) target = $region17
    $region16: #{_attention_block_call.1} parent=1 // pred_region
      _
    $region17: #{_attention_block_call.1} parent=1 // pred_fallthru
      _
    // Predicated region
    $region18: #{_attention_block_call.1} parent=1 // pred_check
      _
    $region19: #{_attention_block_call.1} parent=1 // pred_check_branch
      %34 = sbr.rel (0) target = $region21
    $region20: #{_attention_block_call.1} parent=1 // pred_region
      _
    $region21: #{_attention_block_call.1} parent=1 // pred_fallthru
      _
    // Predicated region
    $region22: #{_attention_block_call.1} parent=1 // pred_check
      _
    $region23: #{_attention_block_call.1} parent=1 // pred_check_branch
      %36 = sbr.rel (0) target = $region25
    $region24: #{_attention_block_call.1} parent=1 // pred_region
      %s38 = ssub.s32 16, 16
      %39 = vsyncadd [#allocation3], %s38
      %s41 = sshll.u32 [#allocation2], 4
      %s42 = int_to_ptr.vmem [resolvable:$true] %s41
      %44 = dma.hbm_to_vmem [thread:$0]  %s5, 16, %s42, [#allocation3]
    $region25: #{_attention_block_call.1} parent=1 // pred_fallthru
      _
    // Predicated region
    $region26: #{_attention_block_call.1} parent=1 // pred_check
      _
    $region27: #{_attention_block_call.1} parent=1 // pred_check_branch
      %46 = sbr.rel (0) target = $region29
    $region28: #{_attention_block_call.1} parent=1 // pred_region
      %s48 = ssub.s32 16, 16
      %49 = vsyncadd [#allocation6], %s48
      %s51 = sshll.u32 [#allocation5], 4
      %s52 = int_to_ptr.vmem [resolvable:$true] %s51
      %54 = dma.hbm_to_vmem [thread:$0]  %s6, 16, %s52, [#allocation6]
    $region29: #{_attention_block_call.1} parent=1 // pred_fallthru
      _
    // Predicated region
    $region30: #{_attention_block_call.1} parent=1 // pred_check
      _
    $region31: #{_attention_block_call.1} parent=1 // pred_check_branch
      %56 = sbr.rel (0) target = $region33
    $region32: #{_attention_block_call.1} parent=1 // pred_region
      %s58 = ssub.s32 16, 16
      %59 = vsyncadd [#allocation6], %s58
      %s61 = sshll.u32 [#allocation7], 4
      %s62 = int_to_ptr.vmem [resolvable:$true] %s61
      %64 = dma.hbm_to_vmem [thread:$0]  %s7, 16, %s62, [#allocation6]
    $region33: #{_attention_block_call.1} parent=1 // pred_fallthru
      _
    // Predicated region
    $region34: #{_attention_block_call.1} parent=1 // pred_check
      _
    $region35: #{_attention_block_call.1} parent=1 // pred_check_branch
      %66 = sbr.rel (0) target = $region37
    $region36: #{_attention_block_call.1} parent=1 // pred_region
      %s68 = ssub.s32 512, 512
      %69 = vsyncadd [#allocation9], %s68
      %s70 = sshll.u32 [#allocation8], 4
      %s71 = int_to_ptr.vmem [resolvable:$true] %s70
      %76 = dma.hbm_to_vmem [thread:$0]  %s8, 512, %s71, [#allocation9], 128, 128, 8
    $region37: #{_attention_block_call.1} parent=1 // pred_fallthru
      _
    // Predicated region
    $region38: #{_attention_block_call.1} parent=1 // pred_check
      _
    $region39: #{_attention_block_call.1} parent=1 // pred_check_branch
      %78 = sbr.rel (0) target = $region41
    $region40: #{_attention_block_call.1} parent=1 // pred_region
      %s80 = ssub.s32 16, 16
      %81 = vsyncadd [#allocation9], %s80
      %s83 = sshll.u32 [#allocation10], 4
      %s84 = int_to_ptr.vmem [resolvable:$true] %s83
      %86 = dma.hbm_to_vmem [thread:$0]  %s9, 16, %s84, [#allocation9]
    $region41: #{_attention_block_call.1} parent=1 // pred_fallthru
      _
    // Predicated region
    $region42: #{_attention_block_call.1} parent=1 // pred_check
      _
    $region43: #{_attention_block_call.1} parent=1 // pred_check_branch
      %88 = sbr.rel (0) target = $region45
    $region44: #{_attention_block_call.1} parent=1 // pred_region
      _
    $region45: #{_attention_block_call.1} parent=1 // pred_fallthru
      _
    // Predicated region
    $region46: #{_attention_block_call.1} parent=1 // pred_check
      _
    $region47: #{_attention_block_call.1} parent=1 // pred_check_branch
      %90 = sbr.rel (0) target = $region49
    $region48: #{_attention_block_call.1} parent=1 // pred_region
      %s92 = ssub.s32 16, 16
      %93 = vsyncadd [#allocation12], %s92
      %s95 = sshll.u32 [#allocation11], 4
      %s96 = int_to_ptr.vmem [resolvable:$true] %s95
      %98 = dma.hbm_to_vmem [thread:$0]  %s11, 16, %s96, [#allocation12]
    $region49: #{_attention_block_call.1} parent=1 // pred_fallthru
      _
    // Predicated region
    $region50: #{_attention_block_call.1} parent=1 // pred_check
      _
    $region51: #{_attention_block_call.1} parent=1 // pred_check_branch
      %100 = sbr.rel (0) target = $region53
    $region52: #{_attention_block_call.1} parent=1 // pred_region
      %101 = dma.done [#allocation3], 16
    $region53: #{_attention_block_call.1} parent=1 // pred_fallthru
      _
    // Predicated region
    $region54: #{_attention_block_call.1} parent=1 // pred_check
      _
    $region55: #{_attention_block_call.1} parent=1 // pred_check_branch
      %103 = sbr.rel (0) target = $region57
    $region56: #{_attention_block_call.1} parent=1 // pred_region
      %104 = dma.done [#allocation6], 16
    $region57: #{_attention_block_call.1} parent=1 // pred_fallthru
      _
    // Predicated region
    $region58: #{_attention_block_call.1} parent=1 // pred_check
      _
    $region59: #{_attention_block_call.1} parent=1 // pred_check_branch
      %106 = sbr.rel (0) target = $region61
    $region60: #{_attention_block_call.1} parent=1 // pred_region
      %107 = dma.done [#allocation6], 16
    $region61: #{_attention_block_call.1} parent=1 // pred_fallthru
      _
    // Predicated region
    $region62: #{_attention_block_call.1} parent=1 // pred_check
      _
    $region63: #{_attention_block_call.1} parent=1 // pred_check_branch
      %109 = sbr.rel (0) target = $region65
    $region64: #{_attention_block_call.1} parent=1 // pred_region
      %110 = dma.done [#allocation9], 512
    $region65: #{_attention_block_call.1} parent=1 // pred_fallthru
      _
    // Predicated region
    $region66: #{_attention_block_call.1} parent=1 // pred_check
      _
    $region67: #{_attention_block_call.1} parent=1 // pred_check_branch
      %112 = sbr.rel (0) target = $region69
    $region68: #{_attention_block_call.1} parent=1 // pred_region
      %113 = dma.done [#allocation9], 16
    $region69: #{_attention_block_call.1} parent=1 // pred_fallthru
      _
    // Predicated region
    $region70: #{_attention_block_call.1} parent=1 // pred_check
      _
    $region71: #{_attention_block_call.1} parent=1 // pred_check_branch
      %115 = sbr.rel (0) target = $region73
    $region72: #{_attention_block_call.1} parent=1 // pred_region
      %116 = dma.done [#allocation12], 16
    $region73: #{_attention_block_call.1} parent=1 // pred_fallthru
      _
    %v117 = vld [vmem:[%s0] sm:$0xff]
    %v118 = vld [vmem:[%s0 + $0x8] sm:$0xff]
    %v119 = vld [vmem:[%s0 + $0x10] sm:$0xff]
    %v120 = vld [vmem:[%s0 + $0x18] sm:$0xff]
    %vm121 = vcmask 261120
    %v122 = vsel %vm121, %v117, 0.0
    %123 = vadd.xlane.f32.xlu0 %v122
    %v124 = vpop.xlane.xlu0 %123
    %v125 = vsel %vm121, %v118, 0.0
    %126 = vadd.xlane.f32.xlu0 %v125
    %v127 = vpop.xlane.xlu0 %126
    %v128 = vsel %vm121, %v119, 0.0
    %129 = vadd.xlane.f32.xlu0 %v128
    %v130 = vpop.xlane.xlu0 %129
    %v131 = vsel %vm121, %v120, 0.0
    %132 = vadd.xlane.f32.xlu0 %v131
    %v133 = vpop.xlane.xlu0 %132
    %v134 = vrcp.pop 32.0
    %v135 = vmul.f32 %v124, %v134
    %v136 = vmul.f32 %v127, %v134
    %v137 = vmul.f32 %v130, %v134
    %v138 = vmul.f32 %v133, %v134
    %v139 = vsub.f32 %v117, %v135
    %v140 = vsub.f32 %v118, %v136
    %v141 = vsub.f32 %v119, %v137
    %v142 = vsub.f32 %v120, %v138
    %v143 = vmul.f32 %v139, %v139
    %v144 = vmul.f32 %v140, %v140
    %v145 = vmul.f32 %v141, %v141
    %v146 = vmul.f32 %v142, %v142
    %v147 = vsel %vm121, %v143, 0.0
    %148 = vadd.xlane.f32.xlu0 %v147
    %v149 = vpop.xlane.xlu0 %148
    %v150 = vsel %vm121, %v144, 0.0
    %151 = vadd.xlane.f32.xlu0 %v150
    %v152 = vpop.xlane.xlu0 %151
    %v153 = vsel %vm121, %v145, 0.0
    %154 = vadd.xlane.f32.xlu0 %v153
    %v155 = vpop.xlane.xlu0 %154
    %v156 = vsel %vm121, %v146, 0.0
    %157 = vadd.xlane.f32.xlu0 %v156
    %v158 = vpop.xlane.xlu0 %157
    %v159 = vmul.f32 %v149, %v134
    %v160 = vmul.f32 %v152, %v134
    %v161 = vmul.f32 %v155, %v134
    %v162 = vmul.f32 %v158, %v134
    %v163 = vadd.f32 %v159, 1e-05
    %v164 = vadd.f32 %v160, 1e-05
    %v165 = vadd.f32 %v161, 1e-05
    %v166 = vadd.f32 %v162, 1e-05
    %v167 = vrsqrt.pop %v163
    %v168 = vrsqrt.pop %v164
    %v169 = vrsqrt.pop %v165
    %v170 = vrsqrt.pop %v166
    %v171 = vmul.f32 %v139, %v167
    %v172 = vmul.f32 %v140, %v168
    %v173 = vmul.f32 %v141, %v169
    %v174 = vmul.f32 %v142, %v170
    %v175 = vld [vmem:[%s4] sm:$0x1]
    %v177 = vlaneseq
    %v178 = vshrl.u32 %v177, 7
    %v179 = vsub.s32 0, %v178
    %v180 = vrot.slane %v175, %v179
    %v182 = vmul.f32 %v171, %v180
    %v183 = vmul.f32 %v172, %v180
    %v184 = vmul.f32 %v173, %v180
    %v185 = vmul.f32 %v174, %v180
    %v186 = vld [vmem:[#allocation2] sm:$0x1]
    %v188 = vlaneseq
    %v189 = vshrl.u32 %v188, 7
    %v190 = vsub.s32 0, %v189
    %v191 = vrot.slane %v186, %v190
    %v193 = vadd.f32 %v182, %v191
    %v194 = vadd.f32 %v183, %v191
    %v195 = vadd.f32 %v184, %v191
    %v196 = vadd.f32 %v185, %v191
    %v197 = vld [vmem:[%s1] sm:$0xff]
    %v198 = vld [vmem:[%s1 + $0x8] sm:$0xff]
    %v199 = vld [vmem:[%s1 + $0x10] sm:$0xff]
    %v200 = vld [vmem:[%s1 + $0x18] sm:$0xff]
    %v202 = vsel %vm121, %v193, 0
    %v205 = vsel %vm121, %v194, 0
    %v208 = vsel %vm121, %v195, 0
    %v211 = vsel %vm121, %v196, 0
    %213 = vmatprep.subr.mxu0 0.0
    %214 = vmatpush1.msra.mxu0 %v197
    %215 = vmatprep.subr.mxu0 0.0
    %216 = vmatpush1.msra.mxu0 %v198
    %217 = vmatprep.subr.mxu0 0.0
    %218 = vmatpush1.msra.mxu0 %v199
    %219 = vmatprep.subr.mxu0 0.0
    %220 = vmatpush1.msra.mxu0 %v200
    %221 = vmatprep.subr.mxu0 0.0
    %222 = vmatpush1.msra.mxu0 0.0
    %223 = vmatprep.subr.mxu0 0.0
    %224 = vmatpush1.msra.mxu0 0.0
    %225 = vmatprep.subr.mxu0 0.0
    %226 = vmatpush1.msra.mxu0 0.0
    %227 = vmatprep.subr.mxu0 0.0
    %228 = vmatpush1.msra.mxu0 0.0
    %229 = vmatprep.subr.mxu0 0.0
    %230 = vmatpush1.msra.mxu0 0.0
    %231 = vmatprep.subr.mxu0 0.0
    %232 = vmatpush1.msra.mxu0 0.0
    %233 = vmatprep.subr.mxu0 0.0
    %234 = vmatpush1.msra.mxu0 0.0
    %235 = vmatprep.subr.mxu0 0.0
    %236 = vmatpush1.msra.mxu0 0.0
    %237 = vmatprep.subr.mxu0 0.0
    %238 = vmatpush1.msra.mxu0 0.0
    %239 = vmatprep.subr.mxu0 0.0
    %240 = vmatpush1.msra.mxu0 0.0
    %241 = vmatprep.subr.mxu0 0.0
    %242 = vmatpush1.msra.mxu0 0.0
    %243 = vmatprep.subr.mxu0 0.0
    %244 = vmatpush1.msra.mxu0 0.0
    %245 = vmatprep.subr.mxu0 0.0
    %246 = vmatpush1.msra.mxu0 0.0
    %247 = vmatprep.subr.mxu0 0.0
    %248 = vmatpush1.msra.mxu0 0.0
    %249 = vmatprep.subr.mxu0 0.0
    %250 = vmatpush1.msra.mxu0 0.0
    %251 = vmatprep.subr.mxu0 0.0
    %252 = vmatpush1.msra.mxu0 0.0
    %253 = vmatprep.subr.mxu0 0.0
    %254 = vmatpush1.msra.mxu0 0.0
    %255 = vmatprep.subr.mxu0 0.0
    %256 = vmatpush1.msra.mxu0 0.0
    %257 = vmatprep.subr.mxu0 0.0
    %258 = vmatpush1.msra.mxu0 0.0
    %259 = vmatprep.subr.mxu0 0.0
    %260 = vmatpush1.msra.mxu0 0.0
    %261 = vmatprep.subr.mxu0 0.0
    %262 = vmatpush1.msra.mxu0 0.0
    %263 = vmatprep.subr.mxu0 0.0
    %264 = vmatpush1.msra.mxu0 0.0
    %265 = vmatprep.subr.mxu0 0.0
    %266 = vmatpush1.msra.mxu0 0.0
    %267 = vmatprep.subr.mxu0 0.0
    %268 = vmatpush1.msra.mxu0 0.0
    %269 = vmatprep.subr.mxu0 0.0
    %270 = vmatpush1.msra.mxu0 0.0
    %271 = vmatprep.subr.mxu0 0.0
    %272 = vmatpush1.msra.mxu0 0.0
    %273 = vmatprep.subr.mxu0 0.0
    %274 = vmatpush1.msra.mxu0 0.0
    %275 = vmatprep.subr.mxu0 0.0
    %276 = vmatpush1.msra.mxu0 0.0
    %277 = vmatprep.mubr.f32.mxu0 0.0
    %278 = vmatmul.mubr.f32.gmra.mrb[0].mxu0 %v202
    %v279 = vpop.f32.mrb[0].mxu0
    %v280 = vadd.f32 0.0, %v279
    %v281 = vpop.f32.mrb[0].mxu0
    %282 = vmatprep.mubr.f32.mxu0 0.0
    %283 = vmatmul.mubr.f32.gmra.mrb[0].mxu0 %v205
    %v284 = vpop.f32.mrb[0].mxu0
    %v285 = vadd.f32 0.0, %v284
    %v286 = vpop.f32.mrb[0].mxu0
    %287 = vmatprep.mubr.f32.mxu0 0.0
    %288 = vmatmul.mubr.f32.gmra.mrb[0].mxu0 %v208
    %v289 = vpop.f32.mrb[0].mxu0
    %v290 = vadd.f32 0.0, %v289
    %v291 = vpop.f32.mrb[0].mxu0
    %292 = vmatprep.mubr.f32.mxu0 0.0
    %293 = vmatmul.mubr.f32.gmra.mrb[0].mxu0 %v211
    %v294 = vpop.f32.mrb[0].mxu0
    %v295 = vadd.f32 0.0, %v294
    %v296 = vpop.f32.mrb[0].mxu0
    %297 = vdwg.mxu0
    %299 = vrot.lane.b32.xlu0 %v280, 96
    %v300 = vpop.permute.xlu0 %299
    %vm301 = vcmask 64512
    %v302 = vsel %vm301, %v280, 0
    %v304 = vsel %vm301, %v300, 0
    %306 = vmatprep.subr.mxu0 0.0
    %307 = vmatpush1.xpose.msra.mxu0 %v304
    %308 = vmatprep.subr.mxu0 0.0
    %309 = vmatpush1.xpose.msra.mxu0 0.0
    %310 = vmatprep.subr.mxu0 0.0
    %311 = vmatpush1.xpose.msra.mxu0 0.0
    %312 = vmatprep.subr.mxu0 0.0
    %313 = vmatpush1.xpose.msra.mxu0 0.0
    %314 = vmatprep.subr.mxu0 0.0
    %315 = vmatpush1.xpose.msra.mxu0 0.0
    %316 = vmatprep.subr.mxu0 0.0
    %317 = vmatpush1.xpose.msra.mxu0 0.0
    %318 = vmatprep.subr.mxu0 0.0
    %319 = vmatpush1.xpose.msra.mxu0 0.0
    %320 = vmatprep.subr.mxu0 0.0
    %321 = vmatpush1.xpose.msra.mxu0 0.0
    %322 = vmatprep.subr.mxu0 0.0
    %323 = vmatpush1.xpose.msra.mxu0 0.0
    %324 = vmatprep.subr.mxu0 0.0
    %325 = vmatpush1.xpose.msra.mxu0 0.0
    %326 = vmatprep.subr.mxu0 0.0
    %327 = vmatpush1.xpose.msra.mxu0 0.0
    %328 = vmatprep.subr.mxu0 0.0
    %329 = vmatpush1.xpose.msra.mxu0 0.0
    %330 = vmatprep.subr.mxu0 0.0
    %331 = vmatpush1.xpose.msra.mxu0 0.0
    %332 = vmatprep.subr.mxu0 0.0
    %333 = vmatpush1.xpose.msra.mxu0 0.0
    %334 = vmatprep.subr.mxu0 0.0
    %335 = vmatpush1.xpose.msra.mxu0 0.0
    %336 = vmatprep.subr.mxu0 0.0
    %337 = vmatpush1.xpose.msra.mxu0 0.0
    %338 = vmatprep.subr.mxu0 0.0
    %339 = vmatpush1.xpose.msra.mxu0 0.0
    %340 = vmatprep.subr.mxu0 0.0
    %341 = vmatpush1.xpose.msra.mxu0 0.0
    %342 = vmatprep.subr.mxu0 0.0
    %343 = vmatpush1.xpose.msra.mxu0 0.0
    %344 = vmatprep.subr.mxu0 0.0
    %345 = vmatpush1.xpose.msra.mxu0 0.0
    %346 = vmatprep.subr.mxu0 0.0
    %347 = vmatpush1.xpose.msra.mxu0 0.0
    %348 = vmatprep.subr.mxu0 0.0
    %349 = vmatpush1.xpose.msra.mxu0 0.0
    %350 = vmatprep.subr.mxu0 0.0
    %351 = vmatpush1.xpose.msra.mxu0 0.0
    %352 = vmatprep.subr.mxu0 0.0
    %353 = vmatpush1.xpose.msra.mxu0 0.0
    %354 = vmatprep.subr.mxu0 0.0
    %355 = vmatpush1.xpose.msra.mxu0 0.0
    %356 = vmatprep.subr.mxu0 0.0
    %357 = vmatpush1.xpose.msra.mxu0 0.0
    %358 = vmatprep.subr.mxu0 0.0
    %359 = vmatpush1.xpose.msra.mxu0 0.0
    %360 = vmatprep.subr.mxu0 0.0
    %361 = vmatpush1.xpose.msra.mxu0 0.0
    %362 = vmatprep.subr.mxu0 0.0
    %363 = vmatpush1.xpose.msra.mxu0 0.0
    %364 = vmatprep.subr.mxu0 0.0
    %365 = vmatpush1.xpose.msra.mxu0 0.0
    %366 = vmatprep.subr.mxu0 0.0
    %367 = vmatpush1.xpose.msra.mxu0 0.0
    %368 = vmatprep.subr.mxu0 0.0
    %369 = vmatpush1.xpose.msra.mxu0 0.0
    %370 = vmatprep.mubr.f32.mxu0 0.0
    %371 = vmatmul.mubr.f32.gmra.mrb[0].mxu0 %v302
    %v372 = vpop.f32.mrb[0].mxu0
    %v373 = vadd.f32 0.0, %v372
    %v374 = vpop.f32.mrb[0].mxu0
    %375 = vdwg.mxu0
    %377 = vrot.lane.b32.xlu0 %v285, 96
    %v378 = vpop.permute.xlu0 %377
    %v379 = vsel %vm301, %v285, 0
    %v381 = vsel %vm301, %v378, 0
    %383 = vmatprep.subr.mxu0 0.0
    %384 = vmatpush1.xpose.msra.mxu0 %v381
    %385 = vmatprep.subr.mxu0 0.0
    %386 = vmatpush1.xpose.msra.mxu0 0.0
    %387 = vmatprep.subr.mxu0 0.0
    %388 = vmatpush1.xpose.msra.mxu0 0.0
    %389 = vmatprep.subr.mxu0 0.0
    %390 = vmatpush1.xpose.msra.mxu0 0.0
    %391 = vmatprep.subr.mxu0 0.0
    %392 = vmatpush1.xpose.msra.mxu0 0.0
    %393 = vmatprep.subr.mxu0 0.0
    %394 = vmatpush1.xpose.msra.mxu0 0.0
    %395 = vmatprep.subr.mxu0 0.0
    %396 = vmatpush1.xpose.msra.mxu0 0.0
    %397 = vmatprep.subr.mxu0 0.0
    %398 = vmatpush1.xpose.msra.mxu0 0.0
    %399 = vmatprep.subr.mxu0 0.0
    %400 = vmatpush1.xpose.msra.mxu0 0.0
    %401 = vmatprep.subr.mxu0 0.0
    %402 = vmatpush1.xpose.msra.mxu0 0.0
    %403 = vmatprep.subr.mxu0 0.0
    %404 = vmatpush1.xpose.msra.mxu0 0.0
    %405 = vmatprep.subr.mxu0 0.0
    %406 = vmatpush1.xpose.msra.mxu0 0.0
    %407 = vmatprep.subr.mxu0 0.0
    %408 = vmatpush1.xpose.msra.mxu0 0.0
    %409 = vmatprep.subr.mxu0 0.0
    %410 = vmatpush1.xpose.msra.mxu0 0.0
    %411 = vmatprep.subr.mxu0 0.0
    %412 = vmatpush1.xpose.msra.mxu0 0.0
    %413 = vmatprep.subr.mxu0 0.0
    %414 = vmatpush1.xpose.msra.mxu0 0.0
    %415 = vmatprep.subr.mxu0 0.0
    %416 = vmatpush1.xpose.msra.mxu0 0.0
    %417 = vmatprep.subr.mxu0 0.0
    %418 = vmatpush1.xpose.msra.mxu0 0.0
    %419 = vmatprep.subr.mxu0 0.0
    %420 = vmatpush1.xpose.msra.mxu0 0.0
    %421 = vmatprep.subr.mxu0 0.0
    %422 = vmatpush1.xpose.msra.mxu0 0.0
    %423 = vmatprep.subr.mxu0 0.0
    %424 = vmatpush1.xpose.msra.mxu0 0.0
    %425 = vmatprep.subr.mxu0 0.0
    %426 = vmatpush1.xpose.msra.mxu0 0.0
    %427 = vmatprep.subr.mxu0 0.0
    %428 = vmatpush1.xpose.msra.mxu0 0.0
    %429 = vmatprep.subr.mxu0 0.0
    %430 = vmatpush1.xpose.msra.mxu0 0.0
    %431 = vmatprep.subr.mxu0 0.0
    %432 = vmatpush1.xpose.msra.mxu0 0.0
    %433 = vmatprep.subr.mxu0 0.0
    %434 = vmatpush1.xpose.msra.mxu0 0.0
    %435 = vmatprep.subr.mxu0 0.0
    %436 = vmatpush1.xpose.msra.mxu0 0.0
    %437 = vmatprep.subr.mxu0 0.0
    %438 = vmatpush1.xpose.msra.mxu0 0.0
    %439 = vmatprep.subr.mxu0 0.0
    %440 = vmatpush1.xpose.msra.mxu0 0.0
    %441 = vmatprep.subr.mxu0 0.0
    %442 = vmatpush1.xpose.msra.mxu0 0.0
    %443 = vmatprep.subr.mxu0 0.0
    %444 = vmatpush1.xpose.msra.mxu0 0.0
    %445 = vmatprep.subr.mxu0 0.0
    %446 = vmatpush1.xpose.msra.mxu0 0.0
    %447 = vmatprep.mubr.f32.mxu0 0.0
    %448 = vmatmul.mubr.f32.gmra.mrb[0].mxu0 %v379
    %v449 = vpop.f32.mrb[0].mxu0
    %v450 = vadd.f32 0.0, %v449
    %v451 = vpop.f32.mrb[0].mxu0
    %452 = vdwg.mxu0
    %454 = vrot.lane.b32.xlu0 %v290, 96
    %v455 = vpop.permute.xlu0 %454
    %v456 = vsel %vm301, %v290, 0
    %v458 = vsel %vm301, %v455, 0
    %460 = vmatprep.subr.mxu0 0.0
    %461 = vmatpush1.xpose.msra.mxu0 %v458
    %462 = vmatprep.subr.mxu0 0.0
    %463 = vmatpush1.xpose.msra.mxu0 0.0
    %464 = vmatprep.subr.mxu0 0.0
    %465 = vmatpush1.xpose.msra.mxu0 0.0
    %466 = vmatprep.subr.mxu0 0.0
    %467 = vmatpush1.xpose.msra.mxu0 0.0
    %468 = vmatprep.subr.mxu0 0.0
    %469 = vmatpush1.xpose.msra.mxu0 0.0
    %470 = vmatprep.subr.mxu0 0.0
    %471 = vmatpush1.xpose.msra.mxu0 0.0
    %472 = vmatprep.subr.mxu0 0.0
    %473 = vmatpush1.xpose.msra.mxu0 0.0
    %474 = vmatprep.subr.mxu0 0.0
    %475 = vmatpush1.xpose.msra.mxu0 0.0
    %476 = vmatprep.subr.mxu0 0.0
    %477 = vmatpush1.xpose.msra.mxu0 0.0
    %478 = vmatprep.subr.mxu0 0.0
    %479 = vmatpush1.xpose.msra.mxu0 0.0
    %480 = vmatprep.subr.mxu0 0.0
    %481 = vmatpush1.xpose.msra.mxu0 0.0
    %482 = vmatprep.subr.mxu0 0.0
    %483 = vmatpush1.xpose.msra.mxu0 0.0
    %484 = vmatprep.subr.mxu0 0.0
    %485 = vmatpush1.xpose.msra.mxu0 0.0
    %486 = vmatprep.subr.mxu0 0.0
    %487 = vmatpush1.xpose.msra.mxu0 0.0
    %488 = vmatprep.subr.mxu0 0.0
    %489 = vmatpush1.xpose.msra.mxu0 0.0
    %490 = vmatprep.subr.mxu0 0.0
    %491 = vmatpush1.xpose.msra.mxu0 0.0
    %492 = vmatprep.subr.mxu0 0.0
    %493 = vmatpush1.xpose.msra.mxu0 0.0
    %494 = vmatprep.subr.mxu0 0.0
    %495 = vmatpush1.xpose.msra.mxu0 0.0
    %496 = vmatprep.subr.mxu0 0.0
    %497 = vmatpush1.xpose.msra.mxu0 0.0
    %498 = vmatprep.subr.mxu0 0.0
    %499 = vmatpush1.xpose.msra.mxu0 0.0
    %500 = vmatprep.subr.mxu0 0.0
    %501 = vmatpush1.xpose.msra.mxu0 0.0
    %502 = vmatprep.subr.mxu0 0.0
    %503 = vmatpush1.xpose.msra.mxu0 0.0
    %504 = vmatprep.subr.mxu0 0.0
    %505 = vmatpush1.xpose.msra.mxu0 0.0
    %506 = vmatprep.subr.mxu0 0.0
    %507 = vmatpush1.xpose.msra.mxu0 0.0
    %508 = vmatprep.subr.mxu0 0.0
    %509 = vmatpush1.xpose.msra.mxu0 0.0
    %510 = vmatprep.subr.mxu0 0.0
    %511 = vmatpush1.xpose.msra.mxu0 0.0
    %512 = vmatprep.subr.mxu0 0.0
    %513 = vmatpush1.xpose.msra.mxu0 0.0
    %514 = vmatprep.subr.mxu0 0.0
    %515 = vmatpush1.xpose.msra.mxu0 0.0
    %516 = vmatprep.subr.mxu0 0.0
    %517 = vmatpush1.xpose.msra.mxu0 0.0
    %518 = vmatprep.subr.mxu0 0.0
    %519 = vmatpush1.xpose.msra.mxu0 0.0
    %520 = vmatprep.subr.mxu0 0.0
    %521 = vmatpush1.xpose.msra.mxu0 0.0
    %522 = vmatprep.subr.mxu0 0.0
    %523 = vmatpush1.xpose.msra.mxu0 0.0
    %524 = vmatprep.mubr.f32.mxu0 0.0
    %525 = vmatmul.mubr.f32.gmra.mrb[0].mxu0 %v456
    %v526 = vpop.f32.mrb[0].mxu0
    %v527 = vadd.f32 0.0, %v526
    %v528 = vpop.f32.mrb[0].mxu0
    %529 = vdwg.mxu0
    %531 = vrot.lane.b32.xlu0 %v295, 96
    %v532 = vpop.permute.xlu0 %531
    %v533 = vsel %vm301, %v295, 0
    %v535 = vsel %vm301, %v532, 0
    %537 = vmatprep.subr.mxu0 0.0
    %538 = vmatpush1.xpose.msra.mxu0 %v535
    %539 = vmatprep.subr.mxu0 0.0
    %540 = vmatpush1.xpose.msra.mxu0 0.0
    %541 = vmatprep.subr.mxu0 0.0
    %542 = vmatpush1.xpose.msra.mxu0 0.0
    %543 = vmatprep.subr.mxu0 0.0
    %544 = vmatpush1.xpose.msra.mxu0 0.0
    %545 = vmatprep.subr.mxu0 0.0
    %546 = vmatpush1.xpose.msra.mxu0 0.0
    %547 = vmatprep.subr.mxu0 0.0
    %548 = vmatpush1.xpose.msra.mxu0 0.0
    %549 = vmatprep.subr.mxu0 0.0
    %550 = vmatpush1.xpose.msra.mxu0 0.0
    %551 = vmatprep.subr.mxu0 0.0
    %552 = vmatpush1.xpose.msra.mxu0 0.0
    %553 = vmatprep.subr.mxu0 0.0
    %554 = vmatpush1.xpose.msra.mxu0 0.0
    %555 = vmatprep.subr.mxu0 0.0
    %556 = vmatpush1.xpose.msra.mxu0 0.0
    %557 = vmatprep.subr.mxu0 0.0
    %558 = vmatpush1.xpose.msra.mxu0 0.0
    %559 = vmatprep.subr.mxu0 0.0
    %560 = vmatpush1.xpose.msra.mxu0 0.0
    %561 = vmatprep.subr.mxu0 0.0
    %562 = vmatpush1.xpose.msra.mxu0 0.0
    %563 = vmatprep.subr.mxu0 0.0
    %564 = vmatpush1.xpose.msra.mxu0 0.0
    %565 = vmatprep.subr.mxu0 0.0
    %566 = vmatpush1.xpose.msra.mxu0 0.0
    %567 = vmatprep.subr.mxu0 0.0
    %568 = vmatpush1.xpose.msra.mxu0 0.0
    %569 = vmatprep.subr.mxu0 0.0
    %570 = vmatpush1.xpose.msra.mxu0 0.0
    %571 = vmatprep.subr.mxu0 0.0
    %572 = vmatpush1.xpose.msra.mxu0 0.0
    %573 = vmatprep.subr.mxu0 0.0
    %574 = vmatpush1.xpose.msra.mxu0 0.0
    %575 = vmatprep.subr.mxu0 0.0
    %576 = vmatpush1.xpose.msra.mxu0 0.0
    %577 = vmatprep.subr.mxu0 0.0
    %578 = vmatpush1.xpose.msra.mxu0 0.0
    %579 = vmatprep.subr.mxu0 0.0
    %580 = vmatpush1.xpose.msra.mxu0 0.0
    %581 = vmatprep.subr.mxu0 0.0
    %582 = vmatpush1.xpose.msra.mxu0 0.0
    %583 = vmatprep.subr.mxu0 0.0
    %584 = vmatpush1.xpose.msra.mxu0 0.0
    %585 = vmatprep.subr.mxu0 0.0
    %586 = vmatpush1.xpose.msra.mxu0 0.0
    %587 = vmatprep.subr.mxu0 0.0
    %588 = vmatpush1.xpose.msra.mxu0 0.0
    %589 = vmatprep.subr.mxu0 0.0
    %590 = vmatpush1.xpose.msra.mxu0 0.0
    %591 = vmatprep.subr.mxu0 0.0
    %592 = vmatpush1.xpose.msra.mxu0 0.0
    %593 = vmatprep.subr.mxu0 0.0
    %594 = vmatpush1.xpose.msra.mxu0 0.0
    %595 = vmatprep.subr.mxu0 0.0
    %596 = vmatpush1.xpose.msra.mxu0 0.0
    %597 = vmatprep.subr.mxu0 0.0
    %598 = vmatpush1.xpose.msra.mxu0 0.0
    %599 = vmatprep.subr.mxu0 0.0
    %600 = vmatpush1.xpose.msra.mxu0 0.0
    %601 = vmatprep.mubr.f32.mxu0 0.0
    %602 = vmatmul.mubr.f32.gmra.mrb[0].mxu0 %v533
    %v603 = vpop.f32.mrb[0].mxu0
    %v604 = vadd.f32 0.0, %v603
    %v605 = vpop.f32.mrb[0].mxu0
    %606 = vdwg.mxu0
    %v607 = vmul.f32 %v373, 0.35355338
    %v608 = vmul.f32 %v450, 0.35355338
    %v609 = vmul.f32 %v527, 0.35355338
    %v610 = vmul.f32 %v604, 0.35355338
    %v611 = vsel %vm301, %v607, -inf
    %612 = vmax.xlane.f32.xlu0 %v611
    %v613 = vpop.xlane.xlu0 %612
    %v614 = vsel %vm301, %v608, -inf
    %615 = vmax.xlane.f32.xlu0 %v614
    %v616 = vpop.xlane.xlu0 %615
    %v617 = vsel %vm301, %v609, -inf
    %618 = vmax.xlane.f32.xlu0 %v617
    %v619 = vpop.xlane.xlu0 %618
    %v620 = vsel %vm301, %v610, -inf
    %621 = vmax.xlane.f32.xlu0 %v620
    %v622 = vpop.xlane.xlu0 %621
    %v623 = vsub.f32 %v607, %v613
    %v624 = vsub.f32 %v608, %v616
    %v625 = vsub.f32 %v609, %v619
    %v626 = vsub.f32 %v610, %v622
    %v627 = vmul.f32 %v623, 1.442695
    %v628 = vpow.pop %v627
    %v629 = vmul.f32 %v624, 1.442695
    %v630 = vpow.pop %v629
    %v631 = vmul.f32 %v625, 1.442695
    %v632 = vpow.pop %v631
    %v633 = vmul.f32 %v626, 1.442695
    %v634 = vpow.pop %v633
    %v635 = vsel %vm301, %v628, 0.0
    %636 = vadd.xlane.f32.xlu0 %v635
    %v637 = vpop.xlane.xlu0 %636
    %v638 = vsel %vm301, %v630, 0.0
    %639 = vadd.xlane.f32.xlu0 %v638
    %v640 = vpop.xlane.xlu0 %639
    %v641 = vsel %vm301, %v632, 0.0
    %642 = vadd.xlane.f32.xlu0 %v641
    %v643 = vpop.xlane.xlu0 %642
    %v644 = vsel %vm301, %v634, 0.0
    %645 = vadd.xlane.f32.xlu0 %v644
    %v646 = vpop.xlane.xlu0 %645
    %v647 = vrcp.pop %v637
    %v648 = vmul.f32 %v628, %v647
    %v649 = vrcp.pop %v640
    %v650 = vmul.f32 %v630, %v649
    %v651 = vrcp.pop %v643
    %v652 = vmul.f32 %v632, %v651
    %v653 = vrcp.pop %v646
    %v654 = vmul.f32 %v634, %v653
    %655 = vrot.lane.b32.xlu0 %v280, 64
    %v656 = vpop.permute.xlu0 %655
    %v659 = vsel %vm301, %v648, 0
    %661 = vmatprep.subr.mxu0 0.0
    %662 = vmatpush1.msra.mxu0 %v656
    %663 = vmatprep.subr.mxu0 0.0
    %664 = vmatpush1.msra.mxu0 0.0
    %665 = vmatprep.subr.mxu0 0.0
    %666 = vmatpush1.msra.mxu0 0.0
    %667 = vmatprep.subr.mxu0 0.0
    %668 = vmatpush1.msra.mxu0 0.0
    %669 = vmatprep.subr.mxu0 0.0
    %670 = vmatpush1.msra.mxu0 0.0
    %671 = vmatprep.subr.mxu0 0.0
    %672 = vmatpush1.msra.mxu0 0.0
    %673 = vmatprep.subr.mxu0 0.0
    %674 = vmatpush1.msra.mxu0 0.0
    %675 = vmatprep.subr.mxu0 0.0
    %676 = vmatpush1.msra.mxu0 0.0
    %677 = vmatprep.subr.mxu0 0.0
    %678 = vmatpush1.msra.mxu0 0.0
    %679 = vmatprep.subr.mxu0 0.0
    %680 = vmatpush1.msra.mxu0 0.0
    %681 = vmatprep.subr.mxu0 0.0
    %682 = vmatpush1.msra.mxu0 0.0
    %683 = vmatprep.subr.mxu0 0.0
    %684 = vmatpush1.msra.mxu0 0.0
    %685 = vmatprep.subr.mxu0 0.0
    %686 = vmatpush1.msra.mxu0 0.0
    %687 = vmatprep.subr.mxu0 0.0
    %688 = vmatpush1.msra.mxu0 0.0
    %689 = vmatprep.subr.mxu0 0.0
    %690 = vmatpush1.msra.mxu0 0.0
    %691 = vmatprep.subr.mxu0 0.0
    %692 = vmatpush1.msra.mxu0 0.0
    %693 = vmatprep.subr.mxu0 0.0
    %694 = vmatpush1.msra.mxu0 0.0
    %695 = vmatprep.subr.mxu0 0.0
    %696 = vmatpush1.msra.mxu0 0.0
    %697 = vmatprep.subr.mxu0 0.0
    %698 = vmatpush1.msra.mxu0 0.0
    %699 = vmatprep.subr.mxu0 0.0
    %700 = vmatpush1.msra.mxu0 0.0
    %701 = vmatprep.subr.mxu0 0.0
    %702 = vmatpush1.msra.mxu0 0.0
    %703 = vmatprep.subr.mxu0 0.0
    %704 = vmatpush1.msra.mxu0 0.0
    %705 = vmatprep.subr.mxu0 0.0
    %706 = vmatpush1.msra.mxu0 0.0
    %707 = vmatprep.subr.mxu0 0.0
    %708 = vmatpush1.msra.mxu0 0.0
    %709 = vmatprep.subr.mxu0 0.0
    %710 = vmatpush1.msra.mxu0 0.0
    %711 = vmatprep.subr.mxu0 0.0
    %712 = vmatpush1.msra.mxu0 0.0
    %713 = vmatprep.subr.mxu0 0.0
    %714 = vmatpush1.msra.mxu0 0.0
    %715 = vmatprep.subr.mxu0 0.0
    %716 = vmatpush1.msra.mxu0 0.0
    %717 = vmatprep.subr.mxu0 0.0
    %718 = vmatpush1.msra.mxu0 0.0
    %719 = vmatprep.subr.mxu0 0.0
    %720 = vmatpush1.msra.mxu0 0.0
    %721 = vmatprep.subr.mxu0 0.0
    %722 = vmatpush1.msra.mxu0 0.0
    %723 = vmatprep.subr.mxu0 0.0
    %724 = vmatpush1.msra.mxu0 0.0
    %725 = vmatprep.mubr.f32.mxu0 0.0
    %726 = vmatmul.mubr.f32.gmra.mrb[0].mxu0 %v659
    %v727 = vpop.f32.mrb[0].mxu0
    %v728 = vadd.f32 0.0, %v727
    %v729 = vpop.f32.mrb[0].mxu0
    %730 = vdwg.mxu0
    %731 = vrot.lane.b32.xlu0 %v285, 64
    %v732 = vpop.permute.xlu0 %731
    %v735 = vsel %vm301, %v650, 0
    %737 = vmatprep.subr.mxu0 0.0
    %738 = vmatpush1.msra.mxu0 %v732
    %739 = vmatprep.subr.mxu0 0.0
    %740 = vmatpush1.msra.mxu0 0.0
    %741 = vmatprep.subr.mxu0 0.0
    %742 = vmatpush1.msra.mxu0 0.0
    %743 = vmatprep.subr.mxu0 0.0
    %744 = vmatpush1.msra.mxu0 0.0
    %745 = vmatprep.subr.mxu0 0.0
    %746 = vmatpush1.msra.mxu0 0.0
    %747 = vmatprep.subr.mxu0 0.0
    %748 = vmatpush1.msra.mxu0 0.0
    %749 = vmatprep.subr.mxu0 0.0
    %750 = vmatpush1.msra.mxu0 0.0
    %751 = vmatprep.subr.mxu0 0.0
    %752 = vmatpush1.msra.mxu0 0.0
    %753 = vmatprep.subr.mxu0 0.0
    %754 = vmatpush1.msra.mxu0 0.0
    %755 = vmatprep.subr.mxu0 0.0
    %756 = vmatpush1.msra.mxu0 0.0
    %757 = vmatprep.subr.mxu0 0.0
    %758 = vmatpush1.msra.mxu0 0.0
    %759 = vmatprep.subr.mxu0 0.0
    %760 = vmatpush1.msra.mxu0 0.0
    %761 = vmatprep.subr.mxu0 0.0
    %762 = vmatpush1.msra.mxu0 0.0
    %763 = vmatprep.subr.mxu0 0.0
    %764 = vmatpush1.msra.mxu0 0.0
    %765 = vmatprep.subr.mxu0 0.0
    %766 = vmatpush1.msra.mxu0 0.0
    %767 = vmatprep.subr.mxu0 0.0
    %768 = vmatpush1.msra.mxu0 0.0
    %769 = vmatprep.subr.mxu0 0.0
    %770 = vmatpush1.msra.mxu0 0.0
    %771 = vmatprep.subr.mxu0 0.0
    %772 = vmatpush1.msra.mxu0 0.0
    %773 = vmatprep.subr.mxu0 0.0
    %774 = vmatpush1.msra.mxu0 0.0
    %775 = vmatprep.subr.mxu0 0.0
    %776 = vmatpush1.msra.mxu0 0.0
    %777 = vmatprep.subr.mxu0 0.0
    %778 = vmatpush1.msra.mxu0 0.0
    %779 = vmatprep.subr.mxu0 0.0
    %780 = vmatpush1.msra.mxu0 0.0
    %781 = vmatprep.subr.mxu0 0.0
    %782 = vmatpush1.msra.mxu0 0.0
    %783 = vmatprep.subr.mxu0 0.0
    %784 = vmatpush1.msra.mxu0 0.0
    %785 = vmatprep.subr.mxu0 0.0
    %786 = vmatpush1.msra.mxu0 0.0
    %787 = vmatprep.subr.mxu0 0.0
    %788 = vmatpush1.msra.mxu0 0.0
    %789 = vmatprep.subr.mxu0 0.0
    %790 = vmatpush1.msra.mxu0 0.0
    %791 = vmatprep.subr.mxu0 0.0
    %792 = vmatpush1.msra.mxu0 0.0
    %793 = vmatprep.subr.mxu0 0.0
    %794 = vmatpush1.msra.mxu0 0.0
    %795 = vmatprep.subr.mxu0 0.0
    %796 = vmatpush1.msra.mxu0 0.0
    %797 = vmatprep.subr.mxu0 0.0
    %798 = vmatpush1.msra.mxu0 0.0
    %799 = vmatprep.subr.mxu0 0.0
    %800 = vmatpush1.msra.mxu0 0.0
    %801 = vmatprep.mubr.f32.mxu0 0.0
    %802 = vmatmul.mubr.f32.gmra.mrb[0].mxu0 %v735
    %v803 = vpop.f32.mrb[0].mxu0
    %v804 = vadd.f32 0.0, %v803
    %v805 = vpop.f32.mrb[0].mxu0
    %806 = vdwg.mxu0
    %807 = vrot.lane.b32.xlu0 %v290, 64
    %v808 = vpop.permute.xlu0 %807
    %v811 = vsel %vm301, %v652, 0
    %813 = vmatprep.subr.mxu0 0.0
    %814 = vmatpush1.msra.mxu0 %v808
    %815 = vmatprep.subr.mxu0 0.0
    %816 = vmatpush1.msra.mxu0 0.0
    %817 = vmatprep.subr.mxu0 0.0
    %818 = vmatpush1.msra.mxu0 0.0
    %819 = vmatprep.subr.mxu0 0.0
    %820 = vmatpush1.msra.mxu0 0.0
    %821 = vmatprep.subr.mxu0 0.0
    %822 = vmatpush1.msra.mxu0 0.0
    %823 = vmatprep.subr.mxu0 0.0
    %824 = vmatpush1.msra.mxu0 0.0
    %825 = vmatprep.subr.mxu0 0.0
    %826 = vmatpush1.msra.mxu0 0.0
    %827 = vmatprep.subr.mxu0 0.0
    %828 = vmatpush1.msra.mxu0 0.0
    %829 = vmatprep.subr.mxu0 0.0
    %830 = vmatpush1.msra.mxu0 0.0
    %831 = vmatprep.subr.mxu0 0.0
    %832 = vmatpush1.msra.mxu0 0.0
    %833 = vmatprep.subr.mxu0 0.0
    %834 = vmatpush1.msra.mxu0 0.0
    %835 = vmatprep.subr.mxu0 0.0
    %836 = vmatpush1.msra.mxu0 0.0
    %837 = vmatprep.subr.mxu0 0.0
    %838 = vmatpush1.msra.mxu0 0.0
    %839 = vmatprep.subr.mxu0 0.0
    %840 = vmatpush1.msra.mxu0 0.0
    %841 = vmatprep.subr.mxu0 0.0
    %842 = vmatpush1.msra.mxu0 0.0
    %843 = vmatprep.subr.mxu0 0.0
    %844 = vmatpush1.msra.mxu0 0.0
    %845 = vmatprep.subr.mxu0 0.0
    %846 = vmatpush1.msra.mxu0 0.0
    %847 = vmatprep.subr.mxu0 0.0
    %848 = vmatpush1.msra.mxu0 0.0
    %849 = vmatprep.subr.mxu0 0.0
    %850 = vmatpush1.msra.mxu0 0.0
    %851 = vmatprep.subr.mxu0 0.0
    %852 = vmatpush1.msra.mxu0 0.0
    %853 = vmatprep.subr.mxu0 0.0
    %854 = vmatpush1.msra.mxu0 0.0
    %855 = vmatprep.subr.mxu0 0.0
    %856 = vmatpush1.msra.mxu0 0.0
    %857 = vmatprep.subr.mxu0 0.0
    %858 = vmatpush1.msra.mxu0 0.0
    %859 = vmatprep.subr.mxu0 0.0
    %860 = vmatpush1.msra.mxu0 0.0
    %861 = vmatprep.subr.mxu0 0.0
    %862 = vmatpush1.msra.mxu0 0.0
    %863 = vmatprep.subr.mxu0 0.0
    %864 = vmatpush1.msra.mxu0 0.0
    %865 = vmatprep.subr.mxu0 0.0
    %866 = vmatpush1.msra.mxu0 0.0
    %867 = vmatprep.subr.mxu0 0.0
    %868 = vmatpush1.msra.mxu0 0.0
    %869 = vmatprep.subr.mxu0 0.0
    %870 = vmatpush1.msra.mxu0 0.0
    %871 = vmatprep.subr.mxu0 0.0
    %872 = vmatpush1.msra.mxu0 0.0
    %873 = vmatprep.subr.mxu0 0.0
    %874 = vmatpush1.msra.mxu0 0.0
    %875 = vmatprep.subr.mxu0 0.0
    %876 = vmatpush1.msra.mxu0 0.0
    %877 = vmatprep.mubr.f32.mxu0 0.0
    %878 = vmatmul.mubr.f32.gmra.mrb[0].mxu0 %v811
    %v879 = vpop.f32.mrb[0].mxu0
    %v880 = vadd.f32 0.0, %v879
    %v881 = vpop.f32.mrb[0].mxu0
    %882 = vdwg.mxu0
    %883 = vrot.lane.b32.xlu0 %v295, 64
    %v884 = vpop.permute.xlu0 %883
    %v887 = vsel %vm301, %v654, 0
    %889 = vmatprep.subr.mxu0 0.0
    %890 = vmatpush1.msra.mxu0 %v884
    %891 = vmatprep.subr.mxu0 0.0
    %892 = vmatpush1.msra.mxu0 0.0
    %893 = vmatprep.subr.mxu0 0.0
    %894 = vmatpush1.msra.mxu0 0.0
    %895 = vmatprep.subr.mxu0 0.0
    %896 = vmatpush1.msra.mxu0 0.0
    %897 = vmatprep.subr.mxu0 0.0
    %898 = vmatpush1.msra.mxu0 0.0
    %899 = vmatprep.subr.mxu0 0.0
    %900 = vmatpush1.msra.mxu0 0.0
    %901 = vmatprep.subr.mxu0 0.0
    %902 = vmatpush1.msra.mxu0 0.0
    %903 = vmatprep.subr.mxu0 0.0
    %904 = vmatpush1.msra.mxu0 0.0
    %905 = vmatprep.subr.mxu0 0.0
    %906 = vmatpush1.msra.mxu0 0.0
    %907 = vmatprep.subr.mxu0 0.0
    %908 = vmatpush1.msra.mxu0 0.0
    %909 = vmatprep.subr.mxu0 0.0
    %910 = vmatpush1.msra.mxu0 0.0
    %911 = vmatprep.subr.mxu0 0.0
    %912 = vmatpush1.msra.mxu0 0.0
    %913 = vmatprep.subr.mxu0 0.0
    %914 = vmatpush1.msra.mxu0 0.0
    %915 = vmatprep.subr.mxu0 0.0
    %916 = vmatpush1.msra.mxu0 0.0
    %917 = vmatprep.subr.mxu0 0.0
    %918 = vmatpush1.msra.mxu0 0.0
    %919 = vmatprep.subr.mxu0 0.0
    %920 = vmatpush1.msra.mxu0 0.0
    %921 = vmatprep.subr.mxu0 0.0
    %922 = vmatpush1.msra.mxu0 0.0
    %923 = vmatprep.subr.mxu0 0.0
    %924 = vmatpush1.msra.mxu0 0.0
    %925 = vmatprep.subr.mxu0 0.0
    %926 = vmatpush1.msra.mxu0 0.0
    %927 = vmatprep.subr.mxu0 0.0
    %928 = vmatpush1.msra.mxu0 0.0
    %929 = vmatprep.subr.mxu0 0.0
    %930 = vmatpush1.msra.mxu0 0.0
    %931 = vmatprep.subr.mxu0 0.0
    %932 = vmatpush1.msra.mxu0 0.0
    %933 = vmatprep.subr.mxu0 0.0
    %934 = vmatpush1.msra.mxu0 0.0
    %935 = vmatprep.subr.mxu0 0.0
    %936 = vmatpush1.msra.mxu0 0.0
    %937 = vmatprep.subr.mxu0 0.0
    %938 = vmatpush1.msra.mxu0 0.0
    %939 = vmatprep.subr.mxu0 0.0
    %940 = vmatpush1.msra.mxu0 0.0
    %941 = vmatprep.subr.mxu0 0.0
    %942 = vmatpush1.msra.mxu0 0.0
    %943 = vmatprep.subr.mxu0 0.0
    %944 = vmatpush1.msra.mxu0 0.0
    %945 = vmatprep.subr.mxu0 0.0
    %946 = vmatpush1.msra.mxu0 0.0
    %947 = vmatprep.subr.mxu0 0.0
    %948 = vmatpush1.msra.mxu0 0.0
    %949 = vmatprep.subr.mxu0 0.0
    %950 = vmatpush1.msra.mxu0 0.0
    %951 = vmatprep.subr.mxu0 0.0
    %952 = vmatpush1.msra.mxu0 0.0
    %953 = vmatprep.mubr.f32.mxu0 0.0
    %954 = vmatmul.mubr.f32.gmra.mrb[0].mxu0 %v887
    %v955 = vpop.f32.mrb[0].mxu0
    %v956 = vadd.f32 0.0, %v955
    %v957 = vpop.f32.mrb[0].mxu0
    %958 = vdwg.mxu0
    %v959 = vld [vmem:[%s2] sm:$0xff]
    %960 = vrot.lane.b32.xlu0 %v280, 120
    %v961 = vpop.permute.xlu0 %960
    %962 = vrot.lane.b32.xlu0 %v280, 88
    %v963 = vpop.permute.xlu0 %962
    %v964 = vsel %vm301, %v961, 0
    %v966 = vsel %vm301, %v963, 0
    %968 = vmatprep.subr.mxu0 0.0
    %969 = vmatpush1.xpose.msra.mxu0 %v966
    %970 = vmatprep.subr.mxu0 0.0
    %971 = vmatpush1.xpose.msra.mxu0 0.0
    %972 = vmatprep.subr.mxu0 0.0
    %973 = vmatpush1.xpose.msra.mxu0 0.0
    %974 = vmatprep.subr.mxu0 0.0
    %975 = vmatpush1.xpose.msra.mxu0 0.0
    %976 = vmatprep.subr.mxu0 0.0
    %977 = vmatpush1.xpose.msra.mxu0 0.0
    %978 = vmatprep.subr.mxu0 0.0
    %979 = vmatpush1.xpose.msra.mxu0 0.0
    %980 = vmatprep.subr.mxu0 0.0
    %981 = vmatpush1.xpose.msra.mxu0 0.0
    %982 = vmatprep.subr.mxu0 0.0
    %983 = vmatpush1.xpose.msra.mxu0 0.0
    %984 = vmatprep.subr.mxu0 0.0
    %985 = vmatpush1.xpose.msra.mxu0 0.0
    %986 = vmatprep.subr.mxu0 0.0
    %987 = vmatpush1.xpose.msra.mxu0 0.0
    %988 = vmatprep.subr.mxu0 0.0
    %989 = vmatpush1.xpose.msra.mxu0 0.0
    %990 = vmatprep.subr.mxu0 0.0
    %991 = vmatpush1.xpose.msra.mxu0 0.0
    %992 = vmatprep.subr.mxu0 0.0
    %993 = vmatpush1.xpose.msra.mxu0 0.0
    %994 = vmatprep.subr.mxu0 0.0
    %995 = vmatpush1.xpose.msra.mxu0 0.0
    %996 = vmatprep.subr.mxu0 0.0
    %997 = vmatpush1.xpose.msra.mxu0 0.0
    %998 = vmatprep.subr.mxu0 0.0
    %999 = vmatpush1.xpose.msra.mxu0 0.0
    %1000 = vmatprep.subr.mxu0 0.0
    %1001 = vmatpush1.xpose.msra.mxu0 0.0
    %1002 = vmatprep.subr.mxu0 0.0
    %1003 = vmatpush1.xpose.msra.mxu0 0.0
    %1004 = vmatprep.subr.mxu0 0.0
    %1005 = vmatpush1.xpose.msra.mxu0 0.0
    %1006 = vmatprep.subr.mxu0 0.0
    %1007 = vmatpush1.xpose.msra.mxu0 0.0
    %1008 = vmatprep.subr.mxu0 0.0
    %1009 = vmatpush1.xpose.msra.mxu0 0.0
    %1010 = vmatprep.subr.mxu0 0.0
    %1011 = vmatpush1.xpose.msra.mxu0 0.0
    %1012 = vmatprep.subr.mxu0 0.0
    %1013 = vmatpush1.xpose.msra.mxu0 0.0
    %1014 = vmatprep.subr.mxu0 0.0
    %1015 = vmatpush1.xpose.msra.mxu0 0.0
    %1016 = vmatprep.subr.mxu0 0.0
    %1017 = vmatpush1.xpose.msra.mxu0 0.0
    %1018 = vmatprep.subr.mxu0 0.0
    %1019 = vmatpush1.xpose.msra.mxu0 0.0
    %1020 = vmatprep.subr.mxu0 0.0
    %1021 = vmatpush1.xpose.msra.mxu0 0.0
    %1022 = vmatprep.subr.mxu0 0.0
    %1023 = vmatpush1.xpose.msra.mxu0 0.0
    %1024 = vmatprep.subr.mxu0 0.0
    %1025 = vmatpush1.xpose.msra.mxu0 0.0
    %1026 = vmatprep.subr.mxu0 0.0
    %1027 = vmatpush1.xpose.msra.mxu0 0.0
    %1028 = vmatprep.subr.mxu0 0.0
    %1029 = vmatpush1.xpose.msra.mxu0 0.0
    %1030 = vmatprep.subr.mxu0 0.0
    %1031 = vmatpush1.xpose.msra.mxu0 0.0
    %1032 = vmatprep.mubr.f32.mxu0 0.0
    %1033 = vmatmul.mubr.f32.gmra.mrb[0].mxu0 %v964
    %v1034 = vpop.f32.mrb[0].mxu0
    %v1035 = vadd.f32 0.0, %v1034
    %v1036 = vpop.f32.mrb[0].mxu0
    %1037 = vdwg.mxu0
    %1038 = vrot.lane.b32.xlu0 %v285, 120
    %v1039 = vpop.permute.xlu0 %1038
    %1040 = vrot.lane.b32.xlu0 %v285, 88
    %v1041 = vpop.permute.xlu0 %1040
    %v1042 = vsel %vm301, %v1039, 0
    %v1044 = vsel %vm301, %v1041, 0
    %1046 = vmatprep.subr.mxu0 0.0
    %1047 = vmatpush1.xpose.msra.mxu0 %v1044
    %1048 = vmatprep.subr.mxu0 0.0
    %1049 = vmatpush1.xpose.msra.mxu0 0.0
    %1050 = vmatprep.subr.mxu0 0.0
    %1051 = vmatpush1.xpose.msra.mxu0 0.0
    %1052 = vmatprep.subr.mxu0 0.0
    %1053 = vmatpush1.xpose.msra.mxu0 0.0
    %1054 = vmatprep.subr.mxu0 0.0
    %1055 = vmatpush1.xpose.msra.mxu0 0.0
    %1056 = vmatprep.subr.mxu0 0.0
    %1057 = vmatpush1.xpose.msra.mxu0 0.0
    %1058 = vmatprep.subr.mxu0 0.0
    %1059 = vmatpush1.xpose.msra.mxu0 0.0
    %1060 = vmatprep.subr.mxu0 0.0
    %1061 = vmatpush1.xpose.msra.mxu0 0.0
    %1062 = vmatprep.subr.mxu0 0.0
    %1063 = vmatpush1.xpose.msra.mxu0 0.0
    %1064 = vmatprep.subr.mxu0 0.0
    %1065 = vmatpush1.xpose.msra.mxu0 0.0
    %1066 = vmatprep.subr.mxu0 0.0
    %1067 = vmatpush1.xpose.msra.mxu0 0.0
    %1068 = vmatprep.subr.mxu0 0.0
    %1069 = vmatpush1.xpose.msra.mxu0 0.0
    %1070 = vmatprep.subr.mxu0 0.0
    %1071 = vmatpush1.xpose.msra.mxu0 0.0
    %1072 = vmatprep.subr.mxu0 0.0
    %1073 = vmatpush1.xpose.msra.mxu0 0.0
    %1074 = vmatprep.subr.mxu0 0.0
    %1075 = vmatpush1.xpose.msra.mxu0 0.0
    %1076 = vmatprep.subr.mxu0 0.0
    %1077 = vmatpush1.xpose.msra.mxu0 0.0
    %1078 = vmatprep.subr.mxu0 0.0
    %1079 = vmatpush1.xpose.msra.mxu0 0.0
    %1080 = vmatprep.subr.mxu0 0.0
    %1081 = vmatpush1.xpose.msra.mxu0 0.0
    %1082 = vmatprep.subr.mxu0 0.0
    %1083 = vmatpush1.xpose.msra.mxu0 0.0
    %1084 = vmatprep.subr.mxu0 0.0
    %1085 = vmatpush1.xpose.msra.mxu0 0.0
    %1086 = vmatprep.subr.mxu0 0.0
    %1087 = vmatpush1.xpose.msra.mxu0 0.0
    %1088 = vmatprep.subr.mxu0 0.0
    %1089 = vmatpush1.xpose.msra.mxu0 0.0
    %1090 = vmatprep.subr.mxu0 0.0
    %1091 = vmatpush1.xpose.msra.mxu0 0.0
    %1092 = vmatprep.subr.mxu0 0.0
    %1093 = vmatpush1.xpose.msra.mxu0 0.0
    %1094 = vmatprep.subr.mxu0 0.0
    %1095 = vmatpush1.xpose.msra.mxu0 0.0
    %1096 = vmatprep.subr.mxu0 0.0
    %1097 = vmatpush1.xpose.msra.mxu0 0.0
    %1098 = vmatprep.subr.mxu0 0.0
    %1099 = vmatpush1.xpose.msra.mxu0 0.0
    %1100 = vmatprep.subr.mxu0 0.0
    %1101 = vmatpush1.xpose.msra.mxu0 0.0
    %1102 = vmatprep.subr.mxu0 0.0
    %1103 = vmatpush1.xpose.msra.mxu0 0.0
    %1104 = vmatprep.subr.mxu0 0.0
    %1105 = vmatpush1.xpose.msra.mxu0 0.0
    %1106 = vmatprep.subr.mxu0 0.0
    %1107 = vmatpush1.xpose.msra.mxu0 0.0
    %1108 = vmatprep.subr.mxu0 0.0
    %1109 = vmatpush1.xpose.msra.mxu0 0.0
    %1110 = vmatprep.mubr.f32.mxu0 0.0
    %1111 = vmatmul.mubr.f32.gmra.mrb[0].mxu0 %v1042
    %v1112 = vpop.f32.mrb[0].mxu0
    %v1113 = vadd.f32 0.0, %v1112
    %v1114 = vpop.f32.mrb[0].mxu0
    %1115 = vdwg.mxu0
    %1116 = vrot.lane.b32.xlu0 %v290, 120
    %v1117 = vpop.permute.xlu0 %1116
    %1118 = vrot.lane.b32.xlu0 %v290, 88
    %v1119 = vpop.permute.xlu0 %1118
    %v1120 = vsel %vm301, %v1117, 0
    %v1122 = vsel %vm301, %v1119, 0
    %1124 = vmatprep.subr.mxu0 0.0
    %1125 = vmatpush1.xpose.msra.mxu0 %v1122
    %1126 = vmatprep.subr.mxu0 0.0
    %1127 = vmatpush1.xpose.msra.mxu0 0.0
    %1128 = vmatprep.subr.mxu0 0.0
    %1129 = vmatpush1.xpose.msra.mxu0 0.0
    %1130 = vmatprep.subr.mxu0 0.0
    %1131 = vmatpush1.xpose.msra.mxu0 0.0
    %1132 = vmatprep.subr.mxu0 0.0
    %1133 = vmatpush1.xpose.msra.mxu0 0.0
    %1134 = vmatprep.subr.mxu0 0.0
    %1135 = vmatpush1.xpose.msra.mxu0 0.0
    %1136 = vmatprep.subr.mxu0 0.0
    %1137 = vmatpush1.xpose.msra.mxu0 0.0
    %1138 = vmatprep.subr.mxu0 0.0
    %1139 = vmatpush1.xpose.msra.mxu0 0.0
    %1140 = vmatprep.subr.mxu0 0.0
    %1141 = vmatpush1.xpose.msra.mxu0 0.0
    %1142 = vmatprep.subr.mxu0 0.0
    %1143 = vmatpush1.xpose.msra.mxu0 0.0
    %1144 = vmatprep.subr.mxu0 0.0
    %1145 = vmatpush1.xpose.msra.mxu0 0.0
    %1146 = vmatprep.subr.mxu0 0.0
    %1147 = vmatpush1.xpose.msra.mxu0 0.0
    %1148 = vmatprep.subr.mxu0 0.0
    %1149 = vmatpush1.xpose.msra.mxu0 0.0
    %1150 = vmatprep.subr.mxu0 0.0
    %1151 = vmatpush1.xpose.msra.mxu0 0.0
    %1152 = vmatprep.subr.mxu0 0.0
    %1153 = vmatpush1.xpose.msra.mxu0 0.0
    %1154 = vmatprep.subr.mxu0 0.0
    %1155 = vmatpush1.xpose.msra.mxu0 0.0
    %1156 = vmatprep.subr.mxu0 0.0
    %1157 = vmatpush1.xpose.msra.mxu0 0.0
    %1158 = vmatprep.subr.mxu0 0.0
    %1159 = vmatpush1.xpose.msra.mxu0 0.0
    %1160 = vmatprep.subr.mxu0 0.0
    %1161 = vmatpush1.xpose.msra.mxu0 0.0
    %1162 = vmatprep.subr.mxu0 0.0
    %1163 = vmatpush1.xpose.msra.mxu0 0.0
    %1164 = vmatprep.subr.mxu0 0.0
    %1165 = vmatpush1.xpose.msra.mxu0 0.0
    %1166 = vmatprep.subr.mxu0 0.0
    %1167 = vmatpush1.xpose.msra.mxu0 0.0
    %1168 = vmatprep.subr.mxu0 0.0
    %1169 = vmatpush1.xpose.msra.mxu0 0.0
    %1170 = vmatprep.subr.mxu0 0.0
    %1171 = vmatpush1.xpose.msra.mxu0 0.0
    %1172 = vmatprep.subr.mxu0 0.0
    %1173 = vmatpush1.xpose.msra.mxu0 0.0
    %1174 = vmatprep.subr.mxu0 0.0
    %1175 = vmatpush1.xpose.msra.mxu0 0.0
    %1176 = vmatprep.subr.mxu0 0.0
    %1177 = vmatpush1.xpose.msra.mxu0 0.0
    %1178 = vmatprep.subr.mxu0 0.0
    %1179 = vmatpush1.xpose.msra.mxu0 0.0
    %1180 = vmatprep.subr.mxu0 0.0
    %1181 = vmatpush1.xpose.msra.mxu0 0.0
    %1182 = vmatprep.subr.mxu0 0.0
    %1183 = vmatpush1.xpose.msra.mxu0 0.0
    %1184 = vmatprep.subr.mxu0 0.0
    %1185 = vmatpush1.xpose.msra.mxu0 0.0
    %1186 = vmatprep.subr.mxu0 0.0
    %1187 = vmatpush1.xpose.msra.mxu0 0.0
    %1188 = vmatprep.mubr.f32.mxu0 0.0
    %1189 = vmatmul.mubr.f32.gmra.mrb[0].mxu0 %v1120
    %v1190 = vpop.f32.mrb[0].mxu0
    %v1191 = vadd.f32 0.0, %v1190
    %v1192 = vpop.f32.mrb[0].mxu0
    %1193 = vdwg.mxu0
    %1194 = vrot.lane.b32.xlu0 %v295, 120
    %v1195 = vpop.permute.xlu0 %1194
    %1196 = vrot.lane.b32.xlu0 %v295, 88
    %v1197 = vpop.permute.xlu0 %1196
    %v1198 = vsel %vm301, %v1195, 0
    %v1200 = vsel %vm301, %v1197, 0
    %1202 = vmatprep.subr.mxu0 0.0
    %1203 = vmatpush1.xpose.msra.mxu0 %v1200
    %1204 = vmatprep.subr.mxu0 0.0
    %1205 = vmatpush1.xpose.msra.mxu0 0.0
    %1206 = vmatprep.subr.mxu0 0.0
    %1207 = vmatpush1.xpose.msra.mxu0 0.0
    %1208 = vmatprep.subr.mxu0 0.0
    %1209 = vmatpush1.xpose.msra.mxu0 0.0
    %1210 = vmatprep.subr.mxu0 0.0
    %1211 = vmatpush1.xpose.msra.mxu0 0.0
    %1212 = vmatprep.subr.mxu0 0.0
    %1213 = vmatpush1.xpose.msra.mxu0 0.0
    %1214 = vmatprep.subr.mxu0 0.0
    %1215 = vmatpush1.xpose.msra.mxu0 0.0
    %1216 = vmatprep.subr.mxu0 0.0
    %1217 = vmatpush1.xpose.msra.mxu0 0.0
    %1218 = vmatprep.subr.mxu0 0.0
    %1219 = vmatpush1.xpose.msra.mxu0 0.0
    %1220 = vmatprep.subr.mxu0 0.0
    %1221 = vmatpush1.xpose.msra.mxu0 0.0
    %1222 = vmatprep.subr.mxu0 0.0
    %1223 = vmatpush1.xpose.msra.mxu0 0.0
    %1224 = vmatprep.subr.mxu0 0.0
    %1225 = vmatpush1.xpose.msra.mxu0 0.0
    %1226 = vmatprep.subr.mxu0 0.0
    %1227 = vmatpush1.xpose.msra.mxu0 0.0
    %1228 = vmatprep.subr.mxu0 0.0
    %1229 = vmatpush1.xpose.msra.mxu0 0.0
    %1230 = vmatprep.subr.mxu0 0.0
    %1231 = vmatpush1.xpose.msra.mxu0 0.0
    %1232 = vmatprep.subr.mxu0 0.0
    %1233 = vmatpush1.xpose.msra.mxu0 0.0
    %1234 = vmatprep.subr.mxu0 0.0
    %1235 = vmatpush1.xpose.msra.mxu0 0.0
    %1236 = vmatprep.subr.mxu0 0.0
    %1237 = vmatpush1.xpose.msra.mxu0 0.0
    %1238 = vmatprep.subr.mxu0 0.0
    %1239 = vmatpush1.xpose.msra.mxu0 0.0
    %1240 = vmatprep.subr.mxu0 0.0
    %1241 = vmatpush1.xpose.msra.mxu0 0.0
    %1242 = vmatprep.subr.mxu0 0.0
    %1243 = vmatpush1.xpose.msra.mxu0 0.0
    %1244 = vmatprep.subr.mxu0 0.0
    %1245 = vmatpush1.xpose.msra.mxu0 0.0
    %1246 = vmatprep.subr.mxu0 0.0
    %1247 = vmatpush1.xpose.msra.mxu0 0.0
    %1248 = vmatprep.subr.mxu0 0.0
    %1249 = vmatpush1.xpose.msra.mxu0 0.0
    %1250 = vmatprep.subr.mxu0 0.0
    %1251 = vmatpush1.xpose.msra.mxu0 0.0
    %1252 = vmatprep.subr.mxu0 0.0
    %1253 = vmatpush1.xpose.msra.mxu0 0.0
    %1254 = vmatprep.subr.mxu0 0.0
    %1255 = vmatpush1.xpose.msra.mxu0 0.0
    %1256 = vmatprep.subr.mxu0 0.0
    %1257 = vmatpush1.xpose.msra.mxu0 0.0
    %1258 = vmatprep.subr.mxu0 0.0
    %1259 = vmatpush1.xpose.msra.mxu0 0.0
    %1260 = vmatprep.subr.mxu0 0.0
    %1261 = vmatpush1.xpose.msra.mxu0 0.0
    %1262 = vmatprep.subr.mxu0 0.0
    %1263 = vmatpush1.xpose.msra.mxu0 0.0
    %1264 = vmatprep.subr.mxu0 0.0
    %1265 = vmatpush1.xpose.msra.mxu0 0.0
    %1266 = vmatprep.mubr.f32.mxu0 0.0
    %1267 = vmatmul.mubr.f32.gmra.mrb[0].mxu0 %v1198
    %v1268 = vpop.f32.mrb[0].mxu0
    %v1269 = vadd.f32 0.0, %v1268
    %v1270 = vpop.f32.mrb[0].mxu0
    %1271 = vdwg.mxu0
    %v1272 = vmul.f32 %v1035, 0.35355338
    %v1273 = vmul.f32 %v1113, 0.35355338
    %v1274 = vmul.f32 %v1191, 0.35355338
    %v1275 = vmul.f32 %v1269, 0.35355338
    %v1276 = vsel %vm301, %v1272, -inf
    %1277 = vmax.xlane.f32.xlu0 %v1276
    %v1278 = vpop.xlane.xlu0 %1277
    %v1279 = vsel %vm301, %v1273, -inf
    %1280 = vmax.xlane.f32.xlu0 %v1279
    %v1281 = vpop.xlane.xlu0 %1280
    %v1282 = vsel %vm301, %v1274, -inf
    %1283 = vmax.xlane.f32.xlu0 %v1282
    %v1284 = vpop.xlane.xlu0 %1283
    %v1285 = vsel %vm301, %v1275, -inf
    %1286 = vmax.xlane.f32.xlu0 %v1285
    %v1287 = vpop.xlane.xlu0 %1286
    %v1288 = vsub.f32 %v1272, %v1278
    %v1289 = vsub.f32 %v1273, %v1281
    %v1290 = vsub.f32 %v1274, %v1284
    %v1291 = vsub.f32 %v1275, %v1287
    %v1292 = vmul.f32 %v1288, 1.442695
    %v1293 = vpow.pop %v1292
    %v1294 = vmul.f32 %v1289, 1.442695
    %v1295 = vpow.pop %v1294
    %v1296 = vmul.f32 %v1290, 1.442695
    %v1297 = vpow.pop %v1296
    %v1298 = vmul.f32 %v1291, 1.442695
    %v1299 = vpow.pop %v1298
    %v1300 = vsel %vm301, %v1293, 0.0
    %1301 = vadd.xlane.f32.xlu0 %v1300
    %v1302 = vpop.xlane.xlu0 %1301
    %v1303 = vsel %vm301, %v1295, 0.0
    %1304 = vadd.xlane.f32.xlu0 %v1303
    %v1305 = vpop.xlane.xlu0 %1304
    %v1306 = vsel %vm301, %v1297, 0.0
    %1307 = vadd.xlane.f32.xlu0 %v1306
    %v1308 = vpop.xlane.xlu0 %1307
    %v1309 = vsel %vm301, %v1299, 0.0
    %1310 = vadd.xlane.f32.xlu0 %v1309
    %v1311 = vpop.xlane.xlu0 %1310
    %v1312 = vrcp.pop %v1302
    %v1313 = vmul.f32 %v1293, %v1312
    %v1314 = vrcp.pop %v1305
    %v1315 = vmul.f32 %v1295, %v1314
    %v1316 = vrcp.pop %v1308
    %v1317 = vmul.f32 %v1297, %v1316
    %v1318 = vrcp.pop %v1311
    %v1319 = vmul.f32 %v1299, %v1318
    %1320 = vrot.lane.b32.xlu0 %v280, 56
    %v1321 = vpop.permute.xlu0 %1320
    %v1324 = vsel %vm301, %v1313, 0
    %1326 = vmatprep.subr.mxu0 0.0
    %1327 = vmatpush1.msra.mxu0 %v1321
    %1328 = vmatprep.subr.mxu0 0.0
    %1329 = vmatpush1.msra.mxu0 0.0
    %1330 = vmatprep.subr.mxu0 0.0
    %1331 = vmatpush1.msra.mxu0 0.0
    %1332 = vmatprep.subr.mxu0 0.0
    %1333 = vmatpush1.msra.mxu0 0.0
    %1334 = vmatprep.subr.mxu0 0.0
    %1335 = vmatpush1.msra.mxu0 0.0
    %1336 = vmatprep.subr.mxu0 0.0
    %1337 = vmatpush1.msra.mxu0 0.0
    %1338 = vmatprep.subr.mxu0 0.0
    %1339 = vmatpush1.msra.mxu0 0.0
    %1340 = vmatprep.subr.mxu0 0.0
    %1341 = vmatpush1.msra.mxu0 0.0
    %1342 = vmatprep.subr.mxu0 0.0
    %1343 = vmatpush1.msra.mxu0 0.0
    %1344 = vmatprep.subr.mxu0 0.0
    %1345 = vmatpush1.msra.mxu0 0.0
    %1346 = vmatprep.subr.mxu0 0.0
    %1347 = vmatpush1.msra.mxu0 0.0
    %1348 = vmatprep.subr.mxu0 0.0
    %1349 = vmatpush1.msra.mxu0 0.0
    %1350 = vmatprep.subr.mxu0 0.0
    %1351 = vmatpush1.msra.mxu0 0.0
    %1352 = vmatprep.subr.mxu0 0.0
    %1353 = vmatpush1.msra.mxu0 0.0
    %1354 = vmatprep.subr.mxu0 0.0
    %1355 = vmatpush1.msra.mxu0 0.0
    %1356 = vmatprep.subr.mxu0 0.0
    %1357 = vmatpush1.msra.mxu0 0.0
    %1358 = vmatprep.subr.mxu0 0.0
    %1359 = vmatpush1.msra.mxu0 0.0
    %1360 = vmatprep.subr.mxu0 0.0
    %1361 = vmatpush1.msra.mxu0 0.0
    %1362 = vmatprep.subr.mxu0 0.0
    %1363 = vmatpush1.msra.mxu0 0.0
    %1364 = vmatprep.subr.mxu0 0.0
    %1365 = vmatpush1.msra.mxu0 0.0
    %1366 = vmatprep.subr.mxu0 0.0
    %1367 = vmatpush1.msra.mxu0 0.0
    %1368 = vmatprep.subr.mxu0 0.0
    %1369 = vmatpush1.msra.mxu0 0.0
    %1370 = vmatprep.subr.mxu0 0.0
    %1371 = vmatpush1.msra.mxu0 0.0
    %1372 = vmatprep.subr.mxu0 0.0
    %1373 = vmatpush1.msra.mxu0 0.0
    %1374 = vmatprep.subr.mxu0 0.0
    %1375 = vmatpush1.msra.mxu0 0.0
    %1376 = vmatprep.subr.mxu0 0.0
    %1377 = vmatpush1.msra.mxu0 0.0
    %1378 = vmatprep.subr.mxu0 0.0
    %1379 = vmatpush1.msra.mxu0 0.0
    %1380 = vmatprep.subr.mxu0 0.0
    %1381 = vmatpush1.msra.mxu0 0.0
    %1382 = vmatprep.subr.mxu0 0.0
    %1383 = vmatpush1.msra.mxu0 0.0
    %1384 = vmatprep.subr.mxu0 0.0
    %1385 = vmatpush1.msra.mxu0 0.0
    %1386 = vmatprep.subr.mxu0 0.0
    %1387 = vmatpush1.msra.mxu0 0.0
    %1388 = vmatprep.subr.mxu0 0.0
    %1389 = vmatpush1.msra.mxu0 0.0
    %1390 = vmatprep.mubr.f32.mxu0 0.0
    %1391 = vmatmul.mubr.f32.gmra.mrb[0].mxu0 %v1324
    %v1392 = vpop.f32.mrb[0].mxu0
    %v1393 = vadd.f32 0.0, %v1392
    %v1394 = vpop.f32.mrb[0].mxu0
    %1395 = vdwg.mxu0
    %1396 = vrot.lane.b32.xlu0 %v285, 56
    %v1397 = vpop.permute.xlu0 %1396
    %v1400 = vsel %vm301, %v1315, 0
    %1402 = vmatprep.subr.mxu0 0.0
    %1403 = vmatpush1.msra.mxu0 %v1397
    %1404 = vmatprep.subr.mxu0 0.0
    %1405 = vmatpush1.msra.mxu0 0.0
    %1406 = vmatprep.subr.mxu0 0.0
    %1407 = vmatpush1.msra.mxu0 0.0
    %1408 = vmatprep.subr.mxu0 0.0
    %1409 = vmatpush1.msra.mxu0 0.0
    %1410 = vmatprep.subr.mxu0 0.0
    %1411 = vmatpush1.msra.mxu0 0.0
    %1412 = vmatprep.subr.mxu0 0.0
    %1413 = vmatpush1.msra.mxu0 0.0
    %1414 = vmatprep.subr.mxu0 0.0
    %1415 = vmatpush1.msra.mxu0 0.0
    %1416 = vmatprep.subr.mxu0 0.0
    %1417 = vmatpush1.msra.mxu0 0.0
    %1418 = vmatprep.subr.mxu0 0.0
    %1419 = vmatpush1.msra.mxu0 0.0
    %1420 = vmatprep.subr.mxu0 0.0
    %1421 = vmatpush1.msra.mxu0 0.0
    %1422 = vmatprep.subr.mxu0 0.0
    %1423 = vmatpush1.msra.mxu0 0.0
    %1424 = vmatprep.subr.mxu0 0.0
    %1425 = vmatpush1.msra.mxu0 0.0
    %1426 = vmatprep.subr.mxu0 0.0
    %1427 = vmatpush1.msra.mxu0 0.0
    %1428 = vmatprep.subr.mxu0 0.0
    %1429 = vmatpush1.msra.mxu0 0.0
    %1430 = vmatprep.subr.mxu0 0.0
    %1431 = vmatpush1.msra.mxu0 0.0
    %1432 = vmatprep.subr.mxu0 0.0
    %1433 = vmatpush1.msra.mxu0 0.0
    %1434 = vmatprep.subr.mxu0 0.0
    %1435 = vmatpush1.msra.mxu0 0.0
    %1436 = vmatprep.subr.mxu0 0.0
    %1437 = vmatpush1.msra.mxu0 0.0
    %1438 = vmatprep.subr.mxu0 0.0
    %1439 = vmatpush1.msra.mxu0 0.0
    %1440 = vmatprep.subr.mxu0 0.0
    %1441 = vmatpush1.msra.mxu0 0.0
    %1442 = vmatprep.subr.mxu0 0.0
    %1443 = vmatpush1.msra.mxu0 0.0
    %1444 = vmatprep.subr.mxu0 0.0
    %1445 = vmatpush1.msra.mxu0 0.0
    %1446 = vmatprep.subr.mxu0 0.0
    %1447 = vmatpush1.msra.mxu0 0.0
    %1448 = vmatprep.subr.mxu0 0.0
    %1449 = vmatpush1.msra.mxu0 0.0
    %1450 = vmatprep.subr.mxu0 0.0
    %1451 = vmatpush1.msra.mxu0 0.0
    %1452 = vmatprep.subr.mxu0 0.0
    %1453 = vmatpush1.msra.mxu0 0.0
    %1454 = vmatprep.subr.mxu0 0.0
    %1455 = vmatpush1.msra.mxu0 0.0
    %1456 = vmatprep.subr.mxu0 0.0
    %1457 = vmatpush1.msra.mxu0 0.0
    %1458 = vmatprep.subr.mxu0 0.0
    %1459 = vmatpush1.msra.mxu0 0.0
    %1460 = vmatprep.subr.mxu0 0.0
    %1461 = vmatpush1.msra.mxu0 0.0
    %1462 = vmatprep.subr.mxu0 0.0
    %1463 = vmatpush1.msra.mxu0 0.0
    %1464 = vmatprep.subr.mxu0 0.0
    %1465 = vmatpush1.msra.mxu0 0.0
    %1466 = vmatprep.mubr.f32.mxu0 0.0
    %1467 = vmatmul.mubr.f32.gmra.mrb[0].mxu0 %v1400
    %v1468 = vpop.f32.mrb[0].mxu0
    %v1469 = vadd.f32 0.0, %v1468
    %v1470 = vpop.f32.mrb[0].mxu0
    %1471 = vdwg.mxu0
    %1472 = vrot.lane.b32.xlu0 %v290, 56
    %v1473 = vpop.permute.xlu0 %1472
    %v1476 = vsel %vm301, %v1317, 0
    %1478 = vmatprep.subr.mxu0 0.0
    %1479 = vmatpush1.msra.mxu0 %v1473
    %1480 = vmatprep.subr.mxu0 0.0
    %1481 = vmatpush1.msra.mxu0 0.0
    %1482 = vmatprep.subr.mxu0 0.0
    %1483 = vmatpush1.msra.mxu0 0.0
    %1484 = vmatprep.subr.mxu0 0.0
    %1485 = vmatpush1.msra.mxu0 0.0
    %1486 = vmatprep.subr.mxu0 0.0
    %1487 = vmatpush1.msra.mxu0 0.0
    %1488 = vmatprep.subr.mxu0 0.0
    %1489 = vmatpush1.msra.mxu0 0.0
    %1490 = vmatprep.subr.mxu0 0.0
    %1491 = vmatpush1.msra.mxu0 0.0
    %1492 = vmatprep.subr.mxu0 0.0
    %1493 = vmatpush1.msra.mxu0 0.0
    %1494 = vmatprep.subr.mxu0 0.0
    %1495 = vmatpush1.msra.mxu0 0.0
    %1496 = vmatprep.subr.mxu0 0.0
    %1497 = vmatpush1.msra.mxu0 0.0
    %1498 = vmatprep.subr.mxu0 0.0
    %1499 = vmatpush1.msra.mxu0 0.0
    %1500 = vmatprep.subr.mxu0 0.0
    %1501 = vmatpush1.msra.mxu0 0.0
    %1502 = vmatprep.subr.mxu0 0.0
    %1503 = vmatpush1.msra.mxu0 0.0
    %1504 = vmatprep.subr.mxu0 0.0
    %1505 = vmatpush1.msra.mxu0 0.0
    %1506 = vmatprep.subr.mxu0 0.0
    %1507 = vmatpush1.msra.mxu0 0.0
    %1508 = vmatprep.subr.mxu0 0.0
    %1509 = vmatpush1.msra.mxu0 0.0
    %1510 = vmatprep.subr.mxu0 0.0
    %1511 = vmatpush1.msra.mxu0 0.0
    %1512 = vmatprep.subr.mxu0 0.0
    %1513 = vmatpush1.msra.mxu0 0.0
    %1514 = vmatprep.subr.mxu0 0.0
    %1515 = vmatpush1.msra.mxu0 0.0
    %1516 = vmatprep.subr.mxu0 0.0
    %1517 = vmatpush1.msra.mxu0 0.0
    %1518 = vmatprep.subr.mxu0 0.0
    %1519 = vmatpush1.msra.mxu0 0.0
    %1520 = vmatprep.subr.mxu0 0.0
    %1521 = vmatpush1.msra.mxu0 0.0
    %1522 = vmatprep.subr.mxu0 0.0
    %1523 = vmatpush1.msra.mxu0 0.0
    %1524 = vmatprep.subr.mxu0 0.0
    %1525 = vmatpush1.msra.mxu0 0.0
    %1526 = vmatprep.subr.mxu0 0.0
    %1527 = vmatpush1.msra.mxu0 0.0
    %1528 = vmatprep.subr.mxu0 0.0
    %1529 = vmatpush1.msra.mxu0 0.0
    %1530 = vmatprep.subr.mxu0 0.0
    %1531 = vmatpush1.msra.mxu0 0.0
    %1532 = vmatprep.subr.mxu0 0.0
    %1533 = vmatpush1.msra.mxu0 0.0
    %1534 = vmatprep.subr.mxu0 0.0
    %1535 = vmatpush1.msra.mxu0 0.0
    %1536 = vmatprep.subr.mxu0 0.0
    %1537 = vmatpush1.msra.mxu0 0.0
    %1538 = vmatprep.subr.mxu0 0.0
    %1539 = vmatpush1.msra.mxu0 0.0
    %1540 = vmatprep.subr.mxu0 0.0
    %1541 = vmatpush1.msra.mxu0 0.0
    %1542 = vmatprep.mubr.f32.mxu0 0.0
    %1543 = vmatmul.mubr.f32.gmra.mrb[0].mxu0 %v1476
    %v1544 = vpop.f32.mrb[0].mxu0
    %v1545 = vadd.f32 0.0, %v1544
    %v1546 = vpop.f32.mrb[0].mxu0
    %1547 = vdwg.mxu0
    %1548 = vrot.lane.b32.xlu0 %v295, 56
    %v1549 = vpop.permute.xlu0 %1548
    %v1552 = vsel %vm301, %v1319, 0
    %1554 = vmatprep.subr.mxu0 0.0
    %1555 = vmatpush1.msra.mxu0 %v1549
    %1556 = vmatprep.subr.mxu0 0.0
    %1557 = vmatpush1.msra.mxu0 0.0
    %1558 = vmatprep.subr.mxu0 0.0
    %1559 = vmatpush1.msra.mxu0 0.0
    %1560 = vmatprep.subr.mxu0 0.0
    %1561 = vmatpush1.msra.mxu0 0.0
    %1562 = vmatprep.subr.mxu0 0.0
    %1563 = vmatpush1.msra.mxu0 0.0
    %1564 = vmatprep.subr.mxu0 0.0
    %1565 = vmatpush1.msra.mxu0 0.0
    %1566 = vmatprep.subr.mxu0 0.0
    %1567 = vmatpush1.msra.mxu0 0.0
    %1568 = vmatprep.subr.mxu0 0.0
    %1569 = vmatpush1.msra.mxu0 0.0
    %1570 = vmatprep.subr.mxu0 0.0
    %1571 = vmatpush1.msra.mxu0 0.0
    %1572 = vmatprep.subr.mxu0 0.0
    %1573 = vmatpush1.msra.mxu0 0.0
    %1574 = vmatprep.subr.mxu0 0.0
    %1575 = vmatpush1.msra.mxu0 0.0
    %1576 = vmatprep.subr.mxu0 0.0
    %1577 = vmatpush1.msra.mxu0 0.0
    %1578 = vmatprep.subr.mxu0 0.0
    %1579 = vmatpush1.msra.mxu0 0.0
    %1580 = vmatprep.subr.mxu0 0.0
    %1581 = vmatpush1.msra.mxu0 0.0
    %1582 = vmatprep.subr.mxu0 0.0
    %1583 = vmatpush1.msra.mxu0 0.0
    %1584 = vmatprep.subr.mxu0 0.0
    %1585 = vmatpush1.msra.mxu0 0.0
    %1586 = vmatprep.subr.mxu0 0.0
    %1587 = vmatpush1.msra.mxu0 0.0
    %1588 = vmatprep.subr.mxu0 0.0
    %1589 = vmatpush1.msra.mxu0 0.0
    %1590 = vmatprep.subr.mxu0 0.0
    %1591 = vmatpush1.msra.mxu0 0.0
    %1592 = vmatprep.subr.mxu0 0.0
    %1593 = vmatpush1.msra.mxu0 0.0
    %1594 = vmatprep.subr.mxu0 0.0
    %1595 = vmatpush1.msra.mxu0 0.0
    %1596 = vmatprep.subr.mxu0 0.0
    %1597 = vmatpush1.msra.mxu0 0.0
    %1598 = vmatprep.subr.mxu0 0.0
    %1599 = vmatpush1.msra.mxu0 0.0
    %1600 = vmatprep.subr.mxu0 0.0
    %1601 = vmatpush1.msra.mxu0 0.0
    %1602 = vmatprep.subr.mxu0 0.0
    %1603 = vmatpush1.msra.mxu0 0.0
    %1604 = vmatprep.subr.mxu0 0.0
    %1605 = vmatpush1.msra.mxu0 0.0
    %1606 = vmatprep.subr.mxu0 0.0
    %1607 = vmatpush1.msra.mxu0 0.0
    %1608 = vmatprep.subr.mxu0 0.0
    %1609 = vmatpush1.msra.mxu0 0.0
    %1610 = vmatprep.subr.mxu0 0.0
    %1611 = vmatpush1.msra.mxu0 0.0
    %1612 = vmatprep.subr.mxu0 0.0
    %1613 = vmatpush1.msra.mxu0 0.0
    %1614 = vmatprep.subr.mxu0 0.0
    %1615 = vmatpush1.msra.mxu0 0.0
    %1616 = vmatprep.subr.mxu0 0.0
    %1617 = vmatpush1.msra.mxu0 0.0
    %1618 = vmatprep.mubr.f32.mxu0 0.0
    %1619 = vmatmul.mubr.f32.gmra.mrb[0].mxu0 %v1552
    %v1620 = vpop.f32.mrb[0].mxu0
    %v1621 = vadd.f32 0.0, %v1620
    %v1622 = vpop.f32.mrb[0].mxu0
    %1623 = vdwg.mxu0
    %v1624 = vld [vmem:[%s2 + $0x8] sm:$0xff]
    %v1626 = vsel %vm301, %v1393, 0
    %v1629 = vsel %vm301, %v1469, 0
    %v1632 = vsel %vm301, %v1545, 0
    %v1635 = vsel %vm301, %v1621, 0
    %1637 = vmatprep.subr.mxu0 0.0
    %1638 = vmatpush1.msra.mxu0 %v1624
    %1639 = vmatprep.subr.mxu0 0.0
    %1640 = vmatpush1.msra.mxu0 0.0
    %1641 = vmatprep.subr.mxu0 0.0
    %1642 = vmatpush1.msra.mxu0 0.0
    %1643 = vmatprep.subr.mxu0 0.0
    %1644 = vmatpush1.msra.mxu0 0.0
    %1645 = vmatprep.subr.mxu0 0.0
    %1646 = vmatpush1.msra.mxu0 0.0
    %1647 = vmatprep.subr.mxu0 0.0
    %1648 = vmatpush1.msra.mxu0 0.0
    %1649 = vmatprep.subr.mxu0 0.0
    %1650 = vmatpush1.msra.mxu0 0.0
    %1651 = vmatprep.subr.mxu0 0.0
    %1652 = vmatpush1.msra.mxu0 0.0
    %1653 = vmatprep.subr.mxu0 0.0
    %1654 = vmatpush1.msra.mxu0 0.0
    %1655 = vmatprep.subr.mxu0 0.0
    %1656 = vmatpush1.msra.mxu0 0.0
    %1657 = vmatprep.subr.mxu0 0.0
    %1658 = vmatpush1.msra.mxu0 0.0
    %1659 = vmatprep.subr.mxu0 0.0
    %1660 = vmatpush1.msra.mxu0 0.0
    %1661 = vmatprep.subr.mxu0 0.0
    %1662 = vmatpush1.msra.mxu0 0.0
    %1663 = vmatprep.subr.mxu0 0.0
    %1664 = vmatpush1.msra.mxu0 0.0
    %1665 = vmatprep.subr.mxu0 0.0
    %1666 = vmatpush1.msra.mxu0 0.0
    %1667 = vmatprep.subr.mxu0 0.0
    %1668 = vmatpush1.msra.mxu0 0.0
    %1669 = vmatprep.subr.mxu0 0.0
    %1670 = vmatpush1.msra.mxu0 0.0
    %1671 = vmatprep.subr.mxu0 0.0
    %1672 = vmatpush1.msra.mxu0 0.0
    %1673 = vmatprep.subr.mxu0 0.0
    %1674 = vmatpush1.msra.mxu0 0.0
    %1675 = vmatprep.subr.mxu0 0.0
    %1676 = vmatpush1.msra.mxu0 0.0
    %1677 = vmatprep.subr.mxu0 0.0
    %1678 = vmatpush1.msra.mxu0 0.0
    %1679 = vmatprep.subr.mxu0 0.0
    %1680 = vmatpush1.msra.mxu0 0.0
    %1681 = vmatprep.subr.mxu0 0.0
    %1682 = vmatpush1.msra.mxu0 0.0
    %1683 = vmatprep.subr.mxu0 0.0
    %1684 = vmatpush1.msra.mxu0 0.0
    %1685 = vmatprep.subr.mxu0 0.0
    %1686 = vmatpush1.msra.mxu0 0.0
    %1687 = vmatprep.subr.mxu0 0.0
    %1688 = vmatpush1.msra.mxu0 0.0
    %1689 = vmatprep.subr.mxu0 0.0
    %1690 = vmatpush1.msra.mxu0 0.0
    %1691 = vmatprep.subr.mxu0 0.0
    %1692 = vmatpush1.msra.mxu0 0.0
    %1693 = vmatprep.subr.mxu0 0.0
    %1694 = vmatpush1.msra.mxu0 0.0
    %1695 = vmatprep.subr.mxu0 0.0
    %1696 = vmatpush1.msra.mxu0 0.0
    %1697 = vmatprep.subr.mxu0 0.0
    %1698 = vmatpush1.msra.mxu0 0.0
    %1699 = vmatprep.subr.mxu0 0.0
    %1700 = vmatpush1.msra.mxu0 0.0
    %1701 = vmatprep.mubr.f32.mxu0 0.0
    %1702 = vmatmul.mubr.f32.gmra.mrb[0].mxu0 %v1626
    %v1703 = vpop.f32.mrb[0].mxu0
    %v1704 = vadd.f32 0.0, %v1703
    %v1705 = vpop.f32.mrb[0].mxu0
    %1706 = vmatprep.mubr.f32.mxu0 0.0
    %1707 = vmatmul.mubr.f32.gmra.mrb[0].mxu0 %v1629
    %v1708 = vpop.f32.mrb[0].mxu0
    %v1709 = vadd.f32 0.0, %v1708
    %v1710 = vpop.f32.mrb[0].mxu0
    %1711 = vmatprep.mubr.f32.mxu0 0.0
    %1712 = vmatmul.mubr.f32.gmra.mrb[0].mxu0 %v1632
    %v1713 = vpop.f32.mrb[0].mxu0
    %v1714 = vadd.f32 0.0, %v1713
    %v1715 = vpop.f32.mrb[0].mxu0
    %1716 = vmatprep.mubr.f32.mxu0 0.0
    %1717 = vmatmul.mubr.f32.gmra.mrb[0].mxu0 %v1635
    %v1718 = vpop.f32.mrb[0].mxu0
    %v1719 = vadd.f32 0.0, %v1718
    %v1720 = vpop.f32.mrb[0].mxu0
    %1721 = vdwg.mxu0
    %v1723 = vsel %vm301, %v728, 0
    %v1726 = vsel %vm301, %v804, 0
    %v1729 = vsel %vm301, %v880, 0
    %v1732 = vsel %vm301, %v956, 0
    %1734 = vmatprep.subr.mxu0 0.0
    %1735 = vmatpush1.msra.mxu0 %v959
    %1736 = vmatprep.subr.mxu0 0.0
    %1737 = vmatpush1.msra.mxu0 0.0
    %1738 = vmatprep.subr.mxu0 0.0
    %1739 = vmatpush1.msra.mxu0 0.0
    %1740 = vmatprep.subr.mxu0 0.0
    %1741 = vmatpush1.msra.mxu0 0.0
    %1742 = vmatprep.subr.mxu0 0.0
    %1743 = vmatpush1.msra.mxu0 0.0
    %1744 = vmatprep.subr.mxu0 0.0
    %1745 = vmatpush1.msra.mxu0 0.0
    %1746 = vmatprep.subr.mxu0 0.0
    %1747 = vmatpush1.msra.mxu0 0.0
    %1748 = vmatprep.subr.mxu0 0.0
    %1749 = vmatpush1.msra.mxu0 0.0
    %1750 = vmatprep.subr.mxu0 0.0
    %1751 = vmatpush1.msra.mxu0 0.0
    %1752 = vmatprep.subr.mxu0 0.0
    %1753 = vmatpush1.msra.mxu0 0.0
    %1754 = vmatprep.subr.mxu0 0.0
    %1755 = vmatpush1.msra.mxu0 0.0
    %1756 = vmatprep.subr.mxu0 0.0
    %1757 = vmatpush1.msra.mxu0 0.0
    %1758 = vmatprep.subr.mxu0 0.0
    %1759 = vmatpush1.msra.mxu0 0.0
    %1760 = vmatprep.subr.mxu0 0.0
    %1761 = vmatpush1.msra.mxu0 0.0
    %1762 = vmatprep.subr.mxu0 0.0
    %1763 = vmatpush1.msra.mxu0 0.0
    %1764 = vmatprep.subr.mxu0 0.0
    %1765 = vmatpush1.msra.mxu0 0.0
    %1766 = vmatprep.subr.mxu0 0.0
    %1767 = vmatpush1.msra.mxu0 0.0
    %1768 = vmatprep.subr.mxu0 0.0
    %1769 = vmatpush1.msra.mxu0 0.0
    %1770 = vmatprep.subr.mxu0 0.0
    %1771 = vmatpush1.msra.mxu0 0.0
    %1772 = vmatprep.subr.mxu0 0.0
    %1773 = vmatpush1.msra.mxu0 0.0
    %1774 = vmatprep.subr.mxu0 0.0
    %1775 = vmatpush1.msra.mxu0 0.0
    %1776 = vmatprep.subr.mxu0 0.0
    %1777 = vmatpush1.msra.mxu0 0.0
    %1778 = vmatprep.subr.mxu0 0.0
    %1779 = vmatpush1.msra.mxu0 0.0
    %1780 = vmatprep.subr.mxu0 0.0
    %1781 = vmatpush1.msra.mxu0 0.0
    %1782 = vmatprep.subr.mxu0 0.0
    %1783 = vmatpush1.msra.mxu0 0.0
    %1784 = vmatprep.subr.mxu0 0.0
    %1785 = vmatpush1.msra.mxu0 0.0
    %1786 = vmatprep.subr.mxu0 0.0
    %1787 = vmatpush1.msra.mxu0 0.0
    %1788 = vmatprep.subr.mxu0 0.0
    %1789 = vmatpush1.msra.mxu0 0.0
    %1790 = vmatprep.subr.mxu0 0.0
    %1791 = vmatpush1.msra.mxu0 0.0
    %1792 = vmatprep.subr.mxu0 0.0
    %1793 = vmatpush1.msra.mxu0 0.0
    %1794 = vmatprep.subr.mxu0 0.0
    %1795 = vmatpush1.msra.mxu0 0.0
    %1796 = vmatprep.subr.mxu0 0.0
    %1797 = vmatpush1.msra.mxu0 0.0
    %1798 = vmatprep.mubr.f32.mxu0 0.0
    %1799 = vmatmul.mubr.f32.gmra.mrb[0].mxu0 %v1723
    %v1800 = vpop.f32.mrb[0].mxu0
    %v1801 = vadd.f32 %v1704, %v1800
    %v1802 = vpop.f32.mrb[0].mxu0
    %1803 = vmatprep.mubr.f32.mxu0 0.0
    %1804 = vmatmul.mubr.f32.gmra.mrb[0].mxu0 %v1726
    %v1805 = vpop.f32.mrb[0].mxu0
    %v1806 = vadd.f32 %v1709, %v1805
    %v1807 = vpop.f32.mrb[0].mxu0
    %1808 = vmatprep.mubr.f32.mxu0 0.0
    %1809 = vmatmul.mubr.f32.gmra.mrb[0].mxu0 %v1729
    %v1810 = vpop.f32.mrb[0].mxu0
    %v1811 = vadd.f32 %v1714, %v1810
    %v1812 = vpop.f32.mrb[0].mxu0
    %1813 = vmatprep.mubr.f32.mxu0 0.0
    %1814 = vmatmul.mubr.f32.gmra.mrb[0].mxu0 %v1732
    %v1815 = vpop.f32.mrb[0].mxu0
    %v1816 = vadd.f32 %v1719, %v1815
    %v1817 = vpop.f32.mrb[0].mxu0
    %1818 = vdwg.mxu0
    %1819 = vrot.lane.b32.xlu0 %v280, 112
    %v1820 = vpop.permute.xlu0 %1819
    %1821 = vrot.lane.b32.xlu0 %v280, 80
    %v1822 = vpop.permute.xlu0 %1821
    %v1823 = vsel %vm301, %v1820, 0
    %v1825 = vsel %vm301, %v1822, 0
    %1827 = vmatprep.subr.mxu0 0.0
    %1828 = vmatpush1.xpose.msra.mxu0 %v1825
    %1829 = vmatprep.subr.mxu0 0.0
    %1830 = vmatpush1.xpose.msra.mxu0 0.0
    %1831 = vmatprep.subr.mxu0 0.0
    %1832 = vmatpush1.xpose.msra.mxu0 0.0
    %1833 = vmatprep.subr.mxu0 0.0
    %1834 = vmatpush1.xpose.msra.mxu0 0.0
    %1835 = vmatprep.subr.mxu0 0.0
    %1836 = vmatpush1.xpose.msra.mxu0 0.0
    %1837 = vmatprep.subr.mxu0 0.0
    %1838 = vmatpush1.xpose.msra.mxu0 0.0
    %1839 = vmatprep.subr.mxu0 0.0
    %1840 = vmatpush1.xpose.msra.mxu0 0.0
    %1841 = vmatprep.subr.mxu0 0.0
    %1842 = vmatpush1.xpose.msra.mxu0 0.0
    %1843 = vmatprep.subr.mxu0 0.0
    %1844 = vmatpush1.xpose.msra.mxu0 0.0
    %1845 = vmatprep.subr.mxu0 0.0
    %1846 = vmatpush1.xpose.msra.mxu0 0.0
    %1847 = vmatprep.subr.mxu0 0.0
    %1848 = vmatpush1.xpose.msra.mxu0 0.0
    %1849 = vmatprep.subr.mxu0 0.0
    %1850 = vmatpush1.xpose.msra.mxu0 0.0
    %1851 = vmatprep.subr.mxu0 0.0
    %1852 = vmatpush1.xpose.msra.mxu0 0.0
    %1853 = vmatprep.subr.mxu0 0.0
    %1854 = vmatpush1.xpose.msra.mxu0 0.0
    %1855 = vmatprep.subr.mxu0 0.0
    %1856 = vmatpush1.xpose.msra.mxu0 0.0
    %1857 = vmatprep.subr.mxu0 0.0
    %1858 = vmatpush1.xpose.msra.mxu0 0.0
    %1859 = vmatprep.subr.mxu0 0.0
    %1860 = vmatpush1.xpose.msra.mxu0 0.0
    %1861 = vmatprep.subr.mxu0 0.0
    %1862 = vmatpush1.xpose.msra.mxu0 0.0
    %1863 = vmatprep.subr.mxu0 0.0
    %1864 = vmatpush1.xpose.msra.mxu0 0.0
    %1865 = vmatprep.subr.mxu0 0.0
    %1866 = vmatpush1.xpose.msra.mxu0 0.0
    %1867 = vmatprep.subr.mxu0 0.0
    %1868 = vmatpush1.xpose.msra.mxu0 0.0
    %1869 = vmatprep.subr.mxu0 0.0
    %1870 = vmatpush1.xpose.msra.mxu0 0.0
    %1871 = vmatprep.subr.mxu0 0.0
    %1872 = vmatpush1.xpose.msra.mxu0 0.0
    %1873 = vmatprep.subr.mxu0 0.0
    %1874 = vmatpush1.xpose.msra.mxu0 0.0
    %1875 = vmatprep.subr.mxu0 0.0
    %1876 = vmatpush1.xpose.msra.mxu0 0.0
    %1877 = vmatprep.subr.mxu0 0.0
    %1878 = vmatpush1.xpose.msra.mxu0 0.0
    %1879 = vmatprep.subr.mxu0 0.0
    %1880 = vmatpush1.xpose.msra.mxu0 0.0
    %1881 = vmatprep.subr.mxu0 0.0
    %1882 = vmatpush1.xpose.msra.mxu0 0.0
    %1883 = vmatprep.subr.mxu0 0.0
    %1884 = vmatpush1.xpose.msra.mxu0 0.0
    %1885 = vmatprep.subr.mxu0 0.0
    %1886 = vmatpush1.xpose.msra.mxu0 0.0
    %1887 = vmatprep.subr.mxu0 0.0
    %1888 = vmatpush1.xpose.msra.mxu0 0.0
    %1889 = vmatprep.subr.mxu0 0.0
    %1890 = vmatpush1.xpose.msra.mxu0 0.0
    %1891 = vmatprep.mubr.f32.mxu0 0.0
    %1892 = vmatmul.mubr.f32.gmra.mrb[0].mxu0 %v1823
    %v1893 = vpop.f32.mrb[0].mxu0
    %v1894 = vadd.f32 0.0, %v1893
    %v1895 = vpop.f32.mrb[0].mxu0
    %1896 = vdwg.mxu0
    %1897 = vrot.lane.b32.xlu0 %v285, 112
    %v1898 = vpop.permute.xlu0 %1897
    %1899 = vrot.lane.b32.xlu0 %v285, 80
    %v1900 = vpop.permute.xlu0 %1899
    %v1901 = vsel %vm301, %v1898, 0
    %v1903 = vsel %vm301, %v1900, 0
    %1905 = vmatprep.subr.mxu0 0.0
    %1906 = vmatpush1.xpose.msra.mxu0 %v1903
    %1907 = vmatprep.subr.mxu0 0.0
    %1908 = vmatpush1.xpose.msra.mxu0 0.0
    %1909 = vmatprep.subr.mxu0 0.0
    %1910 = vmatpush1.xpose.msra.mxu0 0.0
    %1911 = vmatprep.subr.mxu0 0.0
    %1912 = vmatpush1.xpose.msra.mxu0 0.0
    %1913 = vmatprep.subr.mxu0 0.0
    %1914 = vmatpush1.xpose.msra.mxu0 0.0
    %1915 = vmatprep.subr.mxu0 0.0
    %1916 = vmatpush1.xpose.msra.mxu0 0.0
    %1917 = vmatprep.subr.mxu0 0.0
    %1918 = vmatpush1.xpose.msra.mxu0 0.0
    %1919 = vmatprep.subr.mxu0 0.0
    %1920 = vmatpush1.xpose.msra.mxu0 0.0
    %1921 = vmatprep.subr.mxu0 0.0
    %1922 = vmatpush1.xpose.msra.mxu0 0.0
    %1923 = vmatprep.subr.mxu0 0.0
    %1924 = vmatpush1.xpose.msra.mxu0 0.0
    %1925 = vmatprep.subr.mxu0 0.0
    %1926 = vmatpush1.xpose.msra.mxu0 0.0
    %1927 = vmatprep.subr.mxu0 0.0
    %1928 = vmatpush1.xpose.msra.mxu0 0.0
    %1929 = vmatprep.subr.mxu0 0.0
    %1930 = vmatpush1.xpose.msra.mxu0 0.0
    %1931 = vmatprep.subr.mxu0 0.0
    %1932 = vmatpush1.xpose.msra.mxu0 0.0
    %1933 = vmatprep.subr.mxu0 0.0
    %1934 = vmatpush1.xpose.msra.mxu0 0.0
    %1935 = vmatprep.subr.mxu0 0.0
    %1936 = vmatpush1.xpose.msra.mxu0 0.0
    %1937 = vmatprep.subr.mxu0 0.0
    %1938 = vmatpush1.xpose.msra.mxu0 0.0
    %1939 = vmatprep.subr.mxu0 0.0
    %1940 = vmatpush1.xpose.msra.mxu0 0.0
    %1941 = vmatprep.subr.mxu0 0.0
    %1942 = vmatpush1.xpose.msra.mxu0 0.0
    %1943 = vmatprep.subr.mxu0 0.0
    %1944 = vmatpush1.xpose.msra.mxu0 0.0
    %1945 = vmatprep.subr.mxu0 0.0
    %1946 = vmatpush1.xpose.msra.mxu0 0.0
    %1947 = vmatprep.subr.mxu0 0.0
    %1948 = vmatpush1.xpose.msra.mxu0 0.0
    %1949 = vmatprep.subr.mxu0 0.0
    %1950 = vmatpush1.xpose.msra.mxu0 0.0
    %1951 = vmatprep.subr.mxu0 0.0
    %1952 = vmatpush1.xpose.msra.mxu0 0.0
    %1953 = vmatprep.subr.mxu0 0.0
    %1954 = vmatpush1.xpose.msra.mxu0 0.0
    %1955 = vmatprep.subr.mxu0 0.0
    %1956 = vmatpush1.xpose.msra.mxu0 0.0
    %1957 = vmatprep.subr.mxu0 0.0
    %1958 = vmatpush1.xpose.msra.mxu0 0.0
    %1959 = vmatprep.subr.mxu0 0.0
    %1960 = vmatpush1.xpose.msra.mxu0 0.0
    %1961 = vmatprep.subr.mxu0 0.0
    %1962 = vmatpush1.xpose.msra.mxu0 0.0
    %1963 = vmatprep.subr.mxu0 0.0
    %1964 = vmatpush1.xpose.msra.mxu0 0.0
    %1965 = vmatprep.subr.mxu0 0.0
    %1966 = vmatpush1.xpose.msra.mxu0 0.0
    %1967 = vmatprep.subr.mxu0 0.0
    %1968 = vmatpush1.xpose.msra.mxu0 0.0
    %1969 = vmatprep.mubr.f32.mxu0 0.0
    %1970 = vmatmul.mubr.f32.gmra.mrb[0].mxu0 %v1901
    %v1971 = vpop.f32.mrb[0].mxu0
    %v1972 = vadd.f32 0.0, %v1971
    %v1973 = vpop.f32.mrb[0].mxu0
    %1974 = vdwg.mxu0
    %1975 = vrot.lane.b32.xlu0 %v290, 112
    %v1976 = vpop.permute.xlu0 %1975
    %1977 = vrot.lane.b32.xlu0 %v290, 80
    %v1978 = vpop.permute.xlu0 %1977
    %v1979 = vsel %vm301, %v1976, 0
    %v1981 = vsel %vm301, %v1978, 0
    %1983 = vmatprep.subr.mxu0 0.0
    %1984 = vmatpush1.xpose.msra.mxu0 %v1981
    %1985 = vmatprep.subr.mxu0 0.0
    %1986 = vmatpush1.xpose.msra.mxu0 0.0
    %1987 = vmatprep.subr.mxu0 0.0
    %1988 = vmatpush1.xpose.msra.mxu0 0.0
    %1989 = vmatprep.subr.mxu0 0.0
    %1990 = vmatpush1.xpose.msra.mxu0 0.0
    %1991 = vmatprep.subr.mxu0 0.0
    %1992 = vmatpush1.xpose.msra.mxu0 0.0
    %1993 = vmatprep.subr.mxu0 0.0
    %1994 = vmatpush1.xpose.msra.mxu0 0.0
    %1995 = vmatprep.subr.mxu0 0.0
    %1996 = vmatpush1.xpose.msra.mxu0 0.0
    %1997 = vmatprep.subr.mxu0 0.0
    %1998 = vmatpush1.xpose.msra.mxu0 0.0
    %1999 = vmatprep.subr.mxu0 0.0
    %2000 = vmatpush1.xpose.msra.mxu0 0.0
    %2001 = vmatprep.subr.mxu0 0.0
    %2002 = vmatpush1.xpose.msra.mxu0 0.0
    %2003 = vmatprep.subr.mxu0 0.0
    %2004 = vmatpush1.xpose.msra.mxu0 0.0
    %2005 = vmatprep.subr.mxu0 0.0
    %2006 = vmatpush1.xpose.msra.mxu0 0.0
    %2007 = vmatprep.subr.mxu0 0.0
    %2008 = vmatpush1.xpose.msra.mxu0 0.0
    %2009 = vmatprep.subr.mxu0 0.0
    %2010 = vmatpush1.xpose.msra.mxu0 0.0
    %2011 = vmatprep.subr.mxu0 0.0
    %2012 = vmatpush1.xpose.msra.mxu0 0.0
    %2013 = vmatprep.subr.mxu0 0.0
    %2014 = vmatpush1.xpose.msra.mxu0 0.0
    %2015 = vmatprep.subr.mxu0 0.0
    %2016 = vmatpush1.xpose.msra.mxu0 0.0
    %2017 = vmatprep.subr.mxu0 0.0
    %2018 = vmatpush1.xpose.msra.mxu0 0.0
    %2019 = vmatprep.subr.mxu0 0.0
    %2020 = vmatpush1.xpose.msra.mxu0 0.0
    %2021 = vmatprep.subr.mxu0 0.0
    %2022 = vmatpush1.xpose.msra.mxu0 0.0
    %2023 = vmatprep.subr.mxu0 0.0
    %2024 = vmatpush1.xpose.msra.mxu0 0.0
    %2025 = vmatprep.subr.mxu0 0.0
    %2026 = vmatpush1.xpose.msra.mxu0 0.0
    %2027 = vmatprep.subr.mxu0 0.0
    %2028 = vmatpush1.xpose.msra.mxu0 0.0
    %2029 = vmatprep.subr.mxu0 0.0
    %2030 = vmatpush1.xpose.msra.mxu0 0.0
    %2031 = vmatprep.subr.mxu0 0.0
    %2032 = vmatpush1.xpose.msra.mxu0 0.0
    %2033 = vmatprep.subr.mxu0 0.0
    %2034 = vmatpush1.xpose.msra.mxu0 0.0
    %2035 = vmatprep.subr.mxu0 0.0
    %2036 = vmatpush1.xpose.msra.mxu0 0.0
    %2037 = vmatprep.subr.mxu0 0.0
    %2038 = vmatpush1.xpose.msra.mxu0 0.0
    %2039 = vmatprep.subr.mxu0 0.0
    %2040 = vmatpush1.xpose.msra.mxu0 0.0
    %2041 = vmatprep.subr.mxu0 0.0
    %2042 = vmatpush1.xpose.msra.mxu0 0.0
    %2043 = vmatprep.subr.mxu0 0.0
    %2044 = vmatpush1.xpose.msra.mxu0 0.0
    %2045 = vmatprep.subr.mxu0 0.0
    %2046 = vmatpush1.xpose.msra.mxu0 0.0
    %2047 = vmatprep.mubr.f32.mxu0 0.0
    %2048 = vmatmul.mubr.f32.gmra.mrb[0].mxu0 %v1979
    %v2049 = vpop.f32.mrb[0].mxu0
    %v2050 = vadd.f32 0.0, %v2049
    %v2051 = vpop.f32.mrb[0].mxu0
    %2052 = vdwg.mxu0
    %2053 = vrot.lane.b32.xlu0 %v295, 112
    %v2054 = vpop.permute.xlu0 %2053
    %2055 = vrot.lane.b32.xlu0 %v295, 80
    %v2056 = vpop.permute.xlu0 %2055
    %v2057 = vsel %vm301, %v2054, 0
    %v2059 = vsel %vm301, %v2056, 0
    %2061 = vmatprep.subr.mxu0 0.0
    %2062 = vmatpush1.xpose.msra.mxu0 %v2059
    %2063 = vmatprep.subr.mxu0 0.0
    %2064 = vmatpush1.xpose.msra.mxu0 0.0
    %2065 = vmatprep.subr.mxu0 0.0
    %2066 = vmatpush1.xpose.msra.mxu0 0.0
    %2067 = vmatprep.subr.mxu0 0.0
    %2068 = vmatpush1.xpose.msra.mxu0 0.0
    %2069 = vmatprep.subr.mxu0 0.0
    %2070 = vmatpush1.xpose.msra.mxu0 0.0
    %2071 = vmatprep.subr.mxu0 0.0
    %2072 = vmatpush1.xpose.msra.mxu0 0.0
    %2073 = vmatprep.subr.mxu0 0.0
    %2074 = vmatpush1.xpose.msra.mxu0 0.0
    %2075 = vmatprep.subr.mxu0 0.0
    %2076 = vmatpush1.xpose.msra.mxu0 0.0
    %2077 = vmatprep.subr.mxu0 0.0
    %2078 = vmatpush1.xpose.msra.mxu0 0.0
    %2079 = vmatprep.subr.mxu0 0.0
    %2080 = vmatpush1.xpose.msra.mxu0 0.0
    %2081 = vmatprep.subr.mxu0 0.0
    %2082 = vmatpush1.xpose.msra.mxu0 0.0
    %2083 = vmatprep.subr.mxu0 0.0
    %2084 = vmatpush1.xpose.msra.mxu0 0.0
    %2085 = vmatprep.subr.mxu0 0.0
    %2086 = vmatpush1.xpose.msra.mxu0 0.0
    %2087 = vmatprep.subr.mxu0 0.0
    %2088 = vmatpush1.xpose.msra.mxu0 0.0
    %2089 = vmatprep.subr.mxu0 0.0
    %2090 = vmatpush1.xpose.msra.mxu0 0.0
    %2091 = vmatprep.subr.mxu0 0.0
    %2092 = vmatpush1.xpose.msra.mxu0 0.0
    %2093 = vmatprep.subr.mxu0 0.0
    %2094 = vmatpush1.xpose.msra.mxu0 0.0
    %2095 = vmatprep.subr.mxu0 0.0
    %2096 = vmatpush1.xpose.msra.mxu0 0.0
    %2097 = vmatprep.subr.mxu0 0.0
    %2098 = vmatpush1.xpose.msra.mxu0 0.0
    %2099 = vmatprep.subr.mxu0 0.0
    %2100 = vmatpush1.xpose.msra.mxu0 0.0
    %2101 = vmatprep.subr.mxu0 0.0
    %2102 = vmatpush1.xpose.msra.mxu0 0.0
    %2103 = vmatprep.subr.mxu0 0.0
    %2104 = vmatpush1.xpose.msra.mxu0 0.0
    %2105 = vmatprep.subr.mxu0 0.0
    %2106 = vmatpush1.xpose.msra.mxu0 0.0
    %2107 = vmatprep.subr.mxu0 0.0
    %2108 = vmatpush1.xpose.msra.mxu0 0.0
    %2109 = vmatprep.subr.mxu0 0.0
    %2110 = vmatpush1.xpose.msra.mxu0 0.0
    %2111 = vmatprep.subr.mxu0 0.0
    %2112 = vmatpush1.xpose.msra.mxu0 0.0
    %2113 = vmatprep.subr.mxu0 0.0
    %2114 = vmatpush1.xpose.msra.mxu0 0.0
    %2115 = vmatprep.subr.mxu0 0.0
    %2116 = vmatpush1.xpose.msra.mxu0 0.0
    %2117 = vmatprep.subr.mxu0 0.0
    %2118 = vmatpush1.xpose.msra.mxu0 0.0
    %2119 = vmatprep.subr.mxu0 0.0
    %2120 = vmatpush1.xpose.msra.mxu0 0.0
    %2121 = vmatprep.subr.mxu0 0.0
    %2122 = vmatpush1.xpose.msra.mxu0 0.0
    %2123 = vmatprep.subr.mxu0 0.0
    %2124 = vmatpush1.xpose.msra.mxu0 0.0
    %2125 = vmatprep.mubr.f32.mxu0 0.0
    %2126 = vmatmul.mubr.f32.gmra.mrb[0].mxu0 %v2057
    %v2127 = vpop.f32.mrb[0].mxu0
    %v2128 = vadd.f32 0.0, %v2127
    %v2129 = vpop.f32.mrb[0].mxu0
    %2130 = vdwg.mxu0
    %v2131 = vmul.f32 %v1894, 0.35355338
    %v2132 = vmul.f32 %v1972, 0.35355338
    %v2133 = vmul.f32 %v2050, 0.35355338
    %v2134 = vmul.f32 %v2128, 0.35355338
    %v2135 = vsel %vm301, %v2131, -inf
    %2136 = vmax.xlane.f32.xlu0 %v2135
    %v2137 = vpop.xlane.xlu0 %2136
    %v2138 = vsel %vm301, %v2132, -inf
    %2139 = vmax.xlane.f32.xlu0 %v2138
    %v2140 = vpop.xlane.xlu0 %2139
    %v2141 = vsel %vm301, %v2133, -inf
    %2142 = vmax.xlane.f32.xlu0 %v2141
    %v2143 = vpop.xlane.xlu0 %2142
    %v2144 = vsel %vm301, %v2134, -inf
    %2145 = vmax.xlane.f32.xlu0 %v2144
    %v2146 = vpop.xlane.xlu0 %2145
    %v2147 = vsub.f32 %v2131, %v2137
    %v2148 = vsub.f32 %v2132, %v2140
    %v2149 = vsub.f32 %v2133, %v2143
    %v2150 = vsub.f32 %v2134, %v2146
    %v2151 = vmul.f32 %v2147, 1.442695
    %v2152 = vpow.pop %v2151
    %v2153 = vmul.f32 %v2148, 1.442695
    %v2154 = vpow.pop %v2153
    %v2155 = vmul.f32 %v2149, 1.442695
    %v2156 = vpow.pop %v2155
    %v2157 = vmul.f32 %v2150, 1.442695
    %v2158 = vpow.pop %v2157
    %v2159 = vsel %vm301, %v2152, 0.0
    %2160 = vadd.xlane.f32.xlu0 %v2159
    %v2161 = vpop.xlane.xlu0 %2160
    %v2162 = vsel %vm301, %v2154, 0.0
    %2163 = vadd.xlane.f32.xlu0 %v2162
    %v2164 = vpop.xlane.xlu0 %2163
    %v2165 = vsel %vm301, %v2156, 0.0
    %2166 = vadd.xlane.f32.xlu0 %v2165
    %v2167 = vpop.xlane.xlu0 %2166
    %v2168 = vsel %vm301, %v2158, 0.0
    %2169 = vadd.xlane.f32.xlu0 %v2168
    %v2170 = vpop.xlane.xlu0 %2169
    %v2171 = vrcp.pop %v2161
    %v2172 = vmul.f32 %v2152, %v2171
    %v2173 = vrcp.pop %v2164
    %v2174 = vmul.f32 %v2154, %v2173
    %v2175 = vrcp.pop %v2167
    %v2176 = vmul.f32 %v2156, %v2175
    %v2177 = vrcp.pop %v2170
    %v2178 = vmul.f32 %v2158, %v2177
    %2179 = vrot.lane.b32.xlu0 %v280, 48
    %v2180 = vpop.permute.xlu0 %2179
    %v2183 = vsel %vm301, %v2172, 0
    %2185 = vmatprep.subr.mxu0 0.0
    %2186 = vmatpush1.msra.mxu0 %v2180
    %2187 = vmatprep.subr.mxu0 0.0
    %2188 = vmatpush1.msra.mxu0 0.0
    %2189 = vmatprep.subr.mxu0 0.0
    %2190 = vmatpush1.msra.mxu0 0.0
    %2191 = vmatprep.subr.mxu0 0.0
    %2192 = vmatpush1.msra.mxu0 0.0
    %2193 = vmatprep.subr.mxu0 0.0
    %2194 = vmatpush1.msra.mxu0 0.0
    %2195 = vmatprep.subr.mxu0 0.0
    %2196 = vmatpush1.msra.mxu0 0.0
    %2197 = vmatprep.subr.mxu0 0.0
    %2198 = vmatpush1.msra.mxu0 0.0
    %2199 = vmatprep.subr.mxu0 0.0
    %2200 = vmatpush1.msra.mxu0 0.0
    %2201 = vmatprep.subr.mxu0 0.0
    %2202 = vmatpush1.msra.mxu0 0.0
    %2203 = vmatprep.subr.mxu0 0.0
    %2204 = vmatpush1.msra.mxu0 0.0
    %2205 = vmatprep.subr.mxu0 0.0
    %2206 = vmatpush1.msra.mxu0 0.0
    %2207 = vmatprep.subr.mxu0 0.0
    %2208 = vmatpush1.msra.mxu0 0.0
    %2209 = vmatprep.subr.mxu0 0.0
    %2210 = vmatpush1.msra.mxu0 0.0
    %2211 = vmatprep.subr.mxu0 0.0
    %2212 = vmatpush1.msra.mxu0 0.0
    %2213 = vmatprep.subr.mxu0 0.0
    %2214 = vmatpush1.msra.mxu0 0.0
    %2215 = vmatprep.subr.mxu0 0.0
    %2216 = vmatpush1.msra.mxu0 0.0
    %2217 = vmatprep.subr.mxu0 0.0
    %2218 = vmatpush1.msra.mxu0 0.0
    %2219 = vmatprep.subr.mxu0 0.0
    %2220 = vmatpush1.msra.mxu0 0.0
    %2221 = vmatprep.subr.mxu0 0.0
    %2222 = vmatpush1.msra.mxu0 0.0
    %2223 = vmatprep.subr.mxu0 0.0
    %2224 = vmatpush1.msra.mxu0 0.0
    %2225 = vmatprep.subr.mxu0 0.0
    %2226 = vmatpush1.msra.mxu0 0.0
    %2227 = vmatprep.subr.mxu0 0.0
    %2228 = vmatpush1.msra.mxu0 0.0
    %2229 = vmatprep.subr.mxu0 0.0
    %2230 = vmatpush1.msra.mxu0 0.0
    %2231 = vmatprep.subr.mxu0 0.0
    %2232 = vmatpush1.msra.mxu0 0.0
    %2233 = vmatprep.subr.mxu0 0.0
    %2234 = vmatpush1.msra.mxu0 0.0
    %2235 = vmatprep.subr.mxu0 0.0
    %2236 = vmatpush1.msra.mxu0 0.0
    %2237 = vmatprep.subr.mxu0 0.0
    %2238 = vmatpush1.msra.mxu0 0.0
    %2239 = vmatprep.subr.mxu0 0.0
    %2240 = vmatpush1.msra.mxu0 0.0
    %2241 = vmatprep.subr.mxu0 0.0
    %2242 = vmatpush1.msra.mxu0 0.0
    %2243 = vmatprep.subr.mxu0 0.0
    %2244 = vmatpush1.msra.mxu0 0.0
    %2245 = vmatprep.subr.mxu0 0.0
    %2246 = vmatpush1.msra.mxu0 0.0
    %2247 = vmatprep.subr.mxu0 0.0
    %2248 = vmatpush1.msra.mxu0 0.0
    %2249 = vmatprep.mubr.f32.mxu0 0.0
    %2250 = vmatmul.mubr.f32.gmra.mrb[0].mxu0 %v2183
    %v2251 = vpop.f32.mrb[0].mxu0
    %v2252 = vadd.f32 0.0, %v2251
    %v2253 = vpop.f32.mrb[0].mxu0
    %2254 = vdwg.mxu0
    %2255 = vrot.lane.b32.xlu0 %v285, 48
    %v2256 = vpop.permute.xlu0 %2255
    %v2259 = vsel %vm301, %v2174, 0
    %2261 = vmatprep.subr.mxu0 0.0
    %2262 = vmatpush1.msra.mxu0 %v2256
    %2263 = vmatprep.subr.mxu0 0.0
    %2264 = vmatpush1.msra.mxu0 0.0
    %2265 = vmatprep.subr.mxu0 0.0
    %2266 = vmatpush1.msra.mxu0 0.0
    %2267 = vmatprep.subr.mxu0 0.0
    %2268 = vmatpush1.msra.mxu0 0.0
    %2269 = vmatprep.subr.mxu0 0.0
    %2270 = vmatpush1.msra.mxu0 0.0
    %2271 = vmatprep.subr.mxu0 0.0
    %2272 = vmatpush1.msra.mxu0 0.0
    %2273 = vmatprep.subr.mxu0 0.0
    %2274 = vmatpush1.msra.mxu0 0.0
    %2275 = vmatprep.subr.mxu0 0.0
    %2276 = vmatpush1.msra.mxu0 0.0
    %2277 = vmatprep.subr.mxu0 0.0
    %2278 = vmatpush1.msra.mxu0 0.0
    %2279 = vmatprep.subr.mxu0 0.0
    %2280 = vmatpush1.msra.mxu0 0.0
    %2281 = vmatprep.subr.mxu0 0.0
    %2282 = vmatpush1.msra.mxu0 0.0
    %2283 = vmatprep.subr.mxu0 0.0
    %2284 = vmatpush1.msra.mxu0 0.0
    %2285 = vmatprep.subr.mxu0 0.0
    %2286 = vmatpush1.msra.mxu0 0.0
    %2287 = vmatprep.subr.mxu0 0.0
    %2288 = vmatpush1.msra.mxu0 0.0
    %2289 = vmatprep.subr.mxu0 0.0
    %2290 = vmatpush1.msra.mxu0 0.0
    %2291 = vmatprep.subr.mxu0 0.0
    %2292 = vmatpush1.msra.mxu0 0.0
    %2293 = vmatprep.subr.mxu0 0.0
    %2294 = vmatpush1.msra.mxu0 0.0
    %2295 = vmatprep.subr.mxu0 0.0
    %2296 = vmatpush1.msra.mxu0 0.0
    %2297 = vmatprep.subr.mxu0 0.0
    %2298 = vmatpush1.msra.mxu0 0.0
    %2299 = vmatprep.subr.mxu0 0.0
    %2300 = vmatpush1.msra.mxu0 0.0
    %2301 = vmatprep.subr.mxu0 0.0
    %2302 = vmatpush1.msra.mxu0 0.0
    %2303 = vmatprep.subr.mxu0 0.0
    %2304 = vmatpush1.msra.mxu0 0.0
    %2305 = vmatprep.subr.mxu0 0.0
    %2306 = vmatpush1.msra.mxu0 0.0
    %2307 = vmatprep.subr.mxu0 0.0
    %2308 = vmatpush1.msra.mxu0 0.0
    %2309 = vmatprep.subr.mxu0 0.0
    %2310 = vmatpush1.msra.mxu0 0.0
    %2311 = vmatprep.subr.mxu0 0.0
    %2312 = vmatpush1.msra.mxu0 0.0
    %2313 = vmatprep.subr.mxu0 0.0
    %2314 = vmatpush1.msra.mxu0 0.0
    %2315 = vmatprep.subr.mxu0 0.0
    %2316 = vmatpush1.msra.mxu0 0.0
    %2317 = vmatprep.subr.mxu0 0.0
    %2318 = vmatpush1.msra.mxu0 0.0
    %2319 = vmatprep.subr.mxu0 0.0
    %2320 = vmatpush1.msra.mxu0 0.0
    %2321 = vmatprep.subr.mxu0 0.0
    %2322 = vmatpush1.msra.mxu0 0.0
    %2323 = vmatprep.subr.mxu0 0.0
    %2324 = vmatpush1.msra.mxu0 0.0
    %2325 = vmatprep.mubr.f32.mxu0 0.0
    %2326 = vmatmul.mubr.f32.gmra.mrb[0].mxu0 %v2259
    %v2327 = vpop.f32.mrb[0].mxu0
    %v2328 = vadd.f32 0.0, %v2327
    %v2329 = vpop.f32.mrb[0].mxu0
    %2330 = vdwg.mxu0
    %2331 = vrot.lane.b32.xlu0 %v290, 48
    %v2332 = vpop.permute.xlu0 %2331
    %v2335 = vsel %vm301, %v2176, 0
    %2337 = vmatprep.subr.mxu0 0.0
    %2338 = vmatpush1.msra.mxu0 %v2332
    %2339 = vmatprep.subr.mxu0 0.0
    %2340 = vmatpush1.msra.mxu0 0.0
    %2341 = vmatprep.subr.mxu0 0.0
    %2342 = vmatpush1.msra.mxu0 0.0
    %2343 = vmatprep.subr.mxu0 0.0
    %2344 = vmatpush1.msra.mxu0 0.0
    %2345 = vmatprep.subr.mxu0 0.0
    %2346 = vmatpush1.msra.mxu0 0.0
    %2347 = vmatprep.subr.mxu0 0.0
    %2348 = vmatpush1.msra.mxu0 0.0
    %2349 = vmatprep.subr.mxu0 0.0
    %2350 = vmatpush1.msra.mxu0 0.0
    %2351 = vmatprep.subr.mxu0 0.0
    %2352 = vmatpush1.msra.mxu0 0.0
    %2353 = vmatprep.subr.mxu0 0.0
    %2354 = vmatpush1.msra.mxu0 0.0
    %2355 = vmatprep.subr.mxu0 0.0
    %2356 = vmatpush1.msra.mxu0 0.0
    %2357 = vmatprep.subr.mxu0 0.0
    %2358 = vmatpush1.msra.mxu0 0.0
    %2359 = vmatprep.subr.mxu0 0.0
    %2360 = vmatpush1.msra.mxu0 0.0
    %2361 = vmatprep.subr.mxu0 0.0
    %2362 = vmatpush1.msra.mxu0 0.0
    %2363 = vmatprep.subr.mxu0 0.0
    %2364 = vmatpush1.msra.mxu0 0.0
    %2365 = vmatprep.subr.mxu0 0.0
    %2366 = vmatpush1.msra.mxu0 0.0
    %2367 = vmatprep.subr.mxu0 0.0
    %2368 = vmatpush1.msra.mxu0 0.0
    %2369 = vmatprep.subr.mxu0 0.0
    %2370 = vmatpush1.msra.mxu0 0.0
    %2371 = vmatprep.subr.mxu0 0.0
    %2372 = vmatpush1.msra.mxu0 0.0
    %2373 = vmatprep.subr.mxu0 0.0
    %2374 = vmatpush1.msra.mxu0 0.0
    %2375 = vmatprep.subr.mxu0 0.0
    %2376 = vmatpush1.msra.mxu0 0.0
    %2377 = vmatprep.subr.mxu0 0.0
    %2378 = vmatpush1.msra.mxu0 0.0
    %2379 = vmatprep.subr.mxu0 0.0
    %2380 = vmatpush1.msra.mxu0 0.0
    %2381 = vmatprep.subr.mxu0 0.0
    %2382 = vmatpush1.msra.mxu0 0.0
    %2383 = vmatprep.subr.mxu0 0.0
    %2384 = vmatpush1.msra.mxu0 0.0
    %2385 = vmatprep.subr.mxu0 0.0
    %2386 = vmatpush1.msra.mxu0 0.0
    %2387 = vmatprep.subr.mxu0 0.0
    %2388 = vmatpush1.msra.mxu0 0.0
    %2389 = vmatprep.subr.mxu0 0.0
    %2390 = vmatpush1.msra.mxu0 0.0
    %2391 = vmatprep.subr.mxu0 0.0
    %2392 = vmatpush1.msra.mxu0 0.0
    %2393 = vmatprep.subr.mxu0 0.0
    %2394 = vmatpush1.msra.mxu0 0.0
    %2395 = vmatprep.subr.mxu0 0.0
    %2396 = vmatpush1.msra.mxu0 0.0
    %2397 = vmatprep.subr.mxu0 0.0
    %2398 = vmatpush1.msra.mxu0 0.0
    %2399 = vmatprep.subr.mxu0 0.0
    %2400 = vmatpush1.msra.mxu0 0.0
    %2401 = vmatprep.mubr.f32.mxu0 0.0
    %2402 = vmatmul.mubr.f32.gmra.mrb[0].mxu0 %v2335
    %v2403 = vpop.f32.mrb[0].mxu0
    %v2404 = vadd.f32 0.0, %v2403
    %v2405 = vpop.f32.mrb[0].mxu0
    %2406 = vdwg.mxu0
    %2407 = vrot.lane.b32.xlu0 %v295, 48
    %v2408 = vpop.permute.xlu0 %2407
    %v2411 = vsel %vm301, %v2178, 0
    %2413 = vmatprep.subr.mxu0 0.0
    %2414 = vmatpush1.msra.mxu0 %v2408
    %2415 = vmatprep.subr.mxu0 0.0
    %2416 = vmatpush1.msra.mxu0 0.0
    %2417 = vmatprep.subr.mxu0 0.0
    %2418 = vmatpush1.msra.mxu0 0.0
    %2419 = vmatprep.subr.mxu0 0.0
    %2420 = vmatpush1.msra.mxu0 0.0
    %2421 = vmatprep.subr.mxu0 0.0
    %2422 = vmatpush1.msra.mxu0 0.0
    %2423 = vmatprep.subr.mxu0 0.0
    %2424 = vmatpush1.msra.mxu0 0.0
    %2425 = vmatprep.subr.mxu0 0.0
    %2426 = vmatpush1.msra.mxu0 0.0
    %2427 = vmatprep.subr.mxu0 0.0
    %2428 = vmatpush1.msra.mxu0 0.0
    %2429 = vmatprep.subr.mxu0 0.0
    %2430 = vmatpush1.msra.mxu0 0.0
    %2431 = vmatprep.subr.mxu0 0.0
    %2432 = vmatpush1.msra.mxu0 0.0
    %2433 = vmatprep.subr.mxu0 0.0
    %2434 = vmatpush1.msra.mxu0 0.0
    %2435 = vmatprep.subr.mxu0 0.0
    %2436 = vmatpush1.msra.mxu0 0.0
    %2437 = vmatprep.subr.mxu0 0.0
    %2438 = vmatpush1.msra.mxu0 0.0
    %2439 = vmatprep.subr.mxu0 0.0
    %2440 = vmatpush1.msra.mxu0 0.0
    %2441 = vmatprep.subr.mxu0 0.0
    %2442 = vmatpush1.msra.mxu0 0.0
    %2443 = vmatprep.subr.mxu0 0.0
    %2444 = vmatpush1.msra.mxu0 0.0
    %2445 = vmatprep.subr.mxu0 0.0
    %2446 = vmatpush1.msra.mxu0 0.0
    %2447 = vmatprep.subr.mxu0 0.0
    %2448 = vmatpush1.msra.mxu0 0.0
    %2449 = vmatprep.subr.mxu0 0.0
    %2450 = vmatpush1.msra.mxu0 0.0
    %2451 = vmatprep.subr.mxu0 0.0
    %2452 = vmatpush1.msra.mxu0 0.0
    %2453 = vmatprep.subr.mxu0 0.0
    %2454 = vmatpush1.msra.mxu0 0.0
    %2455 = vmatprep.subr.mxu0 0.0
    %2456 = vmatpush1.msra.mxu0 0.0
    %2457 = vmatprep.subr.mxu0 0.0
    %2458 = vmatpush1.msra.mxu0 0.0
    %2459 = vmatprep.subr.mxu0 0.0
    %2460 = vmatpush1.msra.mxu0 0.0
    %2461 = vmatprep.subr.mxu0 0.0
    %2462 = vmatpush1.msra.mxu0 0.0
    %2463 = vmatprep.subr.mxu0 0.0
    %2464 = vmatpush1.msra.mxu0 0.0
    %2465 = vmatprep.subr.mxu0 0.0
    %2466 = vmatpush1.msra.mxu0 0.0
    %2467 = vmatprep.subr.mxu0 0.0
    %2468 = vmatpush1.msra.mxu0 0.0
    %2469 = vmatprep.subr.mxu0 0.0
    %2470 = vmatpush1.msra.mxu0 0.0
    %2471 = vmatprep.subr.mxu0 0.0
    %2472 = vmatpush1.msra.mxu0 0.0
    %2473 = vmatprep.subr.mxu0 0.0
    %2474 = vmatpush1.msra.mxu0 0.0
    %2475 = vmatprep.subr.mxu0 0.0
    %2476 = vmatpush1.msra.mxu0 0.0
    %2477 = vmatprep.mubr.f32.mxu0 0.0
    %2478 = vmatmul.mubr.f32.gmra.mrb[0].mxu0 %v2411
    %v2479 = vpop.f32.mrb[0].mxu0
    %v2480 = vadd.f32 0.0, %v2479
    %v2481 = vpop.f32.mrb[0].mxu0
    %2482 = vdwg.mxu0
    %v2483 = vld [vmem:[%s2 + $0x10] sm:$0xff]
    %v2485 = vsel %vm301, %v2252, 0
    %v2488 = vsel %vm301, %v2328, 0
    %v2491 = vsel %vm301, %v2404, 0
    %v2494 = vsel %vm301, %v2480, 0
    %2496 = vmatprep.subr.mxu0 0.0
    %2497 = vmatpush1.msra.mxu0 %v2483
    %2498 = vmatprep.subr.mxu0 0.0
    %2499 = vmatpush1.msra.mxu0 0.0
    %2500 = vmatprep.subr.mxu0 0.0
    %2501 = vmatpush1.msra.mxu0 0.0
    %2502 = vmatprep.subr.mxu0 0.0
    %2503 = vmatpush1.msra.mxu0 0.0
    %2504 = vmatprep.subr.mxu0 0.0
    %2505 = vmatpush1.msra.mxu0 0.0
    %2506 = vmatprep.subr.mxu0 0.0
    %2507 = vmatpush1.msra.mxu0 0.0
    %2508 = vmatprep.subr.mxu0 0.0
    %2509 = vmatpush1.msra.mxu0 0.0
    %2510 = vmatprep.subr.mxu0 0.0
    %2511 = vmatpush1.msra.mxu0 0.0
    %2512 = vmatprep.subr.mxu0 0.0
    %2513 = vmatpush1.msra.mxu0 0.0
    %2514 = vmatprep.subr.mxu0 0.0
    %2515 = vmatpush1.msra.mxu0 0.0
    %2516 = vmatprep.subr.mxu0 0.0
    %2517 = vmatpush1.msra.mxu0 0.0
    %2518 = vmatprep.subr.mxu0 0.0
    %2519 = vmatpush1.msra.mxu0 0.0
    %2520 = vmatprep.subr.mxu0 0.0
    %2521 = vmatpush1.msra.mxu0 0.0
    %2522 = vmatprep.subr.mxu0 0.0
    %2523 = vmatpush1.msra.mxu0 0.0
    %2524 = vmatprep.subr.mxu0 0.0
    %2525 = vmatpush1.msra.mxu0 0.0
    %2526 = vmatprep.subr.mxu0 0.0
    %2527 = vmatpush1.msra.mxu0 0.0
    %2528 = vmatprep.subr.mxu0 0.0
    %2529 = vmatpush1.msra.mxu0 0.0
    %2530 = vmatprep.subr.mxu0 0.0
    %2531 = vmatpush1.msra.mxu0 0.0
    %2532 = vmatprep.subr.mxu0 0.0
    %2533 = vmatpush1.msra.mxu0 0.0
    %2534 = vmatprep.subr.mxu0 0.0
    %2535 = vmatpush1.msra.mxu0 0.0
    %2536 = vmatprep.subr.mxu0 0.0
    %2537 = vmatpush1.msra.mxu0 0.0
    %2538 = vmatprep.subr.mxu0 0.0
    %2539 = vmatpush1.msra.mxu0 0.0
    %2540 = vmatprep.subr.mxu0 0.0
    %2541 = vmatpush1.msra.mxu0 0.0
    %2542 = vmatprep.subr.mxu0 0.0
    %2543 = vmatpush1.msra.mxu0 0.0
    %2544 = vmatprep.subr.mxu0 0.0
    %2545 = vmatpush1.msra.mxu0 0.0
    %2546 = vmatprep.subr.mxu0 0.0
    %2547 = vmatpush1.msra.mxu0 0.0
    %2548 = vmatprep.subr.mxu0 0.0
    %2549 = vmatpush1.msra.mxu0 0.0
    %2550 = vmatprep.subr.mxu0 0.0
    %2551 = vmatpush1.msra.mxu0 0.0
    %2552 = vmatprep.subr.mxu0 0.0
    %2553 = vmatpush1.msra.mxu0 0.0
    %2554 = vmatprep.subr.mxu0 0.0
    %2555 = vmatpush1.msra.mxu0 0.0
    %2556 = vmatprep.subr.mxu0 0.0
    %2557 = vmatpush1.msra.mxu0 0.0
    %2558 = vmatprep.subr.mxu0 0.0
    %2559 = vmatpush1.msra.mxu0 0.0
    %2560 = vmatprep.mubr.f32.mxu0 0.0
    %2561 = vmatmul.mubr.f32.gmra.mrb[0].mxu0 %v2485
    %v2562 = vpop.f32.mrb[0].mxu0
    %v2563 = vadd.f32 0.0, %v2562
    %v2564 = vpop.f32.mrb[0].mxu0
    %2565 = vmatprep.mubr.f32.mxu0 0.0
    %2566 = vmatmul.mubr.f32.gmra.mrb[0].mxu0 %v2488
    %v2567 = vpop.f32.mrb[0].mxu0
    %v2568 = vadd.f32 0.0, %v2567
    %v2569 = vpop.f32.mrb[0].mxu0
    %2570 = vmatprep.mubr.f32.mxu0 0.0
    %2571 = vmatmul.mubr.f32.gmra.mrb[0].mxu0 %v2491
    %v2572 = vpop.f32.mrb[0].mxu0
    %v2573 = vadd.f32 0.0, %v2572
    %v2574 = vpop.f32.mrb[0].mxu0
    %2575 = vmatprep.mubr.f32.mxu0 0.0
    %2576 = vmatmul.mubr.f32.gmra.mrb[0].mxu0 %v2494
    %v2577 = vpop.f32.mrb[0].mxu0
    %v2578 = vadd.f32 0.0, %v2577
    %v2579 = vpop.f32.mrb[0].mxu0
    %2580 = vdwg.mxu0
    %v2581 = vadd.f32 %v1801, %v2563
    %v2582 = vadd.f32 %v1806, %v2568
    %v2583 = vadd.f32 %v1811, %v2573
    %v2584 = vadd.f32 %v1816, %v2578
    %2585 = vrot.lane.b32.xlu0 %v280, 104
    %v2586 = vpop.permute.xlu0 %2585
    %2587 = vrot.lane.b32.xlu0 %v280, 72
    %v2588 = vpop.permute.xlu0 %2587
    %v2589 = vsel %vm301, %v2586, 0
    %v2591 = vsel %vm301, %v2588, 0
    %2593 = vmatprep.subr.mxu0 0.0
    %2594 = vmatpush1.xpose.msra.mxu0 %v2591
    %2595 = vmatprep.subr.mxu0 0.0
    %2596 = vmatpush1.xpose.msra.mxu0 0.0
    %2597 = vmatprep.subr.mxu0 0.0
    %2598 = vmatpush1.xpose.msra.mxu0 0.0
    %2599 = vmatprep.subr.mxu0 0.0
    %2600 = vmatpush1.xpose.msra.mxu0 0.0
    %2601 = vmatprep.subr.mxu0 0.0
    %2602 = vmatpush1.xpose.msra.mxu0 0.0
    %2603 = vmatprep.subr.mxu0 0.0
    %2604 = vmatpush1.xpose.msra.mxu0 0.0
    %2605 = vmatprep.subr.mxu0 0.0
    %2606 = vmatpush1.xpose.msra.mxu0 0.0
    %2607 = vmatprep.subr.mxu0 0.0
    %2608 = vmatpush1.xpose.msra.mxu0 0.0
    %2609 = vmatprep.subr.mxu0 0.0
    %2610 = vmatpush1.xpose.msra.mxu0 0.0
    %2611 = vmatprep.subr.mxu0 0.0
    %2612 = vmatpush1.xpose.msra.mxu0 0.0
    %2613 = vmatprep.subr.mxu0 0.0
    %2614 = vmatpush1.xpose.msra.mxu0 0.0
    %2615 = vmatprep.subr.mxu0 0.0
    %2616 = vmatpush1.xpose.msra.mxu0 0.0
    %2617 = vmatprep.subr.mxu0 0.0
    %2618 = vmatpush1.xpose.msra.mxu0 0.0
    %2619 = vmatprep.subr.mxu0 0.0
    %2620 = vmatpush1.xpose.msra.mxu0 0.0
    %2621 = vmatprep.subr.mxu0 0.0
    %2622 = vmatpush1.xpose.msra.mxu0 0.0
    %2623 = vmatprep.subr.mxu0 0.0
    %2624 = vmatpush1.xpose.msra.mxu0 0.0
    %2625 = vmatprep.subr.mxu0 0.0
    %2626 = vmatpush1.xpose.msra.mxu0 0.0
    %2627 = vmatprep.subr.mxu0 0.0
    %2628 = vmatpush1.xpose.msra.mxu0 0.0
    %2629 = vmatprep.subr.mxu0 0.0
    %2630 = vmatpush1.xpose.msra.mxu0 0.0
    %2631 = vmatprep.subr.mxu0 0.0
    %2632 = vmatpush1.xpose.msra.mxu0 0.0
    %2633 = vmatprep.subr.mxu0 0.0
    %2634 = vmatpush1.xpose.msra.mxu0 0.0
    %2635 = vmatprep.subr.mxu0 0.0
    %2636 = vmatpush1.xpose.msra.mxu0 0.0
    %2637 = vmatprep.subr.mxu0 0.0
    %2638 = vmatpush1.xpose.msra.mxu0 0.0
    %2639 = vmatprep.subr.mxu0 0.0
    %2640 = vmatpush1.xpose.msra.mxu0 0.0
    %2641 = vmatprep.subr.mxu0 0.0
    %2642 = vmatpush1.xpose.msra.mxu0 0.0
    %2643 = vmatprep.subr.mxu0 0.0
    %2644 = vmatpush1.xpose.msra.mxu0 0.0
    %2645 = vmatprep.subr.mxu0 0.0
    %2646 = vmatpush1.xpose.msra.mxu0 0.0
    %2647 = vmatprep.subr.mxu0 0.0
    %2648 = vmatpush1.xpose.msra.mxu0 0.0
    %2649 = vmatprep.subr.mxu0 0.0
    %2650 = vmatpush1.xpose.msra.mxu0 0.0
    %2651 = vmatprep.subr.mxu0 0.0
    %2652 = vmatpush1.xpose.msra.mxu0 0.0
    %2653 = vmatprep.subr.mxu0 0.0
    %2654 = vmatpush1.xpose.msra.mxu0 0.0
    %2655 = vmatprep.subr.mxu0 0.0
    %2656 = vmatpush1.xpose.msra.mxu0 0.0
    %2657 = vmatprep.mubr.f32.mxu0 0.0
    %2658 = vmatmul.mubr.f32.gmra.mrb[0].mxu0 %v2589
    %v2659 = vpop.f32.mrb[0].mxu0
    %v2660 = vadd.f32 0.0, %v2659
    %v2661 = vpop.f32.mrb[0].mxu0
    %2662 = vdwg.mxu0
    %2663 = vrot.lane.b32.xlu0 %v285, 104
    %v2664 = vpop.permute.xlu0 %2663
    %2665 = vrot.lane.b32.xlu0 %v285, 72
    %v2666 = vpop.permute.xlu0 %2665
    %v2667 = vsel %vm301, %v2664, 0
    %v2669 = vsel %vm301, %v2666, 0
    %2671 = vmatprep.subr.mxu0 0.0
    %2672 = vmatpush1.xpose.msra.mxu0 %v2669
    %2673 = vmatprep.subr.mxu0 0.0
    %2674 = vmatpush1.xpose.msra.mxu0 0.0
    %2675 = vmatprep.subr.mxu0 0.0
    %2676 = vmatpush1.xpose.msra.mxu0 0.0
    %2677 = vmatprep.subr.mxu0 0.0
    %2678 = vmatpush1.xpose.msra.mxu0 0.0
    %2679 = vmatprep.subr.mxu0 0.0
    %2680 = vmatpush1.xpose.msra.mxu0 0.0
    %2681 = vmatprep.subr.mxu0 0.0
    %2682 = vmatpush1.xpose.msra.mxu0 0.0
    %2683 = vmatprep.subr.mxu0 0.0
    %2684 = vmatpush1.xpose.msra.mxu0 0.0
    %2685 = vmatprep.subr.mxu0 0.0
    %2686 = vmatpush1.xpose.msra.mxu0 0.0
    %2687 = vmatprep.subr.mxu0 0.0
    %2688 = vmatpush1.xpose.msra.mxu0 0.0
    %2689 = vmatprep.subr.mxu0 0.0
    %2690 = vmatpush1.xpose.msra.mxu0 0.0
    %2691 = vmatprep.subr.mxu0 0.0
    %2692 = vmatpush1.xpose.msra.mxu0 0.0
    %2693 = vmatprep.subr.mxu0 0.0
    %2694 = vmatpush1.xpose.msra.mxu0 0.0
    %2695 = vmatprep.subr.mxu0 0.0
    %2696 = vmatpush1.xpose.msra.mxu0 0.0
    %2697 = vmatprep.subr.mxu0 0.0
    %2698 = vmatpush1.xpose.msra.mxu0 0.0
    %2699 = vmatprep.subr.mxu0 0.0
    %2700 = vmatpush1.xpose.msra.mxu0 0.0
    %2701 = vmatprep.subr.mxu0 0.0
    %2702 = vmatpush1.xpose.msra.mxu0 0.0
    %2703 = vmatprep.subr.mxu0 0.0
    %2704 = vmatpush1.xpose.msra.mxu0 0.0
    %2705 = vmatprep.subr.mxu0 0.0
    %2706 = vmatpush1.xpose.msra.mxu0 0.0
    %2707 = vmatprep.subr.mxu0 0.0
    %2708 = vmatpush1.xpose.msra.mxu0 0.0
    %2709 = vmatprep.subr.mxu0 0.0
    %2710 = vmatpush1.xpose.msra.mxu0 0.0
    %2711 = vmatprep.subr.mxu0 0.0
    %2712 = vmatpush1.xpose.msra.mxu0 0.0
    %2713 = vmatprep.subr.mxu0 0.0
    %2714 = vmatpush1.xpose.msra.mxu0 0.0
    %2715 = vmatprep.subr.mxu0 0.0
    %2716 = vmatpush1.xpose.msra.mxu0 0.0
    %2717 = vmatprep.subr.mxu0 0.0
    %2718 = vmatpush1.xpose.msra.mxu0 0.0
    %2719 = vmatprep.subr.mxu0 0.0
    %2720 = vmatpush1.xpose.msra.mxu0 0.0
    %2721 = vmatprep.subr.mxu0 0.0
    %2722 = vmatpush1.xpose.msra.mxu0 0.0
    %2723 = vmatprep.subr.mxu0 0.0
    %2724 = vmatpush1.xpose.msra.mxu0 0.0
    %2725 = vmatprep.subr.mxu0 0.0
    %2726 = vmatpush1.xpose.msra.mxu0 0.0
    %2727 = vmatprep.subr.mxu0 0.0
    %2728 = vmatpush1.xpose.msra.mxu0 0.0
    %2729 = vmatprep.subr.mxu0 0.0
    %2730 = vmatpush1.xpose.msra.mxu0 0.0
    %2731 = vmatprep.subr.mxu0 0.0
    %2732 = vmatpush1.xpose.msra.mxu0 0.0
    %2733 = vmatprep.subr.mxu0 0.0
    %2734 = vmatpush1.xpose.msra.mxu0 0.0
    %2735 = vmatprep.mubr.f32.mxu0 0.0
    %2736 = vmatmul.mubr.f32.gmra.mrb[0].mxu0 %v2667
    %v2737 = vpop.f32.mrb[0].mxu0
    %v2738 = vadd.f32 0.0, %v2737
    %v2739 = vpop.f32.mrb[0].mxu0
    %2740 = vdwg.mxu0
    %2741 = vrot.lane.b32.xlu0 %v290, 104
    %v2742 = vpop.permute.xlu0 %2741
    %2743 = vrot.lane.b32.xlu0 %v290, 72
    %v2744 = vpop.permute.xlu0 %2743
    %v2745 = vsel %vm301, %v2742, 0
    %v2747 = vsel %vm301, %v2744, 0
    %2749 = vmatprep.subr.mxu0 0.0
    %2750 = vmatpush1.xpose.msra.mxu0 %v2747
    %2751 = vmatprep.subr.mxu0 0.0
    %2752 = vmatpush1.xpose.msra.mxu0 0.0
    %2753 = vmatprep.subr.mxu0 0.0
    %2754 = vmatpush1.xpose.msra.mxu0 0.0
    %2755 = vmatprep.subr.mxu0 0.0
    %2756 = vmatpush1.xpose.msra.mxu0 0.0
    %2757 = vmatprep.subr.mxu0 0.0
    %2758 = vmatpush1.xpose.msra.mxu0 0.0
    %2759 = vmatprep.subr.mxu0 0.0
    %2760 = vmatpush1.xpose.msra.mxu0 0.0
    %2761 = vmatprep.subr.mxu0 0.0
    %2762 = vmatpush1.xpose.msra.mxu0 0.0
    %2763 = vmatprep.subr.mxu0 0.0
    %2764 = vmatpush1.xpose.msra.mxu0 0.0
    %2765 = vmatprep.subr.mxu0 0.0
    %2766 = vmatpush1.xpose.msra.mxu0 0.0
    %2767 = vmatprep.subr.mxu0 0.0
    %2768 = vmatpush1.xpose.msra.mxu0 0.0
    %2769 = vmatprep.subr.mxu0 0.0
    %2770 = vmatpush1.xpose.msra.mxu0 0.0
    %2771 = vmatprep.subr.mxu0 0.0
    %2772 = vmatpush1.xpose.msra.mxu0 0.0
    %2773 = vmatprep.subr.mxu0 0.0
    %2774 = vmatpush1.xpose.msra.mxu0 0.0
    %2775 = vmatprep.subr.mxu0 0.0
    %2776 = vmatpush1.xpose.msra.mxu0 0.0
    %2777 = vmatprep.subr.mxu0 0.0
    %2778 = vmatpush1.xpose.msra.mxu0 0.0
    %2779 = vmatprep.subr.mxu0 0.0
    %2780 = vmatpush1.xpose.msra.mxu0 0.0
    %2781 = vmatprep.subr.mxu0 0.0
    %2782 = vmatpush1.xpose.msra.mxu0 0.0
    %2783 = vmatprep.subr.mxu0 0.0
    %2784 = vmatpush1.xpose.msra.mxu0 0.0
    %2785 = vmatprep.subr.mxu0 0.0
    %2786 = vmatpush1.xpose.msra.mxu0 0.0
    %2787 = vmatprep.subr.mxu0 0.0
    %2788 = vmatpush1.xpose.msra.mxu0 0.0
    %2789 = vmatprep.subr.mxu0 0.0
    %2790 = vmatpush1.xpose.msra.mxu0 0.0
    %2791 = vmatprep.subr.mxu0 0.0
    %2792 = vmatpush1.xpose.msra.mxu0 0.0
    %2793 = vmatprep.subr.mxu0 0.0
    %2794 = vmatpush1.xpose.msra.mxu0 0.0
    %2795 = vmatprep.subr.mxu0 0.0
    %2796 = vmatpush1.xpose.msra.mxu0 0.0
    %2797 = vmatprep.subr.mxu0 0.0
    %2798 = vmatpush1.xpose.msra.mxu0 0.0
    %2799 = vmatprep.subr.mxu0 0.0
    %2800 = vmatpush1.xpose.msra.mxu0 0.0
    %2801 = vmatprep.subr.mxu0 0.0
    %2802 = vmatpush1.xpose.msra.mxu0 0.0
    %2803 = vmatprep.subr.mxu0 0.0
    %2804 = vmatpush1.xpose.msra.mxu0 0.0
    %2805 = vmatprep.subr.mxu0 0.0
    %2806 = vmatpush1.xpose.msra.mxu0 0.0
    %2807 = vmatprep.subr.mxu0 0.0
    %2808 = vmatpush1.xpose.msra.mxu0 0.0
    %2809 = vmatprep.subr.mxu0 0.0
    %2810 = vmatpush1.xpose.msra.mxu0 0.0
    %2811 = vmatprep.subr.mxu0 0.0
    %2812 = vmatpush1.xpose.msra.mxu0 0.0
    %2813 = vmatprep.mubr.f32.mxu0 0.0
    %2814 = vmatmul.mubr.f32.gmra.mrb[0].mxu0 %v2745
    %v2815 = vpop.f32.mrb[0].mxu0
    %v2816 = vadd.f32 0.0, %v2815
    %v2817 = vpop.f32.mrb[0].mxu0
    %2818 = vdwg.mxu0
    %2819 = vrot.lane.b32.xlu0 %v295, 104
    %v2820 = vpop.permute.xlu0 %2819
    %2821 = vrot.lane.b32.xlu0 %v295, 72
    %v2822 = vpop.permute.xlu0 %2821
    %v2823 = vsel %vm301, %v2820, 0
    %v2825 = vsel %vm301, %v2822, 0
    %2827 = vmatprep.subr.mxu0 0.0
    %2828 = vmatpush1.xpose.msra.mxu0 %v2825
    %2829 = vmatprep.subr.mxu0 0.0
    %2830 = vmatpush1.xpose.msra.mxu0 0.0
    %2831 = vmatprep.subr.mxu0 0.0
    %2832 = vmatpush1.xpose.msra.mxu0 0.0
    %2833 = vmatprep.subr.mxu0 0.0
    %2834 = vmatpush1.xpose.msra.mxu0 0.0
    %2835 = vmatprep.subr.mxu0 0.0
    %2836 = vmatpush1.xpose.msra.mxu0 0.0
    %2837 = vmatprep.subr.mxu0 0.0
    %2838 = vmatpush1.xpose.msra.mxu0 0.0
    %2839 = vmatprep.subr.mxu0 0.0
    %2840 = vmatpush1.xpose.msra.mxu0 0.0
    %2841 = vmatprep.subr.mxu0 0.0
    %2842 = vmatpush1.xpose.msra.mxu0 0.0
    %2843 = vmatprep.subr.mxu0 0.0
    %2844 = vmatpush1.xpose.msra.mxu0 0.0
    %2845 = vmatprep.subr.mxu0 0.0
    %2846 = vmatpush1.xpose.msra.mxu0 0.0
    %2847 = vmatprep.subr.mxu0 0.0
    %2848 = vmatpush1.xpose.msra.mxu0 0.0
    %2849 = vmatprep.subr.mxu0 0.0
    %2850 = vmatpush1.xpose.msra.mxu0 0.0
    %2851 = vmatprep.subr.mxu0 0.0
    %2852 = vmatpush1.xpose.msra.mxu0 0.0
    %2853 = vmatprep.subr.mxu0 0.0
    %2854 = vmatpush1.xpose.msra.mxu0 0.0
    %2855 = vmatprep.subr.mxu0 0.0
    %2856 = vmatpush1.xpose.msra.mxu0 0.0
    %2857 = vmatprep.subr.mxu0 0.0
    %2858 = vmatpush1.xpose.msra.mxu0 0.0
    %2859 = vmatprep.subr.mxu0 0.0
    %2860 = vmatpush1.xpose.msra.mxu0 0.0
    %2861 = vmatprep.subr.mxu0 0.0
    %2862 = vmatpush1.xpose.msra.mxu0 0.0
    %2863 = vmatprep.subr.mxu0 0.0
    %2864 = vmatpush1.xpose.msra.mxu0 0.0
    %2865 = vmatprep.subr.mxu0 0.0
    %2866 = vmatpush1.xpose.msra.mxu0 0.0
    %2867 = vmatprep.subr.mxu0 0.0
    %2868 = vmatpush1.xpose.msra.mxu0 0.0
    %2869 = vmatprep.subr.mxu0 0.0
    %2870 = vmatpush1.xpose.msra.mxu0 0.0
    %2871 = vmatprep.subr.mxu0 0.0
    %2872 = vmatpush1.xpose.msra.mxu0 0.0
    %2873 = vmatprep.subr.mxu0 0.0
    %2874 = vmatpush1.xpose.msra.mxu0 0.0
    %2875 = vmatprep.subr.mxu0 0.0
    %2876 = vmatpush1.xpose.msra.mxu0 0.0
    %2877 = vmatprep.subr.mxu0 0.0
    %2878 = vmatpush1.xpose.msra.mxu0 0.0
    %2879 = vmatprep.subr.mxu0 0.0
    %2880 = vmatpush1.xpose.msra.mxu0 0.0
    %2881 = vmatprep.subr.mxu0 0.0
    %2882 = vmatpush1.xpose.msra.mxu0 0.0
    %2883 = vmatprep.subr.mxu0 0.0
    %2884 = vmatpush1.xpose.msra.mxu0 0.0
    %2885 = vmatprep.subr.mxu0 0.0
    %2886 = vmatpush1.xpose.msra.mxu0 0.0
    %2887 = vmatprep.subr.mxu0 0.0
    %2888 = vmatpush1.xpose.msra.mxu0 0.0
    %2889 = vmatprep.subr.mxu0 0.0
    %2890 = vmatpush1.xpose.msra.mxu0 0.0
    %2891 = vmatprep.mubr.f32.mxu0 0.0
    %2892 = vmatmul.mubr.f32.gmra.mrb[0].mxu0 %v2823
    %v2893 = vpop.f32.mrb[0].mxu0
    %v2894 = vadd.f32 0.0, %v2893
    %v2895 = vpop.f32.mrb[0].mxu0
    %2896 = vdwg.mxu0
    %v2897 = vmul.f32 %v2660, 0.35355338
    %v2898 = vmul.f32 %v2738, 0.35355338
    %v2899 = vmul.f32 %v2816, 0.35355338
    %v2900 = vmul.f32 %v2894, 0.35355338
    %v2901 = vsel %vm301, %v2897, -inf
    %2902 = vmax.xlane.f32.xlu0 %v2901
    %v2903 = vpop.xlane.xlu0 %2902
    %v2904 = vsel %vm301, %v2898, -inf
    %2905 = vmax.xlane.f32.xlu0 %v2904
    %v2906 = vpop.xlane.xlu0 %2905
    %v2907 = vsel %vm301, %v2899, -inf
    %2908 = vmax.xlane.f32.xlu0 %v2907
    %v2909 = vpop.xlane.xlu0 %2908
    %v2910 = vsel %vm301, %v2900, -inf
    %2911 = vmax.xlane.f32.xlu0 %v2910
    %v2912 = vpop.xlane.xlu0 %2911
    %v2913 = vsub.f32 %v2897, %v2903
    %v2914 = vsub.f32 %v2898, %v2906
    %v2915 = vsub.f32 %v2899, %v2909
    %v2916 = vsub.f32 %v2900, %v2912
    %v2917 = vmul.f32 %v2913, 1.442695
    %v2918 = vpow.pop %v2917
    %v2919 = vmul.f32 %v2914, 1.442695
    %v2920 = vpow.pop %v2919
    %v2921 = vmul.f32 %v2915, 1.442695
    %v2922 = vpow.pop %v2921
    %v2923 = vmul.f32 %v2916, 1.442695
    %v2924 = vpow.pop %v2923
    %v2925 = vsel %vm301, %v2918, 0.0
    %2926 = vadd.xlane.f32.xlu0 %v2925
    %v2927 = vpop.xlane.xlu0 %2926
    %v2928 = vsel %vm301, %v2920, 0.0
    %2929 = vadd.xlane.f32.xlu0 %v2928
    %v2930 = vpop.xlane.xlu0 %2929
    %v2931 = vsel %vm301, %v2922, 0.0
    %2932 = vadd.xlane.f32.xlu0 %v2931
    %v2933 = vpop.xlane.xlu0 %2932
    %v2934 = vsel %vm301, %v2924, 0.0
    %2935 = vadd.xlane.f32.xlu0 %v2934
    %v2936 = vpop.xlane.xlu0 %2935
    %v2937 = vrcp.pop %v2927
    %v2938 = vmul.f32 %v2918, %v2937
    %v2939 = vrcp.pop %v2930
    %v2940 = vmul.f32 %v2920, %v2939
    %v2941 = vrcp.pop %v2933
    %v2942 = vmul.f32 %v2922, %v2941
    %v2943 = vrcp.pop %v2936
    %v2944 = vmul.f32 %v2924, %v2943
    %2945 = vrot.lane.b32.xlu0 %v280, 40
    %v2946 = vpop.permute.xlu0 %2945
    %v2949 = vsel %vm301, %v2938, 0
    %2951 = vmatprep.subr.mxu0 0.0
    %2952 = vmatpush1.msra.mxu0 %v2946
    %2953 = vmatprep.subr.mxu0 0.0
    %2954 = vmatpush1.msra.mxu0 0.0
    %2955 = vmatprep.subr.mxu0 0.0
    %2956 = vmatpush1.msra.mxu0 0.0
    %2957 = vmatprep.subr.mxu0 0.0
    %2958 = vmatpush1.msra.mxu0 0.0
    %2959 = vmatprep.subr.mxu0 0.0
    %2960 = vmatpush1.msra.mxu0 0.0
    %2961 = vmatprep.subr.mxu0 0.0
    %2962 = vmatpush1.msra.mxu0 0.0
    %2963 = vmatprep.subr.mxu0 0.0
    %2964 = vmatpush1.msra.mxu0 0.0
    %2965 = vmatprep.subr.mxu0 0.0
    %2966 = vmatpush1.msra.mxu0 0.0
    %2967 = vmatprep.subr.mxu0 0.0
    %2968 = vmatpush1.msra.mxu0 0.0
    %2969 = vmatprep.subr.mxu0 0.0
    %2970 = vmatpush1.msra.mxu0 0.0
    %2971 = vmatprep.subr.mxu0 0.0
    %2972 = vmatpush1.msra.mxu0 0.0
    %2973 = vmatprep.subr.mxu0 0.0
    %2974 = vmatpush1.msra.mxu0 0.0
    %2975 = vmatprep.subr.mxu0 0.0
    %2976 = vmatpush1.msra.mxu0 0.0
    %2977 = vmatprep.subr.mxu0 0.0
    %2978 = vmatpush1.msra.mxu0 0.0
    %2979 = vmatprep.subr.mxu0 0.0
    %2980 = vmatpush1.msra.mxu0 0.0
    %2981 = vmatprep.subr.mxu0 0.0
    %2982 = vmatpush1.msra.mxu0 0.0
    %2983 = vmatprep.subr.mxu0 0.0
    %2984 = vmatpush1.msra.mxu0 0.0
    %2985 = vmatprep.subr.mxu0 0.0
    %2986 = vmatpush1.msra.mxu0 0.0
    %2987 = vmatprep.subr.mxu0 0.0
    %2988 = vmatpush1.msra.mxu0 0.0
    %2989 = vmatprep.subr.mxu0 0.0
    %2990 = vmatpush1.msra.mxu0 0.0
    %2991 = vmatprep.subr.mxu0 0.0
    %2992 = vmatpush1.msra.mxu0 0.0
    %2993 = vmatprep.subr.mxu0 0.0
    %2994 = vmatpush1.msra.mxu0 0.0
    %2995 = vmatprep.subr.mxu0 0.0
    %2996 = vmatpush1.msra.mxu0 0.0
    %2997 = vmatprep.subr.mxu0 0.0
    %2998 = vmatpush1.msra.mxu0 0.0
    %2999 = vmatprep.subr.mxu0 0.0
    %3000 = vmatpush1.msra.mxu0 0.0
    %3001 = vmatprep.subr.mxu0 0.0
    %3002 = vmatpush1.msra.mxu0 0.0
    %3003 = vmatprep.subr.mxu0 0.0
    %3004 = vmatpush1.msra.mxu0 0.0
    %3005 = vmatprep.subr.mxu0 0.0
    %3006 = vmatpush1.msra.mxu0 0.0
    %3007 = vmatprep.subr.mxu0 0.0
    %3008 = vmatpush1.msra.mxu0 0.0
    %3009 = vmatprep.subr.mxu0 0.0
    %3010 = vmatpush1.msra.mxu0 0.0
    %3011 = vmatprep.subr.mxu0 0.0
    %3012 = vmatpush1.msra.mxu0 0.0
    %3013 = vmatprep.subr.mxu0 0.0
    %3014 = vmatpush1.msra.mxu0 0.0
    %3015 = vmatprep.mubr.f32.mxu0 0.0
    %3016 = vmatmul.mubr.f32.gmra.mrb[0].mxu0 %v2949
    %v3017 = vpop.f32.mrb[0].mxu0
    %v3018 = vadd.f32 0.0, %v3017
    %v3019 = vpop.f32.mrb[0].mxu0
    %3020 = vdwg.mxu0
    %3021 = vrot.lane.b32.xlu0 %v285, 40
    %v3022 = vpop.permute.xlu0 %3021
    %v3025 = vsel %vm301, %v2940, 0
    %3027 = vmatprep.subr.mxu0 0.0
    %3028 = vmatpush1.msra.mxu0 %v3022
    %3029 = vmatprep.subr.mxu0 0.0
    %3030 = vmatpush1.msra.mxu0 0.0
    %3031 = vmatprep.subr.mxu0 0.0
    %3032 = vmatpush1.msra.mxu0 0.0
    %3033 = vmatprep.subr.mxu0 0.0
    %3034 = vmatpush1.msra.mxu0 0.0
    %3035 = vmatprep.subr.mxu0 0.0
    %3036 = vmatpush1.msra.mxu0 0.0
    %3037 = vmatprep.subr.mxu0 0.0
    %3038 = vmatpush1.msra.mxu0 0.0
    %3039 = vmatprep.subr.mxu0 0.0
    %3040 = vmatpush1.msra.mxu0 0.0
    %3041 = vmatprep.subr.mxu0 0.0
    %3042 = vmatpush1.msra.mxu0 0.0
    %3043 = vmatprep.subr.mxu0 0.0
    %3044 = vmatpush1.msra.mxu0 0.0
    %3045 = vmatprep.subr.mxu0 0.0
    %3046 = vmatpush1.msra.mxu0 0.0
    %3047 = vmatprep.subr.mxu0 0.0
    %3048 = vmatpush1.msra.mxu0 0.0
    %3049 = vmatprep.subr.mxu0 0.0
    %3050 = vmatpush1.msra.mxu0 0.0
    %3051 = vmatprep.subr.mxu0 0.0
    %3052 = vmatpush1.msra.mxu0 0.0
    %3053 = vmatprep.subr.mxu0 0.0
    %3054 = vmatpush1.msra.mxu0 0.0
    %3055 = vmatprep.subr.mxu0 0.0
    %3056 = vmatpush1.msra.mxu0 0.0
    %3057 = vmatprep.subr.mxu0 0.0
    %3058 = vmatpush1.msra.mxu0 0.0
    %3059 = vmatprep.subr.mxu0 0.0
    %3060 = vmatpush1.msra.mxu0 0.0
    %3061 = vmatprep.subr.mxu0 0.0
    %3062 = vmatpush1.msra.mxu0 0.0
    %3063 = vmatprep.subr.mxu0 0.0
    %3064 = vmatpush1.msra.mxu0 0.0
    %3065 = vmatprep.subr.mxu0 0.0
    %3066 = vmatpush1.msra.mxu0 0.0
    %3067 = vmatprep.subr.mxu0 0.0
    %3068 = vmatpush1.msra.mxu0 0.0
    %3069 = vmatprep.subr.mxu0 0.0
    %3070 = vmatpush1.msra.mxu0 0.0
    %3071 = vmatprep.subr.mxu0 0.0
    %3072 = vmatpush1.msra.mxu0 0.0
    %3073 = vmatprep.subr.mxu0 0.0
    %3074 = vmatpush1.msra.mxu0 0.0
    %3075 = vmatprep.subr.mxu0 0.0
    %3076 = vmatpush1.msra.mxu0 0.0
    %3077 = vmatprep.subr.mxu0 0.0
    %3078 = vmatpush1.msra.mxu0 0.0
    %3079 = vmatprep.subr.mxu0 0.0
    %3080 = vmatpush1.msra.mxu0 0.0
    %3081 = vmatprep.subr.mxu0 0.0
    %3082 = vmatpush1.msra.mxu0 0.0
    %3083 = vmatprep.subr.mxu0 0.0
    %3084 = vmatpush1.msra.mxu0 0.0
    %3085 = vmatprep.subr.mxu0 0.0
    %3086 = vmatpush1.msra.mxu0 0.0
    %3087 = vmatprep.subr.mxu0 0.0
    %3088 = vmatpush1.msra.mxu0 0.0
    %3089 = vmatprep.subr.mxu0 0.0
    %3090 = vmatpush1.msra.mxu0 0.0
    %3091 = vmatprep.mubr.f32.mxu0 0.0
    %3092 = vmatmul.mubr.f32.gmra.mrb[0].mxu0 %v3025
    %v3093 = vpop.f32.mrb[0].mxu0
    %v3094 = vadd.f32 0.0, %v3093
    %v3095 = vpop.f32.mrb[0].mxu0
    %3096 = vdwg.mxu0
    %3097 = vrot.lane.b32.xlu0 %v290, 40
    %v3098 = vpop.permute.xlu0 %3097
    %v3101 = vsel %vm301, %v2942, 0
    %3103 = vmatprep.subr.mxu0 0.0
    %3104 = vmatpush1.msra.mxu0 %v3098
    %3105 = vmatprep.subr.mxu0 0.0
    %3106 = vmatpush1.msra.mxu0 0.0
    %3107 = vmatprep.subr.mxu0 0.0
    %3108 = vmatpush1.msra.mxu0 0.0
    %3109 = vmatprep.subr.mxu0 0.0
    %3110 = vmatpush1.msra.mxu0 0.0
    %3111 = vmatprep.subr.mxu0 0.0
    %3112 = vmatpush1.msra.mxu0 0.0
    %3113 = vmatprep.subr.mxu0 0.0
    %3114 = vmatpush1.msra.mxu0 0.0
    %3115 = vmatprep.subr.mxu0 0.0
    %3116 = vmatpush1.msra.mxu0 0.0
    %3117 = vmatprep.subr.mxu0 0.0
    %3118 = vmatpush1.msra.mxu0 0.0
    %3119 = vmatprep.subr.mxu0 0.0
    %3120 = vmatpush1.msra.mxu0 0.0
    %3121 = vmatprep.subr.mxu0 0.0
    %3122 = vmatpush1.msra.mxu0 0.0
    %3123 = vmatprep.subr.mxu0 0.0
    %3124 = vmatpush1.msra.mxu0 0.0
    %3125 = vmatprep.subr.mxu0 0.0
    %3126 = vmatpush1.msra.mxu0 0.0
    %3127 = vmatprep.subr.mxu0 0.0
    %3128 = vmatpush1.msra.mxu0 0.0
    %3129 = vmatprep.subr.mxu0 0.0
    %3130 = vmatpush1.msra.mxu0 0.0
    %3131 = vmatprep.subr.mxu0 0.0
    %3132 = vmatpush1.msra.mxu0 0.0
    %3133 = vmatprep.subr.mxu0 0.0
    %3134 = vmatpush1.msra.mxu0 0.0
    %3135 = vmatprep.subr.mxu0 0.0
    %3136 = vmatpush1.msra.mxu0 0.0
    %3137 = vmatprep.subr.mxu0 0.0
    %3138 = vmatpush1.msra.mxu0 0.0
    %3139 = vmatprep.subr.mxu0 0.0
    %3140 = vmatpush1.msra.mxu0 0.0
    %3141 = vmatprep.subr.mxu0 0.0
    %3142 = vmatpush1.msra.mxu0 0.0
    %3143 = vmatprep.subr.mxu0 0.0
    %3144 = vmatpush1.msra.mxu0 0.0
    %3145 = vmatprep.subr.mxu0 0.0
    %3146 = vmatpush1.msra.mxu0 0.0
    %3147 = vmatprep.subr.mxu0 0.0
    %3148 = vmatpush1.msra.mxu0 0.0
    %3149 = vmatprep.subr.mxu0 0.0
    %3150 = vmatpush1.msra.mxu0 0.0
    %3151 = vmatprep.subr.mxu0 0.0
    %3152 = vmatpush1.msra.mxu0 0.0
    %3153 = vmatprep.subr.mxu0 0.0
    %3154 = vmatpush1.msra.mxu0 0.0
    %3155 = vmatprep.subr.mxu0 0.0
    %3156 = vmatpush1.msra.mxu0 0.0
    %3157 = vmatprep.subr.mxu0 0.0
    %3158 = vmatpush1.msra.mxu0 0.0
    %3159 = vmatprep.subr.mxu0 0.0
    %3160 = vmatpush1.msra.mxu0 0.0
    %3161 = vmatprep.subr.mxu0 0.0
    %3162 = vmatpush1.msra.mxu0 0.0
    %3163 = vmatprep.subr.mxu0 0.0
    %3164 = vmatpush1.msra.mxu0 0.0
    %3165 = vmatprep.subr.mxu0 0.0
    %3166 = vmatpush1.msra.mxu0 0.0
    %3167 = vmatprep.mubr.f32.mxu0 0.0
    %3168 = vmatmul.mubr.f32.gmra.mrb[0].mxu0 %v3101
    %v3169 = vpop.f32.mrb[0].mxu0
    %v3170 = vadd.f32 0.0, %v3169
    %v3171 = vpop.f32.mrb[0].mxu0
    %3172 = vdwg.mxu0
    %3173 = vrot.lane.b32.xlu0 %v295, 40
    %v3174 = vpop.permute.xlu0 %3173
    %v3177 = vsel %vm301, %v2944, 0
    %3179 = vmatprep.subr.mxu0 0.0
    %3180 = vmatpush1.msra.mxu0 %v3174
    %3181 = vmatprep.subr.mxu0 0.0
    %3182 = vmatpush1.msra.mxu0 0.0
    %3183 = vmatprep.subr.mxu0 0.0
    %3184 = vmatpush1.msra.mxu0 0.0
    %3185 = vmatprep.subr.mxu0 0.0
    %3186 = vmatpush1.msra.mxu0 0.0
    %3187 = vmatprep.subr.mxu0 0.0
    %3188 = vmatpush1.msra.mxu0 0.0
    %3189 = vmatprep.subr.mxu0 0.0
    %3190 = vmatpush1.msra.mxu0 0.0
    %3191 = vmatprep.subr.mxu0 0.0
    %3192 = vmatpush1.msra.mxu0 0.0
    %3193 = vmatprep.subr.mxu0 0.0
    %3194 = vmatpush1.msra.mxu0 0.0
    %3195 = vmatprep.subr.mxu0 0.0
    %3196 = vmatpush1.msra.mxu0 0.0
    %3197 = vmatprep.subr.mxu0 0.0
    %3198 = vmatpush1.msra.mxu0 0.0
    %3199 = vmatprep.subr.mxu0 0.0
    %3200 = vmatpush1.msra.mxu0 0.0
    %3201 = vmatprep.subr.mxu0 0.0
    %3202 = vmatpush1.msra.mxu0 0.0
    %3203 = vmatprep.subr.mxu0 0.0
    %3204 = vmatpush1.msra.mxu0 0.0
    %3205 = vmatprep.subr.mxu0 0.0
    %3206 = vmatpush1.msra.mxu0 0.0
    %3207 = vmatprep.subr.mxu0 0.0
    %3208 = vmatpush1.msra.mxu0 0.0
    %3209 = vmatprep.subr.mxu0 0.0
    %3210 = vmatpush1.msra.mxu0 0.0
    %3211 = vmatprep.subr.mxu0 0.0
    %3212 = vmatpush1.msra.mxu0 0.0
    %3213 = vmatprep.subr.mxu0 0.0
    %3214 = vmatpush1.msra.mxu0 0.0
    %3215 = vmatprep.subr.mxu0 0.0
    %3216 = vmatpush1.msra.mxu0 0.0
    %3217 = vmatprep.subr.mxu0 0.0
    %3218 = vmatpush1.msra.mxu0 0.0
    %3219 = vmatprep.subr.mxu0 0.0
    %3220 = vmatpush1.msra.mxu0 0.0
    %3221 = vmatprep.subr.mxu0 0.0
    %3222 = vmatpush1.msra.mxu0 0.0
    %3223 = vmatprep.subr.mxu0 0.0
    %3224 = vmatpush1.msra.mxu0 0.0
    %3225 = vmatprep.subr.mxu0 0.0
    %3226 = vmatpush1.msra.mxu0 0.0
    %3227 = vmatprep.subr.mxu0 0.0
    %3228 = vmatpush1.msra.mxu0 0.0
    %3229 = vmatprep.subr.mxu0 0.0
    %3230 = vmatpush1.msra.mxu0 0.0
    %3231 = vmatprep.subr.mxu0 0.0
    %3232 = vmatpush1.msra.mxu0 0.0
    %3233 = vmatprep.subr.mxu0 0.0
    %3234 = vmatpush1.msra.mxu0 0.0
    %3235 = vmatprep.subr.mxu0 0.0
    %3236 = vmatpush1.msra.mxu0 0.0
    %3237 = vmatprep.subr.mxu0 0.0
    %3238 = vmatpush1.msra.mxu0 0.0
    %3239 = vmatprep.subr.mxu0 0.0
    %3240 = vmatpush1.msra.mxu0 0.0
    %3241 = vmatprep.subr.mxu0 0.0
    %3242 = vmatpush1.msra.mxu0 0.0
    %3243 = vmatprep.mubr.f32.mxu0 0.0
    %3244 = vmatmul.mubr.f32.gmra.mrb[0].mxu0 %v3177
    %v3245 = vpop.f32.mrb[0].mxu0
    %v3246 = vadd.f32 0.0, %v3245
    %v3247 = vpop.f32.mrb[0].mxu0
    %3248 = vdwg.mxu0
    %v3249 = vld [vmem:[%s2 + $0x18] sm:$0xff]
    %v3251 = vsel %vm301, %v3018, 0
    %v3254 = vsel %vm301, %v3094, 0
    %v3257 = vsel %vm301, %v3170, 0
    %v3260 = vsel %vm301, %v3246, 0
    %3262 = vmatprep.subr.mxu0 0.0
    %3263 = vmatpush1.msra.mxu0 %v3249
    %3264 = vmatprep.subr.mxu0 0.0
    %3265 = vmatpush1.msra.mxu0 0.0
    %3266 = vmatprep.subr.mxu0 0.0
    %3267 = vmatpush1.msra.mxu0 0.0
    %3268 = vmatprep.subr.mxu0 0.0
    %3269 = vmatpush1.msra.mxu0 0.0
    %3270 = vmatprep.subr.mxu0 0.0
    %3271 = vmatpush1.msra.mxu0 0.0
    %3272 = vmatprep.subr.mxu0 0.0
    %3273 = vmatpush1.msra.mxu0 0.0
    %3274 = vmatprep.subr.mxu0 0.0
    %3275 = vmatpush1.msra.mxu0 0.0
    %3276 = vmatprep.subr.mxu0 0.0
    %3277 = vmatpush1.msra.mxu0 0.0
    %3278 = vmatprep.subr.mxu0 0.0
    %3279 = vmatpush1.msra.mxu0 0.0
    %3280 = vmatprep.subr.mxu0 0.0
    %3281 = vmatpush1.msra.mxu0 0.0
    %3282 = vmatprep.subr.mxu0 0.0
    %3283 = vmatpush1.msra.mxu0 0.0
    %3284 = vmatprep.subr.mxu0 0.0
    %3285 = vmatpush1.msra.mxu0 0.0
    %3286 = vmatprep.subr.mxu0 0.0
    %3287 = vmatpush1.msra.mxu0 0.0
    %3288 = vmatprep.subr.mxu0 0.0
    %3289 = vmatpush1.msra.mxu0 0.0
    %3290 = vmatprep.subr.mxu0 0.0
    %3291 = vmatpush1.msra.mxu0 0.0
    %3292 = vmatprep.subr.mxu0 0.0
    %3293 = vmatpush1.msra.mxu0 0.0
    %3294 = vmatprep.subr.mxu0 0.0
    %3295 = vmatpush1.msra.mxu0 0.0
    %3296 = vmatprep.subr.mxu0 0.0
    %3297 = vmatpush1.msra.mxu0 0.0
    %3298 = vmatprep.subr.mxu0 0.0
    %3299 = vmatpush1.msra.mxu0 0.0
    %3300 = vmatprep.subr.mxu0 0.0
    %3301 = vmatpush1.msra.mxu0 0.0
    %3302 = vmatprep.subr.mxu0 0.0
    %3303 = vmatpush1.msra.mxu0 0.0
    %3304 = vmatprep.subr.mxu0 0.0
    %3305 = vmatpush1.msra.mxu0 0.0
    %3306 = vmatprep.subr.mxu0 0.0
    %3307 = vmatpush1.msra.mxu0 0.0
    %3308 = vmatprep.subr.mxu0 0.0
    %3309 = vmatpush1.msra.mxu0 0.0
    %3310 = vmatprep.subr.mxu0 0.0
    %3311 = vmatpush1.msra.mxu0 0.0
    %3312 = vmatprep.subr.mxu0 0.0
    %3313 = vmatpush1.msra.mxu0 0.0
    %3314 = vmatprep.subr.mxu0 0.0
    %3315 = vmatpush1.msra.mxu0 0.0
    %3316 = vmatprep.subr.mxu0 0.0
    %3317 = vmatpush1.msra.mxu0 0.0
    %3318 = vmatprep.subr.mxu0 0.0
    %3319 = vmatpush1.msra.mxu0 0.0
    %3320 = vmatprep.subr.mxu0 0.0
    %3321 = vmatpush1.msra.mxu0 0.0
    %3322 = vmatprep.subr.mxu0 0.0
    %3323 = vmatpush1.msra.mxu0 0.0
    %3324 = vmatprep.subr.mxu0 0.0
    %3325 = vmatpush1.msra.mxu0 0.0
    %3326 = vmatprep.mubr.f32.mxu0 0.0
    %3327 = vmatmul.mubr.f32.gmra.mrb[0].mxu0 %v3251
    %v3328 = vpop.f32.mrb[0].mxu0
    %v3329 = vadd.f32 0.0, %v3328
    %v3330 = vpop.f32.mrb[0].mxu0
    %3331 = vmatprep.mubr.f32.mxu0 0.0
    %3332 = vmatmul.mubr.f32.gmra.mrb[0].mxu0 %v3254
    %v3333 = vpop.f32.mrb[0].mxu0
    %v3334 = vadd.f32 0.0, %v3333
    %v3335 = vpop.f32.mrb[0].mxu0
    %3336 = vmatprep.mubr.f32.mxu0 0.0
    %3337 = vmatmul.mubr.f32.gmra.mrb[0].mxu0 %v3257
    %v3338 = vpop.f32.mrb[0].mxu0
    %v3339 = vadd.f32 0.0, %v3338
    %v3340 = vpop.f32.mrb[0].mxu0
    %3341 = vmatprep.mubr.f32.mxu0 0.0
    %3342 = vmatmul.mubr.f32.gmra.mrb[0].mxu0 %v3260
    %v3343 = vpop.f32.mrb[0].mxu0
    %v3344 = vadd.f32 0.0, %v3343
    %v3345 = vpop.f32.mrb[0].mxu0
    %3346 = vdwg.mxu0
    %v3347 = vadd.f32 %v2581, %v3329
    %v3348 = vadd.f32 %v2582, %v3334
    %v3349 = vadd.f32 %v2583, %v3339
    %v3350 = vadd.f32 %v2584, %v3344
    %v3355 = vrot.slane %v607, 1
    %v3356 = vrot.slane %v608, 1
    %v3357 = vrot.slane %v609, 1
    %v3358 = vrot.slane %v610, 1
    %v3367 = vrot.slane %v2131, 7
    %v3368 = vrot.slane %v2132, 7
    %v3369 = vrot.slane %v2133, 7
    %v3370 = vrot.slane %v2134, 7
    %v3379 = vrot.slane %v2897, 6
    %v3380 = vrot.slane %v2898, 6
    %v3381 = vrot.slane %v2899, 6
    %v3382 = vrot.slane %v2900, 6
    %vm3387 = vcmask 1040384
    %v3388 = vsel %vm3387, %v3355, %v1272
    %v3389 = vsel %vm3387, %v3356, %v1273
    %v3390 = vsel %vm3387, %v3357, %v1274
    %v3391 = vsel %vm3387, %v3358, %v1275
    %vm3392 = vcmask 1041408
    %v3393 = vsel %vm3392, %v3388, %v3367
    %v3394 = vsel %vm3392, %v3389, %v3368
    %v3395 = vsel %vm3392, %v3390, %v3369
    %v3396 = vsel %vm3392, %v3391, %v3370
    %vm3397 = vcmask 1042432
    %v3398 = vsel %vm3397, %v3393, %v3379
    %v3399 = vsel %vm3397, %v3394, %v3380
    %v3400 = vsel %vm3397, %v3395, %v3381
    %v3401 = vsel %vm3397, %v3396, %v3382
    %vm3402 = vcmask 60416
    %3403 = vst.msk [vmem:[#allocation14] sm:$0xf] %vm3402, %v3398
    %3404 = vst.msk [vmem:[#allocation14 + $0x4] sm:$0xf] %vm3402, %v3399
    %3405 = vst.msk [vmem:[#allocation14 + $0x8] sm:$0xf] %vm3402, %v3400
    %3406 = vst.msk [vmem:[#allocation14 + $0xc] sm:$0xf] %vm3402, %v3401
    %v3407 = vadd.f32 %v117, %v3347
    %v3408 = vadd.f32 %v118, %v3348
    %v3409 = vadd.f32 %v119, %v3349
    %v3410 = vadd.f32 %v120, %v3350
    %v3411 = vld [vmem:[%s3] sm:$0x1]
    %v3413 = vlaneseq
    %v3414 = vshrl.u32 %v3413, 7
    %v3415 = vsub.s32 0, %v3414
    %v3416 = vrot.slane %v3411, %v3415
    %v3418 = vadd.f32 %v3407, %v3416
    %v3419 = vadd.f32 %v3408, %v3416
    %v3420 = vadd.f32 %v3409, %v3416
    %v3421 = vadd.f32 %v3410, %v3416
    %v3422 = vsel %vm121, %v3418, 0.0
    %3423 = vadd.xlane.f32.xlu0 %v3422
    %v3424 = vpop.xlane.xlu0 %3423
    %v3425 = vsel %vm121, %v3419, 0.0
    %3426 = vadd.xlane.f32.xlu0 %v3425
    %v3427 = vpop.xlane.xlu0 %3426
    %v3428 = vsel %vm121, %v3420, 0.0
    %3429 = vadd.xlane.f32.xlu0 %v3428
    %v3430 = vpop.xlane.xlu0 %3429
    %v3431 = vsel %vm121, %v3421, 0.0
    %3432 = vadd.xlane.f32.xlu0 %v3431
    %v3433 = vpop.xlane.xlu0 %3432
    %v3434 = vmul.f32 %v3424, %v134
    %v3435 = vmul.f32 %v3427, %v134
    %v3436 = vmul.f32 %v3430, %v134
    %v3437 = vmul.f32 %v3433, %v134
    %v3438 = vsub.f32 %v3418, %v3434
    %v3439 = vsub.f32 %v3419, %v3435
    %v3440 = vsub.f32 %v3420, %v3436
    %v3441 = vsub.f32 %v3421, %v3437
    %v3442 = vmul.f32 %v3438, %v3438
    %v3443 = vmul.f32 %v3439, %v3439
    %v3444 = vmul.f32 %v3440, %v3440
    %v3445 = vmul.f32 %v3441, %v3441
    %v3446 = vsel %vm121, %v3442, 0.0
    %3447 = vadd.xlane.f32.xlu0 %v3446
    %v3448 = vpop.xlane.xlu0 %3447
    %v3449 = vsel %vm121, %v3443, 0.0
    %3450 = vadd.xlane.f32.xlu0 %v3449
    %v3451 = vpop.xlane.xlu0 %3450
    %v3452 = vsel %vm121, %v3444, 0.0
    %3453 = vadd.xlane.f32.xlu0 %v3452
    %v3454 = vpop.xlane.xlu0 %3453
    %v3455 = vsel %vm121, %v3445, 0.0
    %3456 = vadd.xlane.f32.xlu0 %v3455
    %v3457 = vpop.xlane.xlu0 %3456
    %v3458 = vmul.f32 %v3448, %v134
    %v3459 = vmul.f32 %v3451, %v134
    %v3460 = vmul.f32 %v3454, %v134
    %v3461 = vmul.f32 %v3457, %v134
    %v3462 = vadd.f32 %v3458, 1e-05
    %v3463 = vadd.f32 %v3459, 1e-05
    %v3464 = vadd.f32 %v3460, 1e-05
    %v3465 = vadd.f32 %v3461, 1e-05
    %v3466 = vrsqrt.pop %v3462
    %v3467 = vrsqrt.pop %v3463
    %v3468 = vrsqrt.pop %v3464
    %v3469 = vrsqrt.pop %v3465
    %v3470 = vmul.f32 %v3438, %v3466
    %v3471 = vmul.f32 %v3439, %v3467
    %v3472 = vmul.f32 %v3440, %v3468
    %v3473 = vmul.f32 %v3441, %v3469
    %v3474 = vld [vmem:[#allocation5] sm:$0x1]
    %v3476 = vlaneseq
    %v3477 = vshrl.u32 %v3476, 7
    %v3478 = vsub.s32 0, %v3477
    %v3479 = vrot.slane %v3474, %v3478
    %v3481 = vmul.f32 %v3470, %v3479
    %v3482 = vmul.f32 %v3471, %v3479
    %v3483 = vmul.f32 %v3472, %v3479
    %v3484 = vmul.f32 %v3473, %v3479
    %v3485 = vld [vmem:[#allocation7] sm:$0x1]
    %v3487 = vlaneseq
    %v3488 = vshrl.u32 %v3487, 7
    %v3489 = vsub.s32 0, %v3488
    %v3490 = vrot.slane %v3485, %v3489
    %v3492 = vadd.f32 %v3481, %v3490
    %v3493 = vadd.f32 %v3482, %v3490
    %v3494 = vadd.f32 %v3483, %v3490
    %v3495 = vadd.f32 %v3484, %v3490
    %v3496 = vld [vmem:[#allocation8] sm:$0xff]
    %v3497 = vld [vmem:[#allocation8 + $0x8] sm:$0xff]
    %v3498 = vld [vmem:[#allocation8 + $0x10] sm:$0xff]
    %v3499 = vld [vmem:[#allocation8 + $0x18] sm:$0xff]
    %v3500 = vld [vmem:[#allocation10] sm:$0x1]
    %v3502 = vlaneseq
    %v3503 = vshrl.u32 %v3502, 7
    %v3504 = vsub.s32 0, %v3503
    %v3505 = vrot.slane %v3500, %v3504
    %v3508 = vsel %vm121, %v3492, 0
    %v3511 = vsel %vm121, %v3493, 0
    %v3514 = vsel %vm121, %v3494, 0
    %v3517 = vsel %vm121, %v3495, 0
    %3519 = vmatprep.subr.mxu0 0.0
    %3520 = vmatpush1.msra.mxu0 %v3496
    %3521 = vmatprep.subr.mxu0 0.0
    %3522 = vmatpush1.msra.mxu0 %v3497
    %3523 = vmatprep.subr.mxu0 0.0
    %3524 = vmatpush1.msra.mxu0 %v3498
    %3525 = vmatprep.subr.mxu0 0.0
    %3526 = vmatpush1.msra.mxu0 %v3499
    %3527 = vmatprep.subr.mxu0 0.0
    %3528 = vmatpush1.msra.mxu0 0.0
    %3529 = vmatprep.subr.mxu0 0.0
    %3530 = vmatpush1.msra.mxu0 0.0
    %3531 = vmatprep.subr.mxu0 0.0
    %3532 = vmatpush1.msra.mxu0 0.0
    %3533 = vmatprep.subr.mxu0 0.0
    %3534 = vmatpush1.msra.mxu0 0.0
    %3535 = vmatprep.subr.mxu0 0.0
    %3536 = vmatpush1.msra.mxu0 0.0
    %3537 = vmatprep.subr.mxu0 0.0
    %3538 = vmatpush1.msra.mxu0 0.0
    %3539 = vmatprep.subr.mxu0 0.0
    %3540 = vmatpush1.msra.mxu0 0.0
    %3541 = vmatprep.subr.mxu0 0.0
    %3542 = vmatpush1.msra.mxu0 0.0
    %3543 = vmatprep.subr.mxu0 0.0
    %3544 = vmatpush1.msra.mxu0 0.0
    %3545 = vmatprep.subr.mxu0 0.0
    %3546 = vmatpush1.msra.mxu0 0.0
    %3547 = vmatprep.subr.mxu0 0.0
    %3548 = vmatpush1.msra.mxu0 0.0
    %3549 = vmatprep.subr.mxu0 0.0
    %3550 = vmatpush1.msra.mxu0 0.0
    %3551 = vmatprep.subr.mxu0 0.0
    %3552 = vmatpush1.msra.mxu0 0.0
    %3553 = vmatprep.subr.mxu0 0.0
    %3554 = vmatpush1.msra.mxu0 0.0
    %3555 = vmatprep.subr.mxu0 0.0
    %3556 = vmatpush1.msra.mxu0 0.0
    %3557 = vmatprep.subr.mxu0 0.0
    %3558 = vmatpush1.msra.mxu0 0.0
    %3559 = vmatprep.subr.mxu0 0.0
    %3560 = vmatpush1.msra.mxu0 0.0
    %3561 = vmatprep.subr.mxu0 0.0
    %3562 = vmatpush1.msra.mxu0 0.0
    %3563 = vmatprep.subr.mxu0 0.0
    %3564 = vmatpush1.msra.mxu0 0.0
    %3565 = vmatprep.subr.mxu0 0.0
    %3566 = vmatpush1.msra.mxu0 0.0
    %3567 = vmatprep.subr.mxu0 0.0
    %3568 = vmatpush1.msra.mxu0 0.0
    %3569 = vmatprep.subr.mxu0 0.0
    %3570 = vmatpush1.msra.mxu0 0.0
    %3571 = vmatprep.subr.mxu0 0.0
    %3572 = vmatpush1.msra.mxu0 0.0
    %3573 = vmatprep.subr.mxu0 0.0
    %3574 = vmatpush1.msra.mxu0 0.0
    %3575 = vmatprep.subr.mxu0 0.0
    %3576 = vmatpush1.msra.mxu0 0.0
    %3577 = vmatprep.subr.mxu0 0.0
    %3578 = vmatpush1.msra.mxu0 0.0
    %3579 = vmatprep.subr.mxu0 0.0
    %3580 = vmatpush1.msra.mxu0 0.0
    %3581 = vmatprep.subr.mxu0 0.0
    %3582 = vmatpush1.msra.mxu0 0.0
    %3583 = vmatprep.mubr.f32.mxu0 0.0
    %3584 = vmatmul.mubr.f32.gmra.mrb[0].mxu0 %v3508
    %v3585 = vpop.f32.mrb[0].mxu0
    %v3586 = vadd.f32 %v3505, %v3585
    %v3587 = vpop.f32.mrb[0].mxu0
    %3588 = vmatprep.mubr.f32.mxu0 0.0
    %3589 = vmatmul.mubr.f32.gmra.mrb[0].mxu0 %v3511
    %v3590 = vpop.f32.mrb[0].mxu0
    %v3591 = vadd.f32 %v3505, %v3590
    %v3592 = vpop.f32.mrb[0].mxu0
    %3593 = vmatprep.mubr.f32.mxu0 0.0
    %3594 = vmatmul.mubr.f32.gmra.mrb[0].mxu0 %v3514
    %v3595 = vpop.f32.mrb[0].mxu0
    %v3596 = vadd.f32 %v3505, %v3595
    %v3597 = vpop.f32.mrb[0].mxu0
    %3598 = vmatprep.mubr.f32.mxu0 0.0
    %3599 = vmatmul.mubr.f32.gmra.mrb[0].mxu0 %v3517
    %v3600 = vpop.f32.mrb[0].mxu0
    %v3601 = vadd.f32 %v3505, %v3600
    %v3602 = vpop.f32.mrb[0].mxu0
    %3603 = vdwg.mxu0
    %v3604 = vmax.f32 %v3586, 0.0
    %v3605 = vmax.f32 %v3591, 0.0
    %v3606 = vmax.f32 %v3596, 0.0
    %v3607 = vmax.f32 %v3601, 0.0
    %v3608 = vld [vmem:[%s10] sm:$0xff]
    %v3609 = vld [vmem:[%s10 + $0x8] sm:$0xff]
    %v3610 = vld [vmem:[%s10 + $0x10] sm:$0xff]
    %v3611 = vld [vmem:[%s10 + $0x18] sm:$0xff]
    %v3612 = vld [vmem:[%s10 + $0x20] sm:$0xff]
    %v3613 = vld [vmem:[%s10 + $0x28] sm:$0xff]
    %v3614 = vld [vmem:[%s10 + $0x30] sm:$0xff]
    %v3615 = vld [vmem:[%s10 + $0x38] sm:$0xff]
    %v3616 = vld [vmem:[#allocation11] sm:$0x1]
    %v3618 = vlaneseq
    %v3619 = vshrl.u32 %v3618, 7
    %v3620 = vsub.s32 0, %v3619
    %v3621 = vrot.slane %v3616, %v3620
    %vm3623 = vcmask 523264
    %v3625 = vsel %vm3623, %v3604, 0
    %v3628 = vsel %vm3623, %v3605, 0
    %v3631 = vsel %vm3623, %v3606, 0
    %v3634 = vsel %vm3623, %v3607, 0
    %3636 = vmatprep.subr.mxu0 0.0
    %3637 = vmatpush1.msra.mxu0 %v3608
    %3638 = vmatprep.subr.mxu0 0.0
    %3639 = vmatpush1.msra.mxu0 %v3609
    %3640 = vmatprep.subr.mxu0 0.0
    %3641 = vmatpush1.msra.mxu0 %v3610
    %3642 = vmatprep.subr.mxu0 0.0
    %3643 = vmatpush1.msra.mxu0 %v3611
    %3644 = vmatprep.subr.mxu0 0.0
    %3645 = vmatpush1.msra.mxu0 %v3612
    %3646 = vmatprep.subr.mxu0 0.0
    %3647 = vmatpush1.msra.mxu0 %v3613
    %3648 = vmatprep.subr.mxu0 0.0
    %3649 = vmatpush1.msra.mxu0 %v3614
    %3650 = vmatprep.subr.mxu0 0.0
    %3651 = vmatpush1.msra.mxu0 %v3615
    %3652 = vmatprep.subr.mxu0 0.0
    %3653 = vmatpush1.msra.mxu0 0.0
    %3654 = vmatprep.subr.mxu0 0.0
    %3655 = vmatpush1.msra.mxu0 0.0
    %3656 = vmatprep.subr.mxu0 0.0
    %3657 = vmatpush1.msra.mxu0 0.0
    %3658 = vmatprep.subr.mxu0 0.0
    %3659 = vmatpush1.msra.mxu0 0.0
    %3660 = vmatprep.subr.mxu0 0.0
    %3661 = vmatpush1.msra.mxu0 0.0
    %3662 = vmatprep.subr.mxu0 0.0
    %3663 = vmatpush1.msra.mxu0 0.0
    %3664 = vmatprep.subr.mxu0 0.0
    %3665 = vmatpush1.msra.mxu0 0.0
    %3666 = vmatprep.subr.mxu0 0.0
    %3667 = vmatpush1.msra.mxu0 0.0
    %3668 = vmatprep.subr.mxu0 0.0
    %3669 = vmatpush1.msra.mxu0 0.0
    %3670 = vmatprep.subr.mxu0 0.0
    %3671 = vmatpush1.msra.mxu0 0.0
    %3672 = vmatprep.subr.mxu0 0.0
    %3673 = vmatpush1.msra.mxu0 0.0
    %3674 = vmatprep.subr.mxu0 0.0
    %3675 = vmatpush1.msra.mxu0 0.0
    %3676 = vmatprep.subr.mxu0 0.0
    %3677 = vmatpush1.msra.mxu0 0.0
    %3678 = vmatprep.subr.mxu0 0.0
    %3679 = vmatpush1.msra.mxu0 0.0
    %3680 = vmatprep.subr.mxu0 0.0
    %3681 = vmatpush1.msra.mxu0 0.0
    %3682 = vmatprep.subr.mxu0 0.0
    %3683 = vmatpush1.msra.mxu0 0.0
    %3684 = vmatprep.subr.mxu0 0.0
    %3685 = vmatpush1.msra.mxu0 0.0
    %3686 = vmatprep.subr.mxu0 0.0
    %3687 = vmatpush1.msra.mxu0 0.0
    %3688 = vmatprep.subr.mxu0 0.0
    %3689 = vmatpush1.msra.mxu0 0.0
    %3690 = vmatprep.subr.mxu0 0.0
    %3691 = vmatpush1.msra.mxu0 0.0
    %3692 = vmatprep.subr.mxu0 0.0
    %3693 = vmatpush1.msra.mxu0 0.0
    %3694 = vmatprep.subr.mxu0 0.0
    %3695 = vmatpush1.msra.mxu0 0.0
    %3696 = vmatprep.subr.mxu0 0.0
    %3697 = vmatpush1.msra.mxu0 0.0
    %3698 = vmatprep.subr.mxu0 0.0
    %3699 = vmatpush1.msra.mxu0 0.0
    %3700 = vmatprep.mubr.f32.mxu0 0.0
    %3701 = vmatmul.mubr.f32.gmra.mrb[0].mxu0 %v3625
    %v3702 = vpop.f32.mrb[0].mxu0
    %v3703 = vadd.f32 %v3621, %v3702
    %v3704 = vpop.f32.mrb[0].mxu0
    %3705 = vmatprep.mubr.f32.mxu0 0.0
    %3706 = vmatmul.mubr.f32.gmra.mrb[0].mxu0 %v3628
    %v3707 = vpop.f32.mrb[0].mxu0
    %v3708 = vadd.f32 %v3621, %v3707
    %v3709 = vpop.f32.mrb[0].mxu0
    %3710 = vmatprep.mubr.f32.mxu0 0.0
    %3711 = vmatmul.mubr.f32.gmra.mrb[0].mxu0 %v3631
    %v3712 = vpop.f32.mrb[0].mxu0
    %v3713 = vadd.f32 %v3621, %v3712
    %v3714 = vpop.f32.mrb[0].mxu0
    %3715 = vmatprep.mubr.f32.mxu0 0.0
    %3716 = vmatmul.mubr.f32.gmra.mrb[0].mxu0 %v3634
    %v3717 = vpop.f32.mrb[0].mxu0
    %v3718 = vadd.f32 %v3621, %v3717
    %v3719 = vpop.f32.mrb[0].mxu0
    %3720 = vdwg.mxu0
    %v3721 = vadd.f32 %v3418, %v3703
    %v3722 = vadd.f32 %v3419, %v3708
    %v3723 = vadd.f32 %v3420, %v3713
    %v3724 = vadd.f32 %v3421, %v3718
    %3725 = vst.msk [vmem:[#allocation13] sm:$0xff] %vm121, %v3721
    %3726 = vst.msk [vmem:[#allocation13 + $0x8] sm:$0xff] %vm121, %v3722
    %3727 = vst.msk [vmem:[#allocation13 + $0x10] sm:$0xff] %vm121, %v3723
    %3728 = vst.msk [vmem:[#allocation13 + $0x18] sm:$0xff] %vm121, %v3724
    // Predicated region
    $region74: #{_attention_block_call.1} parent=1 // pred_check
      _
    $region75: #{_attention_block_call.1} parent=1 // pred_check_branch
      %3730 = sbr.rel (0) target = $region77
    $region76: #{_attention_block_call.1} parent=1 // pred_region
      %s3732 = ssub.s32 512, 512
      %3733 = vsyncadd [#allocation4], %s3732
      %s3734 = sshll.u32 [#allocation13], 4
      %s3735 = int_to_ptr.vmem [resolvable:$true] %s3734
      %3740 = dma.vmem_to_hbm [thread:$0]  %s3735, 512, %s12, [#allocation4], 128, 128, 8
    $region77: #{_attention_block_call.1} parent=1 // pred_fallthru
      _
    // Predicated region
    $region78: #{_attention_block_call.1} parent=1 // pred_check
      _
    $region79: #{_attention_block_call.1} parent=1 // pred_check_branch
      %3742 = sbr.rel (0) target = $region81
    $region80: #{_attention_block_call.1} parent=1 // pred_region
      %s3744 = ssub.s32 256, 256
      %3745 = vsyncadd [#allocation15], %s3744
      %s3746 = sshll.u32 [#allocation14], 4
      %s3747 = int_to_ptr.vmem [resolvable:$true] %s3746
      %3752 = dma.vmem_to_hbm [thread:$0]  %s3747, 256, %s13, [#allocation15], 64, 64, 4
    $region81: #{_attention_block_call.1} parent=1 // pred_fallthru
      _
    // Predicated region
    $region82: #{_attention_block_call.1} parent=1 // pred_check
      _
    $region83: #{_attention_block_call.1} parent=1 // pred_check_branch
      %3754 = sbr.rel (0) target = $region85
    $region84: #{_attention_block_call.1} parent=1 // pred_region
      %3755 = dma.done [#allocation4], 512
    $region85: #{_attention_block_call.1} parent=1 // pred_fallthru
      _
    // Predicated region
    $region86: #{_attention_block_call.1} parent=1 // pred_check
      _
    $region87: #{_attention_block_call.1} parent=1 // pred_check_branch
      %3757 = sbr.rel (0) target = $region89
    $region88: #{_attention_block_call.1} parent=1 // pred_region
      %3758 = dma.done [#allocation15], 256
    $region89: #{_attention_block_call.1} parent=1 // pred_fallthru
      _
    %3759 = vsyncpa [#allocation3], 1
    %3760 = vsyncpa [#allocation6], 1
    %3761 = vsyncpa [#allocation9], 1
    %3762 = vsyncpa [#allocation12], 1
    %3763 = vsyncpa [#allocation4], 1
    %3764 = vsyncpa [#allocation15], 1

</llo_original>
